<compile_context>
chip_gen: v5e
topology: v5e:2x2
jax: 0.10.0
libtpu: 0.0.40
codegen_flags: <defaults>
</compile_context>

<pallas_src>
import functools

import jax
import jax.numpy as jnp
from jax.experimental import pallas as pl
from jax.experimental.pallas import tpu as pltpu


# ----------------------------------------------------------------------------
# Fused refiner kernel: grid over T iterations, whole batch per step, VMEM resident
# ----------------------------------------------------------------------------

def _refiner_kernel(
    # --- data / initial state ---
    nf0_ref, pf0_ref, inc0_ref, trackt_ref, diagt_ref, chg_ref,
    # --- inc_proj_n MLP ---
    wpn0_ref, bpn0_ref, wpn1_ref, bpn1_ref,
    # --- inc_proj_e MLP ---
    wpe0_ref, bpe0_ref, wpe1_ref, bpe1_ref,
    # --- inc_proj_i MLP (fan-in 1 first layer -> VPU broadcast) ---
    wpi0_ref, bpi0_ref, wpi1_ref, bpi1_ref,
    # --- inc_net MLP (width-1 final layer -> VPU lane reduce) ---
    wn0_ref, bn0_ref, wn1t_ref, bn1_ref,
    # --- hyperedge indicator MLP (first layer split: features | inc_skip column) ---
    whf_ref, whs_ref, bh0_ref, wh1t_ref, bh1_ref,
    # --- norm_pre_e ---
    g_pre_e_ref, b_pre_e_ref,
    # --- deepset_e : layer1 (W1+W2, W2, b1+b2), ReLU+LN, layer2 ---
    de1_w12_ref, de1_w2_ref, de1_b12_ref, de_lng_ref, de_lnb_ref,
    de2_w12_ref, de2_w2_ref, de2_b12_ref,
    # --- norm_e ---
    g_e_ref, b_e_ref,
    # --- norm_pre_n ---
    g_pre_n_ref, b_pre_n_ref,
    # --- deepset_n ---
    dn1_w12_ref, dn1_w2_ref, dn1_b12_ref, dn_lng_ref, dn_lnb_ref,
    dn2_w12_ref, dn2_w2_ref, dn2_b12_ref,
    # --- norm_n ---
    g_n_ref, b_n_ref,
    # --- outputs ---
    pred_ref, nf_s_ref, pf_s_ref, inc_s_ref,
    *, B, N, P):

    f32 = jnp.float32
    BP, BN, E = B * P, B * N, B * P * N
    t = pl.program_id(0)

    # Carried state lives in the grid-resident output blocks; seed on the first step.
    @pl.when(t == 0)
    def _():
        nf_s_ref[...] = nf0_ref[...]
        pf_s_ref[...] = pf0_ref[...]
        inc_s_ref[...] = inc0_ref[...]

    def mm(a, b):
        return jnp.dot(a, b, preferred_element_type=f32)

    def layernorm(x, g, b, eps=1e-5):
        mu = jnp.mean(x, axis=-1, keepdims=True)
        var = jnp.mean(jnp.square(x - mu), axis=-1, keepdims=True)
        return (x - mu) * jax.lax.rsqrt(var + eps) * g + b

    def fdiv(x, d):
        # exact floor-division of small non-negative integers held in f32 (no vector int div)
        return jnp.floor((x + 0.5) * (1.0 / d))

    def make_mask(shape, fn):
        r = jax.lax.broadcasted_iota(jnp.int32, shape, 0).astype(f32)
        c = jax.lax.broadcasted_iota(jnp.int32, shape, 1).astype(f32)
        return jnp.where(fn(r, c), 1.0, 0.0).astype(f32)

    # Trace-time-constant selection / averaging masks, built on the VPU (no extra HBM traffic).
    # Edge ordering: r = (b*P + p)*N + n  ->  particle row r//N, node column r%N,
    #                node row b*N + n with b = r//(P*N).
    rep_e = make_mask((E, BP), lambda r, c: c == fdiv(r, N))                       # edge -> particle
    rep_n = make_mask((E, BN),
                      lambda r, c: c == fdiv(r, P * N) * N + (r - N * fdiv(r, N)))  # edge -> node
    n_1hot = make_mask((E, N), lambda r, c: c == r - N * fdiv(r, N))               # edge's node column
    edge2p = make_mask((BP, E), lambda r, c: r == fdiv(c, N))                      # particle <- its edges
    blockdg = make_mask((BP, BN), lambda r, c: fdiv(r, P) == fdiv(c, N))           # same-event block diag
    mean_p = make_mask((BP, BP), lambda r, c: fdiv(r, P) == fdiv(c, P)) * (1.0 / P)
    mean_n = make_mask((BN, BN), lambda r, c: fdiv(r, N) == fdiv(c, N)) * (1.0 / N)

    nf0 = nf0_ref[...]            # (BN, D)  features_0
    nf = nf_s_ref[...]            # (BN, D)  current node features
    pf = pf_s_ref[...]            # (BP, D)  current particle features
    inct = inc_s_ref[...]         # (BP, N)  incidence (transposed), previously hard-assigned
    trackt = trackt_ref[...]      # (BP, N)
    diagt = diagt_ref[...]        # (BP, N)
    charged = chg_ref[...]        # (BP, 1)

    # ---- incidence_update1 : projection MLPs (whole batch, single matmuls) ----
    n_hid = jnp.maximum(mm(nf, wpn0_ref[...]) + bpn0_ref[...], 0.0)
    n_proj = mm(n_hid, wpn1_ref[...]) + bpn1_ref[...]                     # (BN, D)
    e_hid = jnp.maximum(mm(pf, wpe0_ref[...]) + bpe0_ref[...], 0.0)
    e_proj = mm(e_hid, wpe1_ref[...]) + bpe1_ref[...]                     # (BP, D)

    # per-edge incidence scalar  inc_edge[r] = inct[r//N, r%N]
    inc_edge = jnp.sum(mm(rep_e, inct) * n_1hot, axis=1, keepdims=True)   # (E, 1)
    # fan-in-1 first layer of inc_proj_i on the VPU (broadcast multiply, no MXU)
    i_hid = jnp.maximum(inc_edge * wpi0_ref[...] + bpi0_ref[...], 0.0)    # (E, Hi)
    i_proj = mm(i_hid, wpi1_ref[...]) + bpi1_ref[...]                     # (E, D)

    x = jnp.maximum(mm(rep_n, n_proj) + mm(rep_e, e_proj) + i_proj, 0.0)  # (E, D)
    h = jnp.maximum(mm(x, wn0_ref[...]) + bn0_ref[...], 0.0)              # (E, Hn)
    logit_e = jnp.sum(h * wn1t_ref[...], axis=1, keepdims=True)           # (E, 1)  width-1 layer
    logits_t = mm(edge2p, logit_e * n_1hot) + bn1_ref[...]                # (BP, N)

    # softmax over particles (per node column, per event)
    parts = []
    for b in range(B):
        blk = logits_t[b * P:(b + 1) * P, :]
        mx = jnp.max(blk, axis=0, keepdims=True)
        ex = jnp.exp(blk - mx)
        s = jnp.sum(ex, axis=0, keepdims=True)
        parts.append(ex * pl.reciprocal(s, approx=True))
    inct_sm = jnp.concatenate(parts, axis=0)                              # (BP, N)

    # ---- hyperedge indicator (sigmoid MLP on [particle features, inc_skip]) ----
    inc_skip = jnp.sum(inct_sm, axis=1, keepdims=True)                    # (BP, 1)
    ih = jnp.maximum(mm(pf, whf_ref[...]) + inc_skip * whs_ref[...] + bh0_ref[...], 0.0)
    ind_logit = jnp.sum(ih * wh1t_ref[...], axis=1, keepdims=True) + bh1_ref[...]
    indicator = 1.0 / (1.0 + jnp.exp(-ind_logit))                         # (BP, 1)

    # ---- hard incidence assignment + charged-particle indicator override ----
    inct_hard = inct_sm * (1.0 - trackt) + trackt * diagt                 # (BP, N)
    indicator = indicator * (1.0 - charged) + charged                     # (BP, 1)
    inct_mod = inct_hard * indicator                                      # (BP, N)

    # ---- incidence-weighted aggregations via one block-diagonal matrix ----
    bd = jnp.concatenate([inct_mod] * B, axis=1) * blockdg                # (BP, BN)
    agg_p = mm(bd, nf)                                                    # (BP, D)

    def deepset(xin, avg_mat, w12a, w2a, b12a, lng, lnb, w12b, w2b, b12b):
        # L1(x) + L2(x - mean) == x @ (W1+W2) + (b1+b2) - mean @ W2 ; per-event mean via avg_mat
        h1 = mm(xin, w12a) + b12a - mm(avg_mat, mm(xin, w2a))
        h1 = layernorm(jnp.maximum(h1, 0.0), lng, lnb)
        return mm(h1, w12b) + b12b - mm(avg_mat, mm(h1, w2b))

    he_in = layernorm(jnp.concatenate([pf, agg_p], axis=1),
                      g_pre_e_ref[...], b_pre_e_ref[...])                 # (BP, 2D)
    ds_e = deepset(he_in, mean_p,
                   de1_w12_ref[...], de1_w2_ref[...], de1_b12_ref[...],
                   de_lng_ref[...], de_lnb_ref[...],
                   de2_w12_ref[...], de2_w2_ref[...], de2_b12_ref[...])
    pf_new = layernorm(pf + ds_e, g_e_ref[...], b_e_ref[...])             # (BP, D)

    # node update uses the *updated* particle features (reference ordering)
    agg_n = jax.lax.dot_general(bd, pf_new, (((0,), (0,)), ((), ())),
                                preferred_element_type=f32)               # (BN, D)
    nd_in = layernorm(jnp.concatenate([nf0, nf, agg_n], axis=1),
                      g_pre_n_ref[...], b_pre_n_ref[...])                 # (BN, 3D)
    ds_n = deepset(nd_in, mean_n,
                   dn1_w12_ref[...], dn1_w2_ref[...], dn1_b12_ref[...],
                   dn_lng_ref[...], dn_lnb_ref[...],
                   dn2_w12_ref[...], dn2_w2_ref[...], dn2_b12_ref[...])
    nf_new = layernorm(nf + ds_n, g_n_ref[...], b_n_ref[...])             # (BN, D)

    # ---- outputs : pred_t = [incidence^T | indicator] + carried state ----
    pred_ref[:, 0:N] = inct_hard
    pred_ref[:, N:N + 1] = indicator
    nf_s_ref[...] = nf_new
    pf_s_ref[...] = pf_new
    inc_s_ref[...] = inct_hard


# ----------------------------------------------------------------------------
# Weight flattening (trace-time prep: bias reshapes, skinny-layer transposes,
# DeepSet W1+W2 / b1+b2 merges, indicator first-layer split)
# ----------------------------------------------------------------------------

def _flatten_weights(p):
    D = p["norm_n"]["gamma"].shape[0]
    flat = []
    for name in ("inc_proj_n", "inc_proj_e", "inc_proj_i"):
        for layer in p[name]:
            flat += [layer["w"], layer["b"].reshape(1, -1)]
    # inc_net: final layer is width 1 -> pass its weight as a (1, H) row
    flat += [p["inc_net"][0]["w"], p["inc_net"][0]["b"].reshape(1, -1),
             p["inc_net"][1]["w"].reshape(1, -1), p["inc_net"][1]["b"].reshape(1, 1)]
    # hyperedge indicator: split first-layer weight into [features | inc_skip] parts
    wh0 = p["hyperedge_indicator"][0]["w"]
    flat += [wh0[:D, :], wh0[D:D + 1, :],
             p["hyperedge_indicator"][0]["b"].reshape(1, -1),
             p["hyperedge_indicator"][1]["w"].reshape(1, -1),
             p["hyperedge_indicator"][1]["b"].reshape(1, 1)]
    flat += [p["norm_pre_e"]["gamma"].reshape(1, -1), p["norm_pre_e"]["beta"].reshape(1, -1)]

    def ds_flat(ds):
        l0, l1 = ds["ds"]
        ln0 = ds["ln"][0]
        return [l0["l1"]["w"] + l0["l2"]["w"], l0["l2"]["w"],
                (l0["l1"]["b"] + l0["l2"]["b"]).reshape(1, -1),
                ln0["gamma"].reshape(1, -1), ln0["beta"].reshape(1, -1),
                l1["l1"]["w"] + l1["l2"]["w"], l1["l2"]["w"],
                (l1["l1"]["b"] + l1["l2"]["b"]).reshape(1, -1)]

    flat += ds_flat(p["deepset_e"])
    flat += [p["norm_e"]["gamma"].reshape(1, -1), p["norm_e"]["beta"].reshape(1, -1)]
    flat += [p["norm_pre_n"]["gamma"].reshape(1, -1), p["norm_pre_n"]["beta"].reshape(1, -1)]
    flat += ds_flat(p["deepset_n"])
    flat += [p["norm_n"]["gamma"].reshape(1, -1), p["norm_n"]["beta"].reshape(1, -1)]
    return flat


# ----------------------------------------------------------------------------
# Parameter init (deterministic, PyTorch-default-like uniform bounds)
# ----------------------------------------------------------------------------

def init_linear(key, fan_in, fan_out):
    kw, kb = jax.random.split(key)
    bound = 1.0 / float(fan_in) ** 0.5
    return {
        "w": jax.random.uniform(kw, (fan_in, fan_out), jnp.float32, -bound, bound),
        "b": jax.random.uniform(kb, (fan_out,), jnp.float32, -bound, bound),
    }


def init_mlp(key, dims):
    keys = jax.random.split(key, len(dims) - 1)
    return [init_linear(k, dims[i], dims[i + 1]) for i, k in enumerate(keys)]


def init_layernorm(dim):
    return {"gamma": jnp.ones((dim,), jnp.float32), "beta": jnp.zeros((dim,), jnp.float32)}


def init_deepset(key, d_in, d_hids):
    keys = jax.random.split(key, 2 * len(d_hids))
    ds_layers, ln_layers = [], []
    prev = d_in
    for i, h in enumerate(d_hids):
        ds_layers.append({"l1": init_linear(keys[2 * i], prev, h),
                          "l2": init_linear(keys[2 * i + 1], prev, h)})
        if i < len(d_hids) - 1:
            ln_layers.append(init_layernorm(h))
        prev = h
    return {"ds": ds_layers, "ln": ln_layers}


# ----------------------------------------------------------------------------
# IterativeRefiner forward (one pallas_call for all T iterations)
# ----------------------------------------------------------------------------

@functools.partial(jax.jit, static_argnames=("T", "B", "N", "P", "D"))
def iterative_refiner_forward(params, node_feat0, is_track, inc0, noise, *, T, B, N, P, D):
    flat_w = _flatten_weights(params)

    nf0 = node_feat0.reshape(B * N, D)
    # init_features: e_t = mu + exp(logsigma) * noise
    pf0 = params["edges_mu"] + jnp.exp(params["edges_logsigma"]) * noise          # (B*P, D)

    # "diag" mask: literal reproduction of the reference flat-index arithmetic under the
    # documented (batch, node, particle) edge flattening.
    idx = jnp.arange(N) * (P - 1) + (N - 1)
    diag_mask = jnp.zeros((N * P,), jnp.float32).at[idx].set(1.0).reshape(N, P)
    diag_t = jnp.tile(diag_mask.T, (B, 1))                                        # (B*P, N)
    track_t = jnp.repeat(is_track, P, axis=0)                                     # (B*P, N)

    n_tracks = jnp.sum(is_track, axis=1)                                          # (B,)
    charged = (jnp.arange(P, dtype=jnp.float32)[None, :]
               < n_tracks[:, None]).astype(jnp.float32).reshape(B * P, 1)

    # IterativeRefiner: inc_assignment != 'none' -> hard-assign once before the loop.
    inc_t0 = jnp.transpose(inc0, (0, 2, 1)).reshape(B * P, N)
    inc_t0 = inc_t0 * (1.0 - track_t) + track_t * diag_t

    inputs = [nf0, pf0, inc_t0, track_t, diag_t, charged] + list(flat_w)
    in_specs = [pl.BlockSpec(x.shape, lambda t: (0, 0)) for x in inputs]          # all 2D, resident

    out_shape = (
        jax.ShapeDtypeStruct((T, B * P, N + 1), jnp.float32),   # per-iteration pred
        jax.ShapeDtypeStruct((B * N, D), jnp.float32),          # node features
        jax.ShapeDtypeStruct((B * P, D), jnp.float32),          # particle features
        jax.ShapeDtypeStruct((B * P, N), jnp.float32),          # incidence (transposed)
    )
    out_specs = (
        pl.BlockSpec((None, B * P, N + 1), lambda t: (t, 0, 0)),
        pl.BlockSpec((B * N, D), lambda t: (0, 0)),
        pl.BlockSpec((B * P, D), lambda t: (0, 0)),
        pl.BlockSpec((B * P, N), lambda t: (0, 0)),
    )

    preds, nf, pf, inc_t = pl.pallas_call(
        functools.partial(_refiner_kernel, B=B, N=N, P=P),
        grid=(T,),
        in_specs=in_specs,
        out_specs=out_specs,
        out_shape=out_shape,
        compiler_params=pltpu.CompilerParams(dimension_semantics=("arbitrary",)),
    )(*inputs)

    node_feat = nf.reshape(B, N, D)
    part_feat = pf.reshape(B, P, D)
    inc = jnp.transpose(inc_t.reshape(B, P, N), (0, 2, 1))                        # (B, N, P)
    return preds.reshape(T, B, P, N + 1), node_feat, part_feat, inc


# ----------------------------------------------------------------------------
# Demo / harness
# ----------------------------------------------------------------------------

if __name__ == "__main__":
    B, N, P, D = 2, 8, 16, 32   # batch, detector-nodes/event, max_particles, hidden size
    T = 2                       # T_TOTAL refiner iterations

    key = jax.random.PRNGKey(0)
    keys = jax.random.split(key, 12)

    xav = (6.0 / (1 + D)) ** 0.5
    params = {
        "edges_mu": jax.random.normal(keys[0], (1, D), jnp.float32),
        "edges_logsigma": jax.random.uniform(keys[1], (1, D), jnp.float32, -xav, xav),
        "inc_proj_n": init_mlp(keys[2], [D, 32, D]),
        "inc_proj_e": init_mlp(keys[3], [D, 32, D]),
        "inc_proj_i": init_mlp(keys[4], [1, 32, D]),
        "inc_net": init_mlp(keys[5], [D, 32, 1]),
        "hyperedge_indicator": init_mlp(keys[6], [D + 1, 32, 1]),
        "deepset_e": init_deepset(keys[7], 2 * D, [32, D]),
        "deepset_n": init_deepset(keys[8], 3 * D, [32, D]),
        "norm_pre_n": init_layernorm(3 * D),
        "norm_pre_e": init_layernorm(2 * D),
        "norm_n": init_layernorm(D),
        "norm_e": init_layernorm(D),
    }

    node_feat0 = jax.random.normal(keys[9], (B, N, D), jnp.float32)      # 'nodes'.features_0
    n_tracks = jnp.array([3, 5], dtype=jnp.float32)                      # tracks are the first nodes
    is_track = (jnp.arange(N, dtype=jnp.float32)[None, :] < n_tracks[:, None]).astype(jnp.float32)
    inc0 = jnp.full((B, N, P), 1.0 / P, dtype=jnp.float32)               # initial incidence_val
    noise = jax.random.normal(keys[10], (B * P, D), jnp.float32)         # init_features noise

    preds, node_feat, part_feat, inc = iterative_refiner_forward(
        params, node_feat0, is_track, inc0, noise, T=T, B=B, N=N, P=P, D=D)
    jax.block_until_ready(preds)

    assert preds.shape == (T, B, P, N + 1)
    assert node_feat.shape == (B, N, D) and part_feat.shape == (B, P, D)
    assert inc.shape == (B, N, P)
    assert bool(jnp.all(jnp.isfinite(preds)))
    print("KERNEL_OK")
</pallas_src>

<mosaic_0001>
module attributes {stable_mosaic.version = 11 : i64} {
  func.func @_refiner_kernel(%arg0: i32, %arg1: memref<16x32xf32, #tpu.memory_space<vmem>>, %arg2: memref<32x32xf32, #tpu.memory_space<vmem>>, %arg3: memref<32x8xf32, #tpu.memory_space<vmem>>, %arg4: memref<32x8xf32, #tpu.memory_space<vmem>>, %arg5: memref<32x8xf32, #tpu.memory_space<vmem>>, %arg6: memref<32x1xf32, #tpu.memory_space<vmem>>, %arg7: memref<32x32xf32, #tpu.memory_space<vmem>>, %arg8: memref<1x32xf32, #tpu.memory_space<vmem>>, %arg9: memref<32x32xf32, #tpu.memory_space<vmem>>, %arg10: memref<1x32xf32, #tpu.memory_space<vmem>>, %arg11: memref<32x32xf32, #tpu.memory_space<vmem>>, %arg12: memref<1x32xf32, #tpu.memory_space<vmem>>, %arg13: memref<32x32xf32, #tpu.memory_space<vmem>>, %arg14: memref<1x32xf32, #tpu.memory_space<vmem>>, %arg15: memref<1x32xf32, #tpu.memory_space<vmem>>, %arg16: memref<1x32xf32, #tpu.memory_space<vmem>>, %arg17: memref<32x32xf32, #tpu.memory_space<vmem>>, %arg18: memref<1x32xf32, #tpu.memory_space<vmem>>, %arg19: memref<32x32xf32, #tpu.memory_space<vmem>>, %arg20: memref<1x32xf32, #tpu.memory_space<vmem>>, %arg21: memref<1x32xf32, #tpu.memory_space<vmem>>, %arg22: memref<1x1xf32, #tpu.memory_space<vmem>>, %arg23: memref<32x32xf32, #tpu.memory_space<vmem>>, %arg24: memref<1x32xf32, #tpu.memory_space<vmem>>, %arg25: memref<1x32xf32, #tpu.memory_space<vmem>>, %arg26: memref<1x32xf32, #tpu.memory_space<vmem>>, %arg27: memref<1x1xf32, #tpu.memory_space<vmem>>, %arg28: memref<1x64xf32, #tpu.memory_space<vmem>>, %arg29: memref<1x64xf32, #tpu.memory_space<vmem>>, %arg30: memref<64x32xf32, #tpu.memory_space<vmem>>, %arg31: memref<64x32xf32, #tpu.memory_space<vmem>>, %arg32: memref<1x32xf32, #tpu.memory_space<vmem>>, %arg33: memref<1x32xf32, #tpu.memory_space<vmem>>, %arg34: memref<1x32xf32, #tpu.memory_space<vmem>>, %arg35: memref<32x32xf32, #tpu.memory_space<vmem>>, %arg36: memref<32x32xf32, #tpu.memory_space<vmem>>, %arg37: memref<1x32xf32, #tpu.memory_space<vmem>>, %arg38: memref<1x32xf32, #tpu.memory_space<vmem>>, %arg39: memref<1x32xf32, #tpu.memory_space<vmem>>, %arg40: memref<1x96xf32, #tpu.memory_space<vmem>>, %arg41: memref<1x96xf32, #tpu.memory_space<vmem>>, %arg42: memref<96x32xf32, #tpu.memory_space<vmem>>, %arg43: memref<96x32xf32, #tpu.memory_space<vmem>>, %arg44: memref<1x32xf32, #tpu.memory_space<vmem>>, %arg45: memref<1x32xf32, #tpu.memory_space<vmem>>, %arg46: memref<1x32xf32, #tpu.memory_space<vmem>>, %arg47: memref<32x32xf32, #tpu.memory_space<vmem>>, %arg48: memref<32x32xf32, #tpu.memory_space<vmem>>, %arg49: memref<1x32xf32, #tpu.memory_space<vmem>>, %arg50: memref<1x32xf32, #tpu.memory_space<vmem>>, %arg51: memref<1x32xf32, #tpu.memory_space<vmem>>, %arg52: memref<1x32x9xf32, #tpu.memory_space<vmem>>, %arg53: memref<16x32xf32, #tpu.memory_space<vmem>>, %arg54: memref<32x32xf32, #tpu.memory_space<vmem>>, %arg55: memref<32x8xf32, #tpu.memory_space<vmem>>) attributes {dimension_semantics = [#tpu.dimension_semantics<arbitrary>], iteration_bounds = array<i64: 2>, scalar_prefetch = 0 : i64, scratch_operands = 0 : i64, tpu.core_type = #tpu.core_type<tc>, window_params = [{pipeline_mode = #tpu.pipeline_mode<synchronous>, transform_indices = @transform_0, window_bounds = array<i64: 16, 32>}, {pipeline_mode = #tpu.pipeline_mode<synchronous>, transform_indices = @transform_1, window_bounds = array<i64: 32, 32>}, {pipeline_mode = #tpu.pipeline_mode<synchronous>, transform_indices = @transform_2, window_bounds = array<i64: 32, 8>}, {pipeline_mode = #tpu.pipeline_mode<synchronous>, transform_indices = @transform_3, window_bounds = array<i64: 32, 8>}, {pipeline_mode = #tpu.pipeline_mode<synchronous>, transform_indices = @transform_4, window_bounds = array<i64: 32, 8>}, {pipeline_mode = #tpu.pipeline_mode<synchronous>, transform_indices = @transform_5, window_bounds = array<i64: 32, 1>}, {pipeline_mode = #tpu.pipeline_mode<synchronous>, transform_indices = @transform_6, window_bounds = array<i64: 32, 32>}, {pipeline_mode = #tpu.pipeline_mode<synchronous>, transform_indices = @transform_7, window_bounds = array<i64: 1, 32>}, {pipeline_mode = #tpu.pipeline_mode<synchronous>, transform_indices = @transform_8, window_bounds = array<i64: 32, 32>}, {pipeline_mode = #tpu.pipeline_mode<synchronous>, transform_indices = @transform_9, window_bounds = array<i64: 1, 32>}, {pipeline_mode = #tpu.pipeline_mode<synchronous>, transform_indices = @transform_10, window_bounds = array<i64: 32, 32>}, {pipeline_mode = #tpu.pipeline_mode<synchronous>, transform_indices = @transform_11, window_bounds = array<i64: 1, 32>}, {pipeline_mode = #tpu.pipeline_mode<synchronous>, transform_indices = @transform_12, window_bounds = array<i64: 32, 32>}, {pipeline_mode = #tpu.pipeline_mode<synchronous>, transform_indices = @transform_13, window_bounds = array<i64: 1, 32>}, {pipeline_mode = #tpu.pipeline_mode<synchronous>, transform_indices = @transform_14, window_bounds = array<i64: 1, 32>}, {pipeline_mode = #tpu.pipeline_mode<synchronous>, transform_indices = @transform_15, window_bounds = array<i64: 1, 32>}, {pipeline_mode = #tpu.pipeline_mode<synchronous>, transform_indices = @transform_16, window_bounds = array<i64: 32, 32>}, {pipeline_mode = #tpu.pipeline_mode<synchronous>, transform_indices = @transform_17, window_bounds = array<i64: 1, 32>}, {pipeline_mode = #tpu.pipeline_mode<synchronous>, transform_indices = @transform_18, window_bounds = array<i64: 32, 32>}, {pipeline_mode = #tpu.pipeline_mode<synchronous>, transform_indices = @transform_19, window_bounds = array<i64: 1, 32>}, {pipeline_mode = #tpu.pipeline_mode<synchronous>, transform_indices = @transform_20, window_bounds = array<i64: 1, 32>}, {pipeline_mode = #tpu.pipeline_mode<synchronous>, transform_indices = @transform_21, window_bounds = array<i64: 1, 1>}, {pipeline_mode = #tpu.pipeline_mode<synchronous>, transform_indices = @transform_22, window_bounds = array<i64: 32, 32>}, {pipeline_mode = #tpu.pipeline_mode<synchronous>, transform_indices = @transform_23, window_bounds = array<i64: 1, 32>}, {pipeline_mode = #tpu.pipeline_mode<synchronous>, transform_indices = @transform_24, window_bounds = array<i64: 1, 32>}, {pipeline_mode = #tpu.pipeline_mode<synchronous>, transform_indices = @transform_25, window_bounds = array<i64: 1, 32>}, {pipeline_mode = #tpu.pipeline_mode<synchronous>, transform_indices = @transform_26, window_bounds = array<i64: 1, 1>}, {pipeline_mode = #tpu.pipeline_mode<synchronous>, transform_indices = @transform_27, window_bounds = array<i64: 1, 64>}, {pipeline_mode = #tpu.pipeline_mode<synchronous>, transform_indices = @transform_28, window_bounds = array<i64: 1, 64>}, {pipeline_mode = #tpu.pipeline_mode<synchronous>, transform_indices = @transform_29, window_bounds = array<i64: 64, 32>}, {pipeline_mode = #tpu.pipeline_mode<synchronous>, transform_indices = @transform_30, window_bounds = array<i64: 64, 32>}, {pipeline_mode = #tpu.pipeline_mode<synchronous>, transform_indices = @transform_31, window_bounds = array<i64: 1, 32>}, {pipeline_mode = #tpu.pipeline_mode<synchronous>, transform_indices = @transform_32, window_bounds = array<i64: 1, 32>}, {pipeline_mode = #tpu.pipeline_mode<synchronous>, transform_indices = @transform_33, window_bounds = array<i64: 1, 32>}, {pipeline_mode = #tpu.pipeline_mode<synchronous>, transform_indices = @transform_34, window_bounds = array<i64: 32, 32>}, {pipeline_mode = #tpu.pipeline_mode<synchronous>, transform_indices = @transform_35, window_bounds = array<i64: 32, 32>}, {pipeline_mode = #tpu.pipeline_mode<synchronous>, transform_indices = @transform_36, window_bounds = array<i64: 1, 32>}, {pipeline_mode = #tpu.pipeline_mode<synchronous>, transform_indices = @transform_37, window_bounds = array<i64: 1, 32>}, {pipeline_mode = #tpu.pipeline_mode<synchronous>, transform_indices = @transform_38, window_bounds = array<i64: 1, 32>}, {pipeline_mode = #tpu.pipeline_mode<synchronous>, transform_indices = @transform_39, window_bounds = array<i64: 1, 96>}, {pipeline_mode = #tpu.pipeline_mode<synchronous>, transform_indices = @transform_40, window_bounds = array<i64: 1, 96>}, {pipeline_mode = #tpu.pipeline_mode<synchronous>, transform_indices = @transform_41, window_bounds = array<i64: 96, 32>}, {pipeline_mode = #tpu.pipeline_mode<synchronous>, transform_indices = @transform_42, window_bounds = array<i64: 96, 32>}, {pipeline_mode = #tpu.pipeline_mode<synchronous>, transform_indices = @transform_43, window_bounds = array<i64: 1, 32>}, {pipeline_mode = #tpu.pipeline_mode<synchronous>, transform_indices = @transform_44, window_bounds = array<i64: 1, 32>}, {pipeline_mode = #tpu.pipeline_mode<synchronous>, transform_indices = @transform_45, window_bounds = array<i64: 1, 32>}, {pipeline_mode = #tpu.pipeline_mode<synchronous>, transform_indices = @transform_46, window_bounds = array<i64: 32, 32>}, {pipeline_mode = #tpu.pipeline_mode<synchronous>, transform_indices = @transform_47, window_bounds = array<i64: 32, 32>}, {pipeline_mode = #tpu.pipeline_mode<synchronous>, transform_indices = @transform_48, window_bounds = array<i64: 1, 32>}, {pipeline_mode = #tpu.pipeline_mode<synchronous>, transform_indices = @transform_49, window_bounds = array<i64: 1, 32>}, {pipeline_mode = #tpu.pipeline_mode<synchronous>, transform_indices = @transform_50, window_bounds = array<i64: 1, 32>}, {transform_indices = @transform_51, window_bounds = array<i64: 1, 32, 9>}, {pipeline_mode = #tpu.pipeline_mode<synchronous>, transform_indices = @transform_52, window_bounds = array<i64: 16, 32>}, {pipeline_mode = #tpu.pipeline_mode<synchronous>, transform_indices = @transform_53, window_bounds = array<i64: 32, 32>}, {pipeline_mode = #tpu.pipeline_mode<synchronous>, transform_indices = @transform_54, window_bounds = array<i64: 32, 8>}]} {
    %c0_i32 = arith.constant 0 : i32
    %0 = arith.cmpi eq, %arg0, %c0_i32 : i32
    %1 = arith.extui %0 : i1 to i32
    %c0_i32_0 = arith.constant 0 : i32
    %2 = arith.cmpi ne, %1, %c0_i32_0 : i32
    scf.if %2 {
      %c0_231 = arith.constant 0 : index
      %c0_232 = arith.constant 0 : index
      %464 = vector.load %arg1[%c0_231, %c0_232] : memref<16x32xf32, #tpu.memory_space<vmem>>, vector<16x32xf32>
      %c0_233 = arith.constant 0 : index
      %c0_234 = arith.constant 0 : index
      %465 = vector.load %arg53[%c0_233, %c0_234] : memref<16x32xf32, #tpu.memory_space<vmem>>, vector<16x32xf32>
      tpu.vector_store %arg53[%c0_233, %c0_234], %464 {strides = array<i32>} : memref<16x32xf32, #tpu.memory_space<vmem>>, vector<16x32xf32>,
      %c0_235 = arith.constant 0 : index
      %c0_236 = arith.constant 0 : index
      %466 = vector.load %arg2[%c0_235, %c0_236] : memref<32x32xf32, #tpu.memory_space<vmem>>, vector<32x32xf32>
      %c0_237 = arith.constant 0 : index
      %c0_238 = arith.constant 0 : index
      %467 = vector.load %arg54[%c0_237, %c0_238] : memref<32x32xf32, #tpu.memory_space<vmem>>, vector<32x32xf32>
      tpu.vector_store %arg54[%c0_237, %c0_238], %466 {strides = array<i32>} : memref<32x32xf32, #tpu.memory_space<vmem>>, vector<32x32xf32>,
      %c0_239 = arith.constant 0 : index
      %c0_240 = arith.constant 0 : index
      %468 = vector.load %arg3[%c0_239, %c0_240] : memref<32x8xf32, #tpu.memory_space<vmem>>, vector<32x8xf32>
      %c0_241 = arith.constant 0 : index
      %c0_242 = arith.constant 0 : index
      %469 = vector.load %arg55[%c0_241, %c0_242] : memref<32x8xf32, #tpu.memory_space<vmem>>, vector<32x8xf32>
      tpu.vector_store %arg55[%c0_241, %c0_242], %468 {strides = array<i32>} : memref<32x8xf32, #tpu.memory_space<vmem>>, vector<32x8xf32>,
    } else {
    }
    %3 = tpu.iota {dimensions = array<i32: 0>} : vector<256x32xi32>
    %4 = arith.sitofp %3 : vector<256x32xi32> to vector<256x32xf32>
    %5 = tpu.iota {dimensions = array<i32: 1>} : vector<256x32xi32>
    %6 = arith.sitofp %5 : vector<256x32xi32> to vector<256x32xf32>
    %cst = arith.constant 5.000000e-01 : f32
    %7 = vector.broadcast %cst : f32 to vector<256x32xf32>
    %8 = arith.addf %4, %7 : vector<256x32xf32>
    %cst_1 = arith.constant 1.250000e-01 : f32
    %9 = vector.broadcast %cst_1 : f32 to vector<256x32xf32>
    %10 = arith.mulf %8, %9 : vector<256x32xf32>
    %11 = math.floor %10 : vector<256x32xf32>
    %12 = arith.cmpf oeq, %6, %11 : vector<256x32xf32>
    %cst_2 = arith.constant 1.000000e+00 : f32
    %cst_3 = arith.constant 0.000000e+00 : f32
    %13 = vector.broadcast %cst_2 : f32 to vector<256x32xf32>
    %14 = vector.broadcast %cst_3 : f32 to vector<256x32xf32>
    %15 = arith.select %12, %13, %14 : vector<256x32xi1>, vector<256x32xf32>
    %16 = tpu.iota {dimensions = array<i32: 0>} : vector<256x16xi32>
    %17 = arith.sitofp %16 : vector<256x16xi32> to vector<256x16xf32>
    %18 = tpu.iota {dimensions = array<i32: 1>} : vector<256x16xi32>
    %19 = arith.sitofp %18 : vector<256x16xi32> to vector<256x16xf32>
    %cst_4 = arith.constant 5.000000e-01 : f32
    %20 = vector.broadcast %cst_4 : f32 to vector<256x16xf32>
    %21 = arith.addf %17, %20 : vector<256x16xf32>
    %cst_5 = arith.constant 7.812500e-03 : f32
    %22 = vector.broadcast %cst_5 : f32 to vector<256x16xf32>
    %23 = arith.mulf %21, %22 : vector<256x16xf32>
    %24 = math.floor %23 : vector<256x16xf32>
    %cst_6 = arith.constant 8.000000e+00 : f32
    %25 = vector.broadcast %cst_6 : f32 to vector<256x16xf32>
    %26 = arith.mulf %24, %25 : vector<256x16xf32>
    %cst_7 = arith.constant 5.000000e-01 : f32
    %27 = vector.broadcast %cst_7 : f32 to vector<256x16xf32>
    %28 = arith.addf %17, %27 : vector<256x16xf32>
    %cst_8 = arith.constant 1.250000e-01 : f32
    %29 = vector.broadcast %cst_8 : f32 to vector<256x16xf32>
    %30 = arith.mulf %28, %29 : vector<256x16xf32>
    %31 = math.floor %30 : vector<256x16xf32>
    %cst_9 = arith.constant 8.000000e+00 : f32
    %32 = vector.broadcast %cst_9 : f32 to vector<256x16xf32>
    %33 = arith.mulf %32, %31 : vector<256x16xf32>
    %34 = arith.subf %17, %33 : vector<256x16xf32>
    %35 = arith.addf %26, %34 : vector<256x16xf32>
    %36 = arith.cmpf oeq, %19, %35 : vector<256x16xf32>
    %cst_10 = arith.constant 1.000000e+00 : f32
    %cst_11 = arith.constant 0.000000e+00 : f32
    %37 = vector.broadcast %cst_10 : f32 to vector<256x16xf32>
    %38 = vector.broadcast %cst_11 : f32 to vector<256x16xf32>
    %39 = arith.select %36, %37, %38 : vector<256x16xi1>, vector<256x16xf32>
    %40 = tpu.iota {dimensions = array<i32: 0>} : vector<256x8xi32>
    %41 = arith.sitofp %40 : vector<256x8xi32> to vector<256x8xf32>
    %42 = tpu.iota {dimensions = array<i32: 1>} : vector<256x8xi32>
    %43 = arith.sitofp %42 : vector<256x8xi32> to vector<256x8xf32>
    %cst_12 = arith.constant 5.000000e-01 : f32
    %44 = vector.broadcast %cst_12 : f32 to vector<256x8xf32>
    %45 = arith.addf %41, %44 : vector<256x8xf32>
    %cst_13 = arith.constant 1.250000e-01 : f32
    %46 = vector.broadcast %cst_13 : f32 to vector<256x8xf32>
    %47 = arith.mulf %45, %46 : vector<256x8xf32>
    %48 = math.floor %47 : vector<256x8xf32>
    %cst_14 = arith.constant 8.000000e+00 : f32
    %49 = vector.broadcast %cst_14 : f32 to vector<256x8xf32>
    %50 = arith.mulf %49, %48 : vector<256x8xf32>
    %51 = arith.subf %41, %50 : vector<256x8xf32>
    %52 = arith.cmpf oeq, %43, %51 : vector<256x8xf32>
    %cst_15 = arith.constant 1.000000e+00 : f32
    %cst_16 = arith.constant 0.000000e+00 : f32
    %53 = vector.broadcast %cst_15 : f32 to vector<256x8xf32>
    %54 = vector.broadcast %cst_16 : f32 to vector<256x8xf32>
    %55 = arith.select %52, %53, %54 : vector<256x8xi1>, vector<256x8xf32>
    %56 = tpu.iota {dimensions = array<i32: 0>} : vector<32x256xi32>
    %57 = arith.sitofp %56 : vector<32x256xi32> to vector<32x256xf32>
    %58 = tpu.iota {dimensions = array<i32: 1>} : vector<32x256xi32>
    %59 = arith.sitofp %58 : vector<32x256xi32> to vector<32x256xf32>
    %cst_17 = arith.constant 5.000000e-01 : f32
    %60 = vector.broadcast %cst_17 : f32 to vector<32x256xf32>
    %61 = arith.addf %59, %60 : vector<32x256xf32>
    %cst_18 = arith.constant 1.250000e-01 : f32
    %62 = vector.broadcast %cst_18 : f32 to vector<32x256xf32>
    %63 = arith.mulf %61, %62 : vector<32x256xf32>
    %64 = math.floor %63 : vector<32x256xf32>
    %65 = arith.cmpf oeq, %57, %64 : vector<32x256xf32>
    %cst_19 = arith.constant 1.000000e+00 : f32
    %cst_20 = arith.constant 0.000000e+00 : f32
    %66 = vector.broadcast %cst_19 : f32 to vector<32x256xf32>
    %67 = vector.broadcast %cst_20 : f32 to vector<32x256xf32>
    %68 = arith.select %65, %66, %67 : vector<32x256xi1>, vector<32x256xf32>
    %69 = tpu.iota {dimensions = array<i32: 0>} : vector<32x16xi32>
    %70 = arith.sitofp %69 : vector<32x16xi32> to vector<32x16xf32>
    %71 = tpu.iota {dimensions = array<i32: 1>} : vector<32x16xi32>
    %72 = arith.sitofp %71 : vector<32x16xi32> to vector<32x16xf32>
    %cst_21 = arith.constant 5.000000e-01 : f32
    %73 = vector.broadcast %cst_21 : f32 to vector<32x16xf32>
    %74 = arith.addf %70, %73 : vector<32x16xf32>
    %cst_22 = arith.constant 6.250000e-02 : f32
    %75 = vector.broadcast %cst_22 : f32 to vector<32x16xf32>
    %76 = arith.mulf %74, %75 : vector<32x16xf32>
    %77 = math.floor %76 : vector<32x16xf32>
    %cst_23 = arith.constant 5.000000e-01 : f32
    %78 = vector.broadcast %cst_23 : f32 to vector<32x16xf32>
    %79 = arith.addf %72, %78 : vector<32x16xf32>
    %cst_24 = arith.constant 1.250000e-01 : f32
    %80 = vector.broadcast %cst_24 : f32 to vector<32x16xf32>
    %81 = arith.mulf %79, %80 : vector<32x16xf32>
    %82 = math.floor %81 : vector<32x16xf32>
    %83 = arith.cmpf oeq, %77, %82 : vector<32x16xf32>
    %cst_25 = arith.constant 1.000000e+00 : f32
    %cst_26 = arith.constant 0.000000e+00 : f32
    %84 = vector.broadcast %cst_25 : f32 to vector<32x16xf32>
    %85 = vector.broadcast %cst_26 : f32 to vector<32x16xf32>
    %86 = arith.select %83, %84, %85 : vector<32x16xi1>, vector<32x16xf32>
    %87 = tpu.iota {dimensions = array<i32: 0>} : vector<32x32xi32>
    %88 = arith.sitofp %87 : vector<32x32xi32> to vector<32x32xf32>
    %89 = tpu.iota {dimensions = array<i32: 1>} : vector<32x32xi32>
    %90 = arith.sitofp %89 : vector<32x32xi32> to vector<32x32xf32>
    %cst_27 = arith.constant 5.000000e-01 : f32
    %91 = vector.broadcast %cst_27 : f32 to vector<32x32xf32>
    %92 = arith.addf %88, %91 : vector<32x32xf32>
    %cst_28 = arith.constant 6.250000e-02 : f32
    %93 = vector.broadcast %cst_28 : f32 to vector<32x32xf32>
    %94 = arith.mulf %92, %93 : vector<32x32xf32>
    %95 = math.floor %94 : vector<32x32xf32>
    %cst_29 = arith.constant 5.000000e-01 : f32
    %96 = vector.broadcast %cst_29 : f32 to vector<32x32xf32>
    %97 = arith.addf %90, %96 : vector<32x32xf32>
    %cst_30 = arith.constant 6.250000e-02 : f32
    %98 = vector.broadcast %cst_30 : f32 to vector<32x32xf32>
    %99 = arith.mulf %97, %98 : vector<32x32xf32>
    %100 = math.floor %99 : vector<32x32xf32>
    %101 = arith.cmpf oeq, %95, %100 : vector<32x32xf32>
    %cst_31 = arith.constant 1.000000e+00 : f32
    %cst_32 = arith.constant 0.000000e+00 : f32
    %102 = vector.broadcast %cst_31 : f32 to vector<32x32xf32>
    %103 = vector.broadcast %cst_32 : f32 to vector<32x32xf32>
    %104 = arith.select %101, %102, %103 : vector<32x32xi1>, vector<32x32xf32>
    %cst_33 = arith.constant 6.250000e-02 : f32
    %105 = vector.broadcast %cst_33 : f32 to vector<32x32xf32>
    %106 = arith.mulf %104, %105 : vector<32x32xf32>
    %107 = tpu.iota {dimensions = array<i32: 0>} : vector<16x16xi32>
    %108 = arith.sitofp %107 : vector<16x16xi32> to vector<16x16xf32>
    %109 = tpu.iota {dimensions = array<i32: 1>} : vector<16x16xi32>
    %110 = arith.sitofp %109 : vector<16x16xi32> to vector<16x16xf32>
    %cst_34 = arith.constant 5.000000e-01 : f32
    %111 = vector.broadcast %cst_34 : f32 to vector<16x16xf32>
    %112 = arith.addf %108, %111 : vector<16x16xf32>
    %cst_35 = arith.constant 1.250000e-01 : f32
    %113 = vector.broadcast %cst_35 : f32 to vector<16x16xf32>
    %114 = arith.mulf %112, %113 : vector<16x16xf32>
    %115 = math.floor %114 : vector<16x16xf32>
    %cst_36 = arith.constant 5.000000e-01 : f32
    %116 = vector.broadcast %cst_36 : f32 to vector<16x16xf32>
    %117 = arith.addf %110, %116 : vector<16x16xf32>
    %cst_37 = arith.constant 1.250000e-01 : f32
    %118 = vector.broadcast %cst_37 : f32 to vector<16x16xf32>
    %119 = arith.mulf %117, %118 : vector<16x16xf32>
    %120 = math.floor %119 : vector<16x16xf32>
    %121 = arith.cmpf oeq, %115, %120 : vector<16x16xf32>
    %cst_38 = arith.constant 1.000000e+00 : f32
    %cst_39 = arith.constant 0.000000e+00 : f32
    %122 = vector.broadcast %cst_38 : f32 to vector<16x16xf32>
    %123 = vector.broadcast %cst_39 : f32 to vector<16x16xf32>
    %124 = arith.select %121, %122, %123 : vector<16x16xi1>, vector<16x16xf32>
    %cst_40 = arith.constant 1.250000e-01 : f32
    %125 = vector.broadcast %cst_40 : f32 to vector<16x16xf32>
    %126 = arith.mulf %124, %125 : vector<16x16xf32>
    %c0 = arith.constant 0 : index
    %c0_41 = arith.constant 0 : index
    %127 = vector.load %arg1[%c0, %c0_41] : memref<16x32xf32, #tpu.memory_space<vmem>>, vector<16x32xf32>
    %c0_42 = arith.constant 0 : index
    %c0_43 = arith.constant 0 : index
    %128 = vector.load %arg53[%c0_42, %c0_43] : memref<16x32xf32, #tpu.memory_space<vmem>>, vector<16x32xf32>
    %c0_44 = arith.constant 0 : index
    %c0_45 = arith.constant 0 : index
    %129 = vector.load %arg54[%c0_44, %c0_45] : memref<32x32xf32, #tpu.memory_space<vmem>>, vector<32x32xf32>
    %c0_46 = arith.constant 0 : index
    %c0_47 = arith.constant 0 : index
    %130 = vector.load %arg55[%c0_46, %c0_47] : memref<32x8xf32, #tpu.memory_space<vmem>>, vector<32x8xf32>
    %c0_48 = arith.constant 0 : index
    %c0_49 = arith.constant 0 : index
    %131 = vector.load %arg4[%c0_48, %c0_49] : memref<32x8xf32, #tpu.memory_space<vmem>>, vector<32x8xf32>
    %c0_50 = arith.constant 0 : index
    %c0_51 = arith.constant 0 : index
    %132 = vector.load %arg5[%c0_50, %c0_51] : memref<32x8xf32, #tpu.memory_space<vmem>>, vector<32x8xf32>
    %c0_52 = arith.constant 0 : index
    %c0_53 = arith.constant 0 : index
    %133 = vector.load %arg6[%c0_52, %c0_53] : memref<32x1xf32, #tpu.memory_space<vmem>>, vector<32x1xf32>
    %c0_54 = arith.constant 0 : index
    %c0_55 = arith.constant 0 : index
    %134 = vector.load %arg7[%c0_54, %c0_55] : memref<32x32xf32, #tpu.memory_space<vmem>>, vector<32x32xf32>
    %cst_56 = arith.constant dense<0.000000e+00> : vector<16x32xf32>
    %135 = tpu.matmul %128, %134, %cst_56 {dimension_numbers = #tpu.dot_dimension_numbers<[1], [0], [0], [1], [0, 0, 1, 1], [], []>} : vector<16x32xf32>, vector<32x32xf32>, vector<16x32xf32> -> vector<16x32xf32>
    %c0_57 = arith.constant 0 : index
    %c0_58 = arith.constant 0 : index
    %136 = vector.load %arg8[%c0_57, %c0_58] : memref<1x32xf32, #tpu.memory_space<vmem>>, vector<1x32xf32>
    %137 = vector.broadcast %136 : vector<1x32xf32> to vector<16x32xf32>
    %138 = arith.addf %135, %137 : vector<16x32xf32>
    %cst_59 = arith.constant 0.000000e+00 : f32
    %139 = vector.broadcast %cst_59 : f32 to vector<16x32xf32>
    %140 = arith.maximumf %138, %139 : vector<16x32xf32>
    %c0_60 = arith.constant 0 : index
    %c0_61 = arith.constant 0 : index
    %141 = vector.load %arg9[%c0_60, %c0_61] : memref<32x32xf32, #tpu.memory_space<vmem>>, vector<32x32xf32>
    %cst_62 = arith.constant dense<0.000000e+00> : vector<16x32xf32>
    %142 = tpu.matmul %140, %141, %cst_62 {dimension_numbers = #tpu.dot_dimension_numbers<[1], [0], [0], [1], [0, 0, 1, 1], [], []>} : vector<16x32xf32>, vector<32x32xf32>, vector<16x32xf32> -> vector<16x32xf32>
    %c0_63 = arith.constant 0 : index
    %c0_64 = arith.constant 0 : index
    %143 = vector.load %arg10[%c0_63, %c0_64] : memref<1x32xf32, #tpu.memory_space<vmem>>, vector<1x32xf32>
    %144 = vector.broadcast %143 : vector<1x32xf32> to vector<16x32xf32>
    %145 = arith.addf %142, %144 : vector<16x32xf32>
    %c0_65 = arith.constant 0 : index
    %c0_66 = arith.constant 0 : index
    %146 = vector.load %arg11[%c0_65, %c0_66] : memref<32x32xf32, #tpu.memory_space<vmem>>, vector<32x32xf32>
    %cst_67 = arith.constant dense<0.000000e+00> : vector<32x32xf32>
    %147 = tpu.matmul %129, %146, %cst_67 {dimension_numbers = #tpu.dot_dimension_numbers<[1], [0], [0], [1], [0, 0, 1, 1], [], []>} : vector<32x32xf32>, vector<32x32xf32>, vector<32x32xf32> -> vector<32x32xf32>
    %c0_68 = arith.constant 0 : index
    %c0_69 = arith.constant 0 : index
    %148 = vector.load %arg12[%c0_68, %c0_69] : memref<1x32xf32, #tpu.memory_space<vmem>>, vector<1x32xf32>
    %149 = vector.broadcast %148 : vector<1x32xf32> to vector<32x32xf32>
    %150 = arith.addf %147, %149 : vector<32x32xf32>
    %cst_70 = arith.constant 0.000000e+00 : f32
    %151 = vector.broadcast %cst_70 : f32 to vector<32x32xf32>
    %152 = arith.maximumf %150, %151 : vector<32x32xf32>
    %c0_71 = arith.constant 0 : index
    %c0_72 = arith.constant 0 : index
    %153 = vector.load %arg13[%c0_71, %c0_72] : memref<32x32xf32, #tpu.memory_space<vmem>>, vector<32x32xf32>
    %cst_73 = arith.constant dense<0.000000e+00> : vector<32x32xf32>
    %154 = tpu.matmul %152, %153, %cst_73 {dimension_numbers = #tpu.dot_dimension_numbers<[1], [0], [0], [1], [0, 0, 1, 1], [], []>} : vector<32x32xf32>, vector<32x32xf32>, vector<32x32xf32> -> vector<32x32xf32>
    %c0_74 = arith.constant 0 : index
    %c0_75 = arith.constant 0 : index
    %155 = vector.load %arg14[%c0_74, %c0_75] : memref<1x32xf32, #tpu.memory_space<vmem>>, vector<1x32xf32>
    %156 = vector.broadcast %155 : vector<1x32xf32> to vector<32x32xf32>
    %157 = arith.addf %154, %156 : vector<32x32xf32>
    %cst_76 = arith.constant dense<0.000000e+00> : vector<256x8xf32>
    %158 = tpu.matmul %15, %130, %cst_76 {dimension_numbers = #tpu.dot_dimension_numbers<[1], [0], [0], [1], [0, 0, 1, 1], [], []>} : vector<256x32xf32>, vector<32x8xf32>, vector<256x8xf32> -> vector<256x8xf32>
    %159 = arith.mulf %158, %55 : vector<256x8xf32>
    %cst_77 = arith.constant dense<0.000000e+00> : vector<256xf32>
    %160 = vector.multi_reduction <add>, %159, %cst_77 [1] : vector<256x8xf32> to vector<256xf32>
    %161 = vector.shape_cast %160 : vector<256xf32> to vector<256x1xf32>
    %c0_78 = arith.constant 0 : index
    %c0_79 = arith.constant 0 : index
    %162 = vector.load %arg15[%c0_78, %c0_79] : memref<1x32xf32, #tpu.memory_space<vmem>>, vector<1x32xf32>
    %163 = vector.broadcast %161 : vector<256x1xf32> to vector<256x32xf32>
    %164 = vector.broadcast %162 : vector<1x32xf32> to vector<256x32xf32>
    %165 = arith.mulf %163, %164 : vector<256x32xf32>
    %c0_80 = arith.constant 0 : index
    %c0_81 = arith.constant 0 : index
    %166 = vector.load %arg16[%c0_80, %c0_81] : memref<1x32xf32, #tpu.memory_space<vmem>>, vector<1x32xf32>
    %167 = vector.broadcast %166 : vector<1x32xf32> to vector<256x32xf32>
    %168 = arith.addf %165, %167 : vector<256x32xf32>
    %cst_82 = arith.constant 0.000000e+00 : f32
    %169 = vector.broadcast %cst_82 : f32 to vector<256x32xf32>
    %170 = arith.maximumf %168, %169 : vector<256x32xf32>
    %c0_83 = arith.constant 0 : index
    %c0_84 = arith.constant 0 : index
    %171 = vector.load %arg17[%c0_83, %c0_84] : memref<32x32xf32, #tpu.memory_space<vmem>>, vector<32x32xf32>
    %cst_85 = arith.constant dense<0.000000e+00> : vector<256x32xf32>
    %172 = tpu.matmul %170, %171, %cst_85 {dimension_numbers = #tpu.dot_dimension_numbers<[1], [0], [0], [1], [0, 0, 1, 1], [], []>} : vector<256x32xf32>, vector<32x32xf32>, vector<256x32xf32> -> vector<256x32xf32>
    %c0_86 = arith.constant 0 : index
    %c0_87 = arith.constant 0 : index
    %173 = vector.load %arg18[%c0_86, %c0_87] : memref<1x32xf32, #tpu.memory_space<vmem>>, vector<1x32xf32>
    %174 = vector.broadcast %173 : vector<1x32xf32> to vector<256x32xf32>
    %175 = arith.addf %172, %174 : vector<256x32xf32>
    %cst_88 = arith.constant dense<0.000000e+00> : vector<256x32xf32>
    %176 = tpu.matmul %39, %145, %cst_88 {dimension_numbers = #tpu.dot_dimension_numbers<[1], [0], [0], [1], [0, 0, 1, 1], [], []>} : vector<256x16xf32>, vector<16x32xf32>, vector<256x32xf32> -> vector<256x32xf32>
    %cst_89 = arith.constant dense<0.000000e+00> : vector<256x32xf32>
    %177 = tpu.matmul %15, %157, %cst_89 {dimension_numbers = #tpu.dot_dimension_numbers<[1], [0], [0], [1], [0, 0, 1, 1], [], []>} : vector<256x32xf32>, vector<32x32xf32>, vector<256x32xf32> -> vector<256x32xf32>
    %178 = arith.addf %176, %177 : vector<256x32xf32>
    %179 = arith.addf %178, %175 : vector<256x32xf32>
    %cst_90 = arith.constant 0.000000e+00 : f32
    %180 = vector.broadcast %cst_90 : f32 to vector<256x32xf32>
    %181 = arith.maximumf %179, %180 : vector<256x32xf32>
    %c0_91 = arith.constant 0 : index
    %c0_92 = arith.constant 0 : index
    %182 = vector.load %arg19[%c0_91, %c0_92] : memref<32x32xf32, #tpu.memory_space<vmem>>, vector<32x32xf32>
    %cst_93 = arith.constant dense<0.000000e+00> : vector<256x32xf32>
    %183 = tpu.matmul %181, %182, %cst_93 {dimension_numbers = #tpu.dot_dimension_numbers<[1], [0], [0], [1], [0, 0, 1, 1], [], []>} : vector<256x32xf32>, vector<32x32xf32>, vector<256x32xf32> -> vector<256x32xf32>
    %c0_94 = arith.constant 0 : index
    %c0_95 = arith.constant 0 : index
    %184 = vector.load %arg20[%c0_94, %c0_95] : memref<1x32xf32, #tpu.memory_space<vmem>>, vector<1x32xf32>
    %185 = vector.broadcast %184 : vector<1x32xf32> to vector<256x32xf32>
    %186 = arith.addf %183, %185 : vector<256x32xf32>
    %cst_96 = arith.constant 0.000000e+00 : f32
    %187 = vector.broadcast %cst_96 : f32 to vector<256x32xf32>
    %188 = arith.maximumf %186, %187 : vector<256x32xf32>
    %c0_97 = arith.constant 0 : index
    %c0_98 = arith.constant 0 : index
    %189 = vector.load %arg21[%c0_97, %c0_98] : memref<1x32xf32, #tpu.memory_space<vmem>>, vector<1x32xf32>
    %190 = vector.broadcast %189 : vector<1x32xf32> to vector<256x32xf32>
    %191 = arith.mulf %188, %190 : vector<256x32xf32>
    %cst_99 = arith.constant dense<0.000000e+00> : vector<256xf32>
    %192 = vector.multi_reduction <add>, %191, %cst_99 [1] : vector<256x32xf32> to vector<256xf32>
    %193 = vector.shape_cast %192 : vector<256xf32> to vector<256x1xf32>
    %194 = vector.broadcast %193 : vector<256x1xf32> to vector<256x8xf32>
    %195 = arith.mulf %194, %55 : vector<256x8xf32>
    %cst_100 = arith.constant dense<0.000000e+00> : vector<32x8xf32>
    %196 = tpu.matmul %68, %195, %cst_100 {dimension_numbers = #tpu.dot_dimension_numbers<[1], [0], [0], [1], [0, 0, 1, 1], [], []>} : vector<32x256xf32>, vector<256x8xf32>, vector<32x8xf32> -> vector<32x8xf32>
    %c0_101 = arith.constant 0 : index
    %c0_102 = arith.constant 0 : index
    %197 = vector.load %arg22[%c0_101, %c0_102] : memref<1x1xf32, #tpu.memory_space<vmem>>, vector<1x1xf32>
    %198 = vector.broadcast %197 : vector<1x1xf32> to vector<32x8xf32>
    %199 = arith.addf %196, %198 : vector<32x8xf32>
    %200 = vector.extract_strided_slice %199 {offsets = [0, 0], sizes = [16, 8], strides = [1, 1]} : vector<32x8xf32> to vector<16x8xf32>
    %cst_103 = arith.constant dense<0xFF800000> : vector<8xf32>
    %201 = vector.multi_reduction <maximumf>, %200, %cst_103 [0] : vector<16x8xf32> to vector<8xf32>
    %202 = vector.shape_cast %201 : vector<8xf32> to vector<1x8xf32>
    %203 = vector.broadcast %202 : vector<1x8xf32> to vector<16x8xf32>
    %204 = arith.subf %200, %203 : vector<16x8xf32>
    %205 = math.exp %204 : vector<16x8xf32>
    %cst_104 = arith.constant dense<0.000000e+00> : vector<8xf32>
    %206 = vector.multi_reduction <add>, %205, %cst_104 [0] : vector<16x8xf32> to vector<8xf32>
    %207 = vector.shape_cast %206 : vector<8xf32> to vector<1x8xf32>
    %208 = tpu.reciprocal %207 {approx = true} : vector<1x8xf32> -> vector<1x8xf32>
    %209 = vector.broadcast %208 : vector<1x8xf32> to vector<16x8xf32>
    %210 = arith.mulf %205, %209 : vector<16x8xf32>
    %211 = vector.extract_strided_slice %199 {offsets = [16, 0], sizes = [16, 8], strides = [1, 1]} : vector<32x8xf32> to vector<16x8xf32>
    %cst_105 = arith.constant dense<0xFF800000> : vector<8xf32>
    %212 = vector.multi_reduction <maximumf>, %211, %cst_105 [0] : vector<16x8xf32> to vector<8xf32>
    %213 = vector.shape_cast %212 : vector<8xf32> to vector<1x8xf32>
    %214 = vector.broadcast %213 : vector<1x8xf32> to vector<16x8xf32>
    %215 = arith.subf %211, %214 : vector<16x8xf32>
    %216 = math.exp %215 : vector<16x8xf32>
    %cst_106 = arith.constant dense<0.000000e+00> : vector<8xf32>
    %217 = vector.multi_reduction <add>, %216, %cst_106 [0] : vector<16x8xf32> to vector<8xf32>
    %218 = vector.shape_cast %217 : vector<8xf32> to vector<1x8xf32>
    %219 = tpu.reciprocal %218 {approx = true} : vector<1x8xf32> -> vector<1x8xf32>
    %220 = vector.broadcast %219 : vector<1x8xf32> to vector<16x8xf32>
    %221 = arith.mulf %216, %220 : vector<16x8xf32>
    %222 = tpu.concatenate %210, %221 in 0 : vector<16x8xf32>, vector<16x8xf32> -> vector<32x8xf32>
    %cst_107 = arith.constant dense<0.000000e+00> : vector<32xf32>
    %223 = vector.multi_reduction <add>, %222, %cst_107 [1] : vector<32x8xf32> to vector<32xf32>
    %224 = vector.shape_cast %223 : vector<32xf32> to vector<32x1xf32>
    %c0_108 = arith.constant 0 : index
    %c0_109 = arith.constant 0 : index
    %225 = vector.load %arg23[%c0_108, %c0_109] : memref<32x32xf32, #tpu.memory_space<vmem>>, vector<32x32xf32>
    %cst_110 = arith.constant dense<0.000000e+00> : vector<32x32xf32>
    %226 = tpu.matmul %129, %225, %cst_110 {dimension_numbers = #tpu.dot_dimension_numbers<[1], [0], [0], [1], [0, 0, 1, 1], [], []>} : vector<32x32xf32>, vector<32x32xf32>, vector<32x32xf32> -> vector<32x32xf32>
    %c0_111 = arith.constant 0 : index
    %c0_112 = arith.constant 0 : index
    %227 = vector.load %arg24[%c0_111, %c0_112] : memref<1x32xf32, #tpu.memory_space<vmem>>, vector<1x32xf32>
    %228 = vector.broadcast %224 : vector<32x1xf32> to vector<32x32xf32>
    %229 = vector.broadcast %227 : vector<1x32xf32> to vector<32x32xf32>
    %230 = arith.mulf %228, %229 : vector<32x32xf32>
    %231 = arith.addf %226, %230 : vector<32x32xf32>
    %c0_113 = arith.constant 0 : index
    %c0_114 = arith.constant 0 : index
    %232 = vector.load %arg25[%c0_113, %c0_114] : memref<1x32xf32, #tpu.memory_space<vmem>>, vector<1x32xf32>
    %233 = vector.broadcast %232 : vector<1x32xf32> to vector<32x32xf32>
    %234 = arith.addf %231, %233 : vector<32x32xf32>
    %cst_115 = arith.constant 0.000000e+00 : f32
    %235 = vector.broadcast %cst_115 : f32 to vector<32x32xf32>
    %236 = arith.maximumf %234, %235 : vector<32x32xf32>
    %c0_116 = arith.constant 0 : index
    %c0_117 = arith.constant 0 : index
    %237 = vector.load %arg26[%c0_116, %c0_117] : memref<1x32xf32, #tpu.memory_space<vmem>>, vector<1x32xf32>
    %238 = vector.broadcast %237 : vector<1x32xf32> to vector<32x32xf32>
    %239 = arith.mulf %236, %238 : vector<32x32xf32>
    %cst_118 = arith.constant dense<0.000000e+00> : vector<32xf32>
    %240 = vector.multi_reduction <add>, %239, %cst_118 [1] : vector<32x32xf32> to vector<32xf32>
    %241 = vector.shape_cast %240 : vector<32xf32> to vector<32x1xf32>
    %c0_119 = arith.constant 0 : index
    %c0_120 = arith.constant 0 : index
    %242 = vector.load %arg27[%c0_119, %c0_120] : memref<1x1xf32, #tpu.memory_space<vmem>>, vector<1x1xf32>
    %243 = vector.broadcast %242 : vector<1x1xf32> to vector<32x1xf32>
    %244 = arith.addf %241, %243 : vector<32x1xf32>
    %cst_121 = arith.constant 0.000000e+00 : f32
    %245 = vector.broadcast %cst_121 : f32 to vector<32x1xf32>
    %246 = arith.subf %245, %244 : vector<32x1xf32>
    %247 = math.exp %246 : vector<32x1xf32>
    %cst_122 = arith.constant 1.000000e+00 : f32
    %248 = vector.broadcast %cst_122 : f32 to vector<32x1xf32>
    %249 = arith.addf %248, %247 : vector<32x1xf32>
    %cst_123 = arith.constant 1.000000e+00 : f32
    %250 = vector.broadcast %cst_123 : f32 to vector<32x1xf32>
    %251 = arith.divf %250, %249 : vector<32x1xf32>
    %cst_124 = arith.constant 1.000000e+00 : f32
    %252 = vector.broadcast %cst_124 : f32 to vector<32x8xf32>
    %253 = arith.subf %252, %131 : vector<32x8xf32>
    %254 = arith.mulf %222, %253 : vector<32x8xf32>
    %255 = arith.mulf %131, %132 : vector<32x8xf32>
    %256 = arith.addf %254, %255 : vector<32x8xf32>
    %cst_125 = arith.constant 1.000000e+00 : f32
    %257 = vector.broadcast %cst_125 : f32 to vector<32x1xf32>
    %258 = arith.subf %257, %133 : vector<32x1xf32>
    %259 = arith.mulf %251, %258 : vector<32x1xf32>
    %260 = arith.addf %259, %133 : vector<32x1xf32>
    %261 = vector.broadcast %260 : vector<32x1xf32> to vector<32x8xf32>
    %262 = arith.mulf %256, %261 : vector<32x8xf32>
    %263 = tpu.concatenate %262, %262 in 1 : vector<32x8xf32>, vector<32x8xf32> -> vector<32x16xf32>
    %264 = arith.mulf %263, %86 : vector<32x16xf32>
    %cst_126 = arith.constant dense<0.000000e+00> : vector<32x32xf32>
    %265 = tpu.matmul %264, %128, %cst_126 {dimension_numbers = #tpu.dot_dimension_numbers<[1], [0], [0], [1], [0, 0, 1, 1], [], []>} : vector<32x16xf32>, vector<16x32xf32>, vector<32x32xf32> -> vector<32x32xf32>
    %266 = tpu.concatenate %129, %265 in 1 : vector<32x32xf32>, vector<32x32xf32> -> vector<32x64xf32>
    %c0_127 = arith.constant 0 : index
    %c0_128 = arith.constant 0 : index
    %267 = vector.load %arg28[%c0_127, %c0_128] : memref<1x64xf32, #tpu.memory_space<vmem>>, vector<1x64xf32>
    %c0_129 = arith.constant 0 : index
    %c0_130 = arith.constant 0 : index
    %268 = vector.load %arg29[%c0_129, %c0_130] : memref<1x64xf32, #tpu.memory_space<vmem>>, vector<1x64xf32>
    %cst_131 = arith.constant dense<0.000000e+00> : vector<32xf32>
    %269 = vector.multi_reduction <add>, %266, %cst_131 [1] : vector<32x64xf32> to vector<32xf32>
    %270 = vector.shape_cast %269 : vector<32xf32> to vector<32x1xf32>
    %cst_132 = arith.constant 6.400000e+01 : f32
    %271 = vector.broadcast %cst_132 : f32 to vector<32x1xf32>
    %272 = arith.divf %270, %271 : vector<32x1xf32>
    %273 = vector.broadcast %272 : vector<32x1xf32> to vector<32x64xf32>
    %274 = arith.subf %266, %273 : vector<32x64xf32>
    %275 = arith.mulf %274, %274 : vector<32x64xf32>
    %cst_133 = arith.constant dense<0.000000e+00> : vector<32xf32>
    %276 = vector.multi_reduction <add>, %275, %cst_133 [1] : vector<32x64xf32> to vector<32xf32>
    %277 = vector.shape_cast %276 : vector<32xf32> to vector<32x1xf32>
    %cst_134 = arith.constant 6.400000e+01 : f32
    %278 = vector.broadcast %cst_134 : f32 to vector<32x1xf32>
    %279 = arith.divf %277, %278 : vector<32x1xf32>
    %280 = vector.broadcast %272 : vector<32x1xf32> to vector<32x64xf32>
    %281 = arith.subf %266, %280 : vector<32x64xf32>
    %cst_135 = arith.constant 9.99999974E-6 : f32
    %282 = vector.broadcast %cst_135 : f32 to vector<32x1xf32>
    %283 = arith.addf %279, %282 : vector<32x1xf32>
    %284 = math.rsqrt %283 : vector<32x1xf32>
    %285 = vector.broadcast %284 : vector<32x1xf32> to vector<32x64xf32>
    %286 = arith.mulf %281, %285 : vector<32x64xf32>
    %287 = vector.broadcast %267 : vector<1x64xf32> to vector<32x64xf32>
    %288 = arith.mulf %286, %287 : vector<32x64xf32>
    %289 = vector.broadcast %268 : vector<1x64xf32> to vector<32x64xf32>
    %290 = arith.addf %288, %289 : vector<32x64xf32>
    %c0_136 = arith.constant 0 : index
    %c0_137 = arith.constant 0 : index
    %291 = vector.load %arg30[%c0_136, %c0_137] : memref<64x32xf32, #tpu.memory_space<vmem>>, vector<64x32xf32>
    %c0_138 = arith.constant 0 : index
    %c0_139 = arith.constant 0 : index
    %292 = vector.load %arg31[%c0_138, %c0_139] : memref<64x32xf32, #tpu.memory_space<vmem>>, vector<64x32xf32>
    %c0_140 = arith.constant 0 : index
    %c0_141 = arith.constant 0 : index
    %293 = vector.load %arg32[%c0_140, %c0_141] : memref<1x32xf32, #tpu.memory_space<vmem>>, vector<1x32xf32>
    %c0_142 = arith.constant 0 : index
    %c0_143 = arith.constant 0 : index
    %294 = vector.load %arg33[%c0_142, %c0_143] : memref<1x32xf32, #tpu.memory_space<vmem>>, vector<1x32xf32>
    %c0_144 = arith.constant 0 : index
    %c0_145 = arith.constant 0 : index
    %295 = vector.load %arg34[%c0_144, %c0_145] : memref<1x32xf32, #tpu.memory_space<vmem>>, vector<1x32xf32>
    %c0_146 = arith.constant 0 : index
    %c0_147 = arith.constant 0 : index
    %296 = vector.load %arg35[%c0_146, %c0_147] : memref<32x32xf32, #tpu.memory_space<vmem>>, vector<32x32xf32>
    %c0_148 = arith.constant 0 : index
    %c0_149 = arith.constant 0 : index
    %297 = vector.load %arg36[%c0_148, %c0_149] : memref<32x32xf32, #tpu.memory_space<vmem>>, vector<32x32xf32>
    %c0_150 = arith.constant 0 : index
    %c0_151 = arith.constant 0 : index
    %298 = vector.load %arg37[%c0_150, %c0_151] : memref<1x32xf32, #tpu.memory_space<vmem>>, vector<1x32xf32>
    %cst_152 = arith.constant dense<0.000000e+00> : vector<32x32xf32>
    %299 = tpu.matmul %290, %291, %cst_152 {dimension_numbers = #tpu.dot_dimension_numbers<[1], [0], [0], [1], [0, 0, 1, 1], [], []>} : vector<32x64xf32>, vector<64x32xf32>, vector<32x32xf32> -> vector<32x32xf32>
    %300 = vector.broadcast %293 : vector<1x32xf32> to vector<32x32xf32>
    %301 = arith.addf %299, %300 : vector<32x32xf32>
    %cst_153 = arith.constant dense<0.000000e+00> : vector<32x32xf32>
    %302 = tpu.matmul %290, %292, %cst_153 {dimension_numbers = #tpu.dot_dimension_numbers<[1], [0], [0], [1], [0, 0, 1, 1], [], []>} : vector<32x64xf32>, vector<64x32xf32>, vector<32x32xf32> -> vector<32x32xf32>
    %cst_154 = arith.constant dense<0.000000e+00> : vector<32x32xf32>
    %303 = tpu.matmul %106, %302, %cst_154 {dimension_numbers = #tpu.dot_dimension_numbers<[1], [0], [0], [1], [0, 0, 1, 1], [], []>} : vector<32x32xf32>, vector<32x32xf32>, vector<32x32xf32> -> vector<32x32xf32>
    %304 = arith.subf %301, %303 : vector<32x32xf32>
    %cst_155 = arith.constant 0.000000e+00 : f32
    %305 = vector.broadcast %cst_155 : f32 to vector<32x32xf32>
    %306 = arith.maximumf %304, %305 : vector<32x32xf32>
    %cst_156 = arith.constant dense<0.000000e+00> : vector<32xf32>
    %307 = vector.multi_reduction <add>, %306, %cst_156 [1] : vector<32x32xf32> to vector<32xf32>
    %308 = vector.shape_cast %307 : vector<32xf32> to vector<32x1xf32>
    %cst_157 = arith.constant 3.200000e+01 : f32
    %309 = vector.broadcast %cst_157 : f32 to vector<32x1xf32>
    %310 = arith.divf %308, %309 : vector<32x1xf32>
    %311 = vector.broadcast %310 : vector<32x1xf32> to vector<32x32xf32>
    %312 = arith.subf %306, %311 : vector<32x32xf32>
    %313 = arith.mulf %312, %312 : vector<32x32xf32>
    %cst_158 = arith.constant dense<0.000000e+00> : vector<32xf32>
    %314 = vector.multi_reduction <add>, %313, %cst_158 [1] : vector<32x32xf32> to vector<32xf32>
    %315 = vector.shape_cast %314 : vector<32xf32> to vector<32x1xf32>
    %cst_159 = arith.constant 3.200000e+01 : f32
    %316 = vector.broadcast %cst_159 : f32 to vector<32x1xf32>
    %317 = arith.divf %315, %316 : vector<32x1xf32>
    %318 = vector.broadcast %310 : vector<32x1xf32> to vector<32x32xf32>
    %319 = arith.subf %306, %318 : vector<32x32xf32>
    %cst_160 = arith.constant 9.99999974E-6 : f32
    %320 = vector.broadcast %cst_160 : f32 to vector<32x1xf32>
    %321 = arith.addf %317, %320 : vector<32x1xf32>
    %322 = math.rsqrt %321 : vector<32x1xf32>
    %323 = vector.broadcast %322 : vector<32x1xf32> to vector<32x32xf32>
    %324 = arith.mulf %319, %323 : vector<32x32xf32>
    %325 = vector.broadcast %294 : vector<1x32xf32> to vector<32x32xf32>
    %326 = arith.mulf %324, %325 : vector<32x32xf32>
    %327 = vector.broadcast %295 : vector<1x32xf32> to vector<32x32xf32>
    %328 = arith.addf %326, %327 : vector<32x32xf32>
    %cst_161 = arith.constant dense<0.000000e+00> : vector<32x32xf32>
    %329 = tpu.matmul %328, %296, %cst_161 {dimension_numbers = #tpu.dot_dimension_numbers<[1], [0], [0], [1], [0, 0, 1, 1], [], []>} : vector<32x32xf32>, vector<32x32xf32>, vector<32x32xf32> -> vector<32x32xf32>
    %330 = vector.broadcast %298 : vector<1x32xf32> to vector<32x32xf32>
    %331 = arith.addf %329, %330 : vector<32x32xf32>
    %cst_162 = arith.constant dense<0.000000e+00> : vector<32x32xf32>
    %332 = tpu.matmul %328, %297, %cst_162 {dimension_numbers = #tpu.dot_dimension_numbers<[1], [0], [0], [1], [0, 0, 1, 1], [], []>} : vector<32x32xf32>, vector<32x32xf32>, vector<32x32xf32> -> vector<32x32xf32>
    %cst_163 = arith.constant dense<0.000000e+00> : vector<32x32xf32>
    %333 = tpu.matmul %106, %332, %cst_163 {dimension_numbers = #tpu.dot_dimension_numbers<[1], [0], [0], [1], [0, 0, 1, 1], [], []>} : vector<32x32xf32>, vector<32x32xf32>, vector<32x32xf32> -> vector<32x32xf32>
    %334 = arith.subf %331, %333 : vector<32x32xf32>
    %335 = arith.addf %129, %334 : vector<32x32xf32>
    %c0_164 = arith.constant 0 : index
    %c0_165 = arith.constant 0 : index
    %336 = vector.load %arg38[%c0_164, %c0_165] : memref<1x32xf32, #tpu.memory_space<vmem>>, vector<1x32xf32>
    %c0_166 = arith.constant 0 : index
    %c0_167 = arith.constant 0 : index
    %337 = vector.load %arg39[%c0_166, %c0_167] : memref<1x32xf32, #tpu.memory_space<vmem>>, vector<1x32xf32>
    %cst_168 = arith.constant dense<0.000000e+00> : vector<32xf32>
    %338 = vector.multi_reduction <add>, %335, %cst_168 [1] : vector<32x32xf32> to vector<32xf32>
    %339 = vector.shape_cast %338 : vector<32xf32> to vector<32x1xf32>
    %cst_169 = arith.constant 3.200000e+01 : f32
    %340 = vector.broadcast %cst_169 : f32 to vector<32x1xf32>
    %341 = arith.divf %339, %340 : vector<32x1xf32>
    %342 = vector.broadcast %341 : vector<32x1xf32> to vector<32x32xf32>
    %343 = arith.subf %335, %342 : vector<32x32xf32>
    %344 = arith.mulf %343, %343 : vector<32x32xf32>
    %cst_170 = arith.constant dense<0.000000e+00> : vector<32xf32>
    %345 = vector.multi_reduction <add>, %344, %cst_170 [1] : vector<32x32xf32> to vector<32xf32>
    %346 = vector.shape_cast %345 : vector<32xf32> to vector<32x1xf32>
    %cst_171 = arith.constant 3.200000e+01 : f32
    %347 = vector.broadcast %cst_171 : f32 to vector<32x1xf32>
    %348 = arith.divf %346, %347 : vector<32x1xf32>
    %349 = vector.broadcast %341 : vector<32x1xf32> to vector<32x32xf32>
    %350 = arith.subf %335, %349 : vector<32x32xf32>
    %cst_172 = arith.constant 9.99999974E-6 : f32
    %351 = vector.broadcast %cst_172 : f32 to vector<32x1xf32>
    %352 = arith.addf %348, %351 : vector<32x1xf32>
    %353 = math.rsqrt %352 : vector<32x1xf32>
    %354 = vector.broadcast %353 : vector<32x1xf32> to vector<32x32xf32>
    %355 = arith.mulf %350, %354 : vector<32x32xf32>
    %356 = vector.broadcast %336 : vector<1x32xf32> to vector<32x32xf32>
    %357 = arith.mulf %355, %356 : vector<32x32xf32>
    %358 = vector.broadcast %337 : vector<1x32xf32> to vector<32x32xf32>
    %359 = arith.addf %357, %358 : vector<32x32xf32>
    %cst_173 = arith.constant dense<0.000000e+00> : vector<16x32xf32>
    %360 = tpu.matmul %264, %359, %cst_173 {dimension_numbers = #tpu.dot_dimension_numbers<[0], [0], [1], [1], [0, 1, 1, 1], [], []>} : vector<32x16xf32>, vector<32x32xf32>, vector<16x32xf32> -> vector<16x32xf32>
    %361 = tpu.concatenate %127, %128, %360 in 1 : vector<16x32xf32>, vector<16x32xf32>, vector<16x32xf32> -> vector<16x96xf32>
    %c0_174 = arith.constant 0 : index
    %c0_175 = arith.constant 0 : index
    %362 = vector.load %arg40[%c0_174, %c0_175] : memref<1x96xf32, #tpu.memory_space<vmem>>, vector<1x96xf32>
    %c0_176 = arith.constant 0 : index
    %c0_177 = arith.constant 0 : index
    %363 = vector.load %arg41[%c0_176, %c0_177] : memref<1x96xf32, #tpu.memory_space<vmem>>, vector<1x96xf32>
    %cst_178 = arith.constant dense<0.000000e+00> : vector<16xf32>
    %364 = vector.multi_reduction <add>, %361, %cst_178 [1] : vector<16x96xf32> to vector<16xf32>
    %365 = vector.shape_cast %364 : vector<16xf32> to vector<16x1xf32>
    %cst_179 = arith.constant 9.600000e+01 : f32
    %366 = vector.broadcast %cst_179 : f32 to vector<16x1xf32>
    %367 = arith.divf %365, %366 : vector<16x1xf32>
    %368 = vector.broadcast %367 : vector<16x1xf32> to vector<16x96xf32>
    %369 = arith.subf %361, %368 : vector<16x96xf32>
    %370 = arith.mulf %369, %369 : vector<16x96xf32>
    %cst_180 = arith.constant dense<0.000000e+00> : vector<16xf32>
    %371 = vector.multi_reduction <add>, %370, %cst_180 [1] : vector<16x96xf32> to vector<16xf32>
    %372 = vector.shape_cast %371 : vector<16xf32> to vector<16x1xf32>
    %cst_181 = arith.constant 9.600000e+01 : f32
    %373 = vector.broadcast %cst_181 : f32 to vector<16x1xf32>
    %374 = arith.divf %372, %373 : vector<16x1xf32>
    %375 = vector.broadcast %367 : vector<16x1xf32> to vector<16x96xf32>
    %376 = arith.subf %361, %375 : vector<16x96xf32>
    %cst_182 = arith.constant 9.99999974E-6 : f32
    %377 = vector.broadcast %cst_182 : f32 to vector<16x1xf32>
    %378 = arith.addf %374, %377 : vector<16x1xf32>
    %379 = math.rsqrt %378 : vector<16x1xf32>
    %380 = vector.broadcast %379 : vector<16x1xf32> to vector<16x96xf32>
    %381 = arith.mulf %376, %380 : vector<16x96xf32>
    %382 = vector.broadcast %362 : vector<1x96xf32> to vector<16x96xf32>
    %383 = arith.mulf %381, %382 : vector<16x96xf32>
    %384 = vector.broadcast %363 : vector<1x96xf32> to vector<16x96xf32>
    %385 = arith.addf %383, %384 : vector<16x96xf32>
    %c0_183 = arith.constant 0 : index
    %c0_184 = arith.constant 0 : index
    %386 = vector.load %arg42[%c0_183, %c0_184] : memref<96x32xf32, #tpu.memory_space<vmem>>, vector<96x32xf32>
    %c0_185 = arith.constant 0 : index
    %c0_186 = arith.constant 0 : index
    %387 = vector.load %arg43[%c0_185, %c0_186] : memref<96x32xf32, #tpu.memory_space<vmem>>, vector<96x32xf32>
    %c0_187 = arith.constant 0 : index
    %c0_188 = arith.constant 0 : index
    %388 = vector.load %arg44[%c0_187, %c0_188] : memref<1x32xf32, #tpu.memory_space<vmem>>, vector<1x32xf32>
    %c0_189 = arith.constant 0 : index
    %c0_190 = arith.constant 0 : index
    %389 = vector.load %arg45[%c0_189, %c0_190] : memref<1x32xf32, #tpu.memory_space<vmem>>, vector<1x32xf32>
    %c0_191 = arith.constant 0 : index
    %c0_192 = arith.constant 0 : index
    %390 = vector.load %arg46[%c0_191, %c0_192] : memref<1x32xf32, #tpu.memory_space<vmem>>, vector<1x32xf32>
    %c0_193 = arith.constant 0 : index
    %c0_194 = arith.constant 0 : index
    %391 = vector.load %arg47[%c0_193, %c0_194] : memref<32x32xf32, #tpu.memory_space<vmem>>, vector<32x32xf32>
    %c0_195 = arith.constant 0 : index
    %c0_196 = arith.constant 0 : index
    %392 = vector.load %arg48[%c0_195, %c0_196] : memref<32x32xf32, #tpu.memory_space<vmem>>, vector<32x32xf32>
    %c0_197 = arith.constant 0 : index
    %c0_198 = arith.constant 0 : index
    %393 = vector.load %arg49[%c0_197, %c0_198] : memref<1x32xf32, #tpu.memory_space<vmem>>, vector<1x32xf32>
    %cst_199 = arith.constant dense<0.000000e+00> : vector<16x32xf32>
    %394 = tpu.matmul %385, %386, %cst_199 {dimension_numbers = #tpu.dot_dimension_numbers<[1], [0], [0], [1], [0, 0, 1, 1], [], []>} : vector<16x96xf32>, vector<96x32xf32>, vector<16x32xf32> -> vector<16x32xf32>
    %395 = vector.broadcast %388 : vector<1x32xf32> to vector<16x32xf32>
    %396 = arith.addf %394, %395 : vector<16x32xf32>
    %cst_200 = arith.constant dense<0.000000e+00> : vector<16x32xf32>
    %397 = tpu.matmul %385, %387, %cst_200 {dimension_numbers = #tpu.dot_dimension_numbers<[1], [0], [0], [1], [0, 0, 1, 1], [], []>} : vector<16x96xf32>, vector<96x32xf32>, vector<16x32xf32> -> vector<16x32xf32>
    %cst_201 = arith.constant dense<0.000000e+00> : vector<16x32xf32>
    %398 = tpu.matmul %126, %397, %cst_201 {dimension_numbers = #tpu.dot_dimension_numbers<[1], [0], [0], [1], [0, 0, 1, 1], [], []>} : vector<16x16xf32>, vector<16x32xf32>, vector<16x32xf32> -> vector<16x32xf32>
    %399 = arith.subf %396, %398 : vector<16x32xf32>
    %cst_202 = arith.constant 0.000000e+00 : f32
    %400 = vector.broadcast %cst_202 : f32 to vector<16x32xf32>
    %401 = arith.maximumf %399, %400 : vector<16x32xf32>
    %cst_203 = arith.constant dense<0.000000e+00> : vector<16xf32>
    %402 = vector.multi_reduction <add>, %401, %cst_203 [1] : vector<16x32xf32> to vector<16xf32>
    %403 = vector.shape_cast %402 : vector<16xf32> to vector<16x1xf32>
    %cst_204 = arith.constant 3.200000e+01 : f32
    %404 = vector.broadcast %cst_204 : f32 to vector<16x1xf32>
    %405 = arith.divf %403, %404 : vector<16x1xf32>
    %406 = vector.broadcast %405 : vector<16x1xf32> to vector<16x32xf32>
    %407 = arith.subf %401, %406 : vector<16x32xf32>
    %408 = arith.mulf %407, %407 : vector<16x32xf32>
    %cst_205 = arith.constant dense<0.000000e+00> : vector<16xf32>
    %409 = vector.multi_reduction <add>, %408, %cst_205 [1] : vector<16x32xf32> to vector<16xf32>
    %410 = vector.shape_cast %409 : vector<16xf32> to vector<16x1xf32>
    %cst_206 = arith.constant 3.200000e+01 : f32
    %411 = vector.broadcast %cst_206 : f32 to vector<16x1xf32>
    %412 = arith.divf %410, %411 : vector<16x1xf32>
    %413 = vector.broadcast %405 : vector<16x1xf32> to vector<16x32xf32>
    %414 = arith.subf %401, %413 : vector<16x32xf32>
    %cst_207 = arith.constant 9.99999974E-6 : f32
    %415 = vector.broadcast %cst_207 : f32 to vector<16x1xf32>
    %416 = arith.addf %412, %415 : vector<16x1xf32>
    %417 = math.rsqrt %416 : vector<16x1xf32>
    %418 = vector.broadcast %417 : vector<16x1xf32> to vector<16x32xf32>
    %419 = arith.mulf %414, %418 : vector<16x32xf32>
    %420 = vector.broadcast %389 : vector<1x32xf32> to vector<16x32xf32>
    %421 = arith.mulf %419, %420 : vector<16x32xf32>
    %422 = vector.broadcast %390 : vector<1x32xf32> to vector<16x32xf32>
    %423 = arith.addf %421, %422 : vector<16x32xf32>
    %cst_208 = arith.constant dense<0.000000e+00> : vector<16x32xf32>
    %424 = tpu.matmul %423, %391, %cst_208 {dimension_numbers = #tpu.dot_dimension_numbers<[1], [0], [0], [1], [0, 0, 1, 1], [], []>} : vector<16x32xf32>, vector<32x32xf32>, vector<16x32xf32> -> vector<16x32xf32>
    %425 = vector.broadcast %393 : vector<1x32xf32> to vector<16x32xf32>
    %426 = arith.addf %424, %425 : vector<16x32xf32>
    %cst_209 = arith.constant dense<0.000000e+00> : vector<16x32xf32>
    %427 = tpu.matmul %423, %392, %cst_209 {dimension_numbers = #tpu.dot_dimension_numbers<[1], [0], [0], [1], [0, 0, 1, 1], [], []>} : vector<16x32xf32>, vector<32x32xf32>, vector<16x32xf32> -> vector<16x32xf32>
    %cst_210 = arith.constant dense<0.000000e+00> : vector<16x32xf32>
    %428 = tpu.matmul %126, %427, %cst_210 {dimension_numbers = #tpu.dot_dimension_numbers<[1], [0], [0], [1], [0, 0, 1, 1], [], []>} : vector<16x16xf32>, vector<16x32xf32>, vector<16x32xf32> -> vector<16x32xf32>
    %429 = arith.subf %426, %428 : vector<16x32xf32>
    %430 = arith.addf %128, %429 : vector<16x32xf32>
    %c0_211 = arith.constant 0 : index
    %c0_212 = arith.constant 0 : index
    %431 = vector.load %arg50[%c0_211, %c0_212] : memref<1x32xf32, #tpu.memory_space<vmem>>, vector<1x32xf32>
    %c0_213 = arith.constant 0 : index
    %c0_214 = arith.constant 0 : index
    %432 = vector.load %arg51[%c0_213, %c0_214] : memref<1x32xf32, #tpu.memory_space<vmem>>, vector<1x32xf32>
    %cst_215 = arith.constant dense<0.000000e+00> : vector<16xf32>
    %433 = vector.multi_reduction <add>, %430, %cst_215 [1] : vector<16x32xf32> to vector<16xf32>
    %434 = vector.shape_cast %433 : vector<16xf32> to vector<16x1xf32>
    %cst_216 = arith.constant 3.200000e+01 : f32
    %435 = vector.broadcast %cst_216 : f32 to vector<16x1xf32>
    %436 = arith.divf %434, %435 : vector<16x1xf32>
    %437 = vector.broadcast %436 : vector<16x1xf32> to vector<16x32xf32>
    %438 = arith.subf %430, %437 : vector<16x32xf32>
    %439 = arith.mulf %438, %438 : vector<16x32xf32>
    %cst_217 = arith.constant dense<0.000000e+00> : vector<16xf32>
    %440 = vector.multi_reduction <add>, %439, %cst_217 [1] : vector<16x32xf32> to vector<16xf32>
    %441 = vector.shape_cast %440 : vector<16xf32> to vector<16x1xf32>
    %cst_218 = arith.constant 3.200000e+01 : f32
    %442 = vector.broadcast %cst_218 : f32 to vector<16x1xf32>
    %443 = arith.divf %441, %442 : vector<16x1xf32>
    %444 = vector.broadcast %436 : vector<16x1xf32> to vector<16x32xf32>
    %445 = arith.subf %430, %444 : vector<16x32xf32>
    %cst_219 = arith.constant 9.99999974E-6 : f32
    %446 = vector.broadcast %cst_219 : f32 to vector<16x1xf32>
    %447 = arith.addf %443, %446 : vector<16x1xf32>
    %448 = math.rsqrt %447 : vector<16x1xf32>
    %449 = vector.broadcast %448 : vector<16x1xf32> to vector<16x32xf32>
    %450 = arith.mulf %445, %449 : vector<16x32xf32>
    %451 = vector.broadcast %431 : vector<1x32xf32> to vector<16x32xf32>
    %452 = arith.mulf %450, %451 : vector<16x32xf32>
    %453 = vector.broadcast %432 : vector<1x32xf32> to vector<16x32xf32>
    %454 = arith.addf %452, %453 : vector<16x32xf32>
    %c0_220 = arith.constant 0 : index
    %c0_221 = arith.constant 0 : index
    %c0_222 = arith.constant 0 : index
    %455 = vector.load %arg52[%c0_220, %c0_221, %c0_222] : memref<1x32x9xf32, #tpu.memory_space<vmem>>, vector<1x32x8xf32>
    %456 = vector.shape_cast %455 : vector<1x32x8xf32> to vector<32x8xf32>
    %457 = vector.shape_cast %256 : vector<32x8xf32> to vector<1x32x8xf32>
    tpu.vector_store %arg52[%c0_220, %c0_221, %c0_222], %457 {strides = array<i32>} : memref<1x32x9xf32, #tpu.memory_space<vmem>>, vector<1x32x8xf32>,
    %c0_223 = arith.constant 0 : index
    %c0_224 = arith.constant 0 : index
    %c8 = arith.constant 8 : index
    %458 = vector.load %arg52[%c0_223, %c0_224, %c8] : memref<1x32x9xf32, #tpu.memory_space<vmem>>, vector<1x32x1xf32>
    %459 = vector.shape_cast %458 : vector<1x32x1xf32> to vector<32x1xf32>
    %460 = vector.shape_cast %260 : vector<32x1xf32> to vector<1x32x1xf32>
    tpu.vector_store %arg52[%c0_223, %c0_224, %c8], %460 {strides = array<i32>} : memref<1x32x9xf32, #tpu.memory_space<vmem>>, vector<1x32x1xf32>,
    %c0_225 = arith.constant 0 : index
    %c0_226 = arith.constant 0 : index
    %461 = vector.load %arg53[%c0_225, %c0_226] : memref<16x32xf32, #tpu.memory_space<vmem>>, vector<16x32xf32>
    tpu.vector_store %arg53[%c0_225, %c0_226], %454 {strides = array<i32>} : memref<16x32xf32, #tpu.memory_space<vmem>>, vector<16x32xf32>,
    %c0_227 = arith.constant 0 : index
    %c0_228 = arith.constant 0 : index
    %462 = vector.load %arg54[%c0_227, %c0_228] : memref<32x32xf32, #tpu.memory_space<vmem>>, vector<32x32xf32>
    tpu.vector_store %arg54[%c0_227, %c0_228], %359 {strides = array<i32>} : memref<32x32xf32, #tpu.memory_space<vmem>>, vector<32x32xf32>,
    %c0_229 = arith.constant 0 : index
    %c0_230 = arith.constant 0 : index
    %463 = vector.load %arg55[%c0_229, %c0_230] : memref<32x8xf32, #tpu.memory_space<vmem>>, vector<32x8xf32>
    tpu.vector_store %arg55[%c0_229, %c0_230], %256 {strides = array<i32>} : memref<32x8xf32, #tpu.memory_space<vmem>>, vector<32x8xf32>,
    return
  }
  func.func @transform_0(%arg0: i32) -> (i32, i32) {
    %c0_i32 = arith.constant 0 : i32
    %c0_i32_0 = arith.constant 0 : i32
    %c0_i32_1 = arith.constant 0 : i32
    return %c0_i32, %c0_i32_0 : i32, i32
  }
  func.func @transform_1(%arg0: i32) -> (i32, i32) {
    %c0_i32 = arith.constant 0 : i32
    %c0_i32_0 = arith.constant 0 : i32
    %c0_i32_1 = arith.constant 0 : i32
    return %c0_i32, %c0_i32_0 : i32, i32
  }
  func.func @transform_2(%arg0: i32) -> (i32, i32) {
    %c0_i32 = arith.constant 0 : i32
    %c0_i32_0 = arith.constant 0 : i32
    %c0_i32_1 = arith.constant 0 : i32
    return %c0_i32, %c0_i32_0 : i32, i32
  }
  func.func @transform_3(%arg0: i32) -> (i32, i32) {
    %c0_i32 = arith.constant 0 : i32
    %c0_i32_0 = arith.constant 0 : i32
    %c0_i32_1 = arith.constant 0 : i32
    return %c0_i32, %c0_i32_0 : i32, i32
  }
  func.func @transform_4(%arg0: i32) -> (i32, i32) {
    %c0_i32 = arith.constant 0 : i32
    %c0_i32_0 = arith.constant 0 : i32
    %c0_i32_1 = arith.constant 0 : i32
    return %c0_i32, %c0_i32_0 : i32, i32
  }
  func.func @transform_5(%arg0: i32) -> (i32, i32) {
    %c0_i32 = arith.constant 0 : i32
    %c0_i32_0 = arith.constant 0 : i32
    %c0_i32_1 = arith.constant 0 : i32
    return %c0_i32, %c0_i32_0 : i32, i32
  }
  func.func @transform_6(%arg0: i32) -> (i32, i32) {
    %c0_i32 = arith.constant 0 : i32
    %c0_i32_0 = arith.constant 0 : i32
    %c0_i32_1 = arith.constant 0 : i32
    return %c0_i32, %c0_i32_0 : i32, i32
  }
  func.func @transform_7(%arg0: i32) -> (i32, i32) {
    %c0_i32 = arith.constant 0 : i32
    %c0_i32_0 = arith.constant 0 : i32
    %c0_i32_1 = arith.constant 0 : i32
    return %c0_i32, %c0_i32_0 : i32, i32
  }
  func.func @transform_8(%arg0: i32) -> (i32, i32) {
    %c0_i32 = arith.constant 0 : i32
    %c0_i32_0 = arith.constant 0 : i32
    %c0_i32_1 = arith.constant 0 : i32
    return %c0_i32, %c0_i32_0 : i32, i32
  }
  func.func @transform_9(%arg0: i32) -> (i32, i32) {
    %c0_i32 = arith.constant 0 : i32
    %c0_i32_0 = arith.constant 0 : i32
    %c0_i32_1 = arith.constant 0 : i32
    return %c0_i32, %c0_i32_0 : i32, i32
  }
  func.func @transform_10(%arg0: i32) -> (i32, i32) {
    %c0_i32 = arith.constant 0 : i32
    %c0_i32_0 = arith.constant 0 : i32
    %c0_i32_1 = arith.constant 0 : i32
    return %c0_i32, %c0_i32_0 : i32, i32
  }
  func.func @transform_11(%arg0: i32) -> (i32, i32) {
    %c0_i32 = arith.constant 0 : i32
    %c0_i32_0 = arith.constant 0 : i32
    %c0_i32_1 = arith.constant 0 : i32
    return %c0_i32, %c0_i32_0 : i32, i32
  }
  func.func @transform_12(%arg0: i32) -> (i32, i32) {
    %c0_i32 = arith.constant 0 : i32
    %c0_i32_0 = arith.constant 0 : i32
    %c0_i32_1 = arith.constant 0 : i32
    return %c0_i32, %c0_i32_0 : i32, i32
  }
  func.func @transform_13(%arg0: i32) -> (i32, i32) {
    %c0_i32 = arith.constant 0 : i32
    %c0_i32_0 = arith.constant 0 : i32
    %c0_i32_1 = arith.constant 0 : i32
    return %c0_i32, %c0_i32_0 : i32, i32
  }
  func.func @transform_14(%arg0: i32) -> (i32, i32) {
    %c0_i32 = arith.constant 0 : i32
    %c0_i32_0 = arith.constant 0 : i32
    %c0_i32_1 = arith.constant 0 : i32
    return %c0_i32, %c0_i32_0 : i32, i32
  }
  func.func @transform_15(%arg0: i32) -> (i32, i32) {
    %c0_i32 = arith.constant 0 : i32
    %c0_i32_0 = arith.constant 0 : i32
    %c0_i32_1 = arith.constant 0 : i32
    return %c0_i32, %c0_i32_0 : i32, i32
  }
  func.func @transform_16(%arg0: i32) -> (i32, i32) {
    %c0_i32 = arith.constant 0 : i32
    %c0_i32_0 = arith.constant 0 : i32
    %c0_i32_1 = arith.constant 0 : i32
    return %c0_i32, %c0_i32_0 : i32, i32
  }
  func.func @transform_17(%arg0: i32) -> (i32, i32) {
    %c0_i32 = arith.constant 0 : i32
    %c0_i32_0 = arith.constant 0 : i32
    %c0_i32_1 = arith.constant 0 : i32
    return %c0_i32, %c0_i32_0 : i32, i32
  }
  func.func @transform_18(%arg0: i32) -> (i32, i32) {
    %c0_i32 = arith.constant 0 : i32
    %c0_i32_0 = arith.constant 0 : i32
    %c0_i32_1 = arith.constant 0 : i32
    return %c0_i32, %c0_i32_0 : i32, i32
  }
  func.func @transform_19(%arg0: i32) -> (i32, i32) {
    %c0_i32 = arith.constant 0 : i32
    %c0_i32_0 = arith.constant 0 : i32
    %c0_i32_1 = arith.constant 0 : i32
    return %c0_i32, %c0_i32_0 : i32, i32
  }
  func.func @transform_20(%arg0: i32) -> (i32, i32) {
    %c0_i32 = arith.constant 0 : i32
    %c0_i32_0 = arith.constant 0 : i32
    %c0_i32_1 = arith.constant 0 : i32
    return %c0_i32, %c0_i32_0 : i32, i32
  }
  func.func @transform_21(%arg0: i32) -> (i32, i32) {
    %c0_i32 = arith.constant 0 : i32
    %c0_i32_0 = arith.constant 0 : i32
    %c0_i32_1 = arith.constant 0 : i32
    return %c0_i32, %c0_i32_0 : i32, i32
  }
  func.func @transform_22(%arg0: i32) -> (i32, i32) {
    %c0_i32 = arith.constant 0 : i32
    %c0_i32_0 = arith.constant 0 : i32
    %c0_i32_1 = arith.constant 0 : i32
    return %c0_i32, %c0_i32_0 : i32, i32
  }
  func.func @transform_23(%arg0: i32) -> (i32, i32) {
    %c0_i32 = arith.constant 0 : i32
    %c0_i32_0 = arith.constant 0 : i32
    %c0_i32_1 = arith.constant 0 : i32
    return %c0_i32, %c0_i32_0 : i32, i32
  }
  func.func @transform_24(%arg0: i32) -> (i32, i32) {
    %c0_i32 = arith.constant 0 : i32
    %c0_i32_0 = arith.constant 0 : i32
    %c0_i32_1 = arith.constant 0 : i32
    return %c0_i32, %c0_i32_0 : i32, i32
  }
  func.func @transform_25(%arg0: i32) -> (i32, i32) {
    %c0_i32 = arith.constant 0 : i32
    %c0_i32_0 = arith.constant 0 : i32
    %c0_i32_1 = arith.constant 0 : i32
    return %c0_i32, %c0_i32_0 : i32, i32
  }
  func.func @transform_26(%arg0: i32) -> (i32, i32) {
    %c0_i32 = arith.constant 0 : i32
    %c0_i32_0 = arith.constant 0 : i32
    %c0_i32_1 = arith.constant 0 : i32
    return %c0_i32, %c0_i32_0 : i32, i32
  }
  func.func @transform_27(%arg0: i32) -> (i32, i32) {
    %c0_i32 = arith.constant 0 : i32
    %c0_i32_0 = arith.constant 0 : i32
    %c0_i32_1 = arith.constant 0 : i32
    return %c0_i32, %c0_i32_0 : i32, i32
  }
  func.func @transform_28(%arg0: i32) -> (i32, i32) {
    %c0_i32 = arith.constant 0 : i32
    %c0_i32_0 = arith.constant 0 : i32
    %c0_i32_1 = arith.constant 0 : i32
    return %c0_i32, %c0_i32_0 : i32, i32
  }
  func.func @transform_29(%arg0: i32) -> (i32, i32) {
    %c0_i32 = arith.constant 0 : i32
    %c0_i32_0 = arith.constant 0 : i32
    %c0_i32_1 = arith.constant 0 : i32
    return %c0_i32, %c0_i32_0 : i32, i32
  }
  func.func @transform_30(%arg0: i32) -> (i32, i32) {
    %c0_i32 = arith.constant 0 : i32
    %c0_i32_0 = arith.constant 0 : i32
    %c0_i32_1 = arith.constant 0 : i32
    return %c0_i32, %c0_i32_0 : i32, i32
  }
  func.func @transform_31(%arg0: i32) -> (i32, i32) {
    %c0_i32 = arith.constant 0 : i32
    %c0_i32_0 = arith.constant 0 : i32
    %c0_i32_1 = arith.constant 0 : i32
    return %c0_i32, %c0_i32_0 : i32, i32
  }
  func.func @transform_32(%arg0: i32) -> (i32, i32) {
    %c0_i32 = arith.constant 0 : i32
    %c0_i32_0 = arith.constant 0 : i32
    %c0_i32_1 = arith.constant 0 : i32
    return %c0_i32, %c0_i32_0 : i32, i32
  }
  func.func @transform_33(%arg0: i32) -> (i32, i32) {
    %c0_i32 = arith.constant 0 : i32
    %c0_i32_0 = arith.constant 0 : i32
    %c0_i32_1 = arith.constant 0 : i32
    return %c0_i32, %c0_i32_0 : i32, i32
  }
  func.func @transform_34(%arg0: i32) -> (i32, i32) {
    %c0_i32 = arith.constant 0 : i32
    %c0_i32_0 = arith.constant 0 : i32
    %c0_i32_1 = arith.constant 0 : i32
    return %c0_i32, %c0_i32_0 : i32, i32
  }
  func.func @transform_35(%arg0: i32) -> (i32, i32) {
    %c0_i32 = arith.constant 0 : i32
    %c0_i32_0 = arith.constant 0 : i32
    %c0_i32_1 = arith.constant 0 : i32
    return %c0_i32, %c0_i32_0 : i32, i32
  }
  func.func @transform_36(%arg0: i32) -> (i32, i32) {
    %c0_i32 = arith.constant 0 : i32
    %c0_i32_0 = arith.constant 0 : i32
    %c0_i32_1 = arith.constant 0 : i32
    return %c0_i32, %c0_i32_0 : i32, i32
  }
  func.func @transform_37(%arg0: i32) -> (i32, i32) {
    %c0_i32 = arith.constant 0 : i32
    %c0_i32_0 = arith.constant 0 : i32
    %c0_i32_1 = arith.constant 0 : i32
    return %c0_i32, %c0_i32_0 : i32, i32
  }
  func.func @transform_38(%arg0: i32) -> (i32, i32) {
    %c0_i32 = arith.constant 0 : i32
    %c0_i32_0 = arith.constant 0 : i32
    %c0_i32_1 = arith.constant 0 : i32
    return %c0_i32, %c0_i32_0 : i32, i32
  }
  func.func @transform_39(%arg0: i32) -> (i32, i32) {
    %c0_i32 = arith.constant 0 : i32
    %c0_i32_0 = arith.constant 0 : i32
    %c0_i32_1 = arith.constant 0 : i32
    return %c0_i32, %c0_i32_0 : i32, i32
  }
  func.func @transform_40(%arg0: i32) -> (i32, i32) {
    %c0_i32 = arith.constant 0 : i32
    %c0_i32_0 = arith.constant 0 : i32
    %c0_i32_1 = arith.constant 0 : i32
    return %c0_i32, %c0_i32_0 : i32, i32
  }
  func.func @transform_41(%arg0: i32) -> (i32, i32) {
    %c0_i32 = arith.constant 0 : i32
    %c0_i32_0 = arith.constant 0 : i32
    %c0_i32_1 = arith.constant 0 : i32
    return %c0_i32, %c0_i32_0 : i32, i32
  }
  func.func @transform_42(%arg0: i32) -> (i32, i32) {
    %c0_i32 = arith.constant 0 : i32
    %c0_i32_0 = arith.constant 0 : i32
    %c0_i32_1 = arith.constant 0 : i32
    return %c0_i32, %c0_i32_0 : i32, i32
  }
  func.func @transform_43(%arg0: i32) -> (i32, i32) {
    %c0_i32 = arith.constant 0 : i32
    %c0_i32_0 = arith.constant 0 : i32
    %c0_i32_1 = arith.constant 0 : i32
    return %c0_i32, %c0_i32_0 : i32, i32
  }
  func.func @transform_44(%arg0: i32) -> (i32, i32) {
    %c0_i32 = arith.constant 0 : i32
    %c0_i32_0 = arith.constant 0 : i32
    %c0_i32_1 = arith.constant 0 : i32
    return %c0_i32, %c0_i32_0 : i32, i32
  }
  func.func @transform_45(%arg0: i32) -> (i32, i32) {
    %c0_i32 = arith.constant 0 : i32
    %c0_i32_0 = arith.constant 0 : i32
    %c0_i32_1 = arith.constant 0 : i32
    return %c0_i32, %c0_i32_0 : i32, i32
  }
  func.func @transform_46(%arg0: i32) -> (i32, i32) {
    %c0_i32 = arith.constant 0 : i32
    %c0_i32_0 = arith.constant 0 : i32
    %c0_i32_1 = arith.constant 0 : i32
    return %c0_i32, %c0_i32_0 : i32, i32
  }
  func.func @transform_47(%arg0: i32) -> (i32, i32) {
    %c0_i32 = arith.constant 0 : i32
    %c0_i32_0 = arith.constant 0 : i32
    %c0_i32_1 = arith.constant 0 : i32
    return %c0_i32, %c0_i32_0 : i32, i32
  }
  func.func @transform_48(%arg0: i32) -> (i32, i32) {
    %c0_i32 = arith.constant 0 : i32
    %c0_i32_0 = arith.constant 0 : i32
    %c0_i32_1 = arith.constant 0 : i32
    return %c0_i32, %c0_i32_0 : i32, i32
  }
  func.func @transform_49(%arg0: i32) -> (i32, i32) {
    %c0_i32 = arith.constant 0 : i32
    %c0_i32_0 = arith.constant 0 : i32
    %c0_i32_1 = arith.constant 0 : i32
    return %c0_i32, %c0_i32_0 : i32, i32
  }
  func.func @transform_50(%arg0: i32) -> (i32, i32) {
    %c0_i32 = arith.constant 0 : i32
    %c0_i32_0 = arith.constant 0 : i32
    %c0_i32_1 = arith.constant 0 : i32
    return %c0_i32, %c0_i32_0 : i32, i32
  }
  func.func @transform_51(%arg0: i32) -> (i32, i32, i32) {
    %c0_i32 = arith.constant 0 : i32
    %c0_i32_0 = arith.constant 0 : i32
    %c0_i32_1 = arith.constant 0 : i32
    return %arg0, %c0_i32, %c0_i32_0 : i32, i32, i32
  }
  func.func @transform_52(%arg0: i32) -> (i32, i32) {
    %c0_i32 = arith.constant 0 : i32
    %c0_i32_0 = arith.constant 0 : i32
    %c0_i32_1 = arith.constant 0 : i32
    return %c0_i32, %c0_i32_0 : i32, i32
  }
  func.func @transform_53(%arg0: i32) -> (i32, i32) {
    %c0_i32 = arith.constant 0 : i32
    %c0_i32_0 = arith.constant 0 : i32
    %c0_i32_1 = arith.constant 0 : i32
    return %c0_i32, %c0_i32_0 : i32, i32
  }
  func.func @transform_54(%arg0: i32) -> (i32, i32) {
    %c0_i32 = arith.constant 0 : i32
    %c0_i32_0 = arith.constant 0 : i32
    %c0_i32_1 = arith.constant 0 : i32
    return %c0_i32, %c0_i32_0 : i32, i32
  }
}

</mosaic_0001>

<llo_original>
// kernel: iterative_refiner_forward.1
$region0: #{iterative_refiner_forward.1}
  #allocation0 [shape = 'u32[]', space=smem, size = 0x4, offset = 0x4, fixed_abs, tag = 'smem constant byte address 0x4 - core index']
  #allocation1 [shape = 'u32[72,128]{1,0:T(1,128)}', space=vmem, size = 0x9000, scoped, tag = 'internal scratch']
  #allocation2 [shape = 'f32[1,1]{1,0:T(1,128)S(1)}', space=vmem, size = 0x200, scoped, tag = 'scoped memory for iterative_refiner_forward.1']
  #allocation3 [shape = 'f32[1,1]{1,0:T(1,128)S(1)}', space=vmem, size = 0x200, scoped, tag = 'scoped memory for iterative_refiner_forward.1']
  %s0 = inlined_call_operand.smem [shape: u32[55], index: -1, kind: input, shape index: {}]
  %s1 = sld [smem:[%s0]]
  %s2 = scalar_lea.smem %s0, 1
  %s3 = sld [smem:[%s2]]
  %s4 = scalar_lea.smem %s0, 2
  %s5 = sld [smem:[%s4]]
  %s6 = scalar_lea.smem %s0, 3
  %s7 = sld [smem:[%s6]]
  %s8 = scalar_lea.smem %s0, 4
  %s9 = sld [smem:[%s8]]
  %s10 = scalar_lea.smem %s0, 5
  %s11 = sld [smem:[%s10]]
  %s12 = scalar_lea.smem %s0, 6
  %s13 = sld [smem:[%s12]]
  %s14 = scalar_lea.smem %s0, 7
  %s15 = sld [smem:[%s14]]
  %s16 = scalar_lea.smem %s0, 8
  %s17 = sld [smem:[%s16]]
  %s18 = scalar_lea.smem %s0, 9
  %s19 = sld [smem:[%s18]]
  %s20 = scalar_lea.smem %s0, 10
  %s21 = sld [smem:[%s20]]
  %s22 = scalar_lea.smem %s0, 11
  %s23 = sld [smem:[%s22]]
  %s24 = scalar_lea.smem %s0, 12
  %s25 = sld [smem:[%s24]]
  %s26 = scalar_lea.smem %s0, 13
  %s27 = sld [smem:[%s26]]
  %s28 = scalar_lea.smem %s0, 14
  %s29 = sld [smem:[%s28]]
  %s30 = scalar_lea.smem %s0, 15
  %s31 = sld [smem:[%s30]]
  %s32 = scalar_lea.smem %s0, 16
  %s33 = sld [smem:[%s32]]
  %s34 = scalar_lea.smem %s0, 17
  %s35 = sld [smem:[%s34]]
  %s36 = scalar_lea.smem %s0, 18
  %s37 = sld [smem:[%s36]]
  %s38 = scalar_lea.smem %s0, 19
  %s39 = sld [smem:[%s38]]
  %s40 = scalar_lea.smem %s0, 20
  %s41 = sld [smem:[%s40]]
  %s42 = scalar_lea.smem %s0, 21
  %s43 = sld [smem:[%s42]]
  %s44 = scalar_lea.smem %s0, 22
  %s45 = sld [smem:[%s44]]
  %s46 = scalar_lea.smem %s0, 23
  %s47 = sld [smem:[%s46]]
  %s48 = scalar_lea.smem %s0, 24
  %s49 = sld [smem:[%s48]]
  %s50 = scalar_lea.smem %s0, 25
  %s51 = sld [smem:[%s50]]
  %s52 = scalar_lea.smem %s0, 26
  %s53 = sld [smem:[%s52]]
  %s54 = scalar_lea.smem %s0, 27
  %s55 = sld [smem:[%s54]]
  %s56 = scalar_lea.smem %s0, 28
  %s57 = sld [smem:[%s56]]
  %s58 = scalar_lea.smem %s0, 29
  %s59 = sld [smem:[%s58]]
  %s60 = scalar_lea.smem %s0, 30
  %s61 = sld [smem:[%s60]]
  %s62 = scalar_lea.smem %s0, 31
  %s63 = sld [smem:[%s62]]
  %s64 = scalar_lea.smem %s0, 32
  %s65 = sld [smem:[%s64]]
  %s66 = scalar_lea.smem %s0, 33
  %s67 = sld [smem:[%s66]]
  %s68 = scalar_lea.smem %s0, 34
  %s69 = sld [smem:[%s68]]
  %s70 = scalar_lea.smem %s0, 35
  %s71 = sld [smem:[%s70]]
  %s72 = scalar_lea.smem %s0, 36
  %s73 = sld [smem:[%s72]]
  %s74 = scalar_lea.smem %s0, 37
  %s75 = sld [smem:[%s74]]
  %s76 = scalar_lea.smem %s0, 38
  %s77 = sld [smem:[%s76]]
  %s78 = scalar_lea.smem %s0, 39
  %s79 = sld [smem:[%s78]]
  %s80 = scalar_lea.smem %s0, 40
  %s81 = sld [smem:[%s80]]
  %s82 = scalar_lea.smem %s0, 41
  %s83 = sld [smem:[%s82]]
  %s84 = scalar_lea.smem %s0, 42
  %s85 = sld [smem:[%s84]]
  %s86 = scalar_lea.smem %s0, 43
  %s87 = sld [smem:[%s86]]
  %s88 = scalar_lea.smem %s0, 44
  %s89 = sld [smem:[%s88]]
  %s90 = scalar_lea.smem %s0, 45
  %s91 = sld [smem:[%s90]]
  %s92 = scalar_lea.smem %s0, 46
  %s93 = sld [smem:[%s92]]
  %s94 = scalar_lea.smem %s0, 47
  %s95 = sld [smem:[%s94]]
  %s96 = scalar_lea.smem %s0, 48
  %s97 = sld [smem:[%s96]]
  %s98 = scalar_lea.smem %s0, 49
  %s99 = sld [smem:[%s98]]
  %s100 = scalar_lea.smem %s0, 50
  %s101 = sld [smem:[%s100]]
  %s102 = scalar_lea.smem %s0, 51
  %s103 = sld [smem:[%s102]]
  %s104 = scalar_lea.smem %s0, 52
  %s105 = sld [smem:[%s104]]
  %s106 = scalar_lea.smem %s0, 53
  %s107 = sld [smem:[%s106]]
  %s108 = scalar_lea.smem %s0, 54
  %s109 = sld [smem:[%s108]]
  %110 = xla_tuple %s103, %s105, %s107, %s109
  %s111 = sld [smem:[#allocation0]]
  $region265: #{iterative_refiner_forward.1} parent=0
    _
  %s113 = ssub.s32 1, %s111
  %s114 = scalar_select 0, %s113, %s111
  %v115 = vstv %s43
  %116 = vst [vmem:[#allocation2] sm:$0x1] %v115
  %v117 = vstv %s53
  %118 = vst [vmem:[#allocation3] sm:$0x1] %v117
  $region1: #{iterative_refiner_forward.1} parent=0
    #allocation4 [shape = 'u8[8192]{0}', space=vmem, size = 0x2000, scoped, tag = 'output window, operand 1, single buffered']
    #allocation5 [shape = 's32[2]{0}', space=sflag, size = 0x8, scoped, tag = 'scoped memory for iterative_refiner_forward.1']
    #allocation6 [shape = 'u8[16384]{0}', space=vmem, size = 0x4000, scoped, tag = 'output window, operand 2, single buffered']
    #allocation7 [shape = 's32[1]{0}', space=sflag, size = 0x4, scoped, tag = 'scoped memory for iterative_refiner_forward.1']
    %119 = vsyncpa [#allocation5], 0
    %120 = vsyncpa [#allocation7], 0
    loop: start=0, step=1, limit=4
    $region2: #{iterative_refiner_forward.1} parent=1 // loop_pre_header
      _
    $region3: #{iterative_refiner_forward.1} parent=1 // loop_header
      %s122 = sphi 0, %s126
      %p123 = scmp.ge.s32.totalorder %s122, 4
      %s130 = sphi 0, %s130
      %s132 = sphi 0, %s130
      %s133 = sphi 0, %s132
      %s147 = sphi 0, %s133
      %s151 = sphi 0, %s151
      %s153 = sphi 0, %s151
      %s154 = sphi 0, %s153
      %s168 = sphi 0, %s154
      %s172 = sphi 0, %s172
      %s174 = sphi 0, %s172
      %s175 = sphi 0, %s174
      %s189 = sphi 0, %s175
      %s193 = sphi 0, %s193
      %s195 = sphi 0, %s193
      %s196 = sphi 0, %s195
      %s210 = sphi 0, %s196
      %s214 = sphi 0, %s214
      %s216 = sphi 0, %s214
      %s217 = sphi 0, %s216
      %s231 = sphi 0, %s217
      %s235 = sphi 0, %s235
      %s237 = sphi 0, %s235
      %s238 = sphi 0, %s237
      %s252 = sphi 0, %s238
      %s256 = sphi 0, %s256
      %s258 = sphi 0, %s256
      %s259 = sphi 0, %s258
      %s273 = sphi 0, %s259
      %s277 = sphi 0, %s277
      %s279 = sphi 0, %s277
      %s280 = sphi 0, %s279
      %s294 = sphi 0, %s280
      %s298 = sphi 0, %s298
      %s300 = sphi 0, %s298
      %s301 = sphi 0, %s300
      %s315 = sphi 0, %s301
      %s319 = sphi 0, %s319
      %s321 = sphi 0, %s319
      %s322 = sphi 0, %s321
      %s336 = sphi 0, %s322
      %s340 = sphi 0, %s340
      %s342 = sphi 0, %s340
      %s343 = sphi 0, %s342
      %s357 = sphi 0, %s343
      %s361 = sphi 0, %s361
      %s363 = sphi 0, %s361
      %s364 = sphi 0, %s363
      %s378 = sphi 0, %s364
      %s382 = sphi 0, %s382
      %s384 = sphi 0, %s382
      %s385 = sphi 0, %s384
      %s399 = sphi 0, %s385
      %s403 = sphi 0, %s403
      %s405 = sphi 0, %s403
      %s406 = sphi 0, %s405
      %s420 = sphi 0, %s406
      %s424 = sphi 0, %s424
      %s426 = sphi 0, %s424
      %s427 = sphi 0, %s426
      %s441 = sphi 0, %s427
      %s445 = sphi 0, %s445
      %s447 = sphi 0, %s445
      %s448 = sphi 0, %s447
      %s462 = sphi 0, %s448
      %s466 = sphi 0, %s466
      %s468 = sphi 0, %s466
      %s469 = sphi 0, %s468
      %s483 = sphi 0, %s469
      %s487 = sphi 0, %s487
      %s489 = sphi 0, %s487
      %s490 = sphi 0, %s489
      %s504 = sphi 0, %s490
      %s508 = sphi 0, %s508
      %s510 = sphi 0, %s508
      %s511 = sphi 0, %s510
      %s525 = sphi 0, %s511
      %s529 = sphi 0, %s529
      %s531 = sphi 0, %s529
      %s532 = sphi 0, %s531
      %s546 = sphi 0, %s532
      %s550 = sphi 0, %s550
      %s552 = sphi 0, %s550
      %s553 = sphi 0, %s552
      %s567 = sphi 0, %s553
      %s571 = sphi 0, %s571
      %s573 = sphi 0, %s571
      %s574 = sphi 0, %s573
      %s588 = sphi 0, %s574
      %s592 = sphi 0, %s592
      %s594 = sphi 0, %s592
      %s595 = sphi 0, %s594
      %s609 = sphi 0, %s595
      %s613 = sphi 0, %s613
      %s615 = sphi 0, %s613
      %s616 = sphi 0, %s615
      %s630 = sphi 0, %s616
      %s634 = sphi 0, %s634
      %s636 = sphi 0, %s634
      %s637 = sphi 0, %s636
      %s651 = sphi 0, %s637
      %s655 = sphi 0, %s655
      %s657 = sphi 0, %s655
      %s658 = sphi 0, %s657
      %s672 = sphi 0, %s658
      %s676 = sphi 0, %s676
      %s678 = sphi 0, %s676
      %s679 = sphi 0, %s678
      %s693 = sphi 0, %s679
      %s697 = sphi 0, %s697
      %s699 = sphi 0, %s697
      %s700 = sphi 0, %s699
      %s714 = sphi 0, %s700
      %s718 = sphi 0, %s718
      %s720 = sphi 0, %s718
      %s721 = sphi 0, %s720
      %s735 = sphi 0, %s721
      %s739 = sphi 0, %s739
      %s741 = sphi 0, %s739
      %s742 = sphi 0, %s741
      %s756 = sphi 0, %s742
      %s760 = sphi 0, %s760
      %s762 = sphi 0, %s760
      %s763 = sphi 0, %s762
      %s777 = sphi 0, %s763
      %s781 = sphi 0, %s781
      %s783 = sphi 0, %s781
      %s784 = sphi 0, %s783
      %s798 = sphi 0, %s784
      %s802 = sphi 0, %s802
      %s804 = sphi 0, %s802
      %s805 = sphi 0, %s804
      %s819 = sphi 0, %s805
      %s823 = sphi 0, %s823
      %s825 = sphi 0, %s823
      %s826 = sphi 0, %s825
      %s840 = sphi 0, %s826
      %s844 = sphi 0, %s844
      %s846 = sphi 0, %s844
      %s847 = sphi 0, %s846
      %s861 = sphi 0, %s847
      %s865 = sphi 0, %s865
      %s867 = sphi 0, %s865
      %s868 = sphi 0, %s867
      %s882 = sphi 0, %s868
      %s886 = sphi 0, %s886
      %s888 = sphi 0, %s886
      %s889 = sphi 0, %s888
      %s903 = sphi 0, %s889
      %s907 = sphi 0, %s907
      %s909 = sphi 0, %s907
      %s910 = sphi 0, %s909
      %s924 = sphi 0, %s910
      %s928 = sphi 0, %s928
      %s930 = sphi 0, %s928
      %s931 = sphi 0, %s930
      %s945 = sphi 0, %s931
      %s949 = sphi 0, %s949
      %s951 = sphi 0, %s949
      %s952 = sphi 0, %s951
      %s966 = sphi 0, %s952
      %s970 = sphi 0, %s970
      %s972 = sphi 0, %s970
      %s973 = sphi 0, %s972
      %s987 = sphi 0, %s973
      %s991 = sphi 0, %s991
      %s993 = sphi 0, %s991
      %s994 = sphi 0, %s993
      %s1008 = sphi 0, %s994
      %s1012 = sphi 0, %s1012
      %s1014 = sphi 0, %s1012
      %s1015 = sphi 0, %s1014
      %s1029 = sphi 0, %s1015
      %s1033 = sphi 0, %s1033
      %s1035 = sphi 0, %s1033
      %s1036 = sphi 0, %s1035
      %s1050 = sphi 0, %s1036
      %s1054 = sphi 0, %s1054
      %s1056 = sphi 0, %s1054
      %s1057 = sphi 0, %s1056
      %s1071 = sphi 0, %s1057
      %s1075 = sphi 0, %s1075
      %s1077 = sphi 0, %s1075
      %s1078 = sphi 0, %s1077
      %s1092 = sphi 0, %s1078
      %s1096 = sphi 0, %s1096
      %s1098 = sphi 0, %s1096
      %s1099 = sphi 0, %s1098
      %s1113 = sphi 0, %s1099
      %s1117 = sphi 0, %s1117
      %s1119 = sphi 0, %s1117
      %s1120 = sphi 0, %s1119
      %s1134 = sphi 0, %s1120
      %s1138 = sphi 0, %s1138
      %s1140 = sphi 0, %s1138
      %s1141 = sphi 0, %s1140
      %s1155 = sphi 0, %s1141
      %s1159 = sphi 0, %s1159
      %s1161 = sphi 0, %s1159
      %s1162 = sphi 0, %s1161
      %s1176 = sphi 0, %s1162
      %s1180 = sphi 0, %s1180
      %s1182 = sphi 0, %s1180
      %s1183 = sphi 0, %s1182
      %s1197 = sphi 0, %s1183
      %s1203 = sphi 0, %s1205
      %s1206 = sphi 0, %s1203
      %s1207 = sphi 0, %s1206
      %s1223 = sphi 0, %s1207
      %s1227 = sphi 0, %s1227
      %s1229 = sphi 0, %s1227
      %s1230 = sphi 0, %s1229
      %s1244 = sphi 0, %s1230
      %s1248 = sphi 0, %s1248
      %s1250 = sphi 0, %s1248
      %s1251 = sphi 0, %s1250
      %s1265 = sphi 0, %s1251
      %s1269 = sphi 0, %s1269
      %s1271 = sphi 0, %s1269
      %s1272 = sphi 0, %s1271
      %s1286 = sphi 0, %s1272
    $region4: #{iterative_refiner_forward.1} parent=1 // loop_header_branch
      %125 = sbr.rel (%p123) target = $region8
    $region5: #{iterative_refiner_forward.1} parent=1 // loop_body
      %s127 = ssub.s32 %s122, 1
      %s128 = ssub.s32 %s122, 2
      %s129 = sadd.s32 %s122, 1
      %s131 = sadd.s32 %s130, 1
      %p134 = scmp.eq.s32.totalorder %s122, 1
      %p135 = scmp.ne.s32.totalorder %s130, %s132
      %p136 = scmp.eq.s32.totalorder %s122, 0
      %p137 = por %p135, %p136
      %p138 = scmp.ne.s32.totalorder %s130, %s132
      %p139 = scmp.eq.s32.totalorder %s127, 1
      %p140 = por %p138, %p139
      %p141 = scmp.ne.s32.totalorder %s132, %s133
      %p142 = scmp.eq.s32.totalorder %s127, 0
      %p143 = por %p141, %p142
      %p144 = scmp.ne.s32.totalorder %s132, %s133
      %p145 = scmp.eq.s32.totalorder %s128, 1
      %p146 = por %p144, %p145
      %p148 = scmp.ne.s32.totalorder %s133, %s147
      %p149 = scmp.eq.s32.totalorder %s128, 0
      %p150 = por %p148, %p149
      %s152 = sadd.s32 %s151, 1
      %p155 = scmp.eq.s32.totalorder %s122, 1
      %p156 = scmp.ne.s32.totalorder %s151, %s153
      %p157 = scmp.eq.s32.totalorder %s122, 0
      %p158 = por %p156, %p157
      %p159 = scmp.ne.s32.totalorder %s151, %s153
      %p160 = scmp.eq.s32.totalorder %s127, 1
      %p161 = por %p159, %p160
      %p162 = scmp.ne.s32.totalorder %s153, %s154
      %p163 = scmp.eq.s32.totalorder %s127, 0
      %p164 = por %p162, %p163
      %p165 = scmp.ne.s32.totalorder %s153, %s154
      %p166 = scmp.eq.s32.totalorder %s128, 1
      %p167 = por %p165, %p166
      %p169 = scmp.ne.s32.totalorder %s154, %s168
      %p170 = scmp.eq.s32.totalorder %s128, 0
      %p171 = por %p169, %p170
      %s173 = sadd.s32 %s172, 1
      %p176 = scmp.eq.s32.totalorder %s122, 1
      %p177 = scmp.ne.s32.totalorder %s172, %s174
      %p178 = scmp.eq.s32.totalorder %s122, 0
      %p179 = por %p177, %p178
      %p180 = scmp.ne.s32.totalorder %s172, %s174
      %p181 = scmp.eq.s32.totalorder %s127, 1
      %p182 = por %p180, %p181
      %p183 = scmp.ne.s32.totalorder %s174, %s175
      %p184 = scmp.eq.s32.totalorder %s127, 0
      %p185 = por %p183, %p184
      %p186 = scmp.ne.s32.totalorder %s174, %s175
      %p187 = scmp.eq.s32.totalorder %s128, 1
      %p188 = por %p186, %p187
      %p190 = scmp.ne.s32.totalorder %s175, %s189
      %p191 = scmp.eq.s32.totalorder %s128, 0
      %p192 = por %p190, %p191
      %s194 = sadd.s32 %s193, 1
      %p197 = scmp.eq.s32.totalorder %s122, 1
      %p198 = scmp.ne.s32.totalorder %s193, %s195
      %p199 = scmp.eq.s32.totalorder %s122, 0
      %p200 = por %p198, %p199
      %p201 = scmp.ne.s32.totalorder %s193, %s195
      %p202 = scmp.eq.s32.totalorder %s127, 1
      %p203 = por %p201, %p202
      %p204 = scmp.ne.s32.totalorder %s195, %s196
      %p205 = scmp.eq.s32.totalorder %s127, 0
      %p206 = por %p204, %p205
      %p207 = scmp.ne.s32.totalorder %s195, %s196
      %p208 = scmp.eq.s32.totalorder %s128, 1
      %p209 = por %p207, %p208
      %p211 = scmp.ne.s32.totalorder %s196, %s210
      %p212 = scmp.eq.s32.totalorder %s128, 0
      %p213 = por %p211, %p212
      %s215 = sadd.s32 %s214, 1
      %p218 = scmp.eq.s32.totalorder %s122, 1
      %p219 = scmp.ne.s32.totalorder %s214, %s216
      %p220 = scmp.eq.s32.totalorder %s122, 0
      %p221 = por %p219, %p220
      %p222 = scmp.ne.s32.totalorder %s214, %s216
      %p223 = scmp.eq.s32.totalorder %s127, 1
      %p224 = por %p222, %p223
      %p225 = scmp.ne.s32.totalorder %s216, %s217
      %p226 = scmp.eq.s32.totalorder %s127, 0
      %p227 = por %p225, %p226
      %p228 = scmp.ne.s32.totalorder %s216, %s217
      %p229 = scmp.eq.s32.totalorder %s128, 1
      %p230 = por %p228, %p229
      %p232 = scmp.ne.s32.totalorder %s217, %s231
      %p233 = scmp.eq.s32.totalorder %s128, 0
      %p234 = por %p232, %p233
      %s236 = sadd.s32 %s235, 1
      %p239 = scmp.eq.s32.totalorder %s122, 1
      %p240 = scmp.ne.s32.totalorder %s235, %s237
      %p241 = scmp.eq.s32.totalorder %s122, 0
      %p242 = por %p240, %p241
      %p243 = scmp.ne.s32.totalorder %s235, %s237
      %p244 = scmp.eq.s32.totalorder %s127, 1
      %p245 = por %p243, %p244
      %p246 = scmp.ne.s32.totalorder %s237, %s238
      %p247 = scmp.eq.s32.totalorder %s127, 0
      %p248 = por %p246, %p247
      %p249 = scmp.ne.s32.totalorder %s237, %s238
      %p250 = scmp.eq.s32.totalorder %s128, 1
      %p251 = por %p249, %p250
      %p253 = scmp.ne.s32.totalorder %s238, %s252
      %p254 = scmp.eq.s32.totalorder %s128, 0
      %p255 = por %p253, %p254
      %s257 = sadd.s32 %s256, 1
      %p260 = scmp.eq.s32.totalorder %s122, 1
      %p261 = scmp.ne.s32.totalorder %s256, %s258
      %p262 = scmp.eq.s32.totalorder %s122, 0
      %p263 = por %p261, %p262
      %p264 = scmp.ne.s32.totalorder %s256, %s258
      %p265 = scmp.eq.s32.totalorder %s127, 1
      %p266 = por %p264, %p265
      %p267 = scmp.ne.s32.totalorder %s258, %s259
      %p268 = scmp.eq.s32.totalorder %s127, 0
      %p269 = por %p267, %p268
      %p270 = scmp.ne.s32.totalorder %s258, %s259
      %p271 = scmp.eq.s32.totalorder %s128, 1
      %p272 = por %p270, %p271
      %p274 = scmp.ne.s32.totalorder %s259, %s273
      %p275 = scmp.eq.s32.totalorder %s128, 0
      %p276 = por %p274, %p275
      %s278 = sadd.s32 %s277, 1
      %p281 = scmp.eq.s32.totalorder %s122, 1
      %p282 = scmp.ne.s32.totalorder %s277, %s279
      %p283 = scmp.eq.s32.totalorder %s122, 0
      %p284 = por %p282, %p283
      %p285 = scmp.ne.s32.totalorder %s277, %s279
      %p286 = scmp.eq.s32.totalorder %s127, 1
      %p287 = por %p285, %p286
      %p288 = scmp.ne.s32.totalorder %s279, %s280
      %p289 = scmp.eq.s32.totalorder %s127, 0
      %p290 = por %p288, %p289
      %p291 = scmp.ne.s32.totalorder %s279, %s280
      %p292 = scmp.eq.s32.totalorder %s128, 1
      %p293 = por %p291, %p292
      %p295 = scmp.ne.s32.totalorder %s280, %s294
      %p296 = scmp.eq.s32.totalorder %s128, 0
      %p297 = por %p295, %p296
      %s299 = sadd.s32 %s298, 1
      %p302 = scmp.eq.s32.totalorder %s122, 1
      %p303 = scmp.ne.s32.totalorder %s298, %s300
      %p304 = scmp.eq.s32.totalorder %s122, 0
      %p305 = por %p303, %p304
      %p306 = scmp.ne.s32.totalorder %s298, %s300
      %p307 = scmp.eq.s32.totalorder %s127, 1
      %p308 = por %p306, %p307
      %p309 = scmp.ne.s32.totalorder %s300, %s301
      %p310 = scmp.eq.s32.totalorder %s127, 0
      %p311 = por %p309, %p310
      %p312 = scmp.ne.s32.totalorder %s300, %s301
      %p313 = scmp.eq.s32.totalorder %s128, 1
      %p314 = por %p312, %p313
      %p316 = scmp.ne.s32.totalorder %s301, %s315
      %p317 = scmp.eq.s32.totalorder %s128, 0
      %p318 = por %p316, %p317
      %s320 = sadd.s32 %s319, 1
      %p323 = scmp.eq.s32.totalorder %s122, 1
      %p324 = scmp.ne.s32.totalorder %s319, %s321
      %p325 = scmp.eq.s32.totalorder %s122, 0
      %p326 = por %p324, %p325
      %p327 = scmp.ne.s32.totalorder %s319, %s321
      %p328 = scmp.eq.s32.totalorder %s127, 1
      %p329 = por %p327, %p328
      %p330 = scmp.ne.s32.totalorder %s321, %s322
      %p331 = scmp.eq.s32.totalorder %s127, 0
      %p332 = por %p330, %p331
      %p333 = scmp.ne.s32.totalorder %s321, %s322
      %p334 = scmp.eq.s32.totalorder %s128, 1
      %p335 = por %p333, %p334
      %p337 = scmp.ne.s32.totalorder %s322, %s336
      %p338 = scmp.eq.s32.totalorder %s128, 0
      %p339 = por %p337, %p338
      %s341 = sadd.s32 %s340, 1
      %p344 = scmp.eq.s32.totalorder %s122, 1
      %p345 = scmp.ne.s32.totalorder %s340, %s342
      %p346 = scmp.eq.s32.totalorder %s122, 0
      %p347 = por %p345, %p346
      %p348 = scmp.ne.s32.totalorder %s340, %s342
      %p349 = scmp.eq.s32.totalorder %s127, 1
      %p350 = por %p348, %p349
      %p351 = scmp.ne.s32.totalorder %s342, %s343
      %p352 = scmp.eq.s32.totalorder %s127, 0
      %p353 = por %p351, %p352
      %p354 = scmp.ne.s32.totalorder %s342, %s343
      %p355 = scmp.eq.s32.totalorder %s128, 1
      %p356 = por %p354, %p355
      %p358 = scmp.ne.s32.totalorder %s343, %s357
      %p359 = scmp.eq.s32.totalorder %s128, 0
      %p360 = por %p358, %p359
      %s362 = sadd.s32 %s361, 1
      %p365 = scmp.eq.s32.totalorder %s122, 1
      %p366 = scmp.ne.s32.totalorder %s361, %s363
      %p367 = scmp.eq.s32.totalorder %s122, 0
      %p368 = por %p366, %p367
      %p369 = scmp.ne.s32.totalorder %s361, %s363
      %p370 = scmp.eq.s32.totalorder %s127, 1
      %p371 = por %p369, %p370
      %p372 = scmp.ne.s32.totalorder %s363, %s364
      %p373 = scmp.eq.s32.totalorder %s127, 0
      %p374 = por %p372, %p373
      %p375 = scmp.ne.s32.totalorder %s363, %s364
      %p376 = scmp.eq.s32.totalorder %s128, 1
      %p377 = por %p375, %p376
      %p379 = scmp.ne.s32.totalorder %s364, %s378
      %p380 = scmp.eq.s32.totalorder %s128, 0
      %p381 = por %p379, %p380
      %s383 = sadd.s32 %s382, 1
      %p386 = scmp.eq.s32.totalorder %s122, 1
      %p387 = scmp.ne.s32.totalorder %s382, %s384
      %p388 = scmp.eq.s32.totalorder %s122, 0
      %p389 = por %p387, %p388
      %p390 = scmp.ne.s32.totalorder %s382, %s384
      %p391 = scmp.eq.s32.totalorder %s127, 1
      %p392 = por %p390, %p391
      %p393 = scmp.ne.s32.totalorder %s384, %s385
      %p394 = scmp.eq.s32.totalorder %s127, 0
      %p395 = por %p393, %p394
      %p396 = scmp.ne.s32.totalorder %s384, %s385
      %p397 = scmp.eq.s32.totalorder %s128, 1
      %p398 = por %p396, %p397
      %p400 = scmp.ne.s32.totalorder %s385, %s399
      %p401 = scmp.eq.s32.totalorder %s128, 0
      %p402 = por %p400, %p401
      %s404 = sadd.s32 %s403, 1
      %p407 = scmp.eq.s32.totalorder %s122, 1
      %p408 = scmp.ne.s32.totalorder %s403, %s405
      %p409 = scmp.eq.s32.totalorder %s122, 0
      %p410 = por %p408, %p409
      %p411 = scmp.ne.s32.totalorder %s403, %s405
      %p412 = scmp.eq.s32.totalorder %s127, 1
      %p413 = por %p411, %p412
      %p414 = scmp.ne.s32.totalorder %s405, %s406
      %p415 = scmp.eq.s32.totalorder %s127, 0
      %p416 = por %p414, %p415
      %p417 = scmp.ne.s32.totalorder %s405, %s406
      %p418 = scmp.eq.s32.totalorder %s128, 1
      %p419 = por %p417, %p418
      %p421 = scmp.ne.s32.totalorder %s406, %s420
      %p422 = scmp.eq.s32.totalorder %s128, 0
      %p423 = por %p421, %p422
      %s425 = sadd.s32 %s424, 1
      %p428 = scmp.eq.s32.totalorder %s122, 1
      %p429 = scmp.ne.s32.totalorder %s424, %s426
      %p430 = scmp.eq.s32.totalorder %s122, 0
      %p431 = por %p429, %p430
      %p432 = scmp.ne.s32.totalorder %s424, %s426
      %p433 = scmp.eq.s32.totalorder %s127, 1
      %p434 = por %p432, %p433
      %p435 = scmp.ne.s32.totalorder %s426, %s427
      %p436 = scmp.eq.s32.totalorder %s127, 0
      %p437 = por %p435, %p436
      %p438 = scmp.ne.s32.totalorder %s426, %s427
      %p439 = scmp.eq.s32.totalorder %s128, 1
      %p440 = por %p438, %p439
      %p442 = scmp.ne.s32.totalorder %s427, %s441
      %p443 = scmp.eq.s32.totalorder %s128, 0
      %p444 = por %p442, %p443
      %s446 = sadd.s32 %s445, 1
      %p449 = scmp.eq.s32.totalorder %s122, 1
      %p450 = scmp.ne.s32.totalorder %s445, %s447
      %p451 = scmp.eq.s32.totalorder %s122, 0
      %p452 = por %p450, %p451
      %p453 = scmp.ne.s32.totalorder %s445, %s447
      %p454 = scmp.eq.s32.totalorder %s127, 1
      %p455 = por %p453, %p454
      %p456 = scmp.ne.s32.totalorder %s447, %s448
      %p457 = scmp.eq.s32.totalorder %s127, 0
      %p458 = por %p456, %p457
      %p459 = scmp.ne.s32.totalorder %s447, %s448
      %p460 = scmp.eq.s32.totalorder %s128, 1
      %p461 = por %p459, %p460
      %p463 = scmp.ne.s32.totalorder %s448, %s462
      %p464 = scmp.eq.s32.totalorder %s128, 0
      %p465 = por %p463, %p464
      %s467 = sadd.s32 %s466, 1
      %p470 = scmp.eq.s32.totalorder %s122, 1
      %p471 = scmp.ne.s32.totalorder %s466, %s468
      %p472 = scmp.eq.s32.totalorder %s122, 0
      %p473 = por %p471, %p472
      %p474 = scmp.ne.s32.totalorder %s466, %s468
      %p475 = scmp.eq.s32.totalorder %s127, 1
      %p476 = por %p474, %p475
      %p477 = scmp.ne.s32.totalorder %s468, %s469
      %p478 = scmp.eq.s32.totalorder %s127, 0
      %p479 = por %p477, %p478
      %p480 = scmp.ne.s32.totalorder %s468, %s469
      %p481 = scmp.eq.s32.totalorder %s128, 1
      %p482 = por %p480, %p481
      %p484 = scmp.ne.s32.totalorder %s469, %s483
      %p485 = scmp.eq.s32.totalorder %s128, 0
      %p486 = por %p484, %p485
      %s488 = sadd.s32 %s487, 1
      %p491 = scmp.eq.s32.totalorder %s122, 1
      %p492 = scmp.ne.s32.totalorder %s487, %s489
      %p493 = scmp.eq.s32.totalorder %s122, 0
      %p494 = por %p492, %p493
      %p495 = scmp.ne.s32.totalorder %s487, %s489
      %p496 = scmp.eq.s32.totalorder %s127, 1
      %p497 = por %p495, %p496
      %p498 = scmp.ne.s32.totalorder %s489, %s490
      %p499 = scmp.eq.s32.totalorder %s127, 0
      %p500 = por %p498, %p499
      %p501 = scmp.ne.s32.totalorder %s489, %s490
      %p502 = scmp.eq.s32.totalorder %s128, 1
      %p503 = por %p501, %p502
      %p505 = scmp.ne.s32.totalorder %s490, %s504
      %p506 = scmp.eq.s32.totalorder %s128, 0
      %p507 = por %p505, %p506
      %s509 = sadd.s32 %s508, 1
      %p512 = scmp.eq.s32.totalorder %s122, 1
      %p513 = scmp.ne.s32.totalorder %s508, %s510
      %p514 = scmp.eq.s32.totalorder %s122, 0
      %p515 = por %p513, %p514
      %p516 = scmp.ne.s32.totalorder %s508, %s510
      %p517 = scmp.eq.s32.totalorder %s127, 1
      %p518 = por %p516, %p517
      %p519 = scmp.ne.s32.totalorder %s510, %s511
      %p520 = scmp.eq.s32.totalorder %s127, 0
      %p521 = por %p519, %p520
      %p522 = scmp.ne.s32.totalorder %s510, %s511
      %p523 = scmp.eq.s32.totalorder %s128, 1
      %p524 = por %p522, %p523
      %p526 = scmp.ne.s32.totalorder %s511, %s525
      %p527 = scmp.eq.s32.totalorder %s128, 0
      %p528 = por %p526, %p527
      %s530 = sadd.s32 %s529, 1
      %p533 = scmp.eq.s32.totalorder %s122, 1
      %p534 = scmp.ne.s32.totalorder %s529, %s531
      %p535 = scmp.eq.s32.totalorder %s122, 0
      %p536 = por %p534, %p535
      %p537 = scmp.ne.s32.totalorder %s529, %s531
      %p538 = scmp.eq.s32.totalorder %s127, 1
      %p539 = por %p537, %p538
      %p540 = scmp.ne.s32.totalorder %s531, %s532
      %p541 = scmp.eq.s32.totalorder %s127, 0
      %p542 = por %p540, %p541
      %p543 = scmp.ne.s32.totalorder %s531, %s532
      %p544 = scmp.eq.s32.totalorder %s128, 1
      %p545 = por %p543, %p544
      %p547 = scmp.ne.s32.totalorder %s532, %s546
      %p548 = scmp.eq.s32.totalorder %s128, 0
      %p549 = por %p547, %p548
      %s551 = sadd.s32 %s550, 1
      %p554 = scmp.eq.s32.totalorder %s122, 1
      %p555 = scmp.ne.s32.totalorder %s550, %s552
      %p556 = scmp.eq.s32.totalorder %s122, 0
      %p557 = por %p555, %p556
      %p558 = scmp.ne.s32.totalorder %s550, %s552
      %p559 = scmp.eq.s32.totalorder %s127, 1
      %p560 = por %p558, %p559
      %p561 = scmp.ne.s32.totalorder %s552, %s553
      %p562 = scmp.eq.s32.totalorder %s127, 0
      %p563 = por %p561, %p562
      %p564 = scmp.ne.s32.totalorder %s552, %s553
      %p565 = scmp.eq.s32.totalorder %s128, 1
      %p566 = por %p564, %p565
      %p568 = scmp.ne.s32.totalorder %s553, %s567
      %p569 = scmp.eq.s32.totalorder %s128, 0
      %p570 = por %p568, %p569
      %s572 = sadd.s32 %s571, 1
      %p575 = scmp.eq.s32.totalorder %s122, 1
      %p576 = scmp.ne.s32.totalorder %s571, %s573
      %p577 = scmp.eq.s32.totalorder %s122, 0
      %p578 = por %p576, %p577
      %p579 = scmp.ne.s32.totalorder %s571, %s573
      %p580 = scmp.eq.s32.totalorder %s127, 1
      %p581 = por %p579, %p580
      %p582 = scmp.ne.s32.totalorder %s573, %s574
      %p583 = scmp.eq.s32.totalorder %s127, 0
      %p584 = por %p582, %p583
      %p585 = scmp.ne.s32.totalorder %s573, %s574
      %p586 = scmp.eq.s32.totalorder %s128, 1
      %p587 = por %p585, %p586
      %p589 = scmp.ne.s32.totalorder %s574, %s588
      %p590 = scmp.eq.s32.totalorder %s128, 0
      %p591 = por %p589, %p590
      %s593 = sadd.s32 %s592, 1
      %p596 = scmp.eq.s32.totalorder %s122, 1
      %p597 = scmp.ne.s32.totalorder %s592, %s594
      %p598 = scmp.eq.s32.totalorder %s122, 0
      %p599 = por %p597, %p598
      %p600 = scmp.ne.s32.totalorder %s592, %s594
      %p601 = scmp.eq.s32.totalorder %s127, 1
      %p602 = por %p600, %p601
      %p603 = scmp.ne.s32.totalorder %s594, %s595
      %p604 = scmp.eq.s32.totalorder %s127, 0
      %p605 = por %p603, %p604
      %p606 = scmp.ne.s32.totalorder %s594, %s595
      %p607 = scmp.eq.s32.totalorder %s128, 1
      %p608 = por %p606, %p607
      %p610 = scmp.ne.s32.totalorder %s595, %s609
      %p611 = scmp.eq.s32.totalorder %s128, 0
      %p612 = por %p610, %p611
      %s614 = sadd.s32 %s613, 1
      %p617 = scmp.eq.s32.totalorder %s122, 1
      %p618 = scmp.ne.s32.totalorder %s613, %s615
      %p619 = scmp.eq.s32.totalorder %s122, 0
      %p620 = por %p618, %p619
      %p621 = scmp.ne.s32.totalorder %s613, %s615
      %p622 = scmp.eq.s32.totalorder %s127, 1
      %p623 = por %p621, %p622
      %p624 = scmp.ne.s32.totalorder %s615, %s616
      %p625 = scmp.eq.s32.totalorder %s127, 0
      %p626 = por %p624, %p625
      %p627 = scmp.ne.s32.totalorder %s615, %s616
      %p628 = scmp.eq.s32.totalorder %s128, 1
      %p629 = por %p627, %p628
      %p631 = scmp.ne.s32.totalorder %s616, %s630
      %p632 = scmp.eq.s32.totalorder %s128, 0
      %p633 = por %p631, %p632
      %s635 = sadd.s32 %s634, 1
      %p638 = scmp.eq.s32.totalorder %s122, 1
      %p639 = scmp.ne.s32.totalorder %s634, %s636
      %p640 = scmp.eq.s32.totalorder %s122, 0
      %p641 = por %p639, %p640
      %p642 = scmp.ne.s32.totalorder %s634, %s636
      %p643 = scmp.eq.s32.totalorder %s127, 1
      %p644 = por %p642, %p643
      %p645 = scmp.ne.s32.totalorder %s636, %s637
      %p646 = scmp.eq.s32.totalorder %s127, 0
      %p647 = por %p645, %p646
      %p648 = scmp.ne.s32.totalorder %s636, %s637
      %p649 = scmp.eq.s32.totalorder %s128, 1
      %p650 = por %p648, %p649
      %p652 = scmp.ne.s32.totalorder %s637, %s651
      %p653 = scmp.eq.s32.totalorder %s128, 0
      %p654 = por %p652, %p653
      %s656 = sadd.s32 %s655, 1
      %p659 = scmp.eq.s32.totalorder %s122, 1
      %p660 = scmp.ne.s32.totalorder %s655, %s657
      %p661 = scmp.eq.s32.totalorder %s122, 0
      %p662 = por %p660, %p661
      %p663 = scmp.ne.s32.totalorder %s655, %s657
      %p664 = scmp.eq.s32.totalorder %s127, 1
      %p665 = por %p663, %p664
      %p666 = scmp.ne.s32.totalorder %s657, %s658
      %p667 = scmp.eq.s32.totalorder %s127, 0
      %p668 = por %p666, %p667
      %p669 = scmp.ne.s32.totalorder %s657, %s658
      %p670 = scmp.eq.s32.totalorder %s128, 1
      %p671 = por %p669, %p670
      %p673 = scmp.ne.s32.totalorder %s658, %s672
      %p674 = scmp.eq.s32.totalorder %s128, 0
      %p675 = por %p673, %p674
      %s677 = sadd.s32 %s676, 1
      %p680 = scmp.eq.s32.totalorder %s122, 1
      %p681 = scmp.ne.s32.totalorder %s676, %s678
      %p682 = scmp.eq.s32.totalorder %s122, 0
      %p683 = por %p681, %p682
      %p684 = scmp.ne.s32.totalorder %s676, %s678
      %p685 = scmp.eq.s32.totalorder %s127, 1
      %p686 = por %p684, %p685
      %p687 = scmp.ne.s32.totalorder %s678, %s679
      %p688 = scmp.eq.s32.totalorder %s127, 0
      %p689 = por %p687, %p688
      %p690 = scmp.ne.s32.totalorder %s678, %s679
      %p691 = scmp.eq.s32.totalorder %s128, 1
      %p692 = por %p690, %p691
      %p694 = scmp.ne.s32.totalorder %s679, %s693
      %p695 = scmp.eq.s32.totalorder %s128, 0
      %p696 = por %p694, %p695
      %s698 = sadd.s32 %s697, 1
      %p701 = scmp.eq.s32.totalorder %s122, 1
      %p702 = scmp.ne.s32.totalorder %s697, %s699
      %p703 = scmp.eq.s32.totalorder %s122, 0
      %p704 = por %p702, %p703
      %p705 = scmp.ne.s32.totalorder %s697, %s699
      %p706 = scmp.eq.s32.totalorder %s127, 1
      %p707 = por %p705, %p706
      %p708 = scmp.ne.s32.totalorder %s699, %s700
      %p709 = scmp.eq.s32.totalorder %s127, 0
      %p710 = por %p708, %p709
      %p711 = scmp.ne.s32.totalorder %s699, %s700
      %p712 = scmp.eq.s32.totalorder %s128, 1
      %p713 = por %p711, %p712
      %p715 = scmp.ne.s32.totalorder %s700, %s714
      %p716 = scmp.eq.s32.totalorder %s128, 0
      %p717 = por %p715, %p716
      %s719 = sadd.s32 %s718, 1
      %p722 = scmp.eq.s32.totalorder %s122, 1
      %p723 = scmp.ne.s32.totalorder %s718, %s720
      %p724 = scmp.eq.s32.totalorder %s122, 0
      %p725 = por %p723, %p724
      %p726 = scmp.ne.s32.totalorder %s718, %s720
      %p727 = scmp.eq.s32.totalorder %s127, 1
      %p728 = por %p726, %p727
      %p729 = scmp.ne.s32.totalorder %s720, %s721
      %p730 = scmp.eq.s32.totalorder %s127, 0
      %p731 = por %p729, %p730
      %p732 = scmp.ne.s32.totalorder %s720, %s721
      %p733 = scmp.eq.s32.totalorder %s128, 1
      %p734 = por %p732, %p733
      %p736 = scmp.ne.s32.totalorder %s721, %s735
      %p737 = scmp.eq.s32.totalorder %s128, 0
      %p738 = por %p736, %p737
      %s740 = sadd.s32 %s739, 1
      %p743 = scmp.eq.s32.totalorder %s122, 1
      %p744 = scmp.ne.s32.totalorder %s739, %s741
      %p745 = scmp.eq.s32.totalorder %s122, 0
      %p746 = por %p744, %p745
      %p747 = scmp.ne.s32.totalorder %s739, %s741
      %p748 = scmp.eq.s32.totalorder %s127, 1
      %p749 = por %p747, %p748
      %p750 = scmp.ne.s32.totalorder %s741, %s742
      %p751 = scmp.eq.s32.totalorder %s127, 0
      %p752 = por %p750, %p751
      %p753 = scmp.ne.s32.totalorder %s741, %s742
      %p754 = scmp.eq.s32.totalorder %s128, 1
      %p755 = por %p753, %p754
      %p757 = scmp.ne.s32.totalorder %s742, %s756
      %p758 = scmp.eq.s32.totalorder %s128, 0
      %p759 = por %p757, %p758
      %s761 = sadd.s32 %s760, 1
      %p764 = scmp.eq.s32.totalorder %s122, 1
      %p765 = scmp.ne.s32.totalorder %s760, %s762
      %p766 = scmp.eq.s32.totalorder %s122, 0
      %p767 = por %p765, %p766
      %p768 = scmp.ne.s32.totalorder %s760, %s762
      %p769 = scmp.eq.s32.totalorder %s127, 1
      %p770 = por %p768, %p769
      %p771 = scmp.ne.s32.totalorder %s762, %s763
      %p772 = scmp.eq.s32.totalorder %s127, 0
      %p773 = por %p771, %p772
      %p774 = scmp.ne.s32.totalorder %s762, %s763
      %p775 = scmp.eq.s32.totalorder %s128, 1
      %p776 = por %p774, %p775
      %p778 = scmp.ne.s32.totalorder %s763, %s777
      %p779 = scmp.eq.s32.totalorder %s128, 0
      %p780 = por %p778, %p779
      %s782 = sadd.s32 %s781, 1
      %p785 = scmp.eq.s32.totalorder %s122, 1
      %p786 = scmp.ne.s32.totalorder %s781, %s783
      %p787 = scmp.eq.s32.totalorder %s122, 0
      %p788 = por %p786, %p787
      %p789 = scmp.ne.s32.totalorder %s781, %s783
      %p790 = scmp.eq.s32.totalorder %s127, 1
      %p791 = por %p789, %p790
      %p792 = scmp.ne.s32.totalorder %s783, %s784
      %p793 = scmp.eq.s32.totalorder %s127, 0
      %p794 = por %p792, %p793
      %p795 = scmp.ne.s32.totalorder %s783, %s784
      %p796 = scmp.eq.s32.totalorder %s128, 1
      %p797 = por %p795, %p796
      %p799 = scmp.ne.s32.totalorder %s784, %s798
      %p800 = scmp.eq.s32.totalorder %s128, 0
      %p801 = por %p799, %p800
      %s803 = sadd.s32 %s802, 1
      %p806 = scmp.eq.s32.totalorder %s122, 1
      %p807 = scmp.ne.s32.totalorder %s802, %s804
      %p808 = scmp.eq.s32.totalorder %s122, 0
      %p809 = por %p807, %p808
      %p810 = scmp.ne.s32.totalorder %s802, %s804
      %p811 = scmp.eq.s32.totalorder %s127, 1
      %p812 = por %p810, %p811
      %p813 = scmp.ne.s32.totalorder %s804, %s805
      %p814 = scmp.eq.s32.totalorder %s127, 0
      %p815 = por %p813, %p814
      %p816 = scmp.ne.s32.totalorder %s804, %s805
      %p817 = scmp.eq.s32.totalorder %s128, 1
      %p818 = por %p816, %p817
      %p820 = scmp.ne.s32.totalorder %s805, %s819
      %p821 = scmp.eq.s32.totalorder %s128, 0
      %p822 = por %p820, %p821
      %s824 = sadd.s32 %s823, 1
      %p827 = scmp.eq.s32.totalorder %s122, 1
      %p828 = scmp.ne.s32.totalorder %s823, %s825
      %p829 = scmp.eq.s32.totalorder %s122, 0
      %p830 = por %p828, %p829
      %p831 = scmp.ne.s32.totalorder %s823, %s825
      %p832 = scmp.eq.s32.totalorder %s127, 1
      %p833 = por %p831, %p832
      %p834 = scmp.ne.s32.totalorder %s825, %s826
      %p835 = scmp.eq.s32.totalorder %s127, 0
      %p836 = por %p834, %p835
      %p837 = scmp.ne.s32.totalorder %s825, %s826
      %p838 = scmp.eq.s32.totalorder %s128, 1
      %p839 = por %p837, %p838
      %p841 = scmp.ne.s32.totalorder %s826, %s840
      %p842 = scmp.eq.s32.totalorder %s128, 0
      %p843 = por %p841, %p842
      %s845 = sadd.s32 %s844, 1
      %p848 = scmp.eq.s32.totalorder %s122, 1
      %p849 = scmp.ne.s32.totalorder %s844, %s846
      %p850 = scmp.eq.s32.totalorder %s122, 0
      %p851 = por %p849, %p850
      %p852 = scmp.ne.s32.totalorder %s844, %s846
      %p853 = scmp.eq.s32.totalorder %s127, 1
      %p854 = por %p852, %p853
      %p855 = scmp.ne.s32.totalorder %s846, %s847
      %p856 = scmp.eq.s32.totalorder %s127, 0
      %p857 = por %p855, %p856
      %p858 = scmp.ne.s32.totalorder %s846, %s847
      %p859 = scmp.eq.s32.totalorder %s128, 1
      %p860 = por %p858, %p859
      %p862 = scmp.ne.s32.totalorder %s847, %s861
      %p863 = scmp.eq.s32.totalorder %s128, 0
      %p864 = por %p862, %p863
      %s866 = sadd.s32 %s865, 1
      %p869 = scmp.eq.s32.totalorder %s122, 1
      %p870 = scmp.ne.s32.totalorder %s865, %s867
      %p871 = scmp.eq.s32.totalorder %s122, 0
      %p872 = por %p870, %p871
      %p873 = scmp.ne.s32.totalorder %s865, %s867
      %p874 = scmp.eq.s32.totalorder %s127, 1
      %p875 = por %p873, %p874
      %p876 = scmp.ne.s32.totalorder %s867, %s868
      %p877 = scmp.eq.s32.totalorder %s127, 0
      %p878 = por %p876, %p877
      %p879 = scmp.ne.s32.totalorder %s867, %s868
      %p880 = scmp.eq.s32.totalorder %s128, 1
      %p881 = por %p879, %p880
      %p883 = scmp.ne.s32.totalorder %s868, %s882
      %p884 = scmp.eq.s32.totalorder %s128, 0
      %p885 = por %p883, %p884
      %s887 = sadd.s32 %s886, 1
      %p890 = scmp.eq.s32.totalorder %s122, 1
      %p891 = scmp.ne.s32.totalorder %s886, %s888
      %p892 = scmp.eq.s32.totalorder %s122, 0
      %p893 = por %p891, %p892
      %p894 = scmp.ne.s32.totalorder %s886, %s888
      %p895 = scmp.eq.s32.totalorder %s127, 1
      %p896 = por %p894, %p895
      %p897 = scmp.ne.s32.totalorder %s888, %s889
      %p898 = scmp.eq.s32.totalorder %s127, 0
      %p899 = por %p897, %p898
      %p900 = scmp.ne.s32.totalorder %s888, %s889
      %p901 = scmp.eq.s32.totalorder %s128, 1
      %p902 = por %p900, %p901
      %p904 = scmp.ne.s32.totalorder %s889, %s903
      %p905 = scmp.eq.s32.totalorder %s128, 0
      %p906 = por %p904, %p905
      %s908 = sadd.s32 %s907, 1
      %p911 = scmp.eq.s32.totalorder %s122, 1
      %p912 = scmp.ne.s32.totalorder %s907, %s909
      %p913 = scmp.eq.s32.totalorder %s122, 0
      %p914 = por %p912, %p913
      %p915 = scmp.ne.s32.totalorder %s907, %s909
      %p916 = scmp.eq.s32.totalorder %s127, 1
      %p917 = por %p915, %p916
      %p918 = scmp.ne.s32.totalorder %s909, %s910
      %p919 = scmp.eq.s32.totalorder %s127, 0
      %p920 = por %p918, %p919
      %p921 = scmp.ne.s32.totalorder %s909, %s910
      %p922 = scmp.eq.s32.totalorder %s128, 1
      %p923 = por %p921, %p922
      %p925 = scmp.ne.s32.totalorder %s910, %s924
      %p926 = scmp.eq.s32.totalorder %s128, 0
      %p927 = por %p925, %p926
      %s929 = sadd.s32 %s928, 1
      %p932 = scmp.eq.s32.totalorder %s122, 1
      %p933 = scmp.ne.s32.totalorder %s928, %s930
      %p934 = scmp.eq.s32.totalorder %s122, 0
      %p935 = por %p933, %p934
      %p936 = scmp.ne.s32.totalorder %s928, %s930
      %p937 = scmp.eq.s32.totalorder %s127, 1
      %p938 = por %p936, %p937
      %p939 = scmp.ne.s32.totalorder %s930, %s931
      %p940 = scmp.eq.s32.totalorder %s127, 0
      %p941 = por %p939, %p940
      %p942 = scmp.ne.s32.totalorder %s930, %s931
      %p943 = scmp.eq.s32.totalorder %s128, 1
      %p944 = por %p942, %p943
      %p946 = scmp.ne.s32.totalorder %s931, %s945
      %p947 = scmp.eq.s32.totalorder %s128, 0
      %p948 = por %p946, %p947
      %s950 = sadd.s32 %s949, 1
      %p953 = scmp.eq.s32.totalorder %s122, 1
      %p954 = scmp.ne.s32.totalorder %s949, %s951
      %p955 = scmp.eq.s32.totalorder %s122, 0
      %p956 = por %p954, %p955
      %p957 = scmp.ne.s32.totalorder %s949, %s951
      %p958 = scmp.eq.s32.totalorder %s127, 1
      %p959 = por %p957, %p958
      %p960 = scmp.ne.s32.totalorder %s951, %s952
      %p961 = scmp.eq.s32.totalorder %s127, 0
      %p962 = por %p960, %p961
      %p963 = scmp.ne.s32.totalorder %s951, %s952
      %p964 = scmp.eq.s32.totalorder %s128, 1
      %p965 = por %p963, %p964
      %p967 = scmp.ne.s32.totalorder %s952, %s966
      %p968 = scmp.eq.s32.totalorder %s128, 0
      %p969 = por %p967, %p968
      %s971 = sadd.s32 %s970, 1
      %p974 = scmp.eq.s32.totalorder %s122, 1
      %p975 = scmp.ne.s32.totalorder %s970, %s972
      %p976 = scmp.eq.s32.totalorder %s122, 0
      %p977 = por %p975, %p976
      %p978 = scmp.ne.s32.totalorder %s970, %s972
      %p979 = scmp.eq.s32.totalorder %s127, 1
      %p980 = por %p978, %p979
      %p981 = scmp.ne.s32.totalorder %s972, %s973
      %p982 = scmp.eq.s32.totalorder %s127, 0
      %p983 = por %p981, %p982
      %p984 = scmp.ne.s32.totalorder %s972, %s973
      %p985 = scmp.eq.s32.totalorder %s128, 1
      %p986 = por %p984, %p985
      %p988 = scmp.ne.s32.totalorder %s973, %s987
      %p989 = scmp.eq.s32.totalorder %s128, 0
      %p990 = por %p988, %p989
      %s992 = sadd.s32 %s991, 1
      %p995 = scmp.eq.s32.totalorder %s122, 1
      %p996 = scmp.ne.s32.totalorder %s991, %s993
      %p997 = scmp.eq.s32.totalorder %s122, 0
      %p998 = por %p996, %p997
      %p999 = scmp.ne.s32.totalorder %s991, %s993
      %p1000 = scmp.eq.s32.totalorder %s127, 1
      %p1001 = por %p999, %p1000
      %p1002 = scmp.ne.s32.totalorder %s993, %s994
      %p1003 = scmp.eq.s32.totalorder %s127, 0
      %p1004 = por %p1002, %p1003
      %p1005 = scmp.ne.s32.totalorder %s993, %s994
      %p1006 = scmp.eq.s32.totalorder %s128, 1
      %p1007 = por %p1005, %p1006
      %p1009 = scmp.ne.s32.totalorder %s994, %s1008
      %p1010 = scmp.eq.s32.totalorder %s128, 0
      %p1011 = por %p1009, %p1010
      %s1013 = sadd.s32 %s1012, 1
      %p1016 = scmp.eq.s32.totalorder %s122, 1
      %p1017 = scmp.ne.s32.totalorder %s1012, %s1014
      %p1018 = scmp.eq.s32.totalorder %s122, 0
      %p1019 = por %p1017, %p1018
      %p1020 = scmp.ne.s32.totalorder %s1012, %s1014
      %p1021 = scmp.eq.s32.totalorder %s127, 1
      %p1022 = por %p1020, %p1021
      %p1023 = scmp.ne.s32.totalorder %s1014, %s1015
      %p1024 = scmp.eq.s32.totalorder %s127, 0
      %p1025 = por %p1023, %p1024
      %p1026 = scmp.ne.s32.totalorder %s1014, %s1015
      %p1027 = scmp.eq.s32.totalorder %s128, 1
      %p1028 = por %p1026, %p1027
      %p1030 = scmp.ne.s32.totalorder %s1015, %s1029
      %p1031 = scmp.eq.s32.totalorder %s128, 0
      %p1032 = por %p1030, %p1031
      %s1034 = sadd.s32 %s1033, 1
      %p1037 = scmp.eq.s32.totalorder %s122, 1
      %p1038 = scmp.ne.s32.totalorder %s1033, %s1035
      %p1039 = scmp.eq.s32.totalorder %s122, 0
      %p1040 = por %p1038, %p1039
      %p1041 = scmp.ne.s32.totalorder %s1033, %s1035
      %p1042 = scmp.eq.s32.totalorder %s127, 1
      %p1043 = por %p1041, %p1042
      %p1044 = scmp.ne.s32.totalorder %s1035, %s1036
      %p1045 = scmp.eq.s32.totalorder %s127, 0
      %p1046 = por %p1044, %p1045
      %p1047 = scmp.ne.s32.totalorder %s1035, %s1036
      %p1048 = scmp.eq.s32.totalorder %s128, 1
      %p1049 = por %p1047, %p1048
      %p1051 = scmp.ne.s32.totalorder %s1036, %s1050
      %p1052 = scmp.eq.s32.totalorder %s128, 0
      %p1053 = por %p1051, %p1052
      %s1055 = sadd.s32 %s1054, 1
      %p1058 = scmp.eq.s32.totalorder %s122, 1
      %p1059 = scmp.ne.s32.totalorder %s1054, %s1056
      %p1060 = scmp.eq.s32.totalorder %s122, 0
      %p1061 = por %p1059, %p1060
      %p1062 = scmp.ne.s32.totalorder %s1054, %s1056
      %p1063 = scmp.eq.s32.totalorder %s127, 1
      %p1064 = por %p1062, %p1063
      %p1065 = scmp.ne.s32.totalorder %s1056, %s1057
      %p1066 = scmp.eq.s32.totalorder %s127, 0
      %p1067 = por %p1065, %p1066
      %p1068 = scmp.ne.s32.totalorder %s1056, %s1057
      %p1069 = scmp.eq.s32.totalorder %s128, 1
      %p1070 = por %p1068, %p1069
      %p1072 = scmp.ne.s32.totalorder %s1057, %s1071
      %p1073 = scmp.eq.s32.totalorder %s128, 0
      %p1074 = por %p1072, %p1073
      %s1076 = sadd.s32 %s1075, 1
      %p1079 = scmp.eq.s32.totalorder %s122, 1
      %p1080 = scmp.ne.s32.totalorder %s1075, %s1077
      %p1081 = scmp.eq.s32.totalorder %s122, 0
      %p1082 = por %p1080, %p1081
      %p1083 = scmp.ne.s32.totalorder %s1075, %s1077
      %p1084 = scmp.eq.s32.totalorder %s127, 1
      %p1085 = por %p1083, %p1084
      %p1086 = scmp.ne.s32.totalorder %s1077, %s1078
      %p1087 = scmp.eq.s32.totalorder %s127, 0
      %p1088 = por %p1086, %p1087
      %p1089 = scmp.ne.s32.totalorder %s1077, %s1078
      %p1090 = scmp.eq.s32.totalorder %s128, 1
      %p1091 = por %p1089, %p1090
      %p1093 = scmp.ne.s32.totalorder %s1078, %s1092
      %p1094 = scmp.eq.s32.totalorder %s128, 0
      %p1095 = por %p1093, %p1094
      %s1097 = sadd.s32 %s1096, 1
      %p1100 = scmp.eq.s32.totalorder %s122, 1
      %p1101 = scmp.ne.s32.totalorder %s1096, %s1098
      %p1102 = scmp.eq.s32.totalorder %s122, 0
      %p1103 = por %p1101, %p1102
      %p1104 = scmp.ne.s32.totalorder %s1096, %s1098
      %p1105 = scmp.eq.s32.totalorder %s127, 1
      %p1106 = por %p1104, %p1105
      %p1107 = scmp.ne.s32.totalorder %s1098, %s1099
      %p1108 = scmp.eq.s32.totalorder %s127, 0
      %p1109 = por %p1107, %p1108
      %p1110 = scmp.ne.s32.totalorder %s1098, %s1099
      %p1111 = scmp.eq.s32.totalorder %s128, 1
      %p1112 = por %p1110, %p1111
      %p1114 = scmp.ne.s32.totalorder %s1099, %s1113
      %p1115 = scmp.eq.s32.totalorder %s128, 0
      %p1116 = por %p1114, %p1115
      %s1118 = sadd.s32 %s1117, 1
      %p1121 = scmp.eq.s32.totalorder %s122, 1
      %p1122 = scmp.ne.s32.totalorder %s1117, %s1119
      %p1123 = scmp.eq.s32.totalorder %s122, 0
      %p1124 = por %p1122, %p1123
      %p1125 = scmp.ne.s32.totalorder %s1117, %s1119
      %p1126 = scmp.eq.s32.totalorder %s127, 1
      %p1127 = por %p1125, %p1126
      %p1128 = scmp.ne.s32.totalorder %s1119, %s1120
      %p1129 = scmp.eq.s32.totalorder %s127, 0
      %p1130 = por %p1128, %p1129
      %p1131 = scmp.ne.s32.totalorder %s1119, %s1120
      %p1132 = scmp.eq.s32.totalorder %s128, 1
      %p1133 = por %p1131, %p1132
      %p1135 = scmp.ne.s32.totalorder %s1120, %s1134
      %p1136 = scmp.eq.s32.totalorder %s128, 0
      %p1137 = por %p1135, %p1136
      %s1139 = sadd.s32 %s1138, 1
      %p1142 = scmp.eq.s32.totalorder %s122, 1
      %p1143 = scmp.ne.s32.totalorder %s1138, %s1140
      %p1144 = scmp.eq.s32.totalorder %s122, 0
      %p1145 = por %p1143, %p1144
      %p1146 = scmp.ne.s32.totalorder %s1138, %s1140
      %p1147 = scmp.eq.s32.totalorder %s127, 1
      %p1148 = por %p1146, %p1147
      %p1149 = scmp.ne.s32.totalorder %s1140, %s1141
      %p1150 = scmp.eq.s32.totalorder %s127, 0
      %p1151 = por %p1149, %p1150
      %p1152 = scmp.ne.s32.totalorder %s1140, %s1141
      %p1153 = scmp.eq.s32.totalorder %s128, 1
      %p1154 = por %p1152, %p1153
      %p1156 = scmp.ne.s32.totalorder %s1141, %s1155
      %p1157 = scmp.eq.s32.totalorder %s128, 0
      %p1158 = por %p1156, %p1157
      %s1160 = sadd.s32 %s1159, 1
      %p1163 = scmp.eq.s32.totalorder %s122, 1
      %p1164 = scmp.ne.s32.totalorder %s1159, %s1161
      %p1165 = scmp.eq.s32.totalorder %s122, 0
      %p1166 = por %p1164, %p1165
      %p1167 = scmp.ne.s32.totalorder %s1159, %s1161
      %p1168 = scmp.eq.s32.totalorder %s127, 1
      %p1169 = por %p1167, %p1168
      %p1170 = scmp.ne.s32.totalorder %s1161, %s1162
      %p1171 = scmp.eq.s32.totalorder %s127, 0
      %p1172 = por %p1170, %p1171
      %p1173 = scmp.ne.s32.totalorder %s1161, %s1162
      %p1174 = scmp.eq.s32.totalorder %s128, 1
      %p1175 = por %p1173, %p1174
      %p1177 = scmp.ne.s32.totalorder %s1162, %s1176
      %p1178 = scmp.eq.s32.totalorder %s128, 0
      %p1179 = por %p1177, %p1178
      %s1181 = sadd.s32 %s1180, 1
      %p1184 = scmp.eq.s32.totalorder %s122, 1
      %p1185 = scmp.ne.s32.totalorder %s1180, %s1182
      %p1186 = scmp.eq.s32.totalorder %s122, 0
      %p1187 = por %p1185, %p1186
      %p1188 = scmp.ne.s32.totalorder %s1180, %s1182
      %p1189 = scmp.eq.s32.totalorder %s127, 1
      %p1190 = por %p1188, %p1189
      %p1191 = scmp.ne.s32.totalorder %s1182, %s1183
      %p1192 = scmp.eq.s32.totalorder %s127, 0
      %p1193 = por %p1191, %p1192
      %p1194 = scmp.ne.s32.totalorder %s1182, %s1183
      %p1195 = scmp.eq.s32.totalorder %s128, 1
      %p1196 = por %p1194, %p1195
      %p1198 = scmp.ne.s32.totalorder %s1183, %s1197
      %p1199 = scmp.eq.s32.totalorder %s128, 0
      %p1200 = por %p1198, %p1199
      %s1201 = ssub.s32 %s122, %s129
      %p1202 = scmp.eq.s32.totalorder %s1201, 0
      %s1204 = sadd.s32 %s1203, 1
      %s1205 = scalar_select %p1202, %s1203, %s1204
      %p1208 = pneg %p1202
      %p1209 = scmp.eq.s32.totalorder %s122, 1
      %p1210 = por %p1208, %p1209
      %p1211 = scmp.ne.s32.totalorder %s1203, %s1206
      %p1212 = scmp.eq.s32.totalorder %s122, 0
      %p1213 = por %p1211, %p1212
      %p1214 = scmp.ne.s32.totalorder %s1203, %s1206
      %p1215 = scmp.eq.s32.totalorder %s127, 1
      %p1216 = por %p1214, %p1215
      %p1217 = scmp.ne.s32.totalorder %s1206, %s1207
      %p1218 = scmp.eq.s32.totalorder %s127, 0
      %p1219 = por %p1217, %p1218
      %p1220 = scmp.ne.s32.totalorder %s1206, %s1207
      %p1221 = scmp.eq.s32.totalorder %s128, 1
      %p1222 = por %p1220, %p1221
      %p1224 = scmp.ne.s32.totalorder %s1207, %s1223
      %p1225 = scmp.eq.s32.totalorder %s128, 0
      %p1226 = por %p1224, %p1225
      %s1228 = sadd.s32 %s1227, 1
      %p1231 = scmp.eq.s32.totalorder %s122, 1
      %p1232 = scmp.ne.s32.totalorder %s1227, %s1229
      %p1233 = scmp.eq.s32.totalorder %s122, 0
      %p1234 = por %p1232, %p1233
      %p1235 = scmp.ne.s32.totalorder %s1227, %s1229
      %p1236 = scmp.eq.s32.totalorder %s127, 1
      %p1237 = por %p1235, %p1236
      %p1238 = scmp.ne.s32.totalorder %s1229, %s1230
      %p1239 = scmp.eq.s32.totalorder %s127, 0
      %p1240 = por %p1238, %p1239
      %p1241 = scmp.ne.s32.totalorder %s1229, %s1230
      %p1242 = scmp.eq.s32.totalorder %s128, 1
      %p1243 = por %p1241, %p1242
      %p1245 = scmp.ne.s32.totalorder %s1230, %s1244
      %p1246 = scmp.eq.s32.totalorder %s128, 0
      %p1247 = por %p1245, %p1246
      %s1249 = sadd.s32 %s1248, 1
      %p1252 = scmp.eq.s32.totalorder %s122, 1
      %p1253 = scmp.ne.s32.totalorder %s1248, %s1250
      %p1254 = scmp.eq.s32.totalorder %s122, 0
      %p1255 = por %p1253, %p1254
      %p1256 = scmp.ne.s32.totalorder %s1248, %s1250
      %p1257 = scmp.eq.s32.totalorder %s127, 1
      %p1258 = por %p1256, %p1257
      %p1259 = scmp.ne.s32.totalorder %s1250, %s1251
      %p1260 = scmp.eq.s32.totalorder %s127, 0
      %p1261 = por %p1259, %p1260
      %p1262 = scmp.ne.s32.totalorder %s1250, %s1251
      %p1263 = scmp.eq.s32.totalorder %s128, 1
      %p1264 = por %p1262, %p1263
      %p1266 = scmp.ne.s32.totalorder %s1251, %s1265
      %p1267 = scmp.eq.s32.totalorder %s128, 0
      %p1268 = por %p1266, %p1267
      %s1270 = sadd.s32 %s1269, 1
      %p1273 = scmp.eq.s32.totalorder %s122, 1
      %p1274 = scmp.ne.s32.totalorder %s1269, %s1271
      %p1275 = scmp.eq.s32.totalorder %s122, 0
      %p1276 = por %p1274, %p1275
      %p1277 = scmp.ne.s32.totalorder %s1269, %s1271
      %p1278 = scmp.eq.s32.totalorder %s127, 1
      %p1279 = por %p1277, %p1278
      %p1280 = scmp.ne.s32.totalorder %s1271, %s1272
      %p1281 = scmp.eq.s32.totalorder %s127, 0
      %p1282 = por %p1280, %p1281
      %p1283 = scmp.ne.s32.totalorder %s1271, %s1272
      %p1284 = scmp.eq.s32.totalorder %s128, 1
      %p1285 = por %p1283, %p1284
      %p1287 = scmp.ne.s32.totalorder %s1272, %s1286
      %p1288 = scmp.eq.s32.totalorder %s128, 0
      %p1289 = por %p1287, %p1288
      %p1290 = scmp.le.s32.totalorder 1, %s122
      %p1291 = scmp.lt.s32.totalorder %s122, 3
      %p1292 = pnand %p1290, %p1291
      %p1293 = pneg %p1292
      // Predicated region
      $region9: #{iterative_refiner_forward.1} parent=5 // pred_check
        _
      $region10: #{iterative_refiner_forward.1} parent=5 // pred_check_branch
        %1295 = sbr.rel (%p1292) target = $region12
      $region11: #{iterative_refiner_forward.1} parent=5 // pred_region
        %s1296 = ssub.s32 %s122, 1
        // Predicated region
        $region13: #{iterative_refiner_forward.1} parent=11 // pred_check
          %p1297 = pneg %p143
        $region14: #{iterative_refiner_forward.1} parent=11 // pred_check_branch
          %1299 = sbr.rel (%p1297) target = $region16
        $region15: #{iterative_refiner_forward.1} parent=11 // pred_region
          _
        $region16: #{iterative_refiner_forward.1} parent=11 // pred_fallthru
          _
        // Predicated region
        $region17: #{iterative_refiner_forward.1} parent=11 // pred_check
          %p1300 = pneg %p164
        $region18: #{iterative_refiner_forward.1} parent=11 // pred_check_branch
          %1302 = sbr.rel (%p1300) target = $region20
        $region19: #{iterative_refiner_forward.1} parent=11 // pred_region
          _
        $region20: #{iterative_refiner_forward.1} parent=11 // pred_fallthru
          _
        // Predicated region
        $region21: #{iterative_refiner_forward.1} parent=11 // pred_check
          %p1303 = pneg %p185
        $region22: #{iterative_refiner_forward.1} parent=11 // pred_check_branch
          %1305 = sbr.rel (%p1303) target = $region24
        $region23: #{iterative_refiner_forward.1} parent=11 // pred_region
          _
        $region24: #{iterative_refiner_forward.1} parent=11 // pred_fallthru
          _
        // Predicated region
        $region25: #{iterative_refiner_forward.1} parent=11 // pred_check
          %p1306 = pneg %p206
        $region26: #{iterative_refiner_forward.1} parent=11 // pred_check_branch
          %1308 = sbr.rel (%p1306) target = $region28
        $region27: #{iterative_refiner_forward.1} parent=11 // pred_region
          _
        $region28: #{iterative_refiner_forward.1} parent=11 // pred_fallthru
          _
        // Predicated region
        $region29: #{iterative_refiner_forward.1} parent=11 // pred_check
          %p1309 = pneg %p227
        $region30: #{iterative_refiner_forward.1} parent=11 // pred_check_branch
          %1311 = sbr.rel (%p1309) target = $region32
        $region31: #{iterative_refiner_forward.1} parent=11 // pred_region
          _
        $region32: #{iterative_refiner_forward.1} parent=11 // pred_fallthru
          _
        // Predicated region
        $region33: #{iterative_refiner_forward.1} parent=11 // pred_check
          %p1312 = pneg %p248
        $region34: #{iterative_refiner_forward.1} parent=11 // pred_check_branch
          %1314 = sbr.rel (%p1312) target = $region36
        $region35: #{iterative_refiner_forward.1} parent=11 // pred_region
          _
        $region36: #{iterative_refiner_forward.1} parent=11 // pred_fallthru
          _
        // Predicated region
        $region37: #{iterative_refiner_forward.1} parent=11 // pred_check
          %p1315 = pneg %p269
        $region38: #{iterative_refiner_forward.1} parent=11 // pred_check_branch
          %1317 = sbr.rel (%p1315) target = $region40
        $region39: #{iterative_refiner_forward.1} parent=11 // pred_region
          _
        $region40: #{iterative_refiner_forward.1} parent=11 // pred_fallthru
          _
        // Predicated region
        $region41: #{iterative_refiner_forward.1} parent=11 // pred_check
          %p1318 = pneg %p290
        $region42: #{iterative_refiner_forward.1} parent=11 // pred_check_branch
          %1320 = sbr.rel (%p1318) target = $region44
        $region43: #{iterative_refiner_forward.1} parent=11 // pred_region
          _
        $region44: #{iterative_refiner_forward.1} parent=11 // pred_fallthru
          _
        // Predicated region
        $region45: #{iterative_refiner_forward.1} parent=11 // pred_check
          %p1321 = pneg %p311
        $region46: #{iterative_refiner_forward.1} parent=11 // pred_check_branch
          %1323 = sbr.rel (%p1321) target = $region48
        $region47: #{iterative_refiner_forward.1} parent=11 // pred_region
          _
        $region48: #{iterative_refiner_forward.1} parent=11 // pred_fallthru
          _
        // Predicated region
        $region49: #{iterative_refiner_forward.1} parent=11 // pred_check
          %p1324 = pneg %p332
        $region50: #{iterative_refiner_forward.1} parent=11 // pred_check_branch
          %1326 = sbr.rel (%p1324) target = $region52
        $region51: #{iterative_refiner_forward.1} parent=11 // pred_region
          _
        $region52: #{iterative_refiner_forward.1} parent=11 // pred_fallthru
          _
        // Predicated region
        $region53: #{iterative_refiner_forward.1} parent=11 // pred_check
          %p1327 = pneg %p353
        $region54: #{iterative_refiner_forward.1} parent=11 // pred_check_branch
          %1329 = sbr.rel (%p1327) target = $region56
        $region55: #{iterative_refiner_forward.1} parent=11 // pred_region
          _
        $region56: #{iterative_refiner_forward.1} parent=11 // pred_fallthru
          _
        // Predicated region
        $region57: #{iterative_refiner_forward.1} parent=11 // pred_check
          %p1330 = pneg %p374
        $region58: #{iterative_refiner_forward.1} parent=11 // pred_check_branch
          %1332 = sbr.rel (%p1330) target = $region60
        $region59: #{iterative_refiner_forward.1} parent=11 // pred_region
          _
        $region60: #{iterative_refiner_forward.1} parent=11 // pred_fallthru
          _
        // Predicated region
        $region61: #{iterative_refiner_forward.1} parent=11 // pred_check
          %p1333 = pneg %p395
        $region62: #{iterative_refiner_forward.1} parent=11 // pred_check_branch
          %1335 = sbr.rel (%p1333) target = $region64
        $region63: #{iterative_refiner_forward.1} parent=11 // pred_region
          _
        $region64: #{iterative_refiner_forward.1} parent=11 // pred_fallthru
          _
        // Predicated region
        $region65: #{iterative_refiner_forward.1} parent=11 // pred_check
          %p1336 = pneg %p416
        $region66: #{iterative_refiner_forward.1} parent=11 // pred_check_branch
          %1338 = sbr.rel (%p1336) target = $region68
        $region67: #{iterative_refiner_forward.1} parent=11 // pred_region
          _
        $region68: #{iterative_refiner_forward.1} parent=11 // pred_fallthru
          _
        // Predicated region
        $region69: #{iterative_refiner_forward.1} parent=11 // pred_check
          %p1339 = pneg %p437
        $region70: #{iterative_refiner_forward.1} parent=11 // pred_check_branch
          %1341 = sbr.rel (%p1339) target = $region72
        $region71: #{iterative_refiner_forward.1} parent=11 // pred_region
          _
        $region72: #{iterative_refiner_forward.1} parent=11 // pred_fallthru
          _
        // Predicated region
        $region73: #{iterative_refiner_forward.1} parent=11 // pred_check
          %p1342 = pneg %p458
        $region74: #{iterative_refiner_forward.1} parent=11 // pred_check_branch
          %1344 = sbr.rel (%p1342) target = $region76
        $region75: #{iterative_refiner_forward.1} parent=11 // pred_region
          _
        $region76: #{iterative_refiner_forward.1} parent=11 // pred_fallthru
          _
        // Predicated region
        $region77: #{iterative_refiner_forward.1} parent=11 // pred_check
          %p1345 = pneg %p479
        $region78: #{iterative_refiner_forward.1} parent=11 // pred_check_branch
          %1347 = sbr.rel (%p1345) target = $region80
        $region79: #{iterative_refiner_forward.1} parent=11 // pred_region
          _
        $region80: #{iterative_refiner_forward.1} parent=11 // pred_fallthru
          _
        // Predicated region
        $region81: #{iterative_refiner_forward.1} parent=11 // pred_check
          %p1348 = pneg %p500
        $region82: #{iterative_refiner_forward.1} parent=11 // pred_check_branch
          %1350 = sbr.rel (%p1348) target = $region84
        $region83: #{iterative_refiner_forward.1} parent=11 // pred_region
          _
        $region84: #{iterative_refiner_forward.1} parent=11 // pred_fallthru
          _
        // Predicated region
        $region85: #{iterative_refiner_forward.1} parent=11 // pred_check
          %p1351 = pneg %p521
        $region86: #{iterative_refiner_forward.1} parent=11 // pred_check_branch
          %1353 = sbr.rel (%p1351) target = $region88
        $region87: #{iterative_refiner_forward.1} parent=11 // pred_region
          _
        $region88: #{iterative_refiner_forward.1} parent=11 // pred_fallthru
          _
        // Predicated region
        $region89: #{iterative_refiner_forward.1} parent=11 // pred_check
          %p1354 = pneg %p542
        $region90: #{iterative_refiner_forward.1} parent=11 // pred_check_branch
          %1356 = sbr.rel (%p1354) target = $region92
        $region91: #{iterative_refiner_forward.1} parent=11 // pred_region
          _
        $region92: #{iterative_refiner_forward.1} parent=11 // pred_fallthru
          _
        // Predicated region
        $region93: #{iterative_refiner_forward.1} parent=11 // pred_check
          %p1357 = pneg %p563
        $region94: #{iterative_refiner_forward.1} parent=11 // pred_check_branch
          %1359 = sbr.rel (%p1357) target = $region96
        $region95: #{iterative_refiner_forward.1} parent=11 // pred_region
          _
        $region96: #{iterative_refiner_forward.1} parent=11 // pred_fallthru
          _
        // Predicated region
        $region97: #{iterative_refiner_forward.1} parent=11 // pred_check
          %p1360 = pneg %p584
        $region98: #{iterative_refiner_forward.1} parent=11 // pred_check_branch
          %1362 = sbr.rel (%p1360) target = $region100
        $region99: #{iterative_refiner_forward.1} parent=11 // pred_region
          _
        $region100: #{iterative_refiner_forward.1} parent=11 // pred_fallthru
          _
        // Predicated region
        $region101: #{iterative_refiner_forward.1} parent=11 // pred_check
          %p1363 = pneg %p605
        $region102: #{iterative_refiner_forward.1} parent=11 // pred_check_branch
          %1365 = sbr.rel (%p1363) target = $region104
        $region103: #{iterative_refiner_forward.1} parent=11 // pred_region
          _
        $region104: #{iterative_refiner_forward.1} parent=11 // pred_fallthru
          _
        // Predicated region
        $region105: #{iterative_refiner_forward.1} parent=11 // pred_check
          %p1366 = pneg %p626
        $region106: #{iterative_refiner_forward.1} parent=11 // pred_check_branch
          %1368 = sbr.rel (%p1366) target = $region108
        $region107: #{iterative_refiner_forward.1} parent=11 // pred_region
          _
        $region108: #{iterative_refiner_forward.1} parent=11 // pred_fallthru
          _
        // Predicated region
        $region109: #{iterative_refiner_forward.1} parent=11 // pred_check
          %p1369 = pneg %p647
        $region110: #{iterative_refiner_forward.1} parent=11 // pred_check_branch
          %1371 = sbr.rel (%p1369) target = $region112
        $region111: #{iterative_refiner_forward.1} parent=11 // pred_region
          _
        $region112: #{iterative_refiner_forward.1} parent=11 // pred_fallthru
          _
        // Predicated region
        $region113: #{iterative_refiner_forward.1} parent=11 // pred_check
          %p1372 = pneg %p668
        $region114: #{iterative_refiner_forward.1} parent=11 // pred_check_branch
          %1374 = sbr.rel (%p1372) target = $region116
        $region115: #{iterative_refiner_forward.1} parent=11 // pred_region
          _
        $region116: #{iterative_refiner_forward.1} parent=11 // pred_fallthru
          _
        // Predicated region
        $region117: #{iterative_refiner_forward.1} parent=11 // pred_check
          %p1375 = pneg %p689
        $region118: #{iterative_refiner_forward.1} parent=11 // pred_check_branch
          %1377 = sbr.rel (%p1375) target = $region120
        $region119: #{iterative_refiner_forward.1} parent=11 // pred_region
          _
        $region120: #{iterative_refiner_forward.1} parent=11 // pred_fallthru
          _
        // Predicated region
        $region121: #{iterative_refiner_forward.1} parent=11 // pred_check
          %p1378 = pneg %p710
        $region122: #{iterative_refiner_forward.1} parent=11 // pred_check_branch
          %1380 = sbr.rel (%p1378) target = $region124
        $region123: #{iterative_refiner_forward.1} parent=11 // pred_region
          _
        $region124: #{iterative_refiner_forward.1} parent=11 // pred_fallthru
          _
        // Predicated region
        $region125: #{iterative_refiner_forward.1} parent=11 // pred_check
          %p1381 = pneg %p731
        $region126: #{iterative_refiner_forward.1} parent=11 // pred_check_branch
          %1383 = sbr.rel (%p1381) target = $region128
        $region127: #{iterative_refiner_forward.1} parent=11 // pred_region
          _
        $region128: #{iterative_refiner_forward.1} parent=11 // pred_fallthru
          _
        // Predicated region
        $region129: #{iterative_refiner_forward.1} parent=11 // pred_check
          %p1384 = pneg %p752
        $region130: #{iterative_refiner_forward.1} parent=11 // pred_check_branch
          %1386 = sbr.rel (%p1384) target = $region132
        $region131: #{iterative_refiner_forward.1} parent=11 // pred_region
          _
        $region132: #{iterative_refiner_forward.1} parent=11 // pred_fallthru
          _
        // Predicated region
        $region133: #{iterative_refiner_forward.1} parent=11 // pred_check
          %p1387 = pneg %p773
        $region134: #{iterative_refiner_forward.1} parent=11 // pred_check_branch
          %1389 = sbr.rel (%p1387) target = $region136
        $region135: #{iterative_refiner_forward.1} parent=11 // pred_region
          _
        $region136: #{iterative_refiner_forward.1} parent=11 // pred_fallthru
          _
        // Predicated region
        $region137: #{iterative_refiner_forward.1} parent=11 // pred_check
          %p1390 = pneg %p794
        $region138: #{iterative_refiner_forward.1} parent=11 // pred_check_branch
          %1392 = sbr.rel (%p1390) target = $region140
        $region139: #{iterative_refiner_forward.1} parent=11 // pred_region
          _
        $region140: #{iterative_refiner_forward.1} parent=11 // pred_fallthru
          _
        // Predicated region
        $region141: #{iterative_refiner_forward.1} parent=11 // pred_check
          %p1393 = pneg %p815
        $region142: #{iterative_refiner_forward.1} parent=11 // pred_check_branch
          %1395 = sbr.rel (%p1393) target = $region144
        $region143: #{iterative_refiner_forward.1} parent=11 // pred_region
          _
        $region144: #{iterative_refiner_forward.1} parent=11 // pred_fallthru
          _
        // Predicated region
        $region145: #{iterative_refiner_forward.1} parent=11 // pred_check
          %p1396 = pneg %p836
        $region146: #{iterative_refiner_forward.1} parent=11 // pred_check_branch
          %1398 = sbr.rel (%p1396) target = $region148
        $region147: #{iterative_refiner_forward.1} parent=11 // pred_region
          _
        $region148: #{iterative_refiner_forward.1} parent=11 // pred_fallthru
          _
        // Predicated region
        $region149: #{iterative_refiner_forward.1} parent=11 // pred_check
          %p1399 = pneg %p857
        $region150: #{iterative_refiner_forward.1} parent=11 // pred_check_branch
          %1401 = sbr.rel (%p1399) target = $region152
        $region151: #{iterative_refiner_forward.1} parent=11 // pred_region
          _
        $region152: #{iterative_refiner_forward.1} parent=11 // pred_fallthru
          _
        // Predicated region
        $region153: #{iterative_refiner_forward.1} parent=11 // pred_check
          %p1402 = pneg %p878
        $region154: #{iterative_refiner_forward.1} parent=11 // pred_check_branch
          %1404 = sbr.rel (%p1402) target = $region156
        $region155: #{iterative_refiner_forward.1} parent=11 // pred_region
          _
        $region156: #{iterative_refiner_forward.1} parent=11 // pred_fallthru
          _
        // Predicated region
        $region157: #{iterative_refiner_forward.1} parent=11 // pred_check
          %p1405 = pneg %p899
        $region158: #{iterative_refiner_forward.1} parent=11 // pred_check_branch
          %1407 = sbr.rel (%p1405) target = $region160
        $region159: #{iterative_refiner_forward.1} parent=11 // pred_region
          _
        $region160: #{iterative_refiner_forward.1} parent=11 // pred_fallthru
          _
        // Predicated region
        $region161: #{iterative_refiner_forward.1} parent=11 // pred_check
          %p1408 = pneg %p920
        $region162: #{iterative_refiner_forward.1} parent=11 // pred_check_branch
          %1410 = sbr.rel (%p1408) target = $region164
        $region163: #{iterative_refiner_forward.1} parent=11 // pred_region
          _
        $region164: #{iterative_refiner_forward.1} parent=11 // pred_fallthru
          _
        // Predicated region
        $region165: #{iterative_refiner_forward.1} parent=11 // pred_check
          %p1411 = pneg %p941
        $region166: #{iterative_refiner_forward.1} parent=11 // pred_check_branch
          %1413 = sbr.rel (%p1411) target = $region168
        $region167: #{iterative_refiner_forward.1} parent=11 // pred_region
          _
        $region168: #{iterative_refiner_forward.1} parent=11 // pred_fallthru
          _
        // Predicated region
        $region169: #{iterative_refiner_forward.1} parent=11 // pred_check
          %p1414 = pneg %p962
        $region170: #{iterative_refiner_forward.1} parent=11 // pred_check_branch
          %1416 = sbr.rel (%p1414) target = $region172
        $region171: #{iterative_refiner_forward.1} parent=11 // pred_region
          _
        $region172: #{iterative_refiner_forward.1} parent=11 // pred_fallthru
          _
        // Predicated region
        $region173: #{iterative_refiner_forward.1} parent=11 // pred_check
          %p1417 = pneg %p983
        $region174: #{iterative_refiner_forward.1} parent=11 // pred_check_branch
          %1419 = sbr.rel (%p1417) target = $region176
        $region175: #{iterative_refiner_forward.1} parent=11 // pred_region
          _
        $region176: #{iterative_refiner_forward.1} parent=11 // pred_fallthru
          _
        // Predicated region
        $region177: #{iterative_refiner_forward.1} parent=11 // pred_check
          %p1420 = pneg %p1004
        $region178: #{iterative_refiner_forward.1} parent=11 // pred_check_branch
          %1422 = sbr.rel (%p1420) target = $region180
        $region179: #{iterative_refiner_forward.1} parent=11 // pred_region
          _
        $region180: #{iterative_refiner_forward.1} parent=11 // pred_fallthru
          _
        // Predicated region
        $region181: #{iterative_refiner_forward.1} parent=11 // pred_check
          %p1423 = pneg %p1025
        $region182: #{iterative_refiner_forward.1} parent=11 // pred_check_branch
          %1425 = sbr.rel (%p1423) target = $region184
        $region183: #{iterative_refiner_forward.1} parent=11 // pred_region
          _
        $region184: #{iterative_refiner_forward.1} parent=11 // pred_fallthru
          _
        // Predicated region
        $region185: #{iterative_refiner_forward.1} parent=11 // pred_check
          %p1426 = pneg %p1046
        $region186: #{iterative_refiner_forward.1} parent=11 // pred_check_branch
          %1428 = sbr.rel (%p1426) target = $region188
        $region187: #{iterative_refiner_forward.1} parent=11 // pred_region
          _
        $region188: #{iterative_refiner_forward.1} parent=11 // pred_fallthru
          _
        // Predicated region
        $region189: #{iterative_refiner_forward.1} parent=11 // pred_check
          %p1429 = pneg %p1067
        $region190: #{iterative_refiner_forward.1} parent=11 // pred_check_branch
          %1431 = sbr.rel (%p1429) target = $region192
        $region191: #{iterative_refiner_forward.1} parent=11 // pred_region
          _
        $region192: #{iterative_refiner_forward.1} parent=11 // pred_fallthru
          _
        // Predicated region
        $region193: #{iterative_refiner_forward.1} parent=11 // pred_check
          %p1432 = pneg %p1088
        $region194: #{iterative_refiner_forward.1} parent=11 // pred_check_branch
          %1434 = sbr.rel (%p1432) target = $region196
        $region195: #{iterative_refiner_forward.1} parent=11 // pred_region
          _
        $region196: #{iterative_refiner_forward.1} parent=11 // pred_fallthru
          _
        // Predicated region
        $region197: #{iterative_refiner_forward.1} parent=11 // pred_check
          %p1435 = pneg %p1109
        $region198: #{iterative_refiner_forward.1} parent=11 // pred_check_branch
          %1437 = sbr.rel (%p1435) target = $region200
        $region199: #{iterative_refiner_forward.1} parent=11 // pred_region
          _
        $region200: #{iterative_refiner_forward.1} parent=11 // pred_fallthru
          _
        // Predicated region
        $region201: #{iterative_refiner_forward.1} parent=11 // pred_check
          %p1438 = pneg %p1130
        $region202: #{iterative_refiner_forward.1} parent=11 // pred_check_branch
          %1440 = sbr.rel (%p1438) target = $region204
        $region203: #{iterative_refiner_forward.1} parent=11 // pred_region
          _
        $region204: #{iterative_refiner_forward.1} parent=11 // pred_fallthru
          _
        // Predicated region
        $region205: #{iterative_refiner_forward.1} parent=11 // pred_check
          %p1441 = pneg %p1151
        $region206: #{iterative_refiner_forward.1} parent=11 // pred_check_branch
          %1443 = sbr.rel (%p1441) target = $region208
        $region207: #{iterative_refiner_forward.1} parent=11 // pred_region
          _
        $region208: #{iterative_refiner_forward.1} parent=11 // pred_fallthru
          _
        // Predicated region
        $region209: #{iterative_refiner_forward.1} parent=11 // pred_check
          %p1444 = pneg %p1172
        $region210: #{iterative_refiner_forward.1} parent=11 // pred_check_branch
          %1446 = sbr.rel (%p1444) target = $region212
        $region211: #{iterative_refiner_forward.1} parent=11 // pred_region
          _
        $region212: #{iterative_refiner_forward.1} parent=11 // pred_fallthru
          _
        // Predicated region
        $region213: #{iterative_refiner_forward.1} parent=11 // pred_check
          %p1447 = pneg %p1193
        $region214: #{iterative_refiner_forward.1} parent=11 // pred_check_branch
          %1449 = sbr.rel (%p1447) target = $region216
        $region215: #{iterative_refiner_forward.1} parent=11 // pred_region
          _
        $region216: #{iterative_refiner_forward.1} parent=11 // pred_fallthru
          _
      $region12: #{iterative_refiner_forward.1} parent=5 // pred_fallthru
        _
      %p1450 = scmp.lt.s32.totalorder %s122, 2
      // Predicated region
      $region217: #{iterative_refiner_forward.1} parent=5 // pred_check
        %p1451 = pneg %p1450
      $region218: #{iterative_refiner_forward.1} parent=5 // pred_check_branch
        %1453 = sbr.rel (%p1451) target = $region220
      $region219: #{iterative_refiner_forward.1} parent=5 // pred_region
        _
      $region220: #{iterative_refiner_forward.1} parent=5 // pred_fallthru
        _
      %p1454 = scmp.le.s32.totalorder 1, %s122
      %p1455 = scmp.lt.s32.totalorder %s122, 3
      %p1456 = pnand %p1454, %p1455
      %p1457 = pneg %p1456
      // Predicated region
      $region221: #{iterative_refiner_forward.1} parent=5 // pred_check
        _
      $region222: #{iterative_refiner_forward.1} parent=5 // pred_check_branch
        %1459 = sbr.rel (%p1456) target = $region224
      $region223: #{iterative_refiner_forward.1} parent=5 // pred_region
        %s1460 = ssub.s32 %s122, 1
        %p1461 = pneg %p143
        %p1462 = pneg %p140
        %p1463 = pneg %p164
        %p1464 = pneg %p161
        %p1465 = pneg %p185
        %p1466 = pneg %p182
        %p1467 = pneg %p206
        %p1468 = pneg %p203
        %p1469 = pneg %p227
        %p1470 = pneg %p224
        %p1471 = pneg %p248
        %p1472 = pneg %p245
        %p1473 = pneg %p269
        %p1474 = pneg %p266
        %p1475 = pneg %p290
        %p1476 = pneg %p287
        %p1477 = pneg %p311
        %p1478 = pneg %p308
        %p1479 = pneg %p332
        %p1480 = pneg %p329
        %p1481 = pneg %p353
        %p1482 = pneg %p350
        %p1483 = pneg %p374
        %p1484 = pneg %p371
        %p1485 = pneg %p395
        %p1486 = pneg %p392
        %p1487 = pneg %p416
        %p1488 = pneg %p413
        %p1489 = pneg %p437
        %p1490 = pneg %p434
        %p1491 = pneg %p458
        %p1492 = pneg %p455
        %p1493 = pneg %p479
        %p1494 = pneg %p476
        %p1495 = pneg %p500
        %p1496 = pneg %p497
        %p1497 = pneg %p521
        %p1498 = pneg %p518
        %p1499 = pneg %p542
        %p1500 = pneg %p539
        %p1501 = pneg %p563
        %p1502 = pneg %p560
        %p1503 = pneg %p584
        %p1504 = pneg %p581
        %p1505 = pneg %p605
        %p1506 = pneg %p602
        %p1507 = pneg %p626
        %p1508 = pneg %p623
        %p1509 = pneg %p647
        %p1510 = pneg %p644
        %p1511 = pneg %p668
        %p1512 = pneg %p665
        %p1513 = pneg %p689
        %p1514 = pneg %p686
        %p1515 = pneg %p710
        %p1516 = pneg %p707
        %p1517 = pneg %p731
        %p1518 = pneg %p728
        %p1519 = pneg %p752
        %p1520 = pneg %p749
        %p1521 = pneg %p773
        %p1522 = pneg %p770
        %p1523 = pneg %p794
        %p1524 = pneg %p791
        %p1525 = pneg %p815
        %p1526 = pneg %p812
        %p1527 = pneg %p836
        %p1528 = pneg %p833
        %p1529 = pneg %p857
        %p1530 = pneg %p854
        %p1531 = pneg %p878
        %p1532 = pneg %p875
        %p1533 = pneg %p899
        %p1534 = pneg %p896
        %p1535 = pneg %p920
        %p1536 = pneg %p917
        %p1537 = pneg %p941
        %p1538 = pneg %p938
        %p1539 = pneg %p962
        %p1540 = pneg %p959
        %p1541 = pneg %p983
        %p1542 = pneg %p980
        %p1543 = pneg %p1004
        %p1544 = pneg %p1001
        %p1545 = pneg %p1025
        %p1546 = pneg %p1022
        %p1547 = pneg %p1046
        %p1548 = pneg %p1043
        %p1549 = pneg %p1067
        %p1550 = pneg %p1064
        %p1551 = pneg %p1088
        %p1552 = pneg %p1085
        %p1553 = pneg %p1109
        %p1554 = pneg %p1106
        %p1555 = pneg %p1130
        %p1556 = pneg %p1127
        %p1557 = pneg %p1151
        %p1558 = pneg %p1148
        %p1559 = pneg %p1172
        %p1560 = pneg %p1169
        %p1561 = pneg %p1193
        %p1562 = pneg %p1190
        %p1563 = pneg %p1219
        %p1564 = pneg %p1216
        %p1565 = scmp.lt.s32.totalorder %s127, 1
        %s1566 = scalar_select %p1565, %s127, 1
        %s1567 = smul.addr %s1566, 4
        %s1568 = smul.addr %s1567, 8
        %s1569 = scalar_lea.vmem %s103, %s1568
        %p1570 = pneg %p1240
        %p1571 = pneg %p1237
        %p1572 = pneg %p1261
        %p1573 = pneg %p1258
        %p1574 = pneg %p1282
        %p1575 = pneg %p1279
        %p1576 = scmp.lt.s32.totalorder %s127, 1
        %s1577 = scalar_select %p1576, %s127, 1
        %s1578 = smul.addr %s1577, 4
        %s1579 = smul.addr %s1578, 8
        %s1580 = scalar_lea.vmem %s103, %s1579
        %p1581 = scmp.eq.s32.totalorder %s127, 0
        // Predicated region
        $region225: #{iterative_refiner_forward.1} parent=223 // pred_check
          %p1582 = pneg %p1581
        $region226: #{iterative_refiner_forward.1} parent=223 // pred_check_branch
          %1584 = sbr.rel (%p1582) target = $region228
        $region227: #{iterative_refiner_forward.1} parent=223 // pred_region
          %v1585 = vld [vmem:[%s1] sm:$0xff]
          %v1586 = vld [vmem:[%s1 + $0x8] sm:$0xff]
          %vm1587 = vcmask 261120
          %1588 = vst.msk [vmem:[#allocation4] sm:$0xff] %vm1587, %v1585
          %1589 = vst.msk [vmem:[#allocation4 + $0x8] sm:$0xff] %vm1587, %v1586
          %v1590 = vld [vmem:[%s3] sm:$0xff]
          %v1591 = vld [vmem:[%s3 + $0x8] sm:$0xff]
          %v1592 = vld [vmem:[%s3 + $0x10] sm:$0xff]
          %v1593 = vld [vmem:[%s3 + $0x18] sm:$0xff]
          %1594 = vst.msk [vmem:[#allocation6] sm:$0xff] %vm1587, %v1590
          %1595 = vst.msk [vmem:[#allocation6 + $0x8] sm:$0xff] %vm1587, %v1591
          %1596 = vst.msk [vmem:[#allocation6 + $0x10] sm:$0xff] %vm1587, %v1592
          %1597 = vst.msk [vmem:[#allocation6 + $0x18] sm:$0xff] %vm1587, %v1593
          %v1598 = vld [vmem:[%s5] sm:$0xff]
          %v1599 = vld [vmem:[%s5 + $0x8] sm:$0xff]
          %v1600 = vld [vmem:[%s5 + $0x10] sm:$0xff]
          %v1601 = vld [vmem:[%s5 + $0x18] sm:$0xff]
          %vm1602 = vcmask 64512
          %1603 = vst.msk [vmem:[%s109] sm:$0xff] %vm1602, %v1598
          %1604 = vst.msk [vmem:[%s109 + $0x8] sm:$0xff] %vm1602, %v1599
          %1605 = vst.msk [vmem:[%s109 + $0x10] sm:$0xff] %vm1602, %v1600
          %1606 = vst.msk [vmem:[%s109 + $0x18] sm:$0xff] %vm1602, %v1601
        $region228: #{iterative_refiner_forward.1} parent=223 // pred_fallthru
          _
        %v1607 = vlaneseq
        %v1608 = vshrl.u32 %v1607, 7
        %v1609 = vadd.s32 %v1608, 8
        %v1610 = vadd.s32 %v1608, 16
        %v1611 = vadd.s32 %v1608, 24
        %v1612 = vadd.s32 %v1608, 32
        %v1613 = vadd.s32 %v1608, 40
        %v1614 = vadd.s32 %v1608, 48
        %v1615 = vadd.s32 %v1608, 56
        %v1616 = vadd.s32 %v1608, 64
        %v1617 = vadd.s32 %v1608, 72
        %v1618 = vadd.s32 %v1608, 80
        %v1619 = vadd.s32 %v1608, 88
        %v1620 = vadd.s32 %v1608, 96
        %v1621 = vadd.s32 %v1608, 104
        %v1622 = vadd.s32 %v1608, 112
        %v1623 = vadd.s32 %v1608, 120
        %v1624 = vadd.s32 %v1608, 128
        %v1625 = vadd.s32 %v1608, 136
        %v1626 = vadd.s32 %v1608, 144
        %v1627 = vadd.s32 %v1608, 152
        %v1628 = vadd.s32 %v1608, 160
        %v1629 = vadd.s32 %v1608, 168
        %v1630 = vadd.s32 %v1608, 176
        %v1631 = vadd.s32 %v1608, 184
        %v1632 = vadd.s32 %v1608, 192
        %v1633 = vadd.s32 %v1608, 200
        %v1634 = vadd.s32 %v1608, 208
        %v1635 = vadd.s32 %v1608, 216
        %v1636 = vadd.s32 %v1608, 224
        %v1637 = vadd.s32 %v1608, 232
        %v1638 = vadd.s32 %v1608, 240
        %v1639 = vadd.s32 %v1608, 248
        %v1640 = vcvt.s32.f32 %v1608
        %v1641 = vcvt.s32.f32 %v1609
        %v1642 = vcvt.s32.f32 %v1610
        %v1643 = vcvt.s32.f32 %v1611
        %v1644 = vcvt.s32.f32 %v1612
        %v1645 = vcvt.s32.f32 %v1613
        %v1646 = vcvt.s32.f32 %v1614
        %v1647 = vcvt.s32.f32 %v1615
        %v1648 = vcvt.s32.f32 %v1616
        %v1649 = vcvt.s32.f32 %v1617
        %v1650 = vcvt.s32.f32 %v1618
        %v1651 = vcvt.s32.f32 %v1619
        %v1652 = vcvt.s32.f32 %v1620
        %v1653 = vcvt.s32.f32 %v1621
        %v1654 = vcvt.s32.f32 %v1622
        %v1655 = vcvt.s32.f32 %v1623
        %v1656 = vcvt.s32.f32 %v1624
        %v1657 = vcvt.s32.f32 %v1625
        %v1658 = vcvt.s32.f32 %v1626
        %v1659 = vcvt.s32.f32 %v1627
        %v1660 = vcvt.s32.f32 %v1628
        %v1661 = vcvt.s32.f32 %v1629
        %v1662 = vcvt.s32.f32 %v1630
        %v1663 = vcvt.s32.f32 %v1631
        %v1664 = vcvt.s32.f32 %v1632
        %v1665 = vcvt.s32.f32 %v1633
        %v1666 = vcvt.s32.f32 %v1634
        %v1667 = vcvt.s32.f32 %v1635
        %v1668 = vcvt.s32.f32 %v1636
        %v1669 = vcvt.s32.f32 %v1637
        %v1670 = vcvt.s32.f32 %v1638
        %v1671 = vcvt.s32.f32 %v1639
        %v1672 = vlaneseq
        %v1673 = vand.u32 %v1672, 127
        %v1674 = vcvt.s32.f32 %v1673
        %v1675 = vadd.f32 %v1640, 0.5
        %v1676 = vadd.f32 %v1641, 0.5
        %v1677 = vadd.f32 %v1642, 0.5
        %v1678 = vadd.f32 %v1643, 0.5
        %v1679 = vadd.f32 %v1644, 0.5
        %v1680 = vadd.f32 %v1645, 0.5
        %v1681 = vadd.f32 %v1646, 0.5
        %v1682 = vadd.f32 %v1647, 0.5
        %v1683 = vadd.f32 %v1648, 0.5
        %v1684 = vadd.f32 %v1649, 0.5
        %v1685 = vadd.f32 %v1650, 0.5
        %v1686 = vadd.f32 %v1651, 0.5
        %v1687 = vadd.f32 %v1652, 0.5
        %v1688 = vadd.f32 %v1653, 0.5
        %v1689 = vadd.f32 %v1654, 0.5
        %v1690 = vadd.f32 %v1655, 0.5
        %v1691 = vadd.f32 %v1656, 0.5
        %v1692 = vadd.f32 %v1657, 0.5
        %v1693 = vadd.f32 %v1658, 0.5
        %v1694 = vadd.f32 %v1659, 0.5
        %v1695 = vadd.f32 %v1660, 0.5
        %v1696 = vadd.f32 %v1661, 0.5
        %v1697 = vadd.f32 %v1662, 0.5
        %v1698 = vadd.f32 %v1663, 0.5
        %v1699 = vadd.f32 %v1664, 0.5
        %v1700 = vadd.f32 %v1665, 0.5
        %v1701 = vadd.f32 %v1666, 0.5
        %v1702 = vadd.f32 %v1667, 0.5
        %v1703 = vadd.f32 %v1668, 0.5
        %v1704 = vadd.f32 %v1669, 0.5
        %v1705 = vadd.f32 %v1670, 0.5
        %v1706 = vadd.f32 %v1671, 0.5
        %v1707 = vmul.f32 %v1675, 0.125
        %v1708 = vmul.f32 %v1676, 0.125
        %v1709 = vmul.f32 %v1677, 0.125
        %v1710 = vmul.f32 %v1678, 0.125
        %v1711 = vmul.f32 %v1679, 0.125
        %v1712 = vmul.f32 %v1680, 0.125
        %v1713 = vmul.f32 %v1681, 0.125
        %v1714 = vmul.f32 %v1682, 0.125
        %v1715 = vmul.f32 %v1683, 0.125
        %v1716 = vmul.f32 %v1684, 0.125
        %v1717 = vmul.f32 %v1685, 0.125
        %v1718 = vmul.f32 %v1686, 0.125
        %v1719 = vmul.f32 %v1687, 0.125
        %v1720 = vmul.f32 %v1688, 0.125
        %v1721 = vmul.f32 %v1689, 0.125
        %v1722 = vmul.f32 %v1690, 0.125
        %v1723 = vmul.f32 %v1691, 0.125
        %v1724 = vmul.f32 %v1692, 0.125
        %v1725 = vmul.f32 %v1693, 0.125
        %v1726 = vmul.f32 %v1694, 0.125
        %v1727 = vmul.f32 %v1695, 0.125
        %v1728 = vmul.f32 %v1696, 0.125
        %v1729 = vmul.f32 %v1697, 0.125
        %v1730 = vmul.f32 %v1698, 0.125
        %v1731 = vmul.f32 %v1699, 0.125
        %v1732 = vmul.f32 %v1700, 0.125
        %v1733 = vmul.f32 %v1701, 0.125
        %v1734 = vmul.f32 %v1702, 0.125
        %v1735 = vmul.f32 %v1703, 0.125
        %v1736 = vmul.f32 %v1704, 0.125
        %v1737 = vmul.f32 %v1705, 0.125
        %v1738 = vmul.f32 %v1706, 0.125
        %v1739 = vfloor.f32 %v1707
        %v1740 = vfloor.f32 %v1708
        %v1741 = vfloor.f32 %v1709
        %v1742 = vfloor.f32 %v1710
        %v1743 = vfloor.f32 %v1711
        %v1744 = vfloor.f32 %v1712
        %v1745 = vfloor.f32 %v1713
        %v1746 = vfloor.f32 %v1714
        %v1747 = vfloor.f32 %v1715
        %v1748 = vfloor.f32 %v1716
        %v1749 = vfloor.f32 %v1717
        %v1750 = vfloor.f32 %v1718
        %v1751 = vfloor.f32 %v1719
        %v1752 = vfloor.f32 %v1720
        %v1753 = vfloor.f32 %v1721
        %v1754 = vfloor.f32 %v1722
        %v1755 = vfloor.f32 %v1723
        %v1756 = vfloor.f32 %v1724
        %v1757 = vfloor.f32 %v1725
        %v1758 = vfloor.f32 %v1726
        %v1759 = vfloor.f32 %v1727
        %v1760 = vfloor.f32 %v1728
        %v1761 = vfloor.f32 %v1729
        %v1762 = vfloor.f32 %v1730
        %v1763 = vfloor.f32 %v1731
        %v1764 = vfloor.f32 %v1732
        %v1765 = vfloor.f32 %v1733
        %v1766 = vfloor.f32 %v1734
        %v1767 = vfloor.f32 %v1735
        %v1768 = vfloor.f32 %v1736
        %v1769 = vfloor.f32 %v1737
        %v1770 = vfloor.f32 %v1738
        %vm1771 = vcmp.eq.f32.partialorder %v1674, %v1739
        %vm1772 = vcmp.eq.f32.partialorder %v1674, %v1740
        %vm1773 = vcmp.eq.f32.partialorder %v1674, %v1741
        %vm1774 = vcmp.eq.f32.partialorder %v1674, %v1742
        %vm1775 = vcmp.eq.f32.partialorder %v1674, %v1743
        %vm1776 = vcmp.eq.f32.partialorder %v1674, %v1744
        %vm1777 = vcmp.eq.f32.partialorder %v1674, %v1745
        %vm1778 = vcmp.eq.f32.partialorder %v1674, %v1746
        %vm1779 = vcmp.eq.f32.partialorder %v1674, %v1747
        %vm1780 = vcmp.eq.f32.partialorder %v1674, %v1748
        %vm1781 = vcmp.eq.f32.partialorder %v1674, %v1749
        %vm1782 = vcmp.eq.f32.partialorder %v1674, %v1750
        %vm1783 = vcmp.eq.f32.partialorder %v1674, %v1751
        %vm1784 = vcmp.eq.f32.partialorder %v1674, %v1752
        %vm1785 = vcmp.eq.f32.partialorder %v1674, %v1753
        %vm1786 = vcmp.eq.f32.partialorder %v1674, %v1754
        %vm1787 = vcmp.eq.f32.partialorder %v1674, %v1755
        %vm1788 = vcmp.eq.f32.partialorder %v1674, %v1756
        %vm1789 = vcmp.eq.f32.partialorder %v1674, %v1757
        %vm1790 = vcmp.eq.f32.partialorder %v1674, %v1758
        %vm1791 = vcmp.eq.f32.partialorder %v1674, %v1759
        %vm1792 = vcmp.eq.f32.partialorder %v1674, %v1760
        %vm1793 = vcmp.eq.f32.partialorder %v1674, %v1761
        %vm1794 = vcmp.eq.f32.partialorder %v1674, %v1762
        %vm1795 = vcmp.eq.f32.partialorder %v1674, %v1763
        %vm1796 = vcmp.eq.f32.partialorder %v1674, %v1764
        %vm1797 = vcmp.eq.f32.partialorder %v1674, %v1765
        %vm1798 = vcmp.eq.f32.partialorder %v1674, %v1766
        %vm1799 = vcmp.eq.f32.partialorder %v1674, %v1767
        %vm1800 = vcmp.eq.f32.partialorder %v1674, %v1768
        %vm1801 = vcmp.eq.f32.partialorder %v1674, %v1769
        %vm1802 = vcmp.eq.f32.partialorder %v1674, %v1770
        %v1803 = vsel %vm1771, 1.0, 0.0
        %v1804 = vsel %vm1772, 1.0, 0.0
        %v1805 = vsel %vm1773, 1.0, 0.0
        %v1806 = vsel %vm1774, 1.0, 0.0
        %v1807 = vsel %vm1775, 1.0, 0.0
        %v1808 = vsel %vm1776, 1.0, 0.0
        %v1809 = vsel %vm1777, 1.0, 0.0
        %v1810 = vsel %vm1778, 1.0, 0.0
        %v1811 = vsel %vm1779, 1.0, 0.0
        %v1812 = vsel %vm1780, 1.0, 0.0
        %v1813 = vsel %vm1781, 1.0, 0.0
        %v1814 = vsel %vm1782, 1.0, 0.0
        %v1815 = vsel %vm1783, 1.0, 0.0
        %v1816 = vsel %vm1784, 1.0, 0.0
        %v1817 = vsel %vm1785, 1.0, 0.0
        %v1818 = vsel %vm1786, 1.0, 0.0
        %v1819 = vsel %vm1787, 1.0, 0.0
        %v1820 = vsel %vm1788, 1.0, 0.0
        %v1821 = vsel %vm1789, 1.0, 0.0
        %v1822 = vsel %vm1790, 1.0, 0.0
        %v1823 = vsel %vm1791, 1.0, 0.0
        %v1824 = vsel %vm1792, 1.0, 0.0
        %v1825 = vsel %vm1793, 1.0, 0.0
        %v1826 = vsel %vm1794, 1.0, 0.0
        %v1827 = vsel %vm1795, 1.0, 0.0
        %v1828 = vsel %vm1796, 1.0, 0.0
        %v1829 = vsel %vm1797, 1.0, 0.0
        %v1830 = vsel %vm1798, 1.0, 0.0
        %v1831 = vsel %vm1799, 1.0, 0.0
        %v1832 = vsel %vm1800, 1.0, 0.0
        %v1833 = vsel %vm1801, 1.0, 0.0
        %v1834 = vsel %vm1802, 1.0, 0.0
        %v1835 = vmul.f32 %v1675, 0.0078125
        %v1836 = vmul.f32 %v1676, 0.0078125
        %v1837 = vmul.f32 %v1677, 0.0078125
        %v1838 = vmul.f32 %v1678, 0.0078125
        %v1839 = vmul.f32 %v1679, 0.0078125
        %v1840 = vmul.f32 %v1680, 0.0078125
        %v1841 = vmul.f32 %v1681, 0.0078125
        %v1842 = vmul.f32 %v1682, 0.0078125
        %v1843 = vmul.f32 %v1683, 0.0078125
        %v1844 = vmul.f32 %v1684, 0.0078125
        %v1845 = vmul.f32 %v1685, 0.0078125
        %v1846 = vmul.f32 %v1686, 0.0078125
        %v1847 = vmul.f32 %v1687, 0.0078125
        %v1848 = vmul.f32 %v1688, 0.0078125
        %v1849 = vmul.f32 %v1689, 0.0078125
        %v1850 = vmul.f32 %v1690, 0.0078125
        %v1851 = vmul.f32 %v1691, 0.0078125
        %v1852 = vmul.f32 %v1692, 0.0078125
        %v1853 = vmul.f32 %v1693, 0.0078125
        %v1854 = vmul.f32 %v1694, 0.0078125
        %v1855 = vmul.f32 %v1695, 0.0078125
        %v1856 = vmul.f32 %v1696, 0.0078125
        %v1857 = vmul.f32 %v1697, 0.0078125
        %v1858 = vmul.f32 %v1698, 0.0078125
        %v1859 = vmul.f32 %v1699, 0.0078125
        %v1860 = vmul.f32 %v1700, 0.0078125
        %v1861 = vmul.f32 %v1701, 0.0078125
        %v1862 = vmul.f32 %v1702, 0.0078125
        %v1863 = vmul.f32 %v1703, 0.0078125
        %v1864 = vmul.f32 %v1704, 0.0078125
        %v1865 = vmul.f32 %v1705, 0.0078125
        %v1866 = vmul.f32 %v1706, 0.0078125
        %v1867 = vfloor.f32 %v1835
        %v1868 = vfloor.f32 %v1836
        %v1869 = vfloor.f32 %v1837
        %v1870 = vfloor.f32 %v1838
        %v1871 = vfloor.f32 %v1839
        %v1872 = vfloor.f32 %v1840
        %v1873 = vfloor.f32 %v1841
        %v1874 = vfloor.f32 %v1842
        %v1875 = vfloor.f32 %v1843
        %v1876 = vfloor.f32 %v1844
        %v1877 = vfloor.f32 %v1845
        %v1878 = vfloor.f32 %v1846
        %v1879 = vfloor.f32 %v1847
        %v1880 = vfloor.f32 %v1848
        %v1881 = vfloor.f32 %v1849
        %v1882 = vfloor.f32 %v1850
        %v1883 = vfloor.f32 %v1851
        %v1884 = vfloor.f32 %v1852
        %v1885 = vfloor.f32 %v1853
        %v1886 = vfloor.f32 %v1854
        %v1887 = vfloor.f32 %v1855
        %v1888 = vfloor.f32 %v1856
        %v1889 = vfloor.f32 %v1857
        %v1890 = vfloor.f32 %v1858
        %v1891 = vfloor.f32 %v1859
        %v1892 = vfloor.f32 %v1860
        %v1893 = vfloor.f32 %v1861
        %v1894 = vfloor.f32 %v1862
        %v1895 = vfloor.f32 %v1863
        %v1896 = vfloor.f32 %v1864
        %v1897 = vfloor.f32 %v1865
        %v1898 = vfloor.f32 %v1866
        %v1899 = vmul.f32 %v1867, 8.0
        %v1900 = vmul.f32 %v1868, 8.0
        %v1901 = vmul.f32 %v1869, 8.0
        %v1902 = vmul.f32 %v1870, 8.0
        %v1903 = vmul.f32 %v1871, 8.0
        %v1904 = vmul.f32 %v1872, 8.0
        %v1905 = vmul.f32 %v1873, 8.0
        %v1906 = vmul.f32 %v1874, 8.0
        %v1907 = vmul.f32 %v1875, 8.0
        %v1908 = vmul.f32 %v1876, 8.0
        %v1909 = vmul.f32 %v1877, 8.0
        %v1910 = vmul.f32 %v1878, 8.0
        %v1911 = vmul.f32 %v1879, 8.0
        %v1912 = vmul.f32 %v1880, 8.0
        %v1913 = vmul.f32 %v1881, 8.0
        %v1914 = vmul.f32 %v1882, 8.0
        %v1915 = vmul.f32 %v1883, 8.0
        %v1916 = vmul.f32 %v1884, 8.0
        %v1917 = vmul.f32 %v1885, 8.0
        %v1918 = vmul.f32 %v1886, 8.0
        %v1919 = vmul.f32 %v1887, 8.0
        %v1920 = vmul.f32 %v1888, 8.0
        %v1921 = vmul.f32 %v1889, 8.0
        %v1922 = vmul.f32 %v1890, 8.0
        %v1923 = vmul.f32 %v1891, 8.0
        %v1924 = vmul.f32 %v1892, 8.0
        %v1925 = vmul.f32 %v1893, 8.0
        %v1926 = vmul.f32 %v1894, 8.0
        %v1927 = vmul.f32 %v1895, 8.0
        %v1928 = vmul.f32 %v1896, 8.0
        %v1929 = vmul.f32 %v1897, 8.0
        %v1930 = vmul.f32 %v1898, 8.0
        %v1931 = vmul.f32 %v1739, 8.0
        %v1932 = vmul.f32 %v1740, 8.0
        %v1933 = vmul.f32 %v1741, 8.0
        %v1934 = vmul.f32 %v1742, 8.0
        %v1935 = vmul.f32 %v1743, 8.0
        %v1936 = vmul.f32 %v1744, 8.0
        %v1937 = vmul.f32 %v1745, 8.0
        %v1938 = vmul.f32 %v1746, 8.0
        %v1939 = vmul.f32 %v1747, 8.0
        %v1940 = vmul.f32 %v1748, 8.0
        %v1941 = vmul.f32 %v1749, 8.0
        %v1942 = vmul.f32 %v1750, 8.0
        %v1943 = vmul.f32 %v1751, 8.0
        %v1944 = vmul.f32 %v1752, 8.0
        %v1945 = vmul.f32 %v1753, 8.0
        %v1946 = vmul.f32 %v1754, 8.0
        %v1947 = vmul.f32 %v1755, 8.0
        %v1948 = vmul.f32 %v1756, 8.0
        %v1949 = vmul.f32 %v1757, 8.0
        %v1950 = vmul.f32 %v1758, 8.0
        %v1951 = vmul.f32 %v1759, 8.0
        %v1952 = vmul.f32 %v1760, 8.0
        %v1953 = vmul.f32 %v1761, 8.0
        %v1954 = vmul.f32 %v1762, 8.0
        %v1955 = vmul.f32 %v1763, 8.0
        %v1956 = vmul.f32 %v1764, 8.0
        %v1957 = vmul.f32 %v1765, 8.0
        %v1958 = vmul.f32 %v1766, 8.0
        %v1959 = vmul.f32 %v1767, 8.0
        %v1960 = vmul.f32 %v1768, 8.0
        %v1961 = vmul.f32 %v1769, 8.0
        %v1962 = vmul.f32 %v1770, 8.0
        %v1963 = vsub.f32 %v1640, %v1931
        %v1964 = vsub.f32 %v1641, %v1932
        %v1965 = vsub.f32 %v1642, %v1933
        %v1966 = vsub.f32 %v1643, %v1934
        %v1967 = vsub.f32 %v1644, %v1935
        %v1968 = vsub.f32 %v1645, %v1936
        %v1969 = vsub.f32 %v1646, %v1937
        %v1970 = vsub.f32 %v1647, %v1938
        %v1971 = vsub.f32 %v1648, %v1939
        %v1972 = vsub.f32 %v1649, %v1940
        %v1973 = vsub.f32 %v1650, %v1941
        %v1974 = vsub.f32 %v1651, %v1942
        %v1975 = vsub.f32 %v1652, %v1943
        %v1976 = vsub.f32 %v1653, %v1944
        %v1977 = vsub.f32 %v1654, %v1945
        %v1978 = vsub.f32 %v1655, %v1946
        %v1979 = vsub.f32 %v1656, %v1947
        %v1980 = vsub.f32 %v1657, %v1948
        %v1981 = vsub.f32 %v1658, %v1949
        %v1982 = vsub.f32 %v1659, %v1950
        %v1983 = vsub.f32 %v1660, %v1951
        %v1984 = vsub.f32 %v1661, %v1952
        %v1985 = vsub.f32 %v1662, %v1953
        %v1986 = vsub.f32 %v1663, %v1954
        %v1987 = vsub.f32 %v1664, %v1955
        %v1988 = vsub.f32 %v1665, %v1956
        %v1989 = vsub.f32 %v1666, %v1957
        %v1990 = vsub.f32 %v1667, %v1958
        %v1991 = vsub.f32 %v1668, %v1959
        %v1992 = vsub.f32 %v1669, %v1960
        %v1993 = vsub.f32 %v1670, %v1961
        %v1994 = vsub.f32 %v1671, %v1962
        %v1995 = vadd.f32 %v1899, %v1963
        %v1996 = vadd.f32 %v1900, %v1964
        %v1997 = vadd.f32 %v1901, %v1965
        %v1998 = vadd.f32 %v1902, %v1966
        %v1999 = vadd.f32 %v1903, %v1967
        %v2000 = vadd.f32 %v1904, %v1968
        %v2001 = vadd.f32 %v1905, %v1969
        %v2002 = vadd.f32 %v1906, %v1970
        %v2003 = vadd.f32 %v1907, %v1971
        %v2004 = vadd.f32 %v1908, %v1972
        %v2005 = vadd.f32 %v1909, %v1973
        %v2006 = vadd.f32 %v1910, %v1974
        %v2007 = vadd.f32 %v1911, %v1975
        %v2008 = vadd.f32 %v1912, %v1976
        %v2009 = vadd.f32 %v1913, %v1977
        %v2010 = vadd.f32 %v1914, %v1978
        %v2011 = vadd.f32 %v1915, %v1979
        %v2012 = vadd.f32 %v1916, %v1980
        %v2013 = vadd.f32 %v1917, %v1981
        %v2014 = vadd.f32 %v1918, %v1982
        %v2015 = vadd.f32 %v1919, %v1983
        %v2016 = vadd.f32 %v1920, %v1984
        %v2017 = vadd.f32 %v1921, %v1985
        %v2018 = vadd.f32 %v1922, %v1986
        %v2019 = vadd.f32 %v1923, %v1987
        %v2020 = vadd.f32 %v1924, %v1988
        %v2021 = vadd.f32 %v1925, %v1989
        %v2022 = vadd.f32 %v1926, %v1990
        %v2023 = vadd.f32 %v1927, %v1991
        %v2024 = vadd.f32 %v1928, %v1992
        %v2025 = vadd.f32 %v1929, %v1993
        %v2026 = vadd.f32 %v1930, %v1994
        %vm2027 = vcmp.eq.f32.partialorder %v1674, %v1995
        %vm2028 = vcmp.eq.f32.partialorder %v1674, %v1996
        %vm2029 = vcmp.eq.f32.partialorder %v1674, %v1997
        %vm2030 = vcmp.eq.f32.partialorder %v1674, %v1998
        %vm2031 = vcmp.eq.f32.partialorder %v1674, %v1999
        %vm2032 = vcmp.eq.f32.partialorder %v1674, %v2000
        %vm2033 = vcmp.eq.f32.partialorder %v1674, %v2001
        %vm2034 = vcmp.eq.f32.partialorder %v1674, %v2002
        %vm2035 = vcmp.eq.f32.partialorder %v1674, %v2003
        %vm2036 = vcmp.eq.f32.partialorder %v1674, %v2004
        %vm2037 = vcmp.eq.f32.partialorder %v1674, %v2005
        %vm2038 = vcmp.eq.f32.partialorder %v1674, %v2006
        %vm2039 = vcmp.eq.f32.partialorder %v1674, %v2007
        %vm2040 = vcmp.eq.f32.partialorder %v1674, %v2008
        %vm2041 = vcmp.eq.f32.partialorder %v1674, %v2009
        %vm2042 = vcmp.eq.f32.partialorder %v1674, %v2010
        %vm2043 = vcmp.eq.f32.partialorder %v1674, %v2011
        %vm2044 = vcmp.eq.f32.partialorder %v1674, %v2012
        %vm2045 = vcmp.eq.f32.partialorder %v1674, %v2013
        %vm2046 = vcmp.eq.f32.partialorder %v1674, %v2014
        %vm2047 = vcmp.eq.f32.partialorder %v1674, %v2015
        %vm2048 = vcmp.eq.f32.partialorder %v1674, %v2016
        %vm2049 = vcmp.eq.f32.partialorder %v1674, %v2017
        %vm2050 = vcmp.eq.f32.partialorder %v1674, %v2018
        %vm2051 = vcmp.eq.f32.partialorder %v1674, %v2019
        %vm2052 = vcmp.eq.f32.partialorder %v1674, %v2020
        %vm2053 = vcmp.eq.f32.partialorder %v1674, %v2021
        %vm2054 = vcmp.eq.f32.partialorder %v1674, %v2022
        %vm2055 = vcmp.eq.f32.partialorder %v1674, %v2023
        %vm2056 = vcmp.eq.f32.partialorder %v1674, %v2024
        %vm2057 = vcmp.eq.f32.partialorder %v1674, %v2025
        %vm2058 = vcmp.eq.f32.partialorder %v1674, %v2026
        %v2059 = vsel %vm2027, 1.0, 0.0
        %v2060 = vsel %vm2028, 1.0, 0.0
        %v2061 = vsel %vm2029, 1.0, 0.0
        %v2062 = vsel %vm2030, 1.0, 0.0
        %v2063 = vsel %vm2031, 1.0, 0.0
        %v2064 = vsel %vm2032, 1.0, 0.0
        %v2065 = vsel %vm2033, 1.0, 0.0
        %v2066 = vsel %vm2034, 1.0, 0.0
        %v2067 = vsel %vm2035, 1.0, 0.0
        %v2068 = vsel %vm2036, 1.0, 0.0
        %v2069 = vsel %vm2037, 1.0, 0.0
        %v2070 = vsel %vm2038, 1.0, 0.0
        %v2071 = vsel %vm2039, 1.0, 0.0
        %v2072 = vsel %vm2040, 1.0, 0.0
        %v2073 = vsel %vm2041, 1.0, 0.0
        %v2074 = vsel %vm2042, 1.0, 0.0
        %v2075 = vsel %vm2043, 1.0, 0.0
        %v2076 = vsel %vm2044, 1.0, 0.0
        %v2077 = vsel %vm2045, 1.0, 0.0
        %v2078 = vsel %vm2046, 1.0, 0.0
        %v2079 = vsel %vm2047, 1.0, 0.0
        %v2080 = vsel %vm2048, 1.0, 0.0
        %v2081 = vsel %vm2049, 1.0, 0.0
        %v2082 = vsel %vm2050, 1.0, 0.0
        %v2083 = vsel %vm2051, 1.0, 0.0
        %v2084 = vsel %vm2052, 1.0, 0.0
        %v2085 = vsel %vm2053, 1.0, 0.0
        %v2086 = vsel %vm2054, 1.0, 0.0
        %v2087 = vsel %vm2055, 1.0, 0.0
        %v2088 = vsel %vm2056, 1.0, 0.0
        %v2089 = vsel %vm2057, 1.0, 0.0
        %v2090 = vsel %vm2058, 1.0, 0.0
        %vm2091 = vcmp.eq.f32.partialorder %v1674, %v1963
        %vm2092 = vcmp.eq.f32.partialorder %v1674, %v1964
        %vm2093 = vcmp.eq.f32.partialorder %v1674, %v1965
        %vm2094 = vcmp.eq.f32.partialorder %v1674, %v1966
        %vm2095 = vcmp.eq.f32.partialorder %v1674, %v1967
        %vm2096 = vcmp.eq.f32.partialorder %v1674, %v1968
        %vm2097 = vcmp.eq.f32.partialorder %v1674, %v1969
        %vm2098 = vcmp.eq.f32.partialorder %v1674, %v1970
        %vm2099 = vcmp.eq.f32.partialorder %v1674, %v1971
        %vm2100 = vcmp.eq.f32.partialorder %v1674, %v1972
        %vm2101 = vcmp.eq.f32.partialorder %v1674, %v1973
        %vm2102 = vcmp.eq.f32.partialorder %v1674, %v1974
        %vm2103 = vcmp.eq.f32.partialorder %v1674, %v1975
        %vm2104 = vcmp.eq.f32.partialorder %v1674, %v1976
        %vm2105 = vcmp.eq.f32.partialorder %v1674, %v1977
        %vm2106 = vcmp.eq.f32.partialorder %v1674, %v1978
        %vm2107 = vcmp.eq.f32.partialorder %v1674, %v1979
        %vm2108 = vcmp.eq.f32.partialorder %v1674, %v1980
        %vm2109 = vcmp.eq.f32.partialorder %v1674, %v1981
        %vm2110 = vcmp.eq.f32.partialorder %v1674, %v1982
        %vm2111 = vcmp.eq.f32.partialorder %v1674, %v1983
        %vm2112 = vcmp.eq.f32.partialorder %v1674, %v1984
        %vm2113 = vcmp.eq.f32.partialorder %v1674, %v1985
        %vm2114 = vcmp.eq.f32.partialorder %v1674, %v1986
        %vm2115 = vcmp.eq.f32.partialorder %v1674, %v1987
        %vm2116 = vcmp.eq.f32.partialorder %v1674, %v1988
        %vm2117 = vcmp.eq.f32.partialorder %v1674, %v1989
        %vm2118 = vcmp.eq.f32.partialorder %v1674, %v1990
        %vm2119 = vcmp.eq.f32.partialorder %v1674, %v1991
        %vm2120 = vcmp.eq.f32.partialorder %v1674, %v1992
        %vm2121 = vcmp.eq.f32.partialorder %v1674, %v1993
        %vm2122 = vcmp.eq.f32.partialorder %v1674, %v1994
        %v2123 = vsel %vm2091, 1.0, 0.0
        %v2124 = vsel %vm2092, 1.0, 0.0
        %v2125 = vsel %vm2093, 1.0, 0.0
        %v2126 = vsel %vm2094, 1.0, 0.0
        %v2127 = vsel %vm2095, 1.0, 0.0
        %v2128 = vsel %vm2096, 1.0, 0.0
        %v2129 = vsel %vm2097, 1.0, 0.0
        %v2130 = vsel %vm2098, 1.0, 0.0
        %v2131 = vsel %vm2099, 1.0, 0.0
        %v2132 = vsel %vm2100, 1.0, 0.0
        %v2133 = vsel %vm2101, 1.0, 0.0
        %v2134 = vsel %vm2102, 1.0, 0.0
        %v2135 = vsel %vm2103, 1.0, 0.0
        %v2136 = vsel %vm2104, 1.0, 0.0
        %v2137 = vsel %vm2105, 1.0, 0.0
        %v2138 = vsel %vm2106, 1.0, 0.0
        %v2139 = vsel %vm2107, 1.0, 0.0
        %v2140 = vsel %vm2108, 1.0, 0.0
        %v2141 = vsel %vm2109, 1.0, 0.0
        %v2142 = vsel %vm2110, 1.0, 0.0
        %v2143 = vsel %vm2111, 1.0, 0.0
        %v2144 = vsel %vm2112, 1.0, 0.0
        %v2145 = vsel %vm2113, 1.0, 0.0
        %v2146 = vsel %vm2114, 1.0, 0.0
        %v2147 = vsel %vm2115, 1.0, 0.0
        %v2148 = vsel %vm2116, 1.0, 0.0
        %v2149 = vsel %vm2117, 1.0, 0.0
        %v2150 = vsel %vm2118, 1.0, 0.0
        %v2151 = vsel %vm2119, 1.0, 0.0
        %v2152 = vsel %vm2120, 1.0, 0.0
        %v2153 = vsel %vm2121, 1.0, 0.0
        %v2154 = vsel %vm2122, 1.0, 0.0
        %v2155 = vadd.s32 %v1673, 128
        %v2156 = vcvt.s32.f32 %v2155
        %v2157 = vadd.f32 %v1674, 0.5
        %v2158 = vadd.f32 %v2156, 0.5
        %v2159 = vmul.f32 %v2157, 0.125
        %v2160 = vmul.f32 %v2158, 0.125
        %v2161 = vfloor.f32 %v2159
        %v2162 = vfloor.f32 %v2160
        %vm2163 = vcmp.eq.f32.partialorder %v1640, %v2161
        %vm2164 = vcmp.eq.f32.partialorder %v1640, %v2162
        %vm2165 = vcmp.eq.f32.partialorder %v1641, %v2161
        %vm2166 = vcmp.eq.f32.partialorder %v1641, %v2162
        %vm2167 = vcmp.eq.f32.partialorder %v1642, %v2161
        %vm2168 = vcmp.eq.f32.partialorder %v1642, %v2162
        %vm2169 = vcmp.eq.f32.partialorder %v1643, %v2161
        %vm2170 = vcmp.eq.f32.partialorder %v1643, %v2162
        %v2171 = vsel %vm2163, 1.0, 0.0
        %v2172 = vsel %vm2164, 1.0, 0.0
        %v2173 = vsel %vm2165, 1.0, 0.0
        %v2174 = vsel %vm2166, 1.0, 0.0
        %v2175 = vsel %vm2167, 1.0, 0.0
        %v2176 = vsel %vm2168, 1.0, 0.0
        %v2177 = vsel %vm2169, 1.0, 0.0
        %v2178 = vsel %vm2170, 1.0, 0.0
        %v2179 = vmul.f32 %v1675, 0.0625
        %v2180 = vmul.f32 %v1676, 0.0625
        %v2181 = vmul.f32 %v1677, 0.0625
        %v2182 = vmul.f32 %v1678, 0.0625
        %v2183 = vfloor.f32 %v2179
        %v2184 = vfloor.f32 %v2180
        %v2185 = vfloor.f32 %v2181
        %v2186 = vfloor.f32 %v2182
        %vm2187 = vcmp.eq.f32.partialorder %v2183, %v2161
        %vm2188 = vcmp.eq.f32.partialorder %v2184, %v2161
        %vm2189 = vcmp.eq.f32.partialorder %v2185, %v2161
        %vm2190 = vcmp.eq.f32.partialorder %v2186, %v2161
        %v2191 = vsel %vm2187, 1.0, 0.0
        %v2192 = vsel %vm2188, 1.0, 0.0
        %v2193 = vsel %vm2189, 1.0, 0.0
        %v2194 = vsel %vm2190, 1.0, 0.0
        %v2195 = vmul.f32 %v2157, 0.0625
        %v2196 = vfloor.f32 %v2195
        %vm2197 = vcmp.eq.f32.partialorder %v2183, %v2196
        %vm2198 = vcmp.eq.f32.partialorder %v2184, %v2196
        %vm2199 = vcmp.eq.f32.partialorder %v2185, %v2196
        %vm2200 = vcmp.eq.f32.partialorder %v2186, %v2196
        %v2201 = vsel %vm2197, 1.0, 0.0
        %v2202 = vsel %vm2198, 1.0, 0.0
        %v2203 = vsel %vm2199, 1.0, 0.0
        %v2204 = vsel %vm2200, 1.0, 0.0
        %v2205 = vmul.f32 %v2201, 0.0625
        %v2206 = vmul.f32 %v2202, 0.0625
        %v2207 = vmul.f32 %v2203, 0.0625
        %v2208 = vmul.f32 %v2204, 0.0625
        %vm2209 = vcmp.eq.f32.partialorder %v1739, %v2161
        %vm2210 = vcmp.eq.f32.partialorder %v1740, %v2161
        %v2211 = vsel %vm2209, 1.0, 0.0
        %v2212 = vsel %vm2210, 1.0, 0.0
        %v2213 = vmul.f32 %v2211, 0.125
        %v2214 = vmul.f32 %v2212, 0.125
        %v2215 = vld [vmem:[%s1] sm:$0xff]
        %v2216 = vld [vmem:[%s1 + $0x8] sm:$0xff]
        %v2217 = vld [vmem:[#allocation4] sm:$0xff]
        %v2218 = vld [vmem:[#allocation4 + $0x8] sm:$0xff]
        %v2219 = vld [vmem:[#allocation6] sm:$0xff]
        %v2220 = vld [vmem:[#allocation6 + $0x8] sm:$0xff]
        %v2221 = vld [vmem:[#allocation6 + $0x10] sm:$0xff]
        %v2222 = vld [vmem:[#allocation6 + $0x18] sm:$0xff]
        %v2223 = vld [vmem:[%s109] sm:$0xff]
        %v2224 = vld [vmem:[%s109 + $0x8] sm:$0xff]
        %v2225 = vld [vmem:[%s109 + $0x10] sm:$0xff]
        %v2226 = vld [vmem:[%s109 + $0x18] sm:$0xff]
        %v2227 = vld [vmem:[%s7] sm:$0xff]
        %v2228 = vld [vmem:[%s7 + $0x8] sm:$0xff]
        %v2229 = vld [vmem:[%s7 + $0x10] sm:$0xff]
        %v2230 = vld [vmem:[%s7 + $0x18] sm:$0xff]
        %v2231 = vld [vmem:[%s9] sm:$0xff]
        %v2232 = vld [vmem:[%s9 + $0x8] sm:$0xff]
        %v2233 = vld [vmem:[%s9 + $0x10] sm:$0xff]
        %v2234 = vld [vmem:[%s9 + $0x18] sm:$0xff]
        %v2235 = vld [vmem:[%s11] sm:$0xff]
        %v2236 = vld [vmem:[%s11 + $0x8] sm:$0xff]
        %v2237 = vld [vmem:[%s11 + $0x10] sm:$0xff]
        %v2238 = vld [vmem:[%s11 + $0x18] sm:$0xff]
        %v2239 = vld [vmem:[%s13] sm:$0xff]
        %v2240 = vld [vmem:[%s13 + $0x8] sm:$0xff]
        %v2241 = vld [vmem:[%s13 + $0x10] sm:$0xff]
        %v2242 = vld [vmem:[%s13 + $0x18] sm:$0xff]
        %v2243 = vld [vmem:[%s15] sm:$0x1]
        %v2245 = vperm.slane %v2243, 0
        %vm2247 = vcmask 261120
        %v2249 = vsel %vm2247, %v2217, 0
        %v2252 = vsel %vm2247, %v2218, 0
        %2254 = vmatpush.msra.mxu0 0.0
        %2255 = vmatpush.msra.mxu0 0.0
        %2256 = vmatpush.msra.mxu0 0.0
        %2257 = vmatpush.msra.mxu0 0.0
        %2258 = vmatpush.msra.mxu0 0.0
        %2259 = vmatpush.msra.mxu0 0.0
        %2260 = vmatpush.msra.mxu0 0.0
        %2261 = vmatpush.msra.mxu0 0.0
        %2262 = vmatpush.msra.mxu0 0.0
        %2263 = vmatpush.msra.mxu0 0.0
        %2264 = vmatpush.msra.mxu0 0.0
        %2265 = vmatpush.msra.mxu0 0.0
        %2266 = vmatpush.msra.mxu0 %v2242
        %2267 = vmatpush.msra.mxu0 %v2241
        %2268 = vmatpush.msra.mxu0 %v2240
        %2269 = vmatpush.msra.mxu0 %v2239
        %2270 = vmatmul.f32.gmra.mxu0 %v2249
        %v2271 = vpop.f32.mrf.mxu0
        %v2272 = vadd.f32 %v2245, %v2271
        %2273 = vmatmul.f32.gmra.mxu0 %v2252
        %v2274 = vpop.f32.mrf.mxu0
        %v2275 = vadd.f32 %v2245, %v2274
        %2276 = vdwg.mxu0
        %v2277 = vmax.f32 %v2272, 0.0
        %v2278 = vmax.f32 %v2275, 0.0
        %v2279 = vld [vmem:[%s17] sm:$0xff]
        %v2280 = vld [vmem:[%s17 + $0x8] sm:$0xff]
        %v2281 = vld [vmem:[%s17 + $0x10] sm:$0xff]
        %v2282 = vld [vmem:[%s17 + $0x18] sm:$0xff]
        %v2283 = vld [vmem:[%s19] sm:$0x1]
        %v2285 = vperm.slane %v2283, 0
        %v2288 = vsel %vm2247, %v2277, 0
        %v2291 = vsel %vm2247, %v2278, 0
        %2293 = vmatpush.msra.mxu0 0.0
        %2294 = vmatpush.msra.mxu0 0.0
        %2295 = vmatpush.msra.mxu0 0.0
        %2296 = vmatpush.msra.mxu0 0.0
        %2297 = vmatpush.msra.mxu0 0.0
        %2298 = vmatpush.msra.mxu0 0.0
        %2299 = vmatpush.msra.mxu0 0.0
        %2300 = vmatpush.msra.mxu0 0.0
        %2301 = vmatpush.msra.mxu0 0.0
        %2302 = vmatpush.msra.mxu0 0.0
        %2303 = vmatpush.msra.mxu0 0.0
        %2304 = vmatpush.msra.mxu0 0.0
        %2305 = vmatpush.msra.mxu0 %v2282
        %2306 = vmatpush.msra.mxu0 %v2281
        %2307 = vmatpush.msra.mxu0 %v2280
        %2308 = vmatpush.msra.mxu0 %v2279
        %2309 = vmatmul.f32.gmra.mxu0 %v2288
        %v2310 = vpop.f32.mrf.mxu0
        %v2311 = vadd.f32 %v2285, %v2310
        %2312 = vmatmul.f32.gmra.mxu0 %v2291
        %v2313 = vpop.f32.mrf.mxu0
        %v2314 = vadd.f32 %v2285, %v2313
        %2315 = vdwg.mxu0
        %v2316 = vld [vmem:[%s21] sm:$0xff]
        %v2317 = vld [vmem:[%s21 + $0x8] sm:$0xff]
        %v2318 = vld [vmem:[%s21 + $0x10] sm:$0xff]
        %v2319 = vld [vmem:[%s21 + $0x18] sm:$0xff]
        %v2320 = vld [vmem:[%s23] sm:$0x1]
        %v2322 = vperm.slane %v2320, 0
        %v2325 = vsel %vm2247, %v2219, 0
        %v2328 = vsel %vm2247, %v2220, 0
        %v2331 = vsel %vm2247, %v2221, 0
        %v2334 = vsel %vm2247, %v2222, 0
        %2336 = vmatpush.msra.mxu0 0.0
        %2337 = vmatpush.msra.mxu0 0.0
        %2338 = vmatpush.msra.mxu0 0.0
        %2339 = vmatpush.msra.mxu0 0.0
        %2340 = vmatpush.msra.mxu0 0.0
        %2341 = vmatpush.msra.mxu0 0.0
        %2342 = vmatpush.msra.mxu0 0.0
        %2343 = vmatpush.msra.mxu0 0.0
        %2344 = vmatpush.msra.mxu0 0.0
        %2345 = vmatpush.msra.mxu0 0.0
        %2346 = vmatpush.msra.mxu0 0.0
        %2347 = vmatpush.msra.mxu0 0.0
        %2348 = vmatpush.msra.mxu0 %v2319
        %2349 = vmatpush.msra.mxu0 %v2318
        %2350 = vmatpush.msra.mxu0 %v2317
        %2351 = vmatpush.msra.mxu0 %v2316
        %2352 = vmatmul.f32.gmra.mxu0 %v2325
        %v2353 = vpop.f32.mrf.mxu0
        %v2354 = vadd.f32 %v2322, %v2353
        %2355 = vmatmul.f32.gmra.mxu0 %v2328
        %v2356 = vpop.f32.mrf.mxu0
        %v2357 = vadd.f32 %v2322, %v2356
        %2358 = vmatmul.f32.gmra.mxu0 %v2331
        %v2359 = vpop.f32.mrf.mxu0
        %v2360 = vadd.f32 %v2322, %v2359
        %2361 = vmatmul.f32.gmra.mxu0 %v2334
        %v2362 = vpop.f32.mrf.mxu0
        %v2363 = vadd.f32 %v2322, %v2362
        %2364 = vdwg.mxu0
        %v2365 = vmax.f32 %v2354, 0.0
        %v2366 = vmax.f32 %v2357, 0.0
        %v2367 = vmax.f32 %v2360, 0.0
        %v2368 = vmax.f32 %v2363, 0.0
        %v2369 = vld [vmem:[%s25] sm:$0xff]
        %v2370 = vld [vmem:[%s25 + $0x8] sm:$0xff]
        %v2371 = vld [vmem:[%s25 + $0x10] sm:$0xff]
        %v2372 = vld [vmem:[%s25 + $0x18] sm:$0xff]
        %v2373 = vld [vmem:[%s27] sm:$0x1]
        %v2375 = vperm.slane %v2373, 0
        %v2378 = vsel %vm2247, %v2365, 0
        %v2381 = vsel %vm2247, %v2366, 0
        %v2384 = vsel %vm2247, %v2367, 0
        %v2387 = vsel %vm2247, %v2368, 0
        %2389 = vmatpush.msra.mxu0 0.0
        %2390 = vmatpush.msra.mxu0 0.0
        %2391 = vmatpush.msra.mxu0 0.0
        %2392 = vmatpush.msra.mxu0 0.0
        %2393 = vmatpush.msra.mxu0 0.0
        %2394 = vmatpush.msra.mxu0 0.0
        %2395 = vmatpush.msra.mxu0 0.0
        %2396 = vmatpush.msra.mxu0 0.0
        %2397 = vmatpush.msra.mxu0 0.0
        %2398 = vmatpush.msra.mxu0 0.0
        %2399 = vmatpush.msra.mxu0 0.0
        %2400 = vmatpush.msra.mxu0 0.0
        %2401 = vmatpush.msra.mxu0 %v2372
        %2402 = vmatpush.msra.mxu0 %v2371
        %2403 = vmatpush.msra.mxu0 %v2370
        %2404 = vmatpush.msra.mxu0 %v2369
        %2405 = vmatmul.f32.gmra.mxu0 %v2378
        %v2406 = vpop.f32.mrf.mxu0
        %v2407 = vadd.f32 %v2375, %v2406
        %2408 = vmatmul.f32.gmra.mxu0 %v2381
        %v2409 = vpop.f32.mrf.mxu0
        %v2410 = vadd.f32 %v2375, %v2409
        %2411 = vmatmul.f32.gmra.mxu0 %v2384
        %v2412 = vpop.f32.mrf.mxu0
        %v2413 = vadd.f32 %v2375, %v2412
        %2414 = vmatmul.f32.gmra.mxu0 %v2387
        %v2415 = vpop.f32.mrf.mxu0
        %v2416 = vadd.f32 %v2375, %v2415
        %2417 = vdwg.mxu0
        %v2419 = vsel %vm2247, %v1803, 0
        %v2422 = vsel %vm2247, %v1804, 0
        %v2425 = vsel %vm2247, %v1805, 0
        %v2428 = vsel %vm2247, %v1806, 0
        %v2431 = vsel %vm2247, %v1807, 0
        %v2434 = vsel %vm2247, %v1808, 0
        %v2437 = vsel %vm2247, %v1809, 0
        %v2440 = vsel %vm2247, %v1810, 0
        %v2443 = vsel %vm2247, %v1811, 0
        %v2446 = vsel %vm2247, %v1812, 0
        %v2449 = vsel %vm2247, %v1813, 0
        %v2452 = vsel %vm2247, %v1814, 0
        %v2455 = vsel %vm2247, %v1815, 0
        %v2458 = vsel %vm2247, %v1816, 0
        %v2461 = vsel %vm2247, %v1817, 0
        %v2464 = vsel %vm2247, %v1818, 0
        %v2467 = vsel %vm2247, %v1819, 0
        %v2470 = vsel %vm2247, %v1820, 0
        %v2473 = vsel %vm2247, %v1821, 0
        %v2476 = vsel %vm2247, %v1822, 0
        %v2479 = vsel %vm2247, %v1823, 0
        %v2482 = vsel %vm2247, %v1824, 0
        %v2485 = vsel %vm2247, %v1825, 0
        %v2488 = vsel %vm2247, %v1826, 0
        %v2491 = vsel %vm2247, %v1827, 0
        %v2494 = vsel %vm2247, %v1828, 0
        %v2497 = vsel %vm2247, %v1829, 0
        %v2500 = vsel %vm2247, %v1830, 0
        %v2503 = vsel %vm2247, %v1831, 0
        %v2506 = vsel %vm2247, %v1832, 0
        %v2509 = vsel %vm2247, %v1833, 0
        %v2512 = vsel %vm2247, %v1834, 0
        %2514 = vmatpush.msra.mxu0 0.0
        %2515 = vmatpush.msra.mxu0 0.0
        %2516 = vmatpush.msra.mxu0 0.0
        %2517 = vmatpush.msra.mxu0 0.0
        %2518 = vmatpush.msra.mxu0 0.0
        %2519 = vmatpush.msra.mxu0 0.0
        %2520 = vmatpush.msra.mxu0 0.0
        %2521 = vmatpush.msra.mxu0 0.0
        %2522 = vmatpush.msra.mxu0 0.0
        %2523 = vmatpush.msra.mxu0 0.0
        %2524 = vmatpush.msra.mxu0 0.0
        %2525 = vmatpush.msra.mxu0 0.0
        %2526 = vmatpush.msra.mxu0 %v2226
        %2527 = vmatpush.msra.mxu0 %v2225
        %2528 = vmatpush.msra.mxu0 %v2224
        %2529 = vmatpush.msra.mxu0 %v2223
        %2530 = vmatmul.f32.gmra.mxu0 %v2419
        %v2531 = vpop.f32.mrf.mxu0
        %v2532 = vadd.f32 0.0, %v2531
        %2533 = vmatmul.f32.gmra.mxu0 %v2422
        %v2534 = vpop.f32.mrf.mxu0
        %v2535 = vadd.f32 0.0, %v2534
        %2536 = vmatmul.f32.gmra.mxu0 %v2425
        %v2537 = vpop.f32.mrf.mxu0
        %v2538 = vadd.f32 0.0, %v2537
        %2539 = vmatmul.f32.gmra.mxu0 %v2428
        %v2540 = vpop.f32.mrf.mxu0
        %v2541 = vadd.f32 0.0, %v2540
        %2542 = vmatmul.f32.gmra.mxu0 %v2431
        %v2543 = vpop.f32.mrf.mxu0
        %v2544 = vadd.f32 0.0, %v2543
        %2545 = vmatmul.f32.gmra.mxu0 %v2434
        %v2546 = vpop.f32.mrf.mxu0
        %v2547 = vadd.f32 0.0, %v2546
        %2548 = vmatmul.f32.gmra.mxu0 %v2437
        %v2549 = vpop.f32.mrf.mxu0
        %v2550 = vadd.f32 0.0, %v2549
        %2551 = vmatmul.f32.gmra.mxu0 %v2440
        %v2552 = vpop.f32.mrf.mxu0
        %v2553 = vadd.f32 0.0, %v2552
        %2554 = vmatmul.f32.gmra.mxu0 %v2443
        %v2555 = vpop.f32.mrf.mxu0
        %v2556 = vadd.f32 0.0, %v2555
        %2557 = vmatmul.f32.gmra.mxu0 %v2446
        %v2558 = vpop.f32.mrf.mxu0
        %v2559 = vadd.f32 0.0, %v2558
        %2560 = vmatmul.f32.gmra.mxu0 %v2449
        %v2561 = vpop.f32.mrf.mxu0
        %v2562 = vadd.f32 0.0, %v2561
        %2563 = vmatmul.f32.gmra.mxu0 %v2452
        %v2564 = vpop.f32.mrf.mxu0
        %v2565 = vadd.f32 0.0, %v2564
        %2566 = vmatmul.f32.gmra.mxu0 %v2455
        %v2567 = vpop.f32.mrf.mxu0
        %v2568 = vadd.f32 0.0, %v2567
        %2569 = vmatmul.f32.gmra.mxu0 %v2458
        %v2570 = vpop.f32.mrf.mxu0
        %v2571 = vadd.f32 0.0, %v2570
        %2572 = vmatmul.f32.gmra.mxu0 %v2461
        %v2573 = vpop.f32.mrf.mxu0
        %v2574 = vadd.f32 0.0, %v2573
        %2575 = vmatmul.f32.gmra.mxu0 %v2464
        %v2576 = vpop.f32.mrf.mxu0
        %v2577 = vadd.f32 0.0, %v2576
        %2578 = vmatmul.f32.gmra.mxu0 %v2467
        %v2579 = vpop.f32.mrf.mxu0
        %v2580 = vadd.f32 0.0, %v2579
        %2581 = vmatmul.f32.gmra.mxu0 %v2470
        %v2582 = vpop.f32.mrf.mxu0
        %v2583 = vadd.f32 0.0, %v2582
        %2584 = vmatmul.f32.gmra.mxu0 %v2473
        %v2585 = vpop.f32.mrf.mxu0
        %v2586 = vadd.f32 0.0, %v2585
        %2587 = vmatmul.f32.gmra.mxu0 %v2476
        %v2588 = vpop.f32.mrf.mxu0
        %v2589 = vadd.f32 0.0, %v2588
        %2590 = vmatmul.f32.gmra.mxu0 %v2479
        %v2591 = vpop.f32.mrf.mxu0
        %v2592 = vadd.f32 0.0, %v2591
        %2593 = vmatmul.f32.gmra.mxu0 %v2482
        %v2594 = vpop.f32.mrf.mxu0
        %v2595 = vadd.f32 0.0, %v2594
        %2596 = vmatmul.f32.gmra.mxu0 %v2485
        %v2597 = vpop.f32.mrf.mxu0
        %v2598 = vadd.f32 0.0, %v2597
        %2599 = vmatmul.f32.gmra.mxu0 %v2488
        %v2600 = vpop.f32.mrf.mxu0
        %v2601 = vadd.f32 0.0, %v2600
        %2602 = vmatmul.f32.gmra.mxu0 %v2491
        %v2603 = vpop.f32.mrf.mxu0
        %v2604 = vadd.f32 0.0, %v2603
        %2605 = vmatmul.f32.gmra.mxu0 %v2494
        %v2606 = vpop.f32.mrf.mxu0
        %v2607 = vadd.f32 0.0, %v2606
        %2608 = vmatmul.f32.gmra.mxu0 %v2497
        %v2609 = vpop.f32.mrf.mxu0
        %v2610 = vadd.f32 0.0, %v2609
        %2611 = vmatmul.f32.gmra.mxu0 %v2500
        %v2612 = vpop.f32.mrf.mxu0
        %v2613 = vadd.f32 0.0, %v2612
        %2614 = vmatmul.f32.gmra.mxu0 %v2503
        %v2615 = vpop.f32.mrf.mxu0
        %v2616 = vadd.f32 0.0, %v2615
        %2617 = vmatmul.f32.gmra.mxu0 %v2506
        %v2618 = vpop.f32.mrf.mxu0
        %v2619 = vadd.f32 0.0, %v2618
        %2620 = vmatmul.f32.gmra.mxu0 %v2509
        %v2621 = vpop.f32.mrf.mxu0
        %v2622 = vadd.f32 0.0, %v2621
        %2623 = vmatmul.f32.gmra.mxu0 %v2512
        %v2624 = vpop.f32.mrf.mxu0
        %v2625 = vadd.f32 0.0, %v2624
        %2626 = vdwg.mxu0
        %v2627 = vmul.f32 %v2532, %v2123
        %v2628 = vmul.f32 %v2535, %v2124
        %v2629 = vmul.f32 %v2538, %v2125
        %v2630 = vmul.f32 %v2541, %v2126
        %v2631 = vmul.f32 %v2544, %v2127
        %v2632 = vmul.f32 %v2547, %v2128
        %v2633 = vmul.f32 %v2550, %v2129
        %v2634 = vmul.f32 %v2553, %v2130
        %v2635 = vmul.f32 %v2556, %v2131
        %v2636 = vmul.f32 %v2559, %v2132
        %v2637 = vmul.f32 %v2562, %v2133
        %v2638 = vmul.f32 %v2565, %v2134
        %v2639 = vmul.f32 %v2568, %v2135
        %v2640 = vmul.f32 %v2571, %v2136
        %v2641 = vmul.f32 %v2574, %v2137
        %v2642 = vmul.f32 %v2577, %v2138
        %v2643 = vmul.f32 %v2580, %v2139
        %v2644 = vmul.f32 %v2583, %v2140
        %v2645 = vmul.f32 %v2586, %v2141
        %v2646 = vmul.f32 %v2589, %v2142
        %v2647 = vmul.f32 %v2592, %v2143
        %v2648 = vmul.f32 %v2595, %v2144
        %v2649 = vmul.f32 %v2598, %v2145
        %v2650 = vmul.f32 %v2601, %v2146
        %v2651 = vmul.f32 %v2604, %v2147
        %v2652 = vmul.f32 %v2607, %v2148
        %v2653 = vmul.f32 %v2610, %v2149
        %v2654 = vmul.f32 %v2613, %v2150
        %v2655 = vmul.f32 %v2616, %v2151
        %v2656 = vmul.f32 %v2619, %v2152
        %v2657 = vmul.f32 %v2622, %v2153
        %v2658 = vmul.f32 %v2625, %v2154
        %vm2659 = vcmask 64512
        %v2660 = vsel %vm2659, %v2627, 0.0
        %2661 = vadd.xlane.f32.xlu0 %v2660
        %v2662 = vpop.xlane.xlu0 %2661
        %v2663 = vsel %vm2659, %v2628, 0.0
        %2664 = vadd.xlane.f32.xlu0 %v2663
        %v2665 = vpop.xlane.xlu0 %2664
        %v2666 = vsel %vm2659, %v2629, 0.0
        %2667 = vadd.xlane.f32.xlu0 %v2666
        %v2668 = vpop.xlane.xlu0 %2667
        %v2669 = vsel %vm2659, %v2630, 0.0
        %2670 = vadd.xlane.f32.xlu0 %v2669
        %v2671 = vpop.xlane.xlu0 %2670
        %v2672 = vsel %vm2659, %v2631, 0.0
        %2673 = vadd.xlane.f32.xlu0 %v2672
        %v2674 = vpop.xlane.xlu0 %2673
        %v2675 = vsel %vm2659, %v2632, 0.0
        %2676 = vadd.xlane.f32.xlu0 %v2675
        %v2677 = vpop.xlane.xlu0 %2676
        %v2678 = vsel %vm2659, %v2633, 0.0
        %2679 = vadd.xlane.f32.xlu0 %v2678
        %v2680 = vpop.xlane.xlu0 %2679
        %v2681 = vsel %vm2659, %v2634, 0.0
        %2682 = vadd.xlane.f32.xlu0 %v2681
        %v2683 = vpop.xlane.xlu0 %2682
        %v2684 = vsel %vm2659, %v2635, 0.0
        %2685 = vadd.xlane.f32.xlu0 %v2684
        %v2686 = vpop.xlane.xlu0 %2685
        %v2687 = vsel %vm2659, %v2636, 0.0
        %2688 = vadd.xlane.f32.xlu0 %v2687
        %v2689 = vpop.xlane.xlu0 %2688
        %v2690 = vsel %vm2659, %v2637, 0.0
        %2691 = vadd.xlane.f32.xlu0 %v2690
        %v2692 = vpop.xlane.xlu0 %2691
        %v2693 = vsel %vm2659, %v2638, 0.0
        %2694 = vadd.xlane.f32.xlu0 %v2693
        %v2695 = vpop.xlane.xlu0 %2694
        %v2696 = vsel %vm2659, %v2639, 0.0
        %2697 = vadd.xlane.f32.xlu0 %v2696
        %v2698 = vpop.xlane.xlu0 %2697
        %v2699 = vsel %vm2659, %v2640, 0.0
        %2700 = vadd.xlane.f32.xlu0 %v2699
        %v2701 = vpop.xlane.xlu0 %2700
        %v2702 = vsel %vm2659, %v2641, 0.0
        %2703 = vadd.xlane.f32.xlu0 %v2702
        %v2704 = vpop.xlane.xlu0 %2703
        %v2705 = vsel %vm2659, %v2642, 0.0
        %2706 = vadd.xlane.f32.xlu0 %v2705
        %v2707 = vpop.xlane.xlu0 %2706
        %v2708 = vsel %vm2659, %v2643, 0.0
        %2709 = vadd.xlane.f32.xlu0 %v2708
        %v2710 = vpop.xlane.xlu0 %2709
        %v2711 = vsel %vm2659, %v2644, 0.0
        %2712 = vadd.xlane.f32.xlu0 %v2711
        %v2713 = vpop.xlane.xlu0 %2712
        %v2714 = vsel %vm2659, %v2645, 0.0
        %2715 = vadd.xlane.f32.xlu0 %v2714
        %v2716 = vpop.xlane.xlu0 %2715
        %v2717 = vsel %vm2659, %v2646, 0.0
        %2718 = vadd.xlane.f32.xlu0 %v2717
        %v2719 = vpop.xlane.xlu0 %2718
        %v2720 = vsel %vm2659, %v2647, 0.0
        %2721 = vadd.xlane.f32.xlu0 %v2720
        %v2722 = vpop.xlane.xlu0 %2721
        %v2723 = vsel %vm2659, %v2648, 0.0
        %2724 = vadd.xlane.f32.xlu0 %v2723
        %v2725 = vpop.xlane.xlu0 %2724
        %v2726 = vsel %vm2659, %v2649, 0.0
        %2727 = vadd.xlane.f32.xlu0 %v2726
        %v2728 = vpop.xlane.xlu0 %2727
        %v2729 = vsel %vm2659, %v2650, 0.0
        %2730 = vadd.xlane.f32.xlu0 %v2729
        %v2731 = vpop.xlane.xlu0 %2730
        %v2732 = vsel %vm2659, %v2651, 0.0
        %2733 = vadd.xlane.f32.xlu0 %v2732
        %v2734 = vpop.xlane.xlu0 %2733
        %v2735 = vsel %vm2659, %v2652, 0.0
        %2736 = vadd.xlane.f32.xlu0 %v2735
        %v2737 = vpop.xlane.xlu0 %2736
        %v2738 = vsel %vm2659, %v2653, 0.0
        %2739 = vadd.xlane.f32.xlu0 %v2738
        %v2740 = vpop.xlane.xlu0 %2739
        %v2741 = vsel %vm2659, %v2654, 0.0
        %2742 = vadd.xlane.f32.xlu0 %v2741
        %v2743 = vpop.xlane.xlu0 %2742
        %v2744 = vsel %vm2659, %v2655, 0.0
        %2745 = vadd.xlane.f32.xlu0 %v2744
        %v2746 = vpop.xlane.xlu0 %2745
        %v2747 = vsel %vm2659, %v2656, 0.0
        %2748 = vadd.xlane.f32.xlu0 %v2747
        %v2749 = vpop.xlane.xlu0 %2748
        %v2750 = vsel %vm2659, %v2657, 0.0
        %2751 = vadd.xlane.f32.xlu0 %v2750
        %v2752 = vpop.xlane.xlu0 %2751
        %v2753 = vsel %vm2659, %v2658, 0.0
        %2754 = vadd.xlane.f32.xlu0 %v2753
        %v2755 = vpop.xlane.xlu0 %2754
        %v2756 = vld [vmem:[%s29] sm:$0x1]
        %v2758 = vperm.slane %v2756, 0
        %v2760 = vmul.f32 %v2662, %v2758
        %v2761 = vmul.f32 %v2665, %v2758
        %v2762 = vmul.f32 %v2668, %v2758
        %v2763 = vmul.f32 %v2671, %v2758
        %v2764 = vmul.f32 %v2674, %v2758
        %v2765 = vmul.f32 %v2677, %v2758
        %v2766 = vmul.f32 %v2680, %v2758
        %v2767 = vmul.f32 %v2683, %v2758
        %v2768 = vmul.f32 %v2686, %v2758
        %v2769 = vmul.f32 %v2689, %v2758
        %v2770 = vmul.f32 %v2692, %v2758
        %v2771 = vmul.f32 %v2695, %v2758
        %v2772 = vmul.f32 %v2698, %v2758
        %v2773 = vmul.f32 %v2701, %v2758
        %v2774 = vmul.f32 %v2704, %v2758
        %v2775 = vmul.f32 %v2707, %v2758
        %v2776 = vmul.f32 %v2710, %v2758
        %v2777 = vmul.f32 %v2713, %v2758
        %v2778 = vmul.f32 %v2716, %v2758
        %v2779 = vmul.f32 %v2719, %v2758
        %v2780 = vmul.f32 %v2722, %v2758
        %v2781 = vmul.f32 %v2725, %v2758
        %v2782 = vmul.f32 %v2728, %v2758
        %v2783 = vmul.f32 %v2731, %v2758
        %v2784 = vmul.f32 %v2734, %v2758
        %v2785 = vmul.f32 %v2737, %v2758
        %v2786 = vmul.f32 %v2740, %v2758
        %v2787 = vmul.f32 %v2743, %v2758
        %v2788 = vmul.f32 %v2746, %v2758
        %v2789 = vmul.f32 %v2749, %v2758
        %v2790 = vmul.f32 %v2752, %v2758
        %v2791 = vmul.f32 %v2755, %v2758
        %v2792 = vld [vmem:[%s31] sm:$0x1]
        %v2794 = vperm.slane %v2792, 0
        %v2796 = vadd.f32 %v2760, %v2794
        %v2797 = vadd.f32 %v2761, %v2794
        %v2798 = vadd.f32 %v2762, %v2794
        %v2799 = vadd.f32 %v2763, %v2794
        %v2800 = vadd.f32 %v2764, %v2794
        %v2801 = vadd.f32 %v2765, %v2794
        %v2802 = vadd.f32 %v2766, %v2794
        %v2803 = vadd.f32 %v2767, %v2794
        %v2804 = vadd.f32 %v2768, %v2794
        %v2805 = vadd.f32 %v2769, %v2794
        %v2806 = vadd.f32 %v2770, %v2794
        %v2807 = vadd.f32 %v2771, %v2794
        %v2808 = vadd.f32 %v2772, %v2794
        %v2809 = vadd.f32 %v2773, %v2794
        %v2810 = vadd.f32 %v2774, %v2794
        %v2811 = vadd.f32 %v2775, %v2794
        %v2812 = vadd.f32 %v2776, %v2794
        %v2813 = vadd.f32 %v2777, %v2794
        %v2814 = vadd.f32 %v2778, %v2794
        %v2815 = vadd.f32 %v2779, %v2794
        %v2816 = vadd.f32 %v2780, %v2794
        %v2817 = vadd.f32 %v2781, %v2794
        %v2818 = vadd.f32 %v2782, %v2794
        %v2819 = vadd.f32 %v2783, %v2794
        %v2820 = vadd.f32 %v2784, %v2794
        %v2821 = vadd.f32 %v2785, %v2794
        %v2822 = vadd.f32 %v2786, %v2794
        %v2823 = vadd.f32 %v2787, %v2794
        %v2824 = vadd.f32 %v2788, %v2794
        %v2825 = vadd.f32 %v2789, %v2794
        %v2826 = vadd.f32 %v2790, %v2794
        %v2827 = vadd.f32 %v2791, %v2794
        %v2828 = vmax.f32 %v2796, 0.0
        %v2829 = vmax.f32 %v2797, 0.0
        %v2830 = vmax.f32 %v2798, 0.0
        %v2831 = vmax.f32 %v2799, 0.0
        %v2832 = vmax.f32 %v2800, 0.0
        %v2833 = vmax.f32 %v2801, 0.0
        %v2834 = vmax.f32 %v2802, 0.0
        %v2835 = vmax.f32 %v2803, 0.0
        %v2836 = vmax.f32 %v2804, 0.0
        %v2837 = vmax.f32 %v2805, 0.0
        %v2838 = vmax.f32 %v2806, 0.0
        %v2839 = vmax.f32 %v2807, 0.0
        %v2840 = vmax.f32 %v2808, 0.0
        %v2841 = vmax.f32 %v2809, 0.0
        %v2842 = vmax.f32 %v2810, 0.0
        %v2843 = vmax.f32 %v2811, 0.0
        %v2844 = vmax.f32 %v2812, 0.0
        %v2845 = vmax.f32 %v2813, 0.0
        %v2846 = vmax.f32 %v2814, 0.0
        %v2847 = vmax.f32 %v2815, 0.0
        %v2848 = vmax.f32 %v2816, 0.0
        %v2849 = vmax.f32 %v2817, 0.0
        %v2850 = vmax.f32 %v2818, 0.0
        %v2851 = vmax.f32 %v2819, 0.0
        %v2852 = vmax.f32 %v2820, 0.0
        %v2853 = vmax.f32 %v2821, 0.0
        %v2854 = vmax.f32 %v2822, 0.0
        %v2855 = vmax.f32 %v2823, 0.0
        %v2856 = vmax.f32 %v2824, 0.0
        %v2857 = vmax.f32 %v2825, 0.0
        %v2858 = vmax.f32 %v2826, 0.0
        %v2859 = vmax.f32 %v2827, 0.0
        %v2860 = vld [vmem:[%s33] sm:$0xff]
        %v2861 = vld [vmem:[%s33 + $0x8] sm:$0xff]
        %v2862 = vld [vmem:[%s33 + $0x10] sm:$0xff]
        %v2863 = vld [vmem:[%s33 + $0x18] sm:$0xff]
        %v2864 = vld [vmem:[%s35] sm:$0x1]
        %v2866 = vperm.slane %v2864, 0
        %v2869 = vsel %vm2247, %v2828, 0
        %v2872 = vsel %vm2247, %v2829, 0
        %v2875 = vsel %vm2247, %v2830, 0
        %v2878 = vsel %vm2247, %v2831, 0
        %v2881 = vsel %vm2247, %v2832, 0
        %v2884 = vsel %vm2247, %v2833, 0
        %v2887 = vsel %vm2247, %v2834, 0
        %v2890 = vsel %vm2247, %v2835, 0
        %v2893 = vsel %vm2247, %v2836, 0
        %v2896 = vsel %vm2247, %v2837, 0
        %v2899 = vsel %vm2247, %v2838, 0
        %v2902 = vsel %vm2247, %v2839, 0
        %v2905 = vsel %vm2247, %v2840, 0
        %v2908 = vsel %vm2247, %v2841, 0
        %v2911 = vsel %vm2247, %v2842, 0
        %v2914 = vsel %vm2247, %v2843, 0
        %v2917 = vsel %vm2247, %v2844, 0
        %v2920 = vsel %vm2247, %v2845, 0
        %v2923 = vsel %vm2247, %v2846, 0
        %v2926 = vsel %vm2247, %v2847, 0
        %v2929 = vsel %vm2247, %v2848, 0
        %v2932 = vsel %vm2247, %v2849, 0
        %v2935 = vsel %vm2247, %v2850, 0
        %v2938 = vsel %vm2247, %v2851, 0
        %v2941 = vsel %vm2247, %v2852, 0
        %v2944 = vsel %vm2247, %v2853, 0
        %v2947 = vsel %vm2247, %v2854, 0
        %v2950 = vsel %vm2247, %v2855, 0
        %v2953 = vsel %vm2247, %v2856, 0
        %v2956 = vsel %vm2247, %v2857, 0
        %v2959 = vsel %vm2247, %v2858, 0
        %v2962 = vsel %vm2247, %v2859, 0
        %2964 = vmatpush.msra.mxu0 0.0
        %2965 = vmatpush.msra.mxu0 0.0
        %2966 = vmatpush.msra.mxu0 0.0
        %2967 = vmatpush.msra.mxu0 0.0
        %2968 = vmatpush.msra.mxu0 0.0
        %2969 = vmatpush.msra.mxu0 0.0
        %2970 = vmatpush.msra.mxu0 0.0
        %2971 = vmatpush.msra.mxu0 0.0
        %2972 = vmatpush.msra.mxu0 0.0
        %2973 = vmatpush.msra.mxu0 0.0
        %2974 = vmatpush.msra.mxu0 0.0
        %2975 = vmatpush.msra.mxu0 0.0
        %2976 = vmatpush.msra.mxu0 %v2863
        %2977 = vmatpush.msra.mxu0 %v2862
        %2978 = vmatpush.msra.mxu0 %v2861
        %2979 = vmatpush.msra.mxu0 %v2860
        %2980 = vmatmul.f32.gmra.mxu0 %v2869
        %v2981 = vpop.f32.mrf.mxu0
        %v2982 = vadd.f32 %v2866, %v2981
        %2983 = vmatmul.f32.gmra.mxu0 %v2872
        %v2984 = vpop.f32.mrf.mxu0
        %v2985 = vadd.f32 %v2866, %v2984
        %2986 = vmatmul.f32.gmra.mxu0 %v2875
        %v2987 = vpop.f32.mrf.mxu0
        %v2988 = vadd.f32 %v2866, %v2987
        %2989 = vmatmul.f32.gmra.mxu0 %v2878
        %v2990 = vpop.f32.mrf.mxu0
        %v2991 = vadd.f32 %v2866, %v2990
        %2992 = vmatmul.f32.gmra.mxu0 %v2881
        %v2993 = vpop.f32.mrf.mxu0
        %v2994 = vadd.f32 %v2866, %v2993
        %2995 = vmatmul.f32.gmra.mxu0 %v2884
        %v2996 = vpop.f32.mrf.mxu0
        %v2997 = vadd.f32 %v2866, %v2996
        %2998 = vmatmul.f32.gmra.mxu0 %v2887
        %v2999 = vpop.f32.mrf.mxu0
        %v3000 = vadd.f32 %v2866, %v2999
        %3001 = vmatmul.f32.gmra.mxu0 %v2890
        %v3002 = vpop.f32.mrf.mxu0
        %v3003 = vadd.f32 %v2866, %v3002
        %3004 = vmatmul.f32.gmra.mxu0 %v2893
        %v3005 = vpop.f32.mrf.mxu0
        %v3006 = vadd.f32 %v2866, %v3005
        %3007 = vmatmul.f32.gmra.mxu0 %v2896
        %v3008 = vpop.f32.mrf.mxu0
        %v3009 = vadd.f32 %v2866, %v3008
        %3010 = vmatmul.f32.gmra.mxu0 %v2899
        %v3011 = vpop.f32.mrf.mxu0
        %v3012 = vadd.f32 %v2866, %v3011
        %3013 = vmatmul.f32.gmra.mxu0 %v2902
        %v3014 = vpop.f32.mrf.mxu0
        %v3015 = vadd.f32 %v2866, %v3014
        %3016 = vmatmul.f32.gmra.mxu0 %v2905
        %v3017 = vpop.f32.mrf.mxu0
        %v3018 = vadd.f32 %v2866, %v3017
        %3019 = vmatmul.f32.gmra.mxu0 %v2908
        %v3020 = vpop.f32.mrf.mxu0
        %v3021 = vadd.f32 %v2866, %v3020
        %3022 = vmatmul.f32.gmra.mxu0 %v2911
        %v3023 = vpop.f32.mrf.mxu0
        %v3024 = vadd.f32 %v2866, %v3023
        %3025 = vmatmul.f32.gmra.mxu0 %v2914
        %v3026 = vpop.f32.mrf.mxu0
        %v3027 = vadd.f32 %v2866, %v3026
        %3028 = vmatmul.f32.gmra.mxu0 %v2917
        %v3029 = vpop.f32.mrf.mxu0
        %v3030 = vadd.f32 %v2866, %v3029
        %3031 = vmatmul.f32.gmra.mxu0 %v2920
        %v3032 = vpop.f32.mrf.mxu0
        %v3033 = vadd.f32 %v2866, %v3032
        %3034 = vmatmul.f32.gmra.mxu0 %v2923
        %v3035 = vpop.f32.mrf.mxu0
        %v3036 = vadd.f32 %v2866, %v3035
        %3037 = vmatmul.f32.gmra.mxu0 %v2926
        %v3038 = vpop.f32.mrf.mxu0
        %v3039 = vadd.f32 %v2866, %v3038
        %3040 = vmatmul.f32.gmra.mxu0 %v2929
        %v3041 = vpop.f32.mrf.mxu0
        %v3042 = vadd.f32 %v2866, %v3041
        %3043 = vmatmul.f32.gmra.mxu0 %v2932
        %v3044 = vpop.f32.mrf.mxu0
        %v3045 = vadd.f32 %v2866, %v3044
        %3046 = vmatmul.f32.gmra.mxu0 %v2935
        %v3047 = vpop.f32.mrf.mxu0
        %v3048 = vadd.f32 %v2866, %v3047
        %3049 = vmatmul.f32.gmra.mxu0 %v2938
        %v3050 = vpop.f32.mrf.mxu0
        %v3051 = vadd.f32 %v2866, %v3050
        %3052 = vmatmul.f32.gmra.mxu0 %v2941
        %v3053 = vpop.f32.mrf.mxu0
        %v3054 = vadd.f32 %v2866, %v3053
        %3055 = vmatmul.f32.gmra.mxu0 %v2944
        %v3056 = vpop.f32.mrf.mxu0
        %v3057 = vadd.f32 %v2866, %v3056
        %3058 = vmatmul.f32.gmra.mxu0 %v2947
        %v3059 = vpop.f32.mrf.mxu0
        %v3060 = vadd.f32 %v2866, %v3059
        %3061 = vmatmul.f32.gmra.mxu0 %v2950
        %v3062 = vpop.f32.mrf.mxu0
        %v3063 = vadd.f32 %v2866, %v3062
        %3064 = vmatmul.f32.gmra.mxu0 %v2953
        %v3065 = vpop.f32.mrf.mxu0
        %v3066 = vadd.f32 %v2866, %v3065
        %3067 = vmatmul.f32.gmra.mxu0 %v2956
        %v3068 = vpop.f32.mrf.mxu0
        %v3069 = vadd.f32 %v2866, %v3068
        %3070 = vmatmul.f32.gmra.mxu0 %v2959
        %v3071 = vpop.f32.mrf.mxu0
        %v3072 = vadd.f32 %v2866, %v3071
        %3073 = vmatmul.f32.gmra.mxu0 %v2962
        %v3074 = vpop.f32.mrf.mxu0
        %v3075 = vadd.f32 %v2866, %v3074
        %3076 = vdwg.mxu0
        %3077 = vmatpush.msra.mxu0 0.0
        %3078 = vmatpush.msra.mxu0 0.0
        %3079 = vmatpush.msra.mxu0 0.0
        %3080 = vmatpush.msra.mxu0 0.0
        %3081 = vmatpush.msra.mxu0 0.0
        %3082 = vmatpush.msra.mxu0 0.0
        %3083 = vmatpush.msra.mxu0 0.0
        %3084 = vmatpush.msra.mxu0 0.0
        %3085 = vmatpush.msra.mxu0 0.0
        %3086 = vmatpush.msra.mxu0 0.0
        %3087 = vmatpush.msra.mxu0 0.0
        %3088 = vmatpush.msra.mxu0 0.0
        %3089 = vmatpush.msra.mxu0 %v2416
        %3090 = vmatpush.msra.mxu0 %v2413
        %3091 = vmatpush.msra.mxu0 %v2410
        %3092 = vmatpush.msra.mxu0 %v2407
        %3093 = vmatmul.f32.gmra.mxu0 %v2419
        %v3094 = vpop.f32.mrf.mxu0
        %v3095 = vadd.f32 0.0, %v3094
        %3096 = vmatmul.f32.gmra.mxu0 %v2422
        %v3097 = vpop.f32.mrf.mxu0
        %v3098 = vadd.f32 0.0, %v3097
        %3099 = vmatmul.f32.gmra.mxu0 %v2425
        %v3100 = vpop.f32.mrf.mxu0
        %v3101 = vadd.f32 0.0, %v3100
        %3102 = vmatmul.f32.gmra.mxu0 %v2428
        %v3103 = vpop.f32.mrf.mxu0
        %v3104 = vadd.f32 0.0, %v3103
        %3105 = vmatmul.f32.gmra.mxu0 %v2431
        %v3106 = vpop.f32.mrf.mxu0
        %v3107 = vadd.f32 0.0, %v3106
        %3108 = vmatmul.f32.gmra.mxu0 %v2434
        %v3109 = vpop.f32.mrf.mxu0
        %v3110 = vadd.f32 0.0, %v3109
        %3111 = vmatmul.f32.gmra.mxu0 %v2437
        %v3112 = vpop.f32.mrf.mxu0
        %v3113 = vadd.f32 0.0, %v3112
        %3114 = vmatmul.f32.gmra.mxu0 %v2440
        %v3115 = vpop.f32.mrf.mxu0
        %v3116 = vadd.f32 0.0, %v3115
        %3117 = vmatmul.f32.gmra.mxu0 %v2443
        %v3118 = vpop.f32.mrf.mxu0
        %v3119 = vadd.f32 0.0, %v3118
        %3120 = vmatmul.f32.gmra.mxu0 %v2446
        %v3121 = vpop.f32.mrf.mxu0
        %v3122 = vadd.f32 0.0, %v3121
        %3123 = vmatmul.f32.gmra.mxu0 %v2449
        %v3124 = vpop.f32.mrf.mxu0
        %v3125 = vadd.f32 0.0, %v3124
        %3126 = vmatmul.f32.gmra.mxu0 %v2452
        %v3127 = vpop.f32.mrf.mxu0
        %v3128 = vadd.f32 0.0, %v3127
        %3129 = vmatmul.f32.gmra.mxu0 %v2455
        %v3130 = vpop.f32.mrf.mxu0
        %v3131 = vadd.f32 0.0, %v3130
        %3132 = vmatmul.f32.gmra.mxu0 %v2458
        %v3133 = vpop.f32.mrf.mxu0
        %v3134 = vadd.f32 0.0, %v3133
        %3135 = vmatmul.f32.gmra.mxu0 %v2461
        %v3136 = vpop.f32.mrf.mxu0
        %v3137 = vadd.f32 0.0, %v3136
        %3138 = vmatmul.f32.gmra.mxu0 %v2464
        %v3139 = vpop.f32.mrf.mxu0
        %v3140 = vadd.f32 0.0, %v3139
        %3141 = vmatmul.f32.gmra.mxu0 %v2467
        %v3142 = vpop.f32.mrf.mxu0
        %v3143 = vadd.f32 0.0, %v3142
        %3144 = vmatmul.f32.gmra.mxu0 %v2470
        %v3145 = vpop.f32.mrf.mxu0
        %v3146 = vadd.f32 0.0, %v3145
        %3147 = vmatmul.f32.gmra.mxu0 %v2473
        %v3148 = vpop.f32.mrf.mxu0
        %v3149 = vadd.f32 0.0, %v3148
        %3150 = vmatmul.f32.gmra.mxu0 %v2476
        %v3151 = vpop.f32.mrf.mxu0
        %v3152 = vadd.f32 0.0, %v3151
        %3153 = vmatmul.f32.gmra.mxu0 %v2479
        %v3154 = vpop.f32.mrf.mxu0
        %v3155 = vadd.f32 0.0, %v3154
        %3156 = vmatmul.f32.gmra.mxu0 %v2482
        %v3157 = vpop.f32.mrf.mxu0
        %v3158 = vadd.f32 0.0, %v3157
        %3159 = vmatmul.f32.gmra.mxu0 %v2485
        %v3160 = vpop.f32.mrf.mxu0
        %v3161 = vadd.f32 0.0, %v3160
        %3162 = vmatmul.f32.gmra.mxu0 %v2488
        %v3163 = vpop.f32.mrf.mxu0
        %v3164 = vadd.f32 0.0, %v3163
        %3165 = vmatmul.f32.gmra.mxu0 %v2491
        %v3166 = vpop.f32.mrf.mxu0
        %v3167 = vadd.f32 0.0, %v3166
        %3168 = vmatmul.f32.gmra.mxu0 %v2494
        %v3169 = vpop.f32.mrf.mxu0
        %v3170 = vadd.f32 0.0, %v3169
        %3171 = vmatmul.f32.gmra.mxu0 %v2497
        %v3172 = vpop.f32.mrf.mxu0
        %v3173 = vadd.f32 0.0, %v3172
        %3174 = vmatmul.f32.gmra.mxu0 %v2500
        %v3175 = vpop.f32.mrf.mxu0
        %v3176 = vadd.f32 0.0, %v3175
        %3177 = vmatmul.f32.gmra.mxu0 %v2503
        %v3178 = vpop.f32.mrf.mxu0
        %v3179 = vadd.f32 0.0, %v3178
        %3180 = vmatmul.f32.gmra.mxu0 %v2506
        %v3181 = vpop.f32.mrf.mxu0
        %v3182 = vadd.f32 0.0, %v3181
        %3183 = vmatmul.f32.gmra.mxu0 %v2509
        %v3184 = vpop.f32.mrf.mxu0
        %v3185 = vadd.f32 0.0, %v3184
        %3186 = vmatmul.f32.gmra.mxu0 %v2512
        %v3187 = vpop.f32.mrf.mxu0
        %v3188 = vadd.f32 0.0, %v3187
        %3189 = vdwg.mxu0
        %vm3190 = vcmask 130048
        %v3192 = vsel %vm3190, %v2059, 0
        %v3195 = vsel %vm3190, %v2060, 0
        %v3198 = vsel %vm3190, %v2061, 0
        %v3201 = vsel %vm3190, %v2062, 0
        %v3204 = vsel %vm3190, %v2063, 0
        %v3207 = vsel %vm3190, %v2064, 0
        %v3210 = vsel %vm3190, %v2065, 0
        %v3213 = vsel %vm3190, %v2066, 0
        %v3216 = vsel %vm3190, %v2067, 0
        %v3219 = vsel %vm3190, %v2068, 0
        %v3222 = vsel %vm3190, %v2069, 0
        %v3225 = vsel %vm3190, %v2070, 0
        %v3228 = vsel %vm3190, %v2071, 0
        %v3231 = vsel %vm3190, %v2072, 0
        %v3234 = vsel %vm3190, %v2073, 0
        %v3237 = vsel %vm3190, %v2074, 0
        %v3240 = vsel %vm3190, %v2075, 0
        %v3243 = vsel %vm3190, %v2076, 0
        %v3246 = vsel %vm3190, %v2077, 0
        %v3249 = vsel %vm3190, %v2078, 0
        %v3252 = vsel %vm3190, %v2079, 0
        %v3255 = vsel %vm3190, %v2080, 0
        %v3258 = vsel %vm3190, %v2081, 0
        %v3261 = vsel %vm3190, %v2082, 0
        %v3264 = vsel %vm3190, %v2083, 0
        %v3267 = vsel %vm3190, %v2084, 0
        %v3270 = vsel %vm3190, %v2085, 0
        %v3273 = vsel %vm3190, %v2086, 0
        %v3276 = vsel %vm3190, %v2087, 0
        %v3279 = vsel %vm3190, %v2088, 0
        %v3282 = vsel %vm3190, %v2089, 0
        %v3285 = vsel %vm3190, %v2090, 0
        %3287 = vmatpush.msra.mxu0 0.0
        %3288 = vmatpush.msra.mxu0 0.0
        %3289 = vmatpush.msra.mxu0 0.0
        %3290 = vmatpush.msra.mxu0 0.0
        %3291 = vmatpush.msra.mxu0 0.0
        %3292 = vmatpush.msra.mxu0 0.0
        %3293 = vmatpush.msra.mxu0 0.0
        %3294 = vmatpush.msra.mxu0 0.0
        %3295 = vmatpush.msra.mxu0 0.0
        %3296 = vmatpush.msra.mxu0 0.0
        %3297 = vmatpush.msra.mxu0 0.0
        %3298 = vmatpush.msra.mxu0 0.0
        %3299 = vmatpush.msra.mxu0 0.0
        %3300 = vmatpush.msra.mxu0 0.0
        %3301 = vmatpush.msra.mxu0 %v2314
        %3302 = vmatpush.msra.mxu0 %v2311
        %3303 = vmatmul.f32.gmra.mxu0 %v3192
        %v3304 = vpop.f32.mrf.mxu0
        %v3305 = vadd.f32 %v3095, %v3304
        %3306 = vmatmul.f32.gmra.mxu0 %v3195
        %v3307 = vpop.f32.mrf.mxu0
        %v3308 = vadd.f32 %v3098, %v3307
        %3309 = vmatmul.f32.gmra.mxu0 %v3198
        %v3310 = vpop.f32.mrf.mxu0
        %v3311 = vadd.f32 %v3101, %v3310
        %3312 = vmatmul.f32.gmra.mxu0 %v3201
        %v3313 = vpop.f32.mrf.mxu0
        %v3314 = vadd.f32 %v3104, %v3313
        %3315 = vmatmul.f32.gmra.mxu0 %v3204
        %v3316 = vpop.f32.mrf.mxu0
        %v3317 = vadd.f32 %v3107, %v3316
        %3318 = vmatmul.f32.gmra.mxu0 %v3207
        %v3319 = vpop.f32.mrf.mxu0
        %v3320 = vadd.f32 %v3110, %v3319
        %3321 = vmatmul.f32.gmra.mxu0 %v3210
        %v3322 = vpop.f32.mrf.mxu0
        %v3323 = vadd.f32 %v3113, %v3322
        %3324 = vmatmul.f32.gmra.mxu0 %v3213
        %v3325 = vpop.f32.mrf.mxu0
        %v3326 = vadd.f32 %v3116, %v3325
        %3327 = vmatmul.f32.gmra.mxu0 %v3216
        %v3328 = vpop.f32.mrf.mxu0
        %v3329 = vadd.f32 %v3119, %v3328
        %3330 = vmatmul.f32.gmra.mxu0 %v3219
        %v3331 = vpop.f32.mrf.mxu0
        %v3332 = vadd.f32 %v3122, %v3331
        %3333 = vmatmul.f32.gmra.mxu0 %v3222
        %v3334 = vpop.f32.mrf.mxu0
        %v3335 = vadd.f32 %v3125, %v3334
        %3336 = vmatmul.f32.gmra.mxu0 %v3225
        %v3337 = vpop.f32.mrf.mxu0
        %v3338 = vadd.f32 %v3128, %v3337
        %3339 = vmatmul.f32.gmra.mxu0 %v3228
        %v3340 = vpop.f32.mrf.mxu0
        %v3341 = vadd.f32 %v3131, %v3340
        %3342 = vmatmul.f32.gmra.mxu0 %v3231
        %v3343 = vpop.f32.mrf.mxu0
        %v3344 = vadd.f32 %v3134, %v3343
        %3345 = vmatmul.f32.gmra.mxu0 %v3234
        %v3346 = vpop.f32.mrf.mxu0
        %v3347 = vadd.f32 %v3137, %v3346
        %3348 = vmatmul.f32.gmra.mxu0 %v3237
        %v3349 = vpop.f32.mrf.mxu0
        %v3350 = vadd.f32 %v3140, %v3349
        %3351 = vmatmul.f32.gmra.mxu0 %v3240
        %v3352 = vpop.f32.mrf.mxu0
        %v3353 = vadd.f32 %v3143, %v3352
        %3354 = vmatmul.f32.gmra.mxu0 %v3243
        %v3355 = vpop.f32.mrf.mxu0
        %v3356 = vadd.f32 %v3146, %v3355
        %3357 = vmatmul.f32.gmra.mxu0 %v3246
        %v3358 = vpop.f32.mrf.mxu0
        %v3359 = vadd.f32 %v3149, %v3358
        %3360 = vmatmul.f32.gmra.mxu0 %v3249
        %v3361 = vpop.f32.mrf.mxu0
        %v3362 = vadd.f32 %v3152, %v3361
        %3363 = vmatmul.f32.gmra.mxu0 %v3252
        %v3364 = vpop.f32.mrf.mxu0
        %v3365 = vadd.f32 %v3155, %v3364
        %3366 = vmatmul.f32.gmra.mxu0 %v3255
        %v3367 = vpop.f32.mrf.mxu0
        %v3368 = vadd.f32 %v3158, %v3367
        %3369 = vmatmul.f32.gmra.mxu0 %v3258
        %v3370 = vpop.f32.mrf.mxu0
        %v3371 = vadd.f32 %v3161, %v3370
        %3372 = vmatmul.f32.gmra.mxu0 %v3261
        %v3373 = vpop.f32.mrf.mxu0
        %v3374 = vadd.f32 %v3164, %v3373
        %3375 = vmatmul.f32.gmra.mxu0 %v3264
        %v3376 = vpop.f32.mrf.mxu0
        %v3377 = vadd.f32 %v3167, %v3376
        %3378 = vmatmul.f32.gmra.mxu0 %v3267
        %v3379 = vpop.f32.mrf.mxu0
        %v3380 = vadd.f32 %v3170, %v3379
        %3381 = vmatmul.f32.gmra.mxu0 %v3270
        %v3382 = vpop.f32.mrf.mxu0
        %v3383 = vadd.f32 %v3173, %v3382
        %3384 = vmatmul.f32.gmra.mxu0 %v3273
        %v3385 = vpop.f32.mrf.mxu0
        %v3386 = vadd.f32 %v3176, %v3385
        %3387 = vmatmul.f32.gmra.mxu0 %v3276
        %v3388 = vpop.f32.mrf.mxu0
        %v3389 = vadd.f32 %v3179, %v3388
        %3390 = vmatmul.f32.gmra.mxu0 %v3279
        %v3391 = vpop.f32.mrf.mxu0
        %v3392 = vadd.f32 %v3182, %v3391
        %3393 = vmatmul.f32.gmra.mxu0 %v3282
        %v3394 = vpop.f32.mrf.mxu0
        %v3395 = vadd.f32 %v3185, %v3394
        %3396 = vmatmul.f32.gmra.mxu0 %v3285
        %v3397 = vpop.f32.mrf.mxu0
        %v3398 = vadd.f32 %v3188, %v3397
        %3399 = vdwg.mxu0
        %v3400 = vadd.f32 %v3305, %v2982
        %v3401 = vadd.f32 %v3308, %v2985
        %v3402 = vadd.f32 %v3311, %v2988
        %v3403 = vadd.f32 %v3314, %v2991
        %v3404 = vadd.f32 %v3317, %v2994
        %v3405 = vadd.f32 %v3320, %v2997
        %v3406 = vadd.f32 %v3323, %v3000
        %v3407 = vadd.f32 %v3326, %v3003
        %v3408 = vadd.f32 %v3329, %v3006
        %v3409 = vadd.f32 %v3332, %v3009
        %v3410 = vadd.f32 %v3335, %v3012
        %v3411 = vadd.f32 %v3338, %v3015
        %v3412 = vadd.f32 %v3341, %v3018
        %v3413 = vadd.f32 %v3344, %v3021
        %v3414 = vadd.f32 %v3347, %v3024
        %v3415 = vadd.f32 %v3350, %v3027
        %v3416 = vadd.f32 %v3353, %v3030
        %v3417 = vadd.f32 %v3356, %v3033
        %v3418 = vadd.f32 %v3359, %v3036
        %v3419 = vadd.f32 %v3362, %v3039
        %v3420 = vadd.f32 %v3365, %v3042
        %v3421 = vadd.f32 %v3368, %v3045
        %v3422 = vadd.f32 %v3371, %v3048
        %v3423 = vadd.f32 %v3374, %v3051
        %v3424 = vadd.f32 %v3377, %v3054
        %v3425 = vadd.f32 %v3380, %v3057
        %v3426 = vadd.f32 %v3383, %v3060
        %v3427 = vadd.f32 %v3386, %v3063
        %v3428 = vadd.f32 %v3389, %v3066
        %v3429 = vadd.f32 %v3392, %v3069
        %v3430 = vadd.f32 %v3395, %v3072
        %v3431 = vadd.f32 %v3398, %v3075
        %v3432 = vmax.f32 %v3400, 0.0
        %v3433 = vmax.f32 %v3401, 0.0
        %v3434 = vmax.f32 %v3402, 0.0
        %v3435 = vmax.f32 %v3403, 0.0
        %v3436 = vmax.f32 %v3404, 0.0
        %v3437 = vmax.f32 %v3405, 0.0
        %v3438 = vmax.f32 %v3406, 0.0
        %v3439 = vmax.f32 %v3407, 0.0
        %v3440 = vmax.f32 %v3408, 0.0
        %v3441 = vmax.f32 %v3409, 0.0
        %v3442 = vmax.f32 %v3410, 0.0
        %v3443 = vmax.f32 %v3411, 0.0
        %v3444 = vmax.f32 %v3412, 0.0
        %v3445 = vmax.f32 %v3413, 0.0
        %v3446 = vmax.f32 %v3414, 0.0
        %v3447 = vmax.f32 %v3415, 0.0
        %v3448 = vmax.f32 %v3416, 0.0
        %v3449 = vmax.f32 %v3417, 0.0
        %v3450 = vmax.f32 %v3418, 0.0
        %v3451 = vmax.f32 %v3419, 0.0
        %v3452 = vmax.f32 %v3420, 0.0
        %v3453 = vmax.f32 %v3421, 0.0
        %v3454 = vmax.f32 %v3422, 0.0
        %v3455 = vmax.f32 %v3423, 0.0
        %v3456 = vmax.f32 %v3424, 0.0
        %v3457 = vmax.f32 %v3425, 0.0
        %v3458 = vmax.f32 %v3426, 0.0
        %v3459 = vmax.f32 %v3427, 0.0
        %v3460 = vmax.f32 %v3428, 0.0
        %v3461 = vmax.f32 %v3429, 0.0
        %v3462 = vmax.f32 %v3430, 0.0
        %v3463 = vmax.f32 %v3431, 0.0
        %v3464 = vld [vmem:[%s37] sm:$0xff]
        %v3465 = vld [vmem:[%s37 + $0x8] sm:$0xff]
        %v3466 = vld [vmem:[%s37 + $0x10] sm:$0xff]
        %v3467 = vld [vmem:[%s37 + $0x18] sm:$0xff]
        %v3468 = vld [vmem:[%s39] sm:$0x1]
        %v3470 = vperm.slane %v3468, 0
        %v3473 = vsel %vm2247, %v3432, 0
        %v3476 = vsel %vm2247, %v3433, 0
        %v3479 = vsel %vm2247, %v3434, 0
        %v3482 = vsel %vm2247, %v3435, 0
        %v3485 = vsel %vm2247, %v3436, 0
        %v3488 = vsel %vm2247, %v3437, 0
        %v3491 = vsel %vm2247, %v3438, 0
        %v3494 = vsel %vm2247, %v3439, 0
        %v3497 = vsel %vm2247, %v3440, 0
        %v3500 = vsel %vm2247, %v3441, 0
        %v3503 = vsel %vm2247, %v3442, 0
        %v3506 = vsel %vm2247, %v3443, 0
        %v3509 = vsel %vm2247, %v3444, 0
        %v3512 = vsel %vm2247, %v3445, 0
        %v3515 = vsel %vm2247, %v3446, 0
        %v3518 = vsel %vm2247, %v3447, 0
        %v3521 = vsel %vm2247, %v3448, 0
        %v3524 = vsel %vm2247, %v3449, 0
        %v3527 = vsel %vm2247, %v3450, 0
        %v3530 = vsel %vm2247, %v3451, 0
        %v3533 = vsel %vm2247, %v3452, 0
        %v3536 = vsel %vm2247, %v3453, 0
        %v3539 = vsel %vm2247, %v3454, 0
        %v3542 = vsel %vm2247, %v3455, 0
        %v3545 = vsel %vm2247, %v3456, 0
        %v3548 = vsel %vm2247, %v3457, 0
        %v3551 = vsel %vm2247, %v3458, 0
        %v3554 = vsel %vm2247, %v3459, 0
        %v3557 = vsel %vm2247, %v3460, 0
        %v3560 = vsel %vm2247, %v3461, 0
        %v3563 = vsel %vm2247, %v3462, 0
        %v3566 = vsel %vm2247, %v3463, 0
        %3568 = vmatpush.msra.mxu0 0.0
        %3569 = vmatpush.msra.mxu0 0.0
        %3570 = vmatpush.msra.mxu0 0.0
        %3571 = vmatpush.msra.mxu0 0.0
        %3572 = vmatpush.msra.mxu0 0.0
        %3573 = vmatpush.msra.mxu0 0.0
        %3574 = vmatpush.msra.mxu0 0.0
        %3575 = vmatpush.msra.mxu0 0.0
        %3576 = vmatpush.msra.mxu0 0.0
        %3577 = vmatpush.msra.mxu0 0.0
        %3578 = vmatpush.msra.mxu0 0.0
        %3579 = vmatpush.msra.mxu0 0.0
        %3580 = vmatpush.msra.mxu0 %v3467
        %3581 = vmatpush.msra.mxu0 %v3466
        %3582 = vmatpush.msra.mxu0 %v3465
        %3583 = vmatpush.msra.mxu0 %v3464
        %3584 = vmatmul.f32.gmra.mxu0 %v3473
        %v3585 = vpop.f32.mrf.mxu0
        %v3586 = vadd.f32 %v3470, %v3585
        %3587 = vmatmul.f32.gmra.mxu0 %v3476
        %v3588 = vpop.f32.mrf.mxu0
        %v3589 = vadd.f32 %v3470, %v3588
        %3590 = vmatmul.f32.gmra.mxu0 %v3479
        %v3591 = vpop.f32.mrf.mxu0
        %v3592 = vadd.f32 %v3470, %v3591
        %3593 = vmatmul.f32.gmra.mxu0 %v3482
        %v3594 = vpop.f32.mrf.mxu0
        %v3595 = vadd.f32 %v3470, %v3594
        %3596 = vmatmul.f32.gmra.mxu0 %v3485
        %v3597 = vpop.f32.mrf.mxu0
        %v3598 = vadd.f32 %v3470, %v3597
        %3599 = vmatmul.f32.gmra.mxu0 %v3488
        %v3600 = vpop.f32.mrf.mxu0
        %v3601 = vadd.f32 %v3470, %v3600
        %3602 = vmatmul.f32.gmra.mxu0 %v3491
        %v3603 = vpop.f32.mrf.mxu0
        %v3604 = vadd.f32 %v3470, %v3603
        %3605 = vmatmul.f32.gmra.mxu0 %v3494
        %v3606 = vpop.f32.mrf.mxu0
        %v3607 = vadd.f32 %v3470, %v3606
        %3608 = vmatmul.f32.gmra.mxu0 %v3497
        %v3609 = vpop.f32.mrf.mxu0
        %v3610 = vadd.f32 %v3470, %v3609
        %3611 = vmatmul.f32.gmra.mxu0 %v3500
        %v3612 = vpop.f32.mrf.mxu0
        %v3613 = vadd.f32 %v3470, %v3612
        %3614 = vmatmul.f32.gmra.mxu0 %v3503
        %v3615 = vpop.f32.mrf.mxu0
        %v3616 = vadd.f32 %v3470, %v3615
        %3617 = vmatmul.f32.gmra.mxu0 %v3506
        %v3618 = vpop.f32.mrf.mxu0
        %v3619 = vadd.f32 %v3470, %v3618
        %3620 = vmatmul.f32.gmra.mxu0 %v3509
        %v3621 = vpop.f32.mrf.mxu0
        %v3622 = vadd.f32 %v3470, %v3621
        %3623 = vmatmul.f32.gmra.mxu0 %v3512
        %v3624 = vpop.f32.mrf.mxu0
        %v3625 = vadd.f32 %v3470, %v3624
        %3626 = vmatmul.f32.gmra.mxu0 %v3515
        %v3627 = vpop.f32.mrf.mxu0
        %v3628 = vadd.f32 %v3470, %v3627
        %3629 = vmatmul.f32.gmra.mxu0 %v3518
        %v3630 = vpop.f32.mrf.mxu0
        %v3631 = vadd.f32 %v3470, %v3630
        %3632 = vmatmul.f32.gmra.mxu0 %v3521
        %v3633 = vpop.f32.mrf.mxu0
        %v3634 = vadd.f32 %v3470, %v3633
        %3635 = vmatmul.f32.gmra.mxu0 %v3524
        %v3636 = vpop.f32.mrf.mxu0
        %v3637 = vadd.f32 %v3470, %v3636
        %3638 = vmatmul.f32.gmra.mxu0 %v3527
        %v3639 = vpop.f32.mrf.mxu0
        %v3640 = vadd.f32 %v3470, %v3639
        %3641 = vmatmul.f32.gmra.mxu0 %v3530
        %v3642 = vpop.f32.mrf.mxu0
        %v3643 = vadd.f32 %v3470, %v3642
        %3644 = vmatmul.f32.gmra.mxu0 %v3533
        %v3645 = vpop.f32.mrf.mxu0
        %v3646 = vadd.f32 %v3470, %v3645
        %3647 = vmatmul.f32.gmra.mxu0 %v3536
        %v3648 = vpop.f32.mrf.mxu0
        %v3649 = vadd.f32 %v3470, %v3648
        %3650 = vmatmul.f32.gmra.mxu0 %v3539
        %v3651 = vpop.f32.mrf.mxu0
        %v3652 = vadd.f32 %v3470, %v3651
        %3653 = vmatmul.f32.gmra.mxu0 %v3542
        %v3654 = vpop.f32.mrf.mxu0
        %v3655 = vadd.f32 %v3470, %v3654
        %3656 = vmatmul.f32.gmra.mxu0 %v3545
        %v3657 = vpop.f32.mrf.mxu0
        %v3658 = vadd.f32 %v3470, %v3657
        %3659 = vmatmul.f32.gmra.mxu0 %v3548
        %v3660 = vpop.f32.mrf.mxu0
        %v3661 = vadd.f32 %v3470, %v3660
        %3662 = vmatmul.f32.gmra.mxu0 %v3551
        %v3663 = vpop.f32.mrf.mxu0
        %v3664 = vadd.f32 %v3470, %v3663
        %3665 = vmatmul.f32.gmra.mxu0 %v3554
        %v3666 = vpop.f32.mrf.mxu0
        %v3667 = vadd.f32 %v3470, %v3666
        %3668 = vmatmul.f32.gmra.mxu0 %v3557
        %v3669 = vpop.f32.mrf.mxu0
        %v3670 = vadd.f32 %v3470, %v3669
        %3671 = vmatmul.f32.gmra.mxu0 %v3560
        %v3672 = vpop.f32.mrf.mxu0
        %v3673 = vadd.f32 %v3470, %v3672
        %3674 = vmatmul.f32.gmra.mxu0 %v3563
        %v3675 = vpop.f32.mrf.mxu0
        %v3676 = vadd.f32 %v3470, %v3675
        %3677 = vmatmul.f32.gmra.mxu0 %v3566
        %v3678 = vpop.f32.mrf.mxu0
        %v3679 = vadd.f32 %v3470, %v3678
        %3680 = vdwg.mxu0
        %v3681 = vmax.f32 %v3586, 0.0
        %v3682 = vmax.f32 %v3589, 0.0
        %v3683 = vmax.f32 %v3592, 0.0
        %v3684 = vmax.f32 %v3595, 0.0
        %v3685 = vmax.f32 %v3598, 0.0
        %v3686 = vmax.f32 %v3601, 0.0
        %v3687 = vmax.f32 %v3604, 0.0
        %v3688 = vmax.f32 %v3607, 0.0
        %v3689 = vmax.f32 %v3610, 0.0
        %v3690 = vmax.f32 %v3613, 0.0
        %v3691 = vmax.f32 %v3616, 0.0
        %v3692 = vmax.f32 %v3619, 0.0
        %v3693 = vmax.f32 %v3622, 0.0
        %v3694 = vmax.f32 %v3625, 0.0
        %v3695 = vmax.f32 %v3628, 0.0
        %v3696 = vmax.f32 %v3631, 0.0
        %v3697 = vmax.f32 %v3634, 0.0
        %v3698 = vmax.f32 %v3637, 0.0
        %v3699 = vmax.f32 %v3640, 0.0
        %v3700 = vmax.f32 %v3643, 0.0
        %v3701 = vmax.f32 %v3646, 0.0
        %v3702 = vmax.f32 %v3649, 0.0
        %v3703 = vmax.f32 %v3652, 0.0
        %v3704 = vmax.f32 %v3655, 0.0
        %v3705 = vmax.f32 %v3658, 0.0
        %v3706 = vmax.f32 %v3661, 0.0
        %v3707 = vmax.f32 %v3664, 0.0
        %v3708 = vmax.f32 %v3667, 0.0
        %v3709 = vmax.f32 %v3670, 0.0
        %v3710 = vmax.f32 %v3673, 0.0
        %v3711 = vmax.f32 %v3676, 0.0
        %v3712 = vmax.f32 %v3679, 0.0
        %v3713 = vld [vmem:[%s41] sm:$0x1]
        %v3715 = vperm.slane %v3713, 0
        %v3717 = vmul.f32 %v3681, %v3715
        %v3718 = vmul.f32 %v3682, %v3715
        %v3719 = vmul.f32 %v3683, %v3715
        %v3720 = vmul.f32 %v3684, %v3715
        %v3721 = vmul.f32 %v3685, %v3715
        %v3722 = vmul.f32 %v3686, %v3715
        %v3723 = vmul.f32 %v3687, %v3715
        %v3724 = vmul.f32 %v3688, %v3715
        %v3725 = vmul.f32 %v3689, %v3715
        %v3726 = vmul.f32 %v3690, %v3715
        %v3727 = vmul.f32 %v3691, %v3715
        %v3728 = vmul.f32 %v3692, %v3715
        %v3729 = vmul.f32 %v3693, %v3715
        %v3730 = vmul.f32 %v3694, %v3715
        %v3731 = vmul.f32 %v3695, %v3715
        %v3732 = vmul.f32 %v3696, %v3715
        %v3733 = vmul.f32 %v3697, %v3715
        %v3734 = vmul.f32 %v3698, %v3715
        %v3735 = vmul.f32 %v3699, %v3715
        %v3736 = vmul.f32 %v3700, %v3715
        %v3737 = vmul.f32 %v3701, %v3715
        %v3738 = vmul.f32 %v3702, %v3715
        %v3739 = vmul.f32 %v3703, %v3715
        %v3740 = vmul.f32 %v3704, %v3715
        %v3741 = vmul.f32 %v3705, %v3715
        %v3742 = vmul.f32 %v3706, %v3715
        %v3743 = vmul.f32 %v3707, %v3715
        %v3744 = vmul.f32 %v3708, %v3715
        %v3745 = vmul.f32 %v3709, %v3715
        %v3746 = vmul.f32 %v3710, %v3715
        %v3747 = vmul.f32 %v3711, %v3715
        %v3748 = vmul.f32 %v3712, %v3715
        %v3749 = vsel %vm2247, %v3717, 0.0
        %3750 = vadd.xlane.f32.xlu0 %v3749
        %v3751 = vpop.xlane.xlu0 %3750
        %v3752 = vsel %vm2247, %v3718, 0.0
        %3753 = vadd.xlane.f32.xlu0 %v3752
        %v3754 = vpop.xlane.xlu0 %3753
        %v3755 = vsel %vm2247, %v3719, 0.0
        %3756 = vadd.xlane.f32.xlu0 %v3755
        %v3757 = vpop.xlane.xlu0 %3756
        %v3758 = vsel %vm2247, %v3720, 0.0
        %3759 = vadd.xlane.f32.xlu0 %v3758
        %v3760 = vpop.xlane.xlu0 %3759
        %v3761 = vsel %vm2247, %v3721, 0.0
        %3762 = vadd.xlane.f32.xlu0 %v3761
        %v3763 = vpop.xlane.xlu0 %3762
        %v3764 = vsel %vm2247, %v3722, 0.0
        %3765 = vadd.xlane.f32.xlu0 %v3764
        %v3766 = vpop.xlane.xlu0 %3765
        %v3767 = vsel %vm2247, %v3723, 0.0
        %3768 = vadd.xlane.f32.xlu0 %v3767
        %v3769 = vpop.xlane.xlu0 %3768
        %v3770 = vsel %vm2247, %v3724, 0.0
        %3771 = vadd.xlane.f32.xlu0 %v3770
        %v3772 = vpop.xlane.xlu0 %3771
        %v3773 = vsel %vm2247, %v3725, 0.0
        %3774 = vadd.xlane.f32.xlu0 %v3773
        %v3775 = vpop.xlane.xlu0 %3774
        %v3776 = vsel %vm2247, %v3726, 0.0
        %3777 = vadd.xlane.f32.xlu0 %v3776
        %v3778 = vpop.xlane.xlu0 %3777
        %v3779 = vsel %vm2247, %v3727, 0.0
        %3780 = vadd.xlane.f32.xlu0 %v3779
        %v3781 = vpop.xlane.xlu0 %3780
        %v3782 = vsel %vm2247, %v3728, 0.0
        %3783 = vadd.xlane.f32.xlu0 %v3782
        %v3784 = vpop.xlane.xlu0 %3783
        %v3785 = vsel %vm2247, %v3729, 0.0
        %3786 = vadd.xlane.f32.xlu0 %v3785
        %v3787 = vpop.xlane.xlu0 %3786
        %v3788 = vsel %vm2247, %v3730, 0.0
        %3789 = vadd.xlane.f32.xlu0 %v3788
        %v3790 = vpop.xlane.xlu0 %3789
        %v3791 = vsel %vm2247, %v3731, 0.0
        %3792 = vadd.xlane.f32.xlu0 %v3791
        %v3793 = vpop.xlane.xlu0 %3792
        %v3794 = vsel %vm2247, %v3732, 0.0
        %3795 = vadd.xlane.f32.xlu0 %v3794
        %v3796 = vpop.xlane.xlu0 %3795
        %v3797 = vsel %vm2247, %v3733, 0.0
        %3798 = vadd.xlane.f32.xlu0 %v3797
        %v3799 = vpop.xlane.xlu0 %3798
        %v3800 = vsel %vm2247, %v3734, 0.0
        %3801 = vadd.xlane.f32.xlu0 %v3800
        %v3802 = vpop.xlane.xlu0 %3801
        %v3803 = vsel %vm2247, %v3735, 0.0
        %3804 = vadd.xlane.f32.xlu0 %v3803
        %v3805 = vpop.xlane.xlu0 %3804
        %v3806 = vsel %vm2247, %v3736, 0.0
        %3807 = vadd.xlane.f32.xlu0 %v3806
        %v3808 = vpop.xlane.xlu0 %3807
        %v3809 = vsel %vm2247, %v3737, 0.0
        %3810 = vadd.xlane.f32.xlu0 %v3809
        %v3811 = vpop.xlane.xlu0 %3810
        %v3812 = vsel %vm2247, %v3738, 0.0
        %3813 = vadd.xlane.f32.xlu0 %v3812
        %v3814 = vpop.xlane.xlu0 %3813
        %v3815 = vsel %vm2247, %v3739, 0.0
        %3816 = vadd.xlane.f32.xlu0 %v3815
        %v3817 = vpop.xlane.xlu0 %3816
        %v3818 = vsel %vm2247, %v3740, 0.0
        %3819 = vadd.xlane.f32.xlu0 %v3818
        %v3820 = vpop.xlane.xlu0 %3819
        %v3821 = vsel %vm2247, %v3741, 0.0
        %3822 = vadd.xlane.f32.xlu0 %v3821
        %v3823 = vpop.xlane.xlu0 %3822
        %v3824 = vsel %vm2247, %v3742, 0.0
        %3825 = vadd.xlane.f32.xlu0 %v3824
        %v3826 = vpop.xlane.xlu0 %3825
        %v3827 = vsel %vm2247, %v3743, 0.0
        %3828 = vadd.xlane.f32.xlu0 %v3827
        %v3829 = vpop.xlane.xlu0 %3828
        %v3830 = vsel %vm2247, %v3744, 0.0
        %3831 = vadd.xlane.f32.xlu0 %v3830
        %v3832 = vpop.xlane.xlu0 %3831
        %v3833 = vsel %vm2247, %v3745, 0.0
        %3834 = vadd.xlane.f32.xlu0 %v3833
        %v3835 = vpop.xlane.xlu0 %3834
        %v3836 = vsel %vm2247, %v3746, 0.0
        %3837 = vadd.xlane.f32.xlu0 %v3836
        %v3838 = vpop.xlane.xlu0 %3837
        %v3839 = vsel %vm2247, %v3747, 0.0
        %3840 = vadd.xlane.f32.xlu0 %v3839
        %v3841 = vpop.xlane.xlu0 %3840
        %v3842 = vsel %vm2247, %v3748, 0.0
        %3843 = vadd.xlane.f32.xlu0 %v3842
        %v3844 = vpop.xlane.xlu0 %3843
        %v3845 = vmul.f32 %v3751, %v2123
        %v3846 = vmul.f32 %v3754, %v2124
        %v3847 = vmul.f32 %v3757, %v2125
        %v3848 = vmul.f32 %v3760, %v2126
        %v3849 = vmul.f32 %v3763, %v2127
        %v3850 = vmul.f32 %v3766, %v2128
        %v3851 = vmul.f32 %v3769, %v2129
        %v3852 = vmul.f32 %v3772, %v2130
        %v3853 = vmul.f32 %v3775, %v2131
        %v3854 = vmul.f32 %v3778, %v2132
        %v3855 = vmul.f32 %v3781, %v2133
        %v3856 = vmul.f32 %v3784, %v2134
        %v3857 = vmul.f32 %v3787, %v2135
        %v3858 = vmul.f32 %v3790, %v2136
        %v3859 = vmul.f32 %v3793, %v2137
        %v3860 = vmul.f32 %v3796, %v2138
        %v3861 = vmul.f32 %v3799, %v2139
        %v3862 = vmul.f32 %v3802, %v2140
        %v3863 = vmul.f32 %v3805, %v2141
        %v3864 = vmul.f32 %v3808, %v2142
        %v3865 = vmul.f32 %v3811, %v2143
        %v3866 = vmul.f32 %v3814, %v2144
        %v3867 = vmul.f32 %v3817, %v2145
        %v3868 = vmul.f32 %v3820, %v2146
        %v3869 = vmul.f32 %v3823, %v2147
        %v3870 = vmul.f32 %v3826, %v2148
        %v3871 = vmul.f32 %v3829, %v2149
        %v3872 = vmul.f32 %v3832, %v2150
        %v3873 = vmul.f32 %v3835, %v2151
        %v3874 = vmul.f32 %v3838, %v2152
        %v3875 = vmul.f32 %v3841, %v2153
        %v3876 = vmul.f32 %v3844, %v2154
        %v3877 = vld [vmem:[#allocation2] sm:$0x1]
        %v3879 = vperm.slane %v3877, 0
        %3880 = vset.pattern.permute.xlu0 0
        %3881 = vperm.xlu0 %3880, %v3879
        %v3882 = vpop.permute.xlu0 %3881
        %3884 = vmatpush.msra.mxu0 %v3860
        %3885 = vmatpush.msra.mxu0 %v3859
        %3886 = vmatpush.msra.mxu0 %v3858
        %3887 = vmatpush.msra.mxu0 %v3857
        %3888 = vmatpush.msra.mxu0 %v3856
        %3889 = vmatpush.msra.mxu0 %v3855
        %3890 = vmatpush.msra.mxu0 %v3854
        %3891 = vmatpush.msra.mxu0 %v3853
        %3892 = vmatpush.msra.mxu0 %v3852
        %3893 = vmatpush.msra.mxu0 %v3851
        %3894 = vmatpush.msra.mxu0 %v3850
        %3895 = vmatpush.msra.mxu0 %v3849
        %3896 = vmatpush.msra.mxu0 %v3848
        %3897 = vmatpush.msra.mxu0 %v3847
        %3898 = vmatpush.msra.mxu0 %v3846
        %3899 = vmatpush.msra.mxu0 %v3845
        %3900 = vmatmul.f32.gmra.mxu0 %v2171
        %v3901 = vpop.f32.mrf.mxu0
        %v3902 = vadd.f32 %v3882, %v3901
        %3903 = vmatmul.f32.gmra.mxu0 %v2173
        %v3904 = vpop.f32.mrf.mxu0
        %v3905 = vadd.f32 %v3882, %v3904
        %3906 = vmatmul.f32.gmra.mxu0 %v2175
        %v3907 = vpop.f32.mrf.mxu0
        %v3908 = vadd.f32 %v3882, %v3907
        %3909 = vmatmul.f32.gmra.mxu0 %v2177
        %v3910 = vpop.f32.mrf.mxu0
        %v3911 = vadd.f32 %v3882, %v3910
        %3912 = vdwg.mxu0
        %3913 = vmatpush.msra.mxu0 %v3876
        %3914 = vmatpush.msra.mxu0 %v3875
        %3915 = vmatpush.msra.mxu0 %v3874
        %3916 = vmatpush.msra.mxu0 %v3873
        %3917 = vmatpush.msra.mxu0 %v3872
        %3918 = vmatpush.msra.mxu0 %v3871
        %3919 = vmatpush.msra.mxu0 %v3870
        %3920 = vmatpush.msra.mxu0 %v3869
        %3921 = vmatpush.msra.mxu0 %v3868
        %3922 = vmatpush.msra.mxu0 %v3867
        %3923 = vmatpush.msra.mxu0 %v3866
        %3924 = vmatpush.msra.mxu0 %v3865
        %3925 = vmatpush.msra.mxu0 %v3864
        %3926 = vmatpush.msra.mxu0 %v3863
        %3927 = vmatpush.msra.mxu0 %v3862
        %3928 = vmatpush.msra.mxu0 %v3861
        %3929 = vmatmul.f32.gmra.mxu0 %v2172
        %v3930 = vpop.f32.mrf.mxu0
        %v3931 = vadd.f32 %v3902, %v3930
        %3932 = vmatmul.f32.gmra.mxu0 %v2174
        %v3933 = vpop.f32.mrf.mxu0
        %v3934 = vadd.f32 %v3905, %v3933
        %3935 = vmatmul.f32.gmra.mxu0 %v2176
        %v3936 = vpop.f32.mrf.mxu0
        %v3937 = vadd.f32 %v3908, %v3936
        %3938 = vmatmul.f32.gmra.mxu0 %v2178
        %v3939 = vpop.f32.mrf.mxu0
        %v3940 = vadd.f32 %v3911, %v3939
        %3941 = vdwg.mxu0
        %v3942 = vsel %vm2659, %v3931, -inf
        %v3943 = vsel %vm2659, %v3934, -inf
        %v3944 = vmax.f32 %v3942, %v3943
        %v3945 = vrot.slane %v3944, 4
        %v3946 = vmax.f32 %v3944, %v3945
        %v3947 = vrot.slane %v3946, 2
        %v3948 = vmax.f32 %v3946, %v3947
        %v3949 = vrot.slane %v3948, 1
        %v3950 = vmax.f32 %v3948, %v3949
        %v3951 = vsub.f32 %v3931, %v3950
        %v3952 = vsub.f32 %v3934, %v3950
        %v3953 = vmul.f32 %v3951, 1.442695
        %v3954 = vpow.pop %v3953
        %v3955 = vmul.f32 %v3952, 1.442695
        %v3956 = vpow.pop %v3955
        %v3957 = vsel %vm2659, %v3954, 0.0
        %v3958 = vsel %vm2659, %v3956, 0.0
        %v3959 = vadd.f32 %v3957, %v3958
        %v3960 = vrot.slane %v3959, 4
        %v3961 = vadd.f32 %v3959, %v3960
        %v3962 = vrot.slane %v3961, 2
        %v3963 = vadd.f32 %v3961, %v3962
        %v3964 = vrot.slane %v3963, 1
        %v3965 = vadd.f32 %v3963, %v3964
        %v3966 = vrcp.pop %v3965
        %v3967 = vmul.f32 %v3954, %v3966
        %v3968 = vmul.f32 %v3956, %v3966
        %v3969 = vsel %vm2659, %v3937, -inf
        %v3970 = vsel %vm2659, %v3940, -inf
        %v3971 = vmax.f32 %v3969, %v3970
        %v3972 = vrot.slane %v3971, 4
        %v3973 = vmax.f32 %v3971, %v3972
        %v3974 = vrot.slane %v3973, 2
        %v3975 = vmax.f32 %v3973, %v3974
        %v3976 = vrot.slane %v3975, 1
        %v3977 = vmax.f32 %v3975, %v3976
        %v3978 = vsub.f32 %v3937, %v3977
        %v3979 = vsub.f32 %v3940, %v3977
        %v3980 = vmul.f32 %v3978, 1.442695
        %v3981 = vpow.pop %v3980
        %v3982 = vmul.f32 %v3979, 1.442695
        %v3983 = vpow.pop %v3982
        %v3984 = vsel %vm2659, %v3981, 0.0
        %v3985 = vsel %vm2659, %v3983, 0.0
        %v3986 = vadd.f32 %v3984, %v3985
        %v3987 = vrot.slane %v3986, 4
        %v3988 = vadd.f32 %v3986, %v3987
        %v3989 = vrot.slane %v3988, 2
        %v3990 = vadd.f32 %v3988, %v3989
        %v3991 = vrot.slane %v3990, 1
        %v3992 = vadd.f32 %v3990, %v3991
        %v3993 = vrcp.pop %v3992
        %v3994 = vmul.f32 %v3981, %v3993
        %v3995 = vmul.f32 %v3983, %v3993
        %v3996 = vsel %vm2659, %v3967, 0.0
        %3997 = vadd.xlane.f32.xlu0 %v3996
        %v3998 = vpop.xlane.xlu0 %3997
        %v3999 = vsel %vm2659, %v3968, 0.0
        %4000 = vadd.xlane.f32.xlu0 %v3999
        %v4001 = vpop.xlane.xlu0 %4000
        %v4002 = vsel %vm2659, %v3994, 0.0
        %4003 = vadd.xlane.f32.xlu0 %v4002
        %v4004 = vpop.xlane.xlu0 %4003
        %v4005 = vsel %vm2659, %v3995, 0.0
        %4006 = vadd.xlane.f32.xlu0 %v4005
        %v4007 = vpop.xlane.xlu0 %4006
        %v4008 = vld [vmem:[%s45] sm:$0xff]
        %v4009 = vld [vmem:[%s45 + $0x8] sm:$0xff]
        %v4010 = vld [vmem:[%s45 + $0x10] sm:$0xff]
        %v4011 = vld [vmem:[%s45 + $0x18] sm:$0xff]
        %v4012 = vld [vmem:[%s47] sm:$0x1]
        %v4014 = vperm.slane %v4012, 0
        %v4016 = vmul.f32 %v3998, %v4014
        %v4017 = vmul.f32 %v4001, %v4014
        %v4018 = vmul.f32 %v4004, %v4014
        %v4019 = vmul.f32 %v4007, %v4014
        %4020 = vmatpush.msra.mxu0 0.0
        %4021 = vmatpush.msra.mxu0 0.0
        %4022 = vmatpush.msra.mxu0 0.0
        %4023 = vmatpush.msra.mxu0 0.0
        %4024 = vmatpush.msra.mxu0 0.0
        %4025 = vmatpush.msra.mxu0 0.0
        %4026 = vmatpush.msra.mxu0 0.0
        %4027 = vmatpush.msra.mxu0 0.0
        %4028 = vmatpush.msra.mxu0 0.0
        %4029 = vmatpush.msra.mxu0 0.0
        %4030 = vmatpush.msra.mxu0 0.0
        %4031 = vmatpush.msra.mxu0 0.0
        %4032 = vmatpush.msra.mxu0 %v4011
        %4033 = vmatpush.msra.mxu0 %v4010
        %4034 = vmatpush.msra.mxu0 %v4009
        %4035 = vmatpush.msra.mxu0 %v4008
        %4036 = vmatmul.f32.gmra.mxu0 %v2325
        %v4037 = vpop.f32.mrf.mxu0
        %v4038 = vadd.f32 %v4016, %v4037
        %4039 = vmatmul.f32.gmra.mxu0 %v2328
        %v4040 = vpop.f32.mrf.mxu0
        %v4041 = vadd.f32 %v4017, %v4040
        %4042 = vmatmul.f32.gmra.mxu0 %v2331
        %v4043 = vpop.f32.mrf.mxu0
        %v4044 = vadd.f32 %v4018, %v4043
        %4045 = vmatmul.f32.gmra.mxu0 %v2334
        %v4046 = vpop.f32.mrf.mxu0
        %v4047 = vadd.f32 %v4019, %v4046
        %4048 = vdwg.mxu0
        %v4049 = vld [vmem:[%s49] sm:$0x1]
        %v4051 = vperm.slane %v4049, 0
        %v4053 = vadd.f32 %v4038, %v4051
        %v4054 = vadd.f32 %v4041, %v4051
        %v4055 = vadd.f32 %v4044, %v4051
        %v4056 = vadd.f32 %v4047, %v4051
        %v4057 = vmax.f32 %v4053, 0.0
        %v4058 = vmax.f32 %v4054, 0.0
        %v4059 = vmax.f32 %v4055, 0.0
        %v4060 = vmax.f32 %v4056, 0.0
        %v4061 = vld [vmem:[%s51] sm:$0x1]
        %v4063 = vperm.slane %v4061, 0
        %v4065 = vmul.f32 %v4057, %v4063
        %v4066 = vmul.f32 %v4058, %v4063
        %v4067 = vmul.f32 %v4059, %v4063
        %v4068 = vmul.f32 %v4060, %v4063
        %v4069 = vsel %vm2247, %v4065, 0.0
        %4070 = vadd.xlane.f32.xlu0 %v4069
        %v4071 = vpop.xlane.xlu0 %4070
        %v4072 = vsel %vm2247, %v4066, 0.0
        %4073 = vadd.xlane.f32.xlu0 %v4072
        %v4074 = vpop.xlane.xlu0 %4073
        %v4075 = vsel %vm2247, %v4067, 0.0
        %4076 = vadd.xlane.f32.xlu0 %v4075
        %v4077 = vpop.xlane.xlu0 %4076
        %v4078 = vsel %vm2247, %v4068, 0.0
        %4079 = vadd.xlane.f32.xlu0 %v4078
        %v4080 = vpop.xlane.xlu0 %4079
        %v4081 = vld [vmem:[#allocation3] sm:$0x1]
        %v4083 = vperm.slane %v4081, 0
        %v4085 = vadd.f32 %v4071, %v4083
        %v4086 = vadd.f32 %v4074, %v4083
        %v4087 = vadd.f32 %v4077, %v4083
        %v4088 = vadd.f32 %v4080, %v4083
        %v4089 = vsub.f32 0.0, %v4085
        %v4090 = vsub.f32 0.0, %v4086
        %v4091 = vsub.f32 0.0, %v4087
        %v4092 = vsub.f32 0.0, %v4088
        %v4093 = vmul.f32 %v4089, 1.442695
        %v4094 = vpow.pop %v4093
        %v4095 = vmul.f32 %v4090, 1.442695
        %v4096 = vpow.pop %v4095
        %v4097 = vmul.f32 %v4091, 1.442695
        %v4098 = vpow.pop %v4097
        %v4099 = vmul.f32 %v4092, 1.442695
        %v4100 = vpow.pop %v4099
        %v4101 = vadd.f32 %v4094, 1.0
        %v4102 = vadd.f32 %v4096, 1.0
        %v4103 = vadd.f32 %v4098, 1.0
        %v4104 = vadd.f32 %v4100, 1.0
        %v4105 = vrcp.pop %v4101
        %v4106 = vmul.f32 %v4101, %v4105
        %v4107 = vsub.f32 1.0, %v4106
        %v4108 = vmul.f32 %v4105, %v4107
        %v4109 = vadd.f32 %v4105, %v4108
        %vm4110 = vweird.f32 %v4101
        %vm4111 = vweird.f32 %v4105
        %vm4112 = vmor %vm4110, %vm4111
        %v4113 = vsel %vm4112, %v4105, %v4109
        %v4114 = vand.u32 2147483647, %v4101
        %vm4115 = vcmp.eq.f32.partialorder %v4114, 8.507059e+37
        %v4116 = vand.u32 %v4101, 2147483648
        %v4117 = vor.u32 1.1754944e-38, %v4116
        %v4118 = vsel %vm4115, %v4117, %v4113
        %v4119 = vmul.f32 1.0, %v4118
        %v4120 = vrcp.pop %v4102
        %v4121 = vmul.f32 %v4102, %v4120
        %v4122 = vsub.f32 1.0, %v4121
        %v4123 = vmul.f32 %v4120, %v4122
        %v4124 = vadd.f32 %v4120, %v4123
        %vm4125 = vweird.f32 %v4102
        %vm4126 = vweird.f32 %v4120
        %vm4127 = vmor %vm4125, %vm4126
        %v4128 = vsel %vm4127, %v4120, %v4124
        %v4129 = vand.u32 2147483647, %v4102
        %vm4130 = vcmp.eq.f32.partialorder %v4129, 8.507059e+37
        %v4131 = vand.u32 %v4102, 2147483648
        %v4132 = vor.u32 1.1754944e-38, %v4131
        %v4133 = vsel %vm4130, %v4132, %v4128
        %v4134 = vmul.f32 1.0, %v4133
        %v4135 = vrcp.pop %v4103
        %v4136 = vmul.f32 %v4103, %v4135
        %v4137 = vsub.f32 1.0, %v4136
        %v4138 = vmul.f32 %v4135, %v4137
        %v4139 = vadd.f32 %v4135, %v4138
        %vm4140 = vweird.f32 %v4103
        %vm4141 = vweird.f32 %v4135
        %vm4142 = vmor %vm4140, %vm4141
        %v4143 = vsel %vm4142, %v4135, %v4139
        %v4144 = vand.u32 2147483647, %v4103
        %vm4145 = vcmp.eq.f32.partialorder %v4144, 8.507059e+37
        %v4146 = vand.u32 %v4103, 2147483648
        %v4147 = vor.u32 1.1754944e-38, %v4146
        %v4148 = vsel %vm4145, %v4147, %v4143
        %v4149 = vmul.f32 1.0, %v4148
        %v4150 = vrcp.pop %v4104
        %v4151 = vmul.f32 %v4104, %v4150
        %v4152 = vsub.f32 1.0, %v4151
        %v4153 = vmul.f32 %v4150, %v4152
        %v4154 = vadd.f32 %v4150, %v4153
        %vm4155 = vweird.f32 %v4104
        %vm4156 = vweird.f32 %v4150
        %vm4157 = vmor %vm4155, %vm4156
        %v4158 = vsel %vm4157, %v4150, %v4154
        %v4159 = vand.u32 2147483647, %v4104
        %vm4160 = vcmp.eq.f32.partialorder %v4159, 8.507059e+37
        %v4161 = vand.u32 %v4104, 2147483648
        %v4162 = vor.u32 1.1754944e-38, %v4161
        %v4163 = vsel %vm4160, %v4162, %v4158
        %v4164 = vmul.f32 1.0, %v4163
        %v4165 = vsub.f32 1.0, %v2227
        %v4166 = vsub.f32 1.0, %v2228
        %v4167 = vsub.f32 1.0, %v2229
        %v4168 = vsub.f32 1.0, %v2230
        %v4169 = vmul.f32 %v3967, %v4165
        %v4170 = vmul.f32 %v3968, %v4166
        %v4171 = vmul.f32 %v3994, %v4167
        %v4172 = vmul.f32 %v3995, %v4168
        %v4173 = vmul.f32 %v2227, %v2231
        %v4174 = vmul.f32 %v2228, %v2232
        %v4175 = vmul.f32 %v2229, %v2233
        %v4176 = vmul.f32 %v2230, %v2234
        %v4177 = vadd.f32 %v4169, %v4173
        %v4178 = vadd.f32 %v4170, %v4174
        %v4179 = vadd.f32 %v4171, %v4175
        %v4180 = vadd.f32 %v4172, %v4176
        %v4181 = vsub.f32 1.0, %v2235
        %v4182 = vsub.f32 1.0, %v2236
        %v4183 = vsub.f32 1.0, %v2237
        %v4184 = vsub.f32 1.0, %v2238
        %v4185 = vmul.f32 %v4119, %v4181
        %v4186 = vmul.f32 %v4134, %v4182
        %v4187 = vmul.f32 %v4149, %v4183
        %v4188 = vmul.f32 %v4164, %v4184
        %v4189 = vadd.f32 %v4185, %v2235
        %v4190 = vadd.f32 %v4186, %v2236
        %v4191 = vadd.f32 %v4187, %v2237
        %v4192 = vadd.f32 %v4188, %v2238
        %4194 = vset.pattern.permute.xlu0 0
        %4195 = vperm.xlu0 %4194, %v4189
        %v4196 = vpop.permute.xlu0 %4195
        %4199 = vset.pattern.permute.xlu0 0
        %4200 = vperm.xlu0 %4199, %v4190
        %v4201 = vpop.permute.xlu0 %4200
        %4204 = vset.pattern.permute.xlu0 0
        %4205 = vperm.xlu0 %4204, %v4191
        %v4206 = vpop.permute.xlu0 %4205
        %4209 = vset.pattern.permute.xlu0 0
        %4210 = vperm.xlu0 %4209, %v4192
        %v4211 = vpop.permute.xlu0 %4210
        %v4213 = vmul.f32 %v4177, %v4196
        %v4214 = vmul.f32 %v4178, %v4201
        %v4215 = vmul.f32 %v4179, %v4206
        %v4216 = vmul.f32 %v4180, %v4211
        %4221 = vrot.lane.b32.xlu0 %v4213, 8
        %v4222 = vpop.permute.xlu0 %4221
        %4223 = vrot.lane.b32.xlu0 %v4214, 8
        %v4224 = vpop.permute.xlu0 %4223
        %4225 = vrot.lane.b32.xlu0 %v4215, 8
        %v4226 = vpop.permute.xlu0 %4225
        %4227 = vrot.lane.b32.xlu0 %v4216, 8
        %v4228 = vpop.permute.xlu0 %4227
        %v4233 = vsel %vm2659, %v4213, %v4222
        %v4234 = vsel %vm2659, %v4214, %v4224
        %v4235 = vsel %vm2659, %v4215, %v4226
        %v4236 = vsel %vm2659, %v4216, %v4228
        %v4237 = vmul.f32 %v4233, %v2191
        %v4238 = vmul.f32 %v4234, %v2192
        %v4239 = vmul.f32 %v4235, %v2193
        %v4240 = vmul.f32 %v4236, %v2194
        %v4242 = vsel %vm3190, %v4237, 0
        %v4245 = vsel %vm3190, %v4238, 0
        %v4248 = vsel %vm3190, %v4239, 0
        %v4251 = vsel %vm3190, %v4240, 0
        %4253 = vmatpush.msra.mxu0 0.0
        %4254 = vmatpush.msra.mxu0 0.0
        %4255 = vmatpush.msra.mxu0 0.0
        %4256 = vmatpush.msra.mxu0 0.0
        %4257 = vmatpush.msra.mxu0 0.0
        %4258 = vmatpush.msra.mxu0 0.0
        %4259 = vmatpush.msra.mxu0 0.0
        %4260 = vmatpush.msra.mxu0 0.0
        %4261 = vmatpush.msra.mxu0 0.0
        %4262 = vmatpush.msra.mxu0 0.0
        %4263 = vmatpush.msra.mxu0 0.0
        %4264 = vmatpush.msra.mxu0 0.0
        %4265 = vmatpush.msra.mxu0 0.0
        %4266 = vmatpush.msra.mxu0 0.0
        %4267 = vmatpush.msra.mxu0 %v2218
        %4268 = vmatpush.msra.mxu0 %v2217
        %4269 = vmatmul.f32.gmra.mxu0 %v4242
        %v4270 = vpop.f32.mrf.mxu0
        %v4271 = vadd.f32 0.0, %v4270
        %4272 = vmatmul.f32.gmra.mxu0 %v4245
        %v4273 = vpop.f32.mrf.mxu0
        %v4274 = vadd.f32 0.0, %v4273
        %4275 = vmatmul.f32.gmra.mxu0 %v4248
        %v4276 = vpop.f32.mrf.mxu0
        %v4277 = vadd.f32 0.0, %v4276
        %4278 = vmatmul.f32.gmra.mxu0 %v4251
        %v4279 = vpop.f32.mrf.mxu0
        %v4280 = vadd.f32 0.0, %v4279
        %4281 = vdwg.mxu0
        %4286 = vrot.lane.b32.xlu0 %v4271, 32
        %v4287 = vpop.permute.xlu0 %4286
        %4288 = vrot.lane.b32.xlu0 %v4274, 32
        %v4289 = vpop.permute.xlu0 %4288
        %4290 = vrot.lane.b32.xlu0 %v4277, 32
        %v4291 = vpop.permute.xlu0 %4290
        %4292 = vrot.lane.b32.xlu0 %v4280, 32
        %v4293 = vpop.permute.xlu0 %4292
        %v4298 = vsel %vm2247, %v2219, %v4287
        %v4299 = vsel %vm2247, %v2220, %v4289
        %v4300 = vsel %vm2247, %v2221, %v4291
        %v4301 = vsel %vm2247, %v2222, %v4293
        %v4302 = vld [vmem:[%s55] sm:$0x1]
        %v4303 = vld [vmem:[%s57] sm:$0x1]
        %vm4304 = vcmask 523264
        %v4305 = vsel %vm4304, %v4298, 0.0
        %4306 = vadd.xlane.f32.xlu0 %v4305
        %v4307 = vpop.xlane.xlu0 %4306
        %v4308 = vsel %vm4304, %v4299, 0.0
        %4309 = vadd.xlane.f32.xlu0 %v4308
        %v4310 = vpop.xlane.xlu0 %4309
        %v4311 = vsel %vm4304, %v4300, 0.0
        %4312 = vadd.xlane.f32.xlu0 %v4311
        %v4313 = vpop.xlane.xlu0 %4312
        %v4314 = vsel %vm4304, %v4301, 0.0
        %4315 = vadd.xlane.f32.xlu0 %v4314
        %v4316 = vpop.xlane.xlu0 %4315
        %v4317 = vrcp.pop 64.0
        %v4318 = vmul.f32 64.0, %v4317
        %v4319 = vsub.f32 1.0, %v4318
        %v4320 = vmul.f32 %v4317, %v4319
        %v4321 = vadd.f32 %v4317, %v4320
        %vm4322 = vweird.f32 %v4317
        %v4323 = vsel %vm4322, %v4317, %v4321
        %v4324 = vmul.f32 %v4307, %v4323
        %v4325 = vmul.f32 %v4310, %v4323
        %v4326 = vmul.f32 %v4313, %v4323
        %v4327 = vmul.f32 %v4316, %v4323
        %v4328 = vsub.f32 %v4298, %v4324
        %v4329 = vsub.f32 %v4299, %v4325
        %v4330 = vsub.f32 %v4300, %v4326
        %v4331 = vsub.f32 %v4301, %v4327
        %v4332 = vmul.f32 %v4328, %v4328
        %v4333 = vmul.f32 %v4329, %v4329
        %v4334 = vmul.f32 %v4330, %v4330
        %v4335 = vmul.f32 %v4331, %v4331
        %v4336 = vsel %vm4304, %v4332, 0.0
        %4337 = vadd.xlane.f32.xlu0 %v4336
        %v4338 = vpop.xlane.xlu0 %4337
        %v4339 = vsel %vm4304, %v4333, 0.0
        %4340 = vadd.xlane.f32.xlu0 %v4339
        %v4341 = vpop.xlane.xlu0 %4340
        %v4342 = vsel %vm4304, %v4334, 0.0
        %4343 = vadd.xlane.f32.xlu0 %v4342
        %v4344 = vpop.xlane.xlu0 %4343
        %v4345 = vsel %vm4304, %v4335, 0.0
        %4346 = vadd.xlane.f32.xlu0 %v4345
        %v4347 = vpop.xlane.xlu0 %4346
        %v4348 = vmul.f32 %v4338, %v4323
        %v4349 = vmul.f32 %v4341, %v4323
        %v4350 = vmul.f32 %v4344, %v4323
        %v4351 = vmul.f32 %v4347, %v4323
        %v4352 = vadd.f32 %v4348, 1e-05
        %v4353 = vadd.f32 %v4349, 1e-05
        %v4354 = vadd.f32 %v4350, 1e-05
        %v4355 = vadd.f32 %v4351, 1e-05
        %v4356 = vrsqrt.pop %v4352
        %v4357 = vmul.f32 %v4356, %v4352
        %v4358 = vmul.f32 %v4357, %v4356
        %v4359 = vmul.f32 0.5, %v4358
        %v4360 = vsub.f32 1.5, %v4359
        %v4361 = vmul.f32 %v4356, %v4360
        %vm4362 = vweird.f32 %v4352
        %vm4363 = vweird.f32 %v4356
        %vm4364 = vmor %vm4362, %vm4363
        %v4365 = vsel %vm4364, %v4356, %v4361
        %v4366 = vrsqrt.pop %v4353
        %v4367 = vmul.f32 %v4366, %v4353
        %v4368 = vmul.f32 %v4367, %v4366
        %v4369 = vmul.f32 0.5, %v4368
        %v4370 = vsub.f32 1.5, %v4369
        %v4371 = vmul.f32 %v4366, %v4370
        %vm4372 = vweird.f32 %v4353
        %vm4373 = vweird.f32 %v4366
        %vm4374 = vmor %vm4372, %vm4373
        %v4375 = vsel %vm4374, %v4366, %v4371
        %v4376 = vrsqrt.pop %v4354
        %v4377 = vmul.f32 %v4376, %v4354
        %v4378 = vmul.f32 %v4377, %v4376
        %v4379 = vmul.f32 0.5, %v4378
        %v4380 = vsub.f32 1.5, %v4379
        %v4381 = vmul.f32 %v4376, %v4380
        %vm4382 = vweird.f32 %v4354
        %vm4383 = vweird.f32 %v4376
        %vm4384 = vmor %vm4382, %vm4383
        %v4385 = vsel %vm4384, %v4376, %v4381
        %v4386 = vrsqrt.pop %v4355
        %v4387 = vmul.f32 %v4386, %v4355
        %v4388 = vmul.f32 %v4387, %v4386
        %v4389 = vmul.f32 0.5, %v4388
        %v4390 = vsub.f32 1.5, %v4389
        %v4391 = vmul.f32 %v4386, %v4390
        %vm4392 = vweird.f32 %v4355
        %vm4393 = vweird.f32 %v4386
        %vm4394 = vmor %vm4392, %vm4393
        %v4395 = vsel %vm4394, %v4386, %v4391
        %v4396 = vmul.f32 %v4328, %v4365
        %v4397 = vmul.f32 %v4329, %v4375
        %v4398 = vmul.f32 %v4330, %v4385
        %v4399 = vmul.f32 %v4331, %v4395
        %v4401 = vperm.slane %v4302, 0
        %v4403 = vmul.f32 %v4396, %v4401
        %v4404 = vmul.f32 %v4397, %v4401
        %v4405 = vmul.f32 %v4398, %v4401
        %v4406 = vmul.f32 %v4399, %v4401
        %v4408 = vperm.slane %v4303, 0
        %v4410 = vadd.f32 %v4403, %v4408
        %v4411 = vadd.f32 %v4404, %v4408
        %v4412 = vadd.f32 %v4405, %v4408
        %v4413 = vadd.f32 %v4406, %v4408
        %v4414 = vld [vmem:[%s59] sm:$0xff]
        %v4415 = vld [vmem:[%s59 + $0x8] sm:$0xff]
        %v4416 = vld [vmem:[%s59 + $0x10] sm:$0xff]
        %v4417 = vld [vmem:[%s59 + $0x18] sm:$0xff]
        %v4418 = vld [vmem:[%s59 + $0x20] sm:$0xff]
        %v4419 = vld [vmem:[%s59 + $0x28] sm:$0xff]
        %v4420 = vld [vmem:[%s59 + $0x30] sm:$0xff]
        %v4421 = vld [vmem:[%s59 + $0x38] sm:$0xff]
        %v4422 = vld [vmem:[%s61] sm:$0xff]
        %v4423 = vld [vmem:[%s61 + $0x8] sm:$0xff]
        %v4424 = vld [vmem:[%s61 + $0x10] sm:$0xff]
        %v4425 = vld [vmem:[%s61 + $0x18] sm:$0xff]
        %v4426 = vld [vmem:[%s61 + $0x20] sm:$0xff]
        %v4427 = vld [vmem:[%s61 + $0x28] sm:$0xff]
        %v4428 = vld [vmem:[%s61 + $0x30] sm:$0xff]
        %v4429 = vld [vmem:[%s61 + $0x38] sm:$0xff]
        %v4430 = vld [vmem:[%s63] sm:$0x1]
        %v4431 = vld [vmem:[%s65] sm:$0x1]
        %v4432 = vld [vmem:[%s67] sm:$0x1]
        %v4433 = vld [vmem:[%s69] sm:$0xff]
        %v4434 = vld [vmem:[%s69 + $0x8] sm:$0xff]
        %v4435 = vld [vmem:[%s69 + $0x10] sm:$0xff]
        %v4436 = vld [vmem:[%s69 + $0x18] sm:$0xff]
        %v4437 = vld [vmem:[%s71] sm:$0xff]
        %v4438 = vld [vmem:[%s71 + $0x8] sm:$0xff]
        %v4439 = vld [vmem:[%s71 + $0x10] sm:$0xff]
        %v4440 = vld [vmem:[%s71 + $0x18] sm:$0xff]
        %v4441 = vld [vmem:[%s73] sm:$0x1]
        %v4443 = vperm.slane %v4430, 0
        %v4446 = vsel %vm4304, %v4410, 0
        %v4449 = vsel %vm4304, %v4411, 0
        %v4452 = vsel %vm4304, %v4412, 0
        %v4455 = vsel %vm4304, %v4413, 0
        %4457 = vmatpush.msra.mxu0 0.0
        %4458 = vmatpush.msra.mxu0 0.0
        %4459 = vmatpush.msra.mxu0 0.0
        %4460 = vmatpush.msra.mxu0 0.0
        %4461 = vmatpush.msra.mxu0 0.0
        %4462 = vmatpush.msra.mxu0 0.0
        %4463 = vmatpush.msra.mxu0 0.0
        %4464 = vmatpush.msra.mxu0 0.0
        %4465 = vmatpush.msra.mxu0 %v4421
        %4466 = vmatpush.msra.mxu0 %v4420
        %4467 = vmatpush.msra.mxu0 %v4419
        %4468 = vmatpush.msra.mxu0 %v4418
        %4469 = vmatpush.msra.mxu0 %v4417
        %4470 = vmatpush.msra.mxu0 %v4416
        %4471 = vmatpush.msra.mxu0 %v4415
        %4472 = vmatpush.msra.mxu0 %v4414
        %4473 = vmatmul.f32.gmra.mxu0 %v4446
        %v4474 = vpop.f32.mrf.mxu0
        %v4475 = vadd.f32 %v4443, %v4474
        %4476 = vmatmul.f32.gmra.mxu0 %v4449
        %v4477 = vpop.f32.mrf.mxu0
        %v4478 = vadd.f32 %v4443, %v4477
        %4479 = vmatmul.f32.gmra.mxu0 %v4452
        %v4480 = vpop.f32.mrf.mxu0
        %v4481 = vadd.f32 %v4443, %v4480
        %4482 = vmatmul.f32.gmra.mxu0 %v4455
        %v4483 = vpop.f32.mrf.mxu0
        %v4484 = vadd.f32 %v4443, %v4483
        %4485 = vdwg.mxu0
        %4486 = vmatpush.msra.mxu0 0.0
        %4487 = vmatpush.msra.mxu0 0.0
        %4488 = vmatpush.msra.mxu0 0.0
        %4489 = vmatpush.msra.mxu0 0.0
        %4490 = vmatpush.msra.mxu0 0.0
        %4491 = vmatpush.msra.mxu0 0.0
        %4492 = vmatpush.msra.mxu0 0.0
        %4493 = vmatpush.msra.mxu0 0.0
        %4494 = vmatpush.msra.mxu0 %v4429
        %4495 = vmatpush.msra.mxu0 %v4428
        %4496 = vmatpush.msra.mxu0 %v4427
        %4497 = vmatpush.msra.mxu0 %v4426
        %4498 = vmatpush.msra.mxu0 %v4425
        %4499 = vmatpush.msra.mxu0 %v4424
        %4500 = vmatpush.msra.mxu0 %v4423
        %4501 = vmatpush.msra.mxu0 %v4422
        %4502 = vmatmul.f32.gmra.mxu0 %v4446
        %v4503 = vpop.f32.mrf.mxu0
        %v4504 = vadd.f32 0.0, %v4503
        %4505 = vmatmul.f32.gmra.mxu0 %v4449
        %v4506 = vpop.f32.mrf.mxu0
        %v4507 = vadd.f32 0.0, %v4506
        %4508 = vmatmul.f32.gmra.mxu0 %v4452
        %v4509 = vpop.f32.mrf.mxu0
        %v4510 = vadd.f32 0.0, %v4509
        %4511 = vmatmul.f32.gmra.mxu0 %v4455
        %v4512 = vpop.f32.mrf.mxu0
        %v4513 = vadd.f32 0.0, %v4512
        %4514 = vdwg.mxu0
        %v4516 = vsel %vm2247, %v2205, 0
        %v4519 = vsel %vm2247, %v2206, 0
        %v4522 = vsel %vm2247, %v2207, 0
        %v4525 = vsel %vm2247, %v2208, 0
        %4527 = vmatpush.msra.mxu0 0.0
        %4528 = vmatpush.msra.mxu0 0.0
        %4529 = vmatpush.msra.mxu0 0.0
        %4530 = vmatpush.msra.mxu0 0.0
        %4531 = vmatpush.msra.mxu0 0.0
        %4532 = vmatpush.msra.mxu0 0.0
        %4533 = vmatpush.msra.mxu0 0.0
        %4534 = vmatpush.msra.mxu0 0.0
        %4535 = vmatpush.msra.mxu0 0.0
        %4536 = vmatpush.msra.mxu0 0.0
        %4537 = vmatpush.msra.mxu0 0.0
        %4538 = vmatpush.msra.mxu0 0.0
        %4539 = vmatpush.msra.mxu0 %v4513
        %4540 = vmatpush.msra.mxu0 %v4510
        %4541 = vmatpush.msra.mxu0 %v4507
        %4542 = vmatpush.msra.mxu0 %v4504
        %4543 = vmatmul.f32.gmra.mxu0 %v4516
        %v4544 = vpop.f32.mrf.mxu0
        %v4545 = vadd.f32 0.0, %v4544
        %4546 = vmatmul.f32.gmra.mxu0 %v4519
        %v4547 = vpop.f32.mrf.mxu0
        %v4548 = vadd.f32 0.0, %v4547
        %4549 = vmatmul.f32.gmra.mxu0 %v4522
        %v4550 = vpop.f32.mrf.mxu0
        %v4551 = vadd.f32 0.0, %v4550
        %4552 = vmatmul.f32.gmra.mxu0 %v4525
        %v4553 = vpop.f32.mrf.mxu0
        %v4554 = vadd.f32 0.0, %v4553
        %4555 = vdwg.mxu0
        %v4556 = vsub.f32 %v4475, %v4545
        %v4557 = vsub.f32 %v4478, %v4548
        %v4558 = vsub.f32 %v4481, %v4551
        %v4559 = vsub.f32 %v4484, %v4554
        %v4560 = vmax.f32 %v4556, 0.0
        %v4561 = vmax.f32 %v4557, 0.0
        %v4562 = vmax.f32 %v4558, 0.0
        %v4563 = vmax.f32 %v4559, 0.0
        %v4564 = vsel %vm2247, %v4560, 0.0
        %4565 = vadd.xlane.f32.xlu0 %v4564
        %v4566 = vpop.xlane.xlu0 %4565
        %v4567 = vsel %vm2247, %v4561, 0.0
        %4568 = vadd.xlane.f32.xlu0 %v4567
        %v4569 = vpop.xlane.xlu0 %4568
        %v4570 = vsel %vm2247, %v4562, 0.0
        %4571 = vadd.xlane.f32.xlu0 %v4570
        %v4572 = vpop.xlane.xlu0 %4571
        %v4573 = vsel %vm2247, %v4563, 0.0
        %4574 = vadd.xlane.f32.xlu0 %v4573
        %v4575 = vpop.xlane.xlu0 %4574
        %v4576 = vrcp.pop 32.0
        %v4577 = vmul.f32 32.0, %v4576
        %v4578 = vsub.f32 1.0, %v4577
        %v4579 = vmul.f32 %v4576, %v4578
        %v4580 = vadd.f32 %v4576, %v4579
        %vm4581 = vweird.f32 %v4576
        %v4582 = vsel %vm4581, %v4576, %v4580
        %v4583 = vmul.f32 %v4566, %v4582
        %v4584 = vmul.f32 %v4569, %v4582
        %v4585 = vmul.f32 %v4572, %v4582
        %v4586 = vmul.f32 %v4575, %v4582
        %v4587 = vsub.f32 %v4560, %v4583
        %v4588 = vsub.f32 %v4561, %v4584
        %v4589 = vsub.f32 %v4562, %v4585
        %v4590 = vsub.f32 %v4563, %v4586
        %v4591 = vmul.f32 %v4587, %v4587
        %v4592 = vmul.f32 %v4588, %v4588
        %v4593 = vmul.f32 %v4589, %v4589
        %v4594 = vmul.f32 %v4590, %v4590
        %v4595 = vsel %vm2247, %v4591, 0.0
        %4596 = vadd.xlane.f32.xlu0 %v4595
        %v4597 = vpop.xlane.xlu0 %4596
        %v4598 = vsel %vm2247, %v4592, 0.0
        %4599 = vadd.xlane.f32.xlu0 %v4598
        %v4600 = vpop.xlane.xlu0 %4599
        %v4601 = vsel %vm2247, %v4593, 0.0
        %4602 = vadd.xlane.f32.xlu0 %v4601
        %v4603 = vpop.xlane.xlu0 %4602
        %v4604 = vsel %vm2247, %v4594, 0.0
        %4605 = vadd.xlane.f32.xlu0 %v4604
        %v4606 = vpop.xlane.xlu0 %4605
        %v4607 = vmul.f32 %v4597, %v4582
        %v4608 = vmul.f32 %v4600, %v4582
        %v4609 = vmul.f32 %v4603, %v4582
        %v4610 = vmul.f32 %v4606, %v4582
        %v4611 = vadd.f32 %v4607, 1e-05
        %v4612 = vadd.f32 %v4608, 1e-05
        %v4613 = vadd.f32 %v4609, 1e-05
        %v4614 = vadd.f32 %v4610, 1e-05
        %v4615 = vrsqrt.pop %v4611
        %v4616 = vmul.f32 %v4615, %v4611
        %v4617 = vmul.f32 %v4616, %v4615
        %v4618 = vmul.f32 0.5, %v4617
        %v4619 = vsub.f32 1.5, %v4618
        %v4620 = vmul.f32 %v4615, %v4619
        %vm4621 = vweird.f32 %v4611
        %vm4622 = vweird.f32 %v4615
        %vm4623 = vmor %vm4621, %vm4622
        %v4624 = vsel %vm4623, %v4615, %v4620
        %v4625 = vrsqrt.pop %v4612
        %v4626 = vmul.f32 %v4625, %v4612
        %v4627 = vmul.f32 %v4626, %v4625
        %v4628 = vmul.f32 0.5, %v4627
        %v4629 = vsub.f32 1.5, %v4628
        %v4630 = vmul.f32 %v4625, %v4629
        %vm4631 = vweird.f32 %v4612
        %vm4632 = vweird.f32 %v4625
        %vm4633 = vmor %vm4631, %vm4632
        %v4634 = vsel %vm4633, %v4625, %v4630
        %v4635 = vrsqrt.pop %v4613
        %v4636 = vmul.f32 %v4635, %v4613
        %v4637 = vmul.f32 %v4636, %v4635
        %v4638 = vmul.f32 0.5, %v4637
        %v4639 = vsub.f32 1.5, %v4638
        %v4640 = vmul.f32 %v4635, %v4639
        %vm4641 = vweird.f32 %v4613
        %vm4642 = vweird.f32 %v4635
        %vm4643 = vmor %vm4641, %vm4642
        %v4644 = vsel %vm4643, %v4635, %v4640
        %v4645 = vrsqrt.pop %v4614
        %v4646 = vmul.f32 %v4645, %v4614
        %v4647 = vmul.f32 %v4646, %v4645
        %v4648 = vmul.f32 0.5, %v4647
        %v4649 = vsub.f32 1.5, %v4648
        %v4650 = vmul.f32 %v4645, %v4649
        %vm4651 = vweird.f32 %v4614
        %vm4652 = vweird.f32 %v4645
        %vm4653 = vmor %vm4651, %vm4652
        %v4654 = vsel %vm4653, %v4645, %v4650
        %v4655 = vmul.f32 %v4587, %v4624
        %v4656 = vmul.f32 %v4588, %v4634
        %v4657 = vmul.f32 %v4589, %v4644
        %v4658 = vmul.f32 %v4590, %v4654
        %v4660 = vperm.slane %v4431, 0
        %v4662 = vmul.f32 %v4655, %v4660
        %v4663 = vmul.f32 %v4656, %v4660
        %v4664 = vmul.f32 %v4657, %v4660
        %v4665 = vmul.f32 %v4658, %v4660
        %v4667 = vperm.slane %v4432, 0
        %v4669 = vadd.f32 %v4662, %v4667
        %v4670 = vadd.f32 %v4663, %v4667
        %v4671 = vadd.f32 %v4664, %v4667
        %v4672 = vadd.f32 %v4665, %v4667
        %v4674 = vperm.slane %v4441, 0
        %v4677 = vsel %vm2247, %v4669, 0
        %v4680 = vsel %vm2247, %v4670, 0
        %v4683 = vsel %vm2247, %v4671, 0
        %v4686 = vsel %vm2247, %v4672, 0
        %4688 = vmatpush.msra.mxu0 0.0
        %4689 = vmatpush.msra.mxu0 0.0
        %4690 = vmatpush.msra.mxu0 0.0
        %4691 = vmatpush.msra.mxu0 0.0
        %4692 = vmatpush.msra.mxu0 0.0
        %4693 = vmatpush.msra.mxu0 0.0
        %4694 = vmatpush.msra.mxu0 0.0
        %4695 = vmatpush.msra.mxu0 0.0
        %4696 = vmatpush.msra.mxu0 0.0
        %4697 = vmatpush.msra.mxu0 0.0
        %4698 = vmatpush.msra.mxu0 0.0
        %4699 = vmatpush.msra.mxu0 0.0
        %4700 = vmatpush.msra.mxu0 %v4436
        %4701 = vmatpush.msra.mxu0 %v4435
        %4702 = vmatpush.msra.mxu0 %v4434
        %4703 = vmatpush.msra.mxu0 %v4433
        %4704 = vmatmul.f32.gmra.mxu0 %v4677
        %v4705 = vpop.f32.mrf.mxu0
        %v4706 = vadd.f32 %v4674, %v4705
        %4707 = vmatmul.f32.gmra.mxu0 %v4680
        %v4708 = vpop.f32.mrf.mxu0
        %v4709 = vadd.f32 %v4674, %v4708
        %4710 = vmatmul.f32.gmra.mxu0 %v4683
        %v4711 = vpop.f32.mrf.mxu0
        %v4712 = vadd.f32 %v4674, %v4711
        %4713 = vmatmul.f32.gmra.mxu0 %v4686
        %v4714 = vpop.f32.mrf.mxu0
        %v4715 = vadd.f32 %v4674, %v4714
        %4716 = vdwg.mxu0
        %4717 = vmatpush.msra.mxu0 0.0
        %4718 = vmatpush.msra.mxu0 0.0
        %4719 = vmatpush.msra.mxu0 0.0
        %4720 = vmatpush.msra.mxu0 0.0
        %4721 = vmatpush.msra.mxu0 0.0
        %4722 = vmatpush.msra.mxu0 0.0
        %4723 = vmatpush.msra.mxu0 0.0
        %4724 = vmatpush.msra.mxu0 0.0
        %4725 = vmatpush.msra.mxu0 0.0
        %4726 = vmatpush.msra.mxu0 0.0
        %4727 = vmatpush.msra.mxu0 0.0
        %4728 = vmatpush.msra.mxu0 0.0
        %4729 = vmatpush.msra.mxu0 %v4440
        %4730 = vmatpush.msra.mxu0 %v4439
        %4731 = vmatpush.msra.mxu0 %v4438
        %4732 = vmatpush.msra.mxu0 %v4437
        %4733 = vmatmul.f32.gmra.mxu0 %v4677
        %v4734 = vpop.f32.mrf.mxu0
        %v4735 = vadd.f32 0.0, %v4734
        %4736 = vmatmul.f32.gmra.mxu0 %v4680
        %v4737 = vpop.f32.mrf.mxu0
        %v4738 = vadd.f32 0.0, %v4737
        %4739 = vmatmul.f32.gmra.mxu0 %v4683
        %v4740 = vpop.f32.mrf.mxu0
        %v4741 = vadd.f32 0.0, %v4740
        %4742 = vmatmul.f32.gmra.mxu0 %v4686
        %v4743 = vpop.f32.mrf.mxu0
        %v4744 = vadd.f32 0.0, %v4743
        %4745 = vdwg.mxu0
        %4746 = vmatpush.msra.mxu0 0.0
        %4747 = vmatpush.msra.mxu0 0.0
        %4748 = vmatpush.msra.mxu0 0.0
        %4749 = vmatpush.msra.mxu0 0.0
        %4750 = vmatpush.msra.mxu0 0.0
        %4751 = vmatpush.msra.mxu0 0.0
        %4752 = vmatpush.msra.mxu0 0.0
        %4753 = vmatpush.msra.mxu0 0.0
        %4754 = vmatpush.msra.mxu0 0.0
        %4755 = vmatpush.msra.mxu0 0.0
        %4756 = vmatpush.msra.mxu0 0.0
        %4757 = vmatpush.msra.mxu0 0.0
        %4758 = vmatpush.msra.mxu0 %v4744
        %4759 = vmatpush.msra.mxu0 %v4741
        %4760 = vmatpush.msra.mxu0 %v4738
        %4761 = vmatpush.msra.mxu0 %v4735
        %4762 = vmatmul.f32.gmra.mxu0 %v4516
        %v4763 = vpop.f32.mrf.mxu0
        %v4764 = vadd.f32 0.0, %v4763
        %4765 = vmatmul.f32.gmra.mxu0 %v4519
        %v4766 = vpop.f32.mrf.mxu0
        %v4767 = vadd.f32 0.0, %v4766
        %4768 = vmatmul.f32.gmra.mxu0 %v4522
        %v4769 = vpop.f32.mrf.mxu0
        %v4770 = vadd.f32 0.0, %v4769
        %4771 = vmatmul.f32.gmra.mxu0 %v4525
        %v4772 = vpop.f32.mrf.mxu0
        %v4773 = vadd.f32 0.0, %v4772
        %4774 = vdwg.mxu0
        %v4775 = vsub.f32 %v4706, %v4764
        %v4776 = vsub.f32 %v4709, %v4767
        %v4777 = vsub.f32 %v4712, %v4770
        %v4778 = vsub.f32 %v4715, %v4773
        %v4779 = vadd.f32 %v2219, %v4775
        %v4780 = vadd.f32 %v2220, %v4776
        %v4781 = vadd.f32 %v2221, %v4777
        %v4782 = vadd.f32 %v2222, %v4778
        %v4783 = vld [vmem:[%s75] sm:$0x1]
        %v4784 = vld [vmem:[%s77] sm:$0x1]
        %v4785 = vsel %vm2247, %v4779, 0.0
        %4786 = vadd.xlane.f32.xlu0 %v4785
        %v4787 = vpop.xlane.xlu0 %4786
        %v4788 = vsel %vm2247, %v4780, 0.0
        %4789 = vadd.xlane.f32.xlu0 %v4788
        %v4790 = vpop.xlane.xlu0 %4789
        %v4791 = vsel %vm2247, %v4781, 0.0
        %4792 = vadd.xlane.f32.xlu0 %v4791
        %v4793 = vpop.xlane.xlu0 %4792
        %v4794 = vsel %vm2247, %v4782, 0.0
        %4795 = vadd.xlane.f32.xlu0 %v4794
        %v4796 = vpop.xlane.xlu0 %4795
        %v4797 = vmul.f32 %v4787, %v4582
        %v4798 = vmul.f32 %v4790, %v4582
        %v4799 = vmul.f32 %v4793, %v4582
        %v4800 = vmul.f32 %v4796, %v4582
        %v4801 = vsub.f32 %v4779, %v4797
        %v4802 = vsub.f32 %v4780, %v4798
        %v4803 = vsub.f32 %v4781, %v4799
        %v4804 = vsub.f32 %v4782, %v4800
        %v4805 = vmul.f32 %v4801, %v4801
        %v4806 = vmul.f32 %v4802, %v4802
        %v4807 = vmul.f32 %v4803, %v4803
        %v4808 = vmul.f32 %v4804, %v4804
        %v4809 = vsel %vm2247, %v4805, 0.0
        %4810 = vadd.xlane.f32.xlu0 %v4809
        %v4811 = vpop.xlane.xlu0 %4810
        %v4812 = vsel %vm2247, %v4806, 0.0
        %4813 = vadd.xlane.f32.xlu0 %v4812
        %v4814 = vpop.xlane.xlu0 %4813
        %v4815 = vsel %vm2247, %v4807, 0.0
        %4816 = vadd.xlane.f32.xlu0 %v4815
        %v4817 = vpop.xlane.xlu0 %4816
        %v4818 = vsel %vm2247, %v4808, 0.0
        %4819 = vadd.xlane.f32.xlu0 %v4818
        %v4820 = vpop.xlane.xlu0 %4819
        %v4821 = vmul.f32 %v4811, %v4582
        %v4822 = vmul.f32 %v4814, %v4582
        %v4823 = vmul.f32 %v4817, %v4582
        %v4824 = vmul.f32 %v4820, %v4582
        %v4825 = vadd.f32 %v4821, 1e-05
        %v4826 = vadd.f32 %v4822, 1e-05
        %v4827 = vadd.f32 %v4823, 1e-05
        %v4828 = vadd.f32 %v4824, 1e-05
        %v4829 = vrsqrt.pop %v4825
        %v4830 = vmul.f32 %v4829, %v4825
        %v4831 = vmul.f32 %v4830, %v4829
        %v4832 = vmul.f32 0.5, %v4831
        %v4833 = vsub.f32 1.5, %v4832
        %v4834 = vmul.f32 %v4829, %v4833
        %vm4835 = vweird.f32 %v4825
        %vm4836 = vweird.f32 %v4829
        %vm4837 = vmor %vm4835, %vm4836
        %v4838 = vsel %vm4837, %v4829, %v4834
        %v4839 = vrsqrt.pop %v4826
        %v4840 = vmul.f32 %v4839, %v4826
        %v4841 = vmul.f32 %v4840, %v4839
        %v4842 = vmul.f32 0.5, %v4841
        %v4843 = vsub.f32 1.5, %v4842
        %v4844 = vmul.f32 %v4839, %v4843
        %vm4845 = vweird.f32 %v4826
        %vm4846 = vweird.f32 %v4839
        %vm4847 = vmor %vm4845, %vm4846
        %v4848 = vsel %vm4847, %v4839, %v4844
        %v4849 = vrsqrt.pop %v4827
        %v4850 = vmul.f32 %v4849, %v4827
        %v4851 = vmul.f32 %v4850, %v4849
        %v4852 = vmul.f32 0.5, %v4851
        %v4853 = vsub.f32 1.5, %v4852
        %v4854 = vmul.f32 %v4849, %v4853
        %vm4855 = vweird.f32 %v4827
        %vm4856 = vweird.f32 %v4849
        %vm4857 = vmor %vm4855, %vm4856
        %v4858 = vsel %vm4857, %v4849, %v4854
        %v4859 = vrsqrt.pop %v4828
        %v4860 = vmul.f32 %v4859, %v4828
        %v4861 = vmul.f32 %v4860, %v4859
        %v4862 = vmul.f32 0.5, %v4861
        %v4863 = vsub.f32 1.5, %v4862
        %v4864 = vmul.f32 %v4859, %v4863
        %vm4865 = vweird.f32 %v4828
        %vm4866 = vweird.f32 %v4859
        %vm4867 = vmor %vm4865, %vm4866
        %v4868 = vsel %vm4867, %v4859, %v4864
        %v4869 = vmul.f32 %v4801, %v4838
        %v4870 = vmul.f32 %v4802, %v4848
        %v4871 = vmul.f32 %v4803, %v4858
        %v4872 = vmul.f32 %v4804, %v4868
        %v4874 = vperm.slane %v4783, 0
        %v4876 = vmul.f32 %v4869, %v4874
        %v4877 = vmul.f32 %v4870, %v4874
        %v4878 = vmul.f32 %v4871, %v4874
        %v4879 = vmul.f32 %v4872, %v4874
        %v4881 = vperm.slane %v4784, 0
        %v4883 = vadd.f32 %v4876, %v4881
        %v4884 = vadd.f32 %v4877, %v4881
        %v4885 = vadd.f32 %v4878, %v4881
        %v4886 = vadd.f32 %v4879, %v4881
        %4887 = vxpose.xlu0.b32.start [1/16] %v4237, 128
        %4888 = vxpose.xlu0.b32.cont [2/16] %v4238, 128
        %4889 = vxpose.xlu0.b32.cont [3/16] %v4239, 128
        %4890 = vxpose.xlu0.b32.cont [4/16] %v4240, 128
        %4891 = vxpose.xlu0.b32.cont [5/16] 0.0, 128
        %4892 = vxpose.xlu0.b32.cont [6/16] 0.0, 128
        %4893 = vxpose.xlu0.b32.cont [7/16] 0.0, 128
        %4894 = vxpose.xlu0.b32.cont [8/16] 0.0, 128
        %4895 = vxpose.xlu0.b32.cont [9/16] 0.0, 128
        %4896 = vxpose.xlu0.b32.cont [10/16] 0.0, 128
        %4897 = vxpose.xlu0.b32.cont [11/16] 0.0, 128
        %4898 = vxpose.xlu0.b32.cont [12/16] 0.0, 128
        %4899 = vxpose.xlu0.b32.cont [13/16] 0.0, 128
        %4900 = vxpose.xlu0.b32.cont [14/16] 0.0, 128
        %4901 = vxpose.xlu0.b32.cont [15/16] 0.0, 128
        %4902 = vxpose.xlu0.b32.end [16/16] 0.0, 128
        %v4903 = vpop.trf.xlu0
        %v4904 = vpop.trf.xlu0
        %v4905 = vpop.trf.xlu0
        %v4906 = vpop.trf.xlu0
        %v4907 = vpop.trf.xlu0
        %v4908 = vpop.trf.xlu0
        %v4909 = vpop.trf.xlu0
        %v4910 = vpop.trf.xlu0
        %v4911 = vpop.trf.xlu0
        %v4912 = vpop.trf.xlu0
        %v4913 = vpop.trf.xlu0
        %v4914 = vpop.trf.xlu0
        %v4915 = vpop.trf.xlu0
        %v4916 = vpop.trf.xlu0
        %v4917 = vpop.trf.xlu0
        %v4918 = vpop.trf.xlu0
        %v4920 = vsel %vm2247, %v4903, 0
        %v4923 = vsel %vm2247, %v4904, 0
        %4925 = vmatpush.msra.mxu0 0.0
        %4926 = vmatpush.msra.mxu0 0.0
        %4927 = vmatpush.msra.mxu0 0.0
        %4928 = vmatpush.msra.mxu0 0.0
        %4929 = vmatpush.msra.mxu0 0.0
        %4930 = vmatpush.msra.mxu0 0.0
        %4931 = vmatpush.msra.mxu0 0.0
        %4932 = vmatpush.msra.mxu0 0.0
        %4933 = vmatpush.msra.mxu0 0.0
        %4934 = vmatpush.msra.mxu0 0.0
        %4935 = vmatpush.msra.mxu0 0.0
        %4936 = vmatpush.msra.mxu0 0.0
        %4937 = vmatpush.msra.mxu0 %v4886
        %4938 = vmatpush.msra.mxu0 %v4885
        %4939 = vmatpush.msra.mxu0 %v4884
        %4940 = vmatpush.msra.mxu0 %v4883
        %4941 = vmatmul.f32.gmra.mxu0 %v4920
        %v4942 = vpop.f32.mrf.mxu0
        %v4943 = vadd.f32 0.0, %v4942
        %4944 = vmatmul.f32.gmra.mxu0 %v4923
        %v4945 = vpop.f32.mrf.mxu0
        %v4946 = vadd.f32 0.0, %v4945
        %4947 = vdwg.mxu0
        %4948 = vrot.lane.b32.xlu0 %v2217, 32
        %v4949 = vpop.permute.xlu0 %4948
        %4950 = vrot.lane.b32.xlu0 %v2218, 32
        %v4951 = vpop.permute.xlu0 %4950
        %4956 = vrot.lane.b32.xlu0 %v4943, 64
        %v4957 = vpop.permute.xlu0 %4956
        %4958 = vrot.lane.b32.xlu0 %v4946, 64
        %v4959 = vpop.permute.xlu0 %4958
        %v4962 = vsel %vm2247, %v2215, %v4949
        %v4963 = vsel %vm2247, %v2216, %v4951
        %v4964 = vsel %vm4304, %v4962, %v4957
        %v4965 = vsel %vm4304, %v4963, %v4959
        %v4966 = vld [vmem:[%s79] sm:$0x1]
        %v4967 = vld [vmem:[%s81] sm:$0x1]
        %vm4968 = vcmask 785408
        %v4969 = vsel %vm4968, %v4964, 0.0
        %4970 = vadd.xlane.f32.xlu0 %v4969
        %v4971 = vpop.xlane.xlu0 %4970
        %v4972 = vsel %vm4968, %v4965, 0.0
        %4973 = vadd.xlane.f32.xlu0 %v4972
        %v4974 = vpop.xlane.xlu0 %4973
        %v4975 = vrcp.pop 96.0
        %v4976 = vmul.f32 96.0, %v4975
        %v4977 = vsub.f32 1.0, %v4976
        %v4978 = vmul.f32 %v4975, %v4977
        %v4979 = vadd.f32 %v4975, %v4978
        %vm4980 = vweird.f32 %v4975
        %v4981 = vsel %vm4980, %v4975, %v4979
        %v4982 = vmul.f32 %v4971, %v4981
        %v4983 = vmul.f32 %v4974, %v4981
        %v4984 = vsub.f32 %v4964, %v4982
        %v4985 = vsub.f32 %v4965, %v4983
        %v4986 = vmul.f32 %v4984, %v4984
        %v4987 = vmul.f32 %v4985, %v4985
        %v4988 = vsel %vm4968, %v4986, 0.0
        %4989 = vadd.xlane.f32.xlu0 %v4988
        %v4990 = vpop.xlane.xlu0 %4989
        %v4991 = vsel %vm4968, %v4987, 0.0
        %4992 = vadd.xlane.f32.xlu0 %v4991
        %v4993 = vpop.xlane.xlu0 %4992
        %v4994 = vmul.f32 %v4990, %v4981
        %v4995 = vmul.f32 %v4993, %v4981
        %v4996 = vadd.f32 %v4994, 1e-05
        %v4997 = vadd.f32 %v4995, 1e-05
        %v4998 = vrsqrt.pop %v4996
        %v4999 = vmul.f32 %v4998, %v4996
        %v5000 = vmul.f32 %v4999, %v4998
        %v5001 = vmul.f32 0.5, %v5000
        %v5002 = vsub.f32 1.5, %v5001
        %v5003 = vmul.f32 %v4998, %v5002
        %vm5004 = vweird.f32 %v4996
        %vm5005 = vweird.f32 %v4998
        %vm5006 = vmor %vm5004, %vm5005
        %v5007 = vsel %vm5006, %v4998, %v5003
        %v5008 = vrsqrt.pop %v4997
        %v5009 = vmul.f32 %v5008, %v4997
        %v5010 = vmul.f32 %v5009, %v5008
        %v5011 = vmul.f32 0.5, %v5010
        %v5012 = vsub.f32 1.5, %v5011
        %v5013 = vmul.f32 %v5008, %v5012
        %vm5014 = vweird.f32 %v4997
        %vm5015 = vweird.f32 %v5008
        %vm5016 = vmor %vm5014, %vm5015
        %v5017 = vsel %vm5016, %v5008, %v5013
        %v5018 = vmul.f32 %v4984, %v5007
        %v5019 = vmul.f32 %v4985, %v5017
        %v5021 = vperm.slane %v4966, 0
        %v5023 = vmul.f32 %v5018, %v5021
        %v5024 = vmul.f32 %v5019, %v5021
        %v5026 = vperm.slane %v4967, 0
        %v5028 = vadd.f32 %v5023, %v5026
        %v5029 = vadd.f32 %v5024, %v5026
        %v5030 = vld [vmem:[%s83] sm:$0xff]
        %v5031 = vld [vmem:[%s83 + $0x8] sm:$0xff]
        %v5032 = vld [vmem:[%s83 + $0x10] sm:$0xff]
        %v5033 = vld [vmem:[%s83 + $0x18] sm:$0xff]
        %v5034 = vld [vmem:[%s83 + $0x20] sm:$0xff]
        %v5035 = vld [vmem:[%s83 + $0x28] sm:$0xff]
        %v5036 = vld [vmem:[%s83 + $0x30] sm:$0xff]
        %v5037 = vld [vmem:[%s83 + $0x38] sm:$0xff]
        %v5038 = vld [vmem:[%s83 + $0x40] sm:$0xff]
        %v5039 = vld [vmem:[%s83 + $0x48] sm:$0xff]
        %v5040 = vld [vmem:[%s83 + $0x50] sm:$0xff]
        %v5041 = vld [vmem:[%s83 + $0x58] sm:$0xff]
        %v5042 = vld [vmem:[%s85] sm:$0xff]
        %v5043 = vld [vmem:[%s85 + $0x8] sm:$0xff]
        %v5044 = vld [vmem:[%s85 + $0x10] sm:$0xff]
        %v5045 = vld [vmem:[%s85 + $0x18] sm:$0xff]
        %v5046 = vld [vmem:[%s85 + $0x20] sm:$0xff]
        %v5047 = vld [vmem:[%s85 + $0x28] sm:$0xff]
        %v5048 = vld [vmem:[%s85 + $0x30] sm:$0xff]
        %v5049 = vld [vmem:[%s85 + $0x38] sm:$0xff]
        %v5050 = vld [vmem:[%s85 + $0x40] sm:$0xff]
        %v5051 = vld [vmem:[%s85 + $0x48] sm:$0xff]
        %v5052 = vld [vmem:[%s85 + $0x50] sm:$0xff]
        %v5053 = vld [vmem:[%s85 + $0x58] sm:$0xff]
        %v5054 = vld [vmem:[%s87] sm:$0x1]
        %v5055 = vld [vmem:[%s89] sm:$0x1]
        %v5056 = vld [vmem:[%s91] sm:$0x1]
        %v5057 = vld [vmem:[%s93] sm:$0xff]
        %v5058 = vld [vmem:[%s93 + $0x8] sm:$0xff]
        %v5059 = vld [vmem:[%s93 + $0x10] sm:$0xff]
        %v5060 = vld [vmem:[%s93 + $0x18] sm:$0xff]
        %v5061 = vld [vmem:[%s95] sm:$0xff]
        %v5062 = vld [vmem:[%s95 + $0x8] sm:$0xff]
        %v5063 = vld [vmem:[%s95 + $0x10] sm:$0xff]
        %v5064 = vld [vmem:[%s95 + $0x18] sm:$0xff]
        %v5065 = vld [vmem:[%s97] sm:$0x1]
        %v5067 = vperm.slane %v5054, 0
        %v5070 = vsel %vm4968, %v5028, 0
        %v5073 = vsel %vm4968, %v5029, 0
        %5075 = vmatpush.msra.mxu0 0.0
        %5076 = vmatpush.msra.mxu0 0.0
        %5077 = vmatpush.msra.mxu0 0.0
        %5078 = vmatpush.msra.mxu0 0.0
        %5079 = vmatpush.msra.mxu0 %v5041
        %5080 = vmatpush.msra.mxu0 %v5040
        %5081 = vmatpush.msra.mxu0 %v5039
        %5082 = vmatpush.msra.mxu0 %v5038
        %5083 = vmatpush.msra.mxu0 %v5037
        %5084 = vmatpush.msra.mxu0 %v5036
        %5085 = vmatpush.msra.mxu0 %v5035
        %5086 = vmatpush.msra.mxu0 %v5034
        %5087 = vmatpush.msra.mxu0 %v5033
        %5088 = vmatpush.msra.mxu0 %v5032
        %5089 = vmatpush.msra.mxu0 %v5031
        %5090 = vmatpush.msra.mxu0 %v5030
        %5091 = vmatmul.f32.gmra.mxu0 %v5070
        %v5092 = vpop.f32.mrf.mxu0
        %v5093 = vadd.f32 %v5067, %v5092
        %5094 = vmatmul.f32.gmra.mxu0 %v5073
        %v5095 = vpop.f32.mrf.mxu0
        %v5096 = vadd.f32 %v5067, %v5095
        %5097 = vdwg.mxu0
        %5098 = vmatpush.msra.mxu0 0.0
        %5099 = vmatpush.msra.mxu0 0.0
        %5100 = vmatpush.msra.mxu0 0.0
        %5101 = vmatpush.msra.mxu0 0.0
        %5102 = vmatpush.msra.mxu0 %v5053
        %5103 = vmatpush.msra.mxu0 %v5052
        %5104 = vmatpush.msra.mxu0 %v5051
        %5105 = vmatpush.msra.mxu0 %v5050
        %5106 = vmatpush.msra.mxu0 %v5049
        %5107 = vmatpush.msra.mxu0 %v5048
        %5108 = vmatpush.msra.mxu0 %v5047
        %5109 = vmatpush.msra.mxu0 %v5046
        %5110 = vmatpush.msra.mxu0 %v5045
        %5111 = vmatpush.msra.mxu0 %v5044
        %5112 = vmatpush.msra.mxu0 %v5043
        %5113 = vmatpush.msra.mxu0 %v5042
        %5114 = vmatmul.f32.gmra.mxu0 %v5070
        %v5115 = vpop.f32.mrf.mxu0
        %v5116 = vadd.f32 0.0, %v5115
        %5117 = vmatmul.f32.gmra.mxu0 %v5073
        %v5118 = vpop.f32.mrf.mxu0
        %v5119 = vadd.f32 0.0, %v5118
        %5120 = vdwg.mxu0
        %v5122 = vsel %vm3190, %v2213, 0
        %v5125 = vsel %vm3190, %v2214, 0
        %5127 = vmatpush.msra.mxu0 0.0
        %5128 = vmatpush.msra.mxu0 0.0
        %5129 = vmatpush.msra.mxu0 0.0
        %5130 = vmatpush.msra.mxu0 0.0
        %5131 = vmatpush.msra.mxu0 0.0
        %5132 = vmatpush.msra.mxu0 0.0
        %5133 = vmatpush.msra.mxu0 0.0
        %5134 = vmatpush.msra.mxu0 0.0
        %5135 = vmatpush.msra.mxu0 0.0
        %5136 = vmatpush.msra.mxu0 0.0
        %5137 = vmatpush.msra.mxu0 0.0
        %5138 = vmatpush.msra.mxu0 0.0
        %5139 = vmatpush.msra.mxu0 0.0
        %5140 = vmatpush.msra.mxu0 0.0
        %5141 = vmatpush.msra.mxu0 %v5119
        %5142 = vmatpush.msra.mxu0 %v5116
        %5143 = vmatmul.f32.gmra.mxu0 %v5122
        %v5144 = vpop.f32.mrf.mxu0
        %v5145 = vadd.f32 0.0, %v5144
        %5146 = vmatmul.f32.gmra.mxu0 %v5125
        %v5147 = vpop.f32.mrf.mxu0
        %v5148 = vadd.f32 0.0, %v5147
        %5149 = vdwg.mxu0
        %v5150 = vsub.f32 %v5093, %v5145
        %v5151 = vsub.f32 %v5096, %v5148
        %v5152 = vmax.f32 %v5150, 0.0
        %v5153 = vmax.f32 %v5151, 0.0
        %v5154 = vsel %vm2247, %v5152, 0.0
        %5155 = vadd.xlane.f32.xlu0 %v5154
        %v5156 = vpop.xlane.xlu0 %5155
        %v5157 = vsel %vm2247, %v5153, 0.0
        %5158 = vadd.xlane.f32.xlu0 %v5157
        %v5159 = vpop.xlane.xlu0 %5158
        %v5160 = vmul.f32 %v5156, %v4582
        %v5161 = vmul.f32 %v5159, %v4582
        %v5162 = vsub.f32 %v5152, %v5160
        %v5163 = vsub.f32 %v5153, %v5161
        %v5164 = vmul.f32 %v5162, %v5162
        %v5165 = vmul.f32 %v5163, %v5163
        %v5166 = vsel %vm2247, %v5164, 0.0
        %5167 = vadd.xlane.f32.xlu0 %v5166
        %v5168 = vpop.xlane.xlu0 %5167
        %v5169 = vsel %vm2247, %v5165, 0.0
        %5170 = vadd.xlane.f32.xlu0 %v5169
        %v5171 = vpop.xlane.xlu0 %5170
        %v5172 = vmul.f32 %v5168, %v4582
        %v5173 = vmul.f32 %v5171, %v4582
        %v5174 = vadd.f32 %v5172, 1e-05
        %v5175 = vadd.f32 %v5173, 1e-05
        %v5176 = vrsqrt.pop %v5174
        %v5177 = vmul.f32 %v5176, %v5174
        %v5178 = vmul.f32 %v5177, %v5176
        %v5179 = vmul.f32 0.5, %v5178
        %v5180 = vsub.f32 1.5, %v5179
        %v5181 = vmul.f32 %v5176, %v5180
        %vm5182 = vweird.f32 %v5174
        %vm5183 = vweird.f32 %v5176
        %vm5184 = vmor %vm5182, %vm5183
        %v5185 = vsel %vm5184, %v5176, %v5181
        %v5186 = vrsqrt.pop %v5175
        %v5187 = vmul.f32 %v5186, %v5175
        %v5188 = vmul.f32 %v5187, %v5186
        %v5189 = vmul.f32 0.5, %v5188
        %v5190 = vsub.f32 1.5, %v5189
        %v5191 = vmul.f32 %v5186, %v5190
        %vm5192 = vweird.f32 %v5175
        %vm5193 = vweird.f32 %v5186
        %vm5194 = vmor %vm5192, %vm5193
        %v5195 = vsel %vm5194, %v5186, %v5191
        %v5196 = vmul.f32 %v5162, %v5185
        %v5197 = vmul.f32 %v5163, %v5195
        %v5199 = vperm.slane %v5055, 0
        %v5201 = vmul.f32 %v5196, %v5199
        %v5202 = vmul.f32 %v5197, %v5199
        %v5204 = vperm.slane %v5056, 0
        %v5206 = vadd.f32 %v5201, %v5204
        %v5207 = vadd.f32 %v5202, %v5204
        %v5209 = vperm.slane %v5065, 0
        %v5212 = vsel %vm2247, %v5206, 0
        %v5215 = vsel %vm2247, %v5207, 0
        %5217 = vmatpush.msra.mxu0 0.0
        %5218 = vmatpush.msra.mxu0 0.0
        %5219 = vmatpush.msra.mxu0 0.0
        %5220 = vmatpush.msra.mxu0 0.0
        %5221 = vmatpush.msra.mxu0 0.0
        %5222 = vmatpush.msra.mxu0 0.0
        %5223 = vmatpush.msra.mxu0 0.0
        %5224 = vmatpush.msra.mxu0 0.0
        %5225 = vmatpush.msra.mxu0 0.0
        %5226 = vmatpush.msra.mxu0 0.0
        %5227 = vmatpush.msra.mxu0 0.0
        %5228 = vmatpush.msra.mxu0 0.0
        %5229 = vmatpush.msra.mxu0 %v5060
        %5230 = vmatpush.msra.mxu0 %v5059
        %5231 = vmatpush.msra.mxu0 %v5058
        %5232 = vmatpush.msra.mxu0 %v5057
        %5233 = vmatmul.f32.gmra.mxu0 %v5212
        %v5234 = vpop.f32.mrf.mxu0
        %v5235 = vadd.f32 %v5209, %v5234
        %5236 = vmatmul.f32.gmra.mxu0 %v5215
        %v5237 = vpop.f32.mrf.mxu0
        %v5238 = vadd.f32 %v5209, %v5237
        %5239 = vdwg.mxu0
        %5240 = vmatpush.msra.mxu0 0.0
        %5241 = vmatpush.msra.mxu0 0.0
        %5242 = vmatpush.msra.mxu0 0.0
        %5243 = vmatpush.msra.mxu0 0.0
        %5244 = vmatpush.msra.mxu0 0.0
        %5245 = vmatpush.msra.mxu0 0.0
        %5246 = vmatpush.msra.mxu0 0.0
        %5247 = vmatpush.msra.mxu0 0.0
        %5248 = vmatpush.msra.mxu0 0.0
        %5249 = vmatpush.msra.mxu0 0.0
        %5250 = vmatpush.msra.mxu0 0.0
        %5251 = vmatpush.msra.mxu0 0.0
        %5252 = vmatpush.msra.mxu0 %v5064
        %5253 = vmatpush.msra.mxu0 %v5063
        %5254 = vmatpush.msra.mxu0 %v5062
        %5255 = vmatpush.msra.mxu0 %v5061
        %5256 = vmatmul.f32.gmra.mxu0 %v5212
        %v5257 = vpop.f32.mrf.mxu0
        %v5258 = vadd.f32 0.0, %v5257
        %5259 = vmatmul.f32.gmra.mxu0 %v5215
        %v5260 = vpop.f32.mrf.mxu0
        %v5261 = vadd.f32 0.0, %v5260
        %5262 = vdwg.mxu0
        %5263 = vmatpush.msra.mxu0 0.0
        %5264 = vmatpush.msra.mxu0 0.0
        %5265 = vmatpush.msra.mxu0 0.0
        %5266 = vmatpush.msra.mxu0 0.0
        %5267 = vmatpush.msra.mxu0 0.0
        %5268 = vmatpush.msra.mxu0 0.0
        %5269 = vmatpush.msra.mxu0 0.0
        %5270 = vmatpush.msra.mxu0 0.0
        %5271 = vmatpush.msra.mxu0 0.0
        %5272 = vmatpush.msra.mxu0 0.0
        %5273 = vmatpush.msra.mxu0 0.0
        %5274 = vmatpush.msra.mxu0 0.0
        %5275 = vmatpush.msra.mxu0 0.0
        %5276 = vmatpush.msra.mxu0 0.0
        %5277 = vmatpush.msra.mxu0 %v5261
        %5278 = vmatpush.msra.mxu0 %v5258
        %5279 = vmatmul.f32.gmra.mxu0 %v5122
        %v5280 = vpop.f32.mrf.mxu0
        %v5281 = vadd.f32 0.0, %v5280
        %5282 = vmatmul.f32.gmra.mxu0 %v5125
        %v5283 = vpop.f32.mrf.mxu0
        %v5284 = vadd.f32 0.0, %v5283
        %5285 = vdwg.mxu0
        %v5286 = vsub.f32 %v5235, %v5281
        %v5287 = vsub.f32 %v5238, %v5284
        %v5288 = vadd.f32 %v2217, %v5286
        %v5289 = vadd.f32 %v2218, %v5287
        %v5290 = vld [vmem:[%s99] sm:$0x1]
        %v5291 = vld [vmem:[%s101] sm:$0x1]
        %v5292 = vsel %vm2247, %v5288, 0.0
        %5293 = vadd.xlane.f32.xlu0 %v5292
        %v5294 = vpop.xlane.xlu0 %5293
        %v5295 = vsel %vm2247, %v5289, 0.0
        %5296 = vadd.xlane.f32.xlu0 %v5295
        %v5297 = vpop.xlane.xlu0 %5296
        %v5298 = vmul.f32 %v5294, %v4582
        %v5299 = vmul.f32 %v5297, %v4582
        %v5300 = vsub.f32 %v5288, %v5298
        %v5301 = vsub.f32 %v5289, %v5299
        %v5302 = vmul.f32 %v5300, %v5300
        %v5303 = vmul.f32 %v5301, %v5301
        %v5304 = vsel %vm2247, %v5302, 0.0
        %5305 = vadd.xlane.f32.xlu0 %v5304
        %v5306 = vpop.xlane.xlu0 %5305
        %v5307 = vsel %vm2247, %v5303, 0.0
        %5308 = vadd.xlane.f32.xlu0 %v5307
        %v5309 = vpop.xlane.xlu0 %5308
        %v5310 = vmul.f32 %v5306, %v4582
        %v5311 = vmul.f32 %v5309, %v4582
        %v5312 = vadd.f32 %v5310, 1e-05
        %v5313 = vadd.f32 %v5311, 1e-05
        %v5314 = vrsqrt.pop %v5312
        %v5315 = vmul.f32 %v5314, %v5312
        %v5316 = vmul.f32 %v5315, %v5314
        %v5317 = vmul.f32 0.5, %v5316
        %v5318 = vsub.f32 1.5, %v5317
        %v5319 = vmul.f32 %v5314, %v5318
        %vm5320 = vweird.f32 %v5312
        %vm5321 = vweird.f32 %v5314
        %vm5322 = vmor %vm5320, %vm5321
        %v5323 = vsel %vm5322, %v5314, %v5319
        %v5324 = vrsqrt.pop %v5313
        %v5325 = vmul.f32 %v5324, %v5313
        %v5326 = vmul.f32 %v5325, %v5324
        %v5327 = vmul.f32 0.5, %v5326
        %v5328 = vsub.f32 1.5, %v5327
        %v5329 = vmul.f32 %v5324, %v5328
        %vm5330 = vweird.f32 %v5313
        %vm5331 = vweird.f32 %v5324
        %vm5332 = vmor %vm5330, %vm5331
        %v5333 = vsel %vm5332, %v5324, %v5329
        %v5334 = vmul.f32 %v5300, %v5323
        %v5335 = vmul.f32 %v5301, %v5333
        %v5337 = vperm.slane %v5290, 0
        %v5339 = vmul.f32 %v5334, %v5337
        %v5340 = vmul.f32 %v5335, %v5337
        %v5342 = vperm.slane %v5291, 0
        %v5344 = vadd.f32 %v5339, %v5342
        %v5345 = vadd.f32 %v5340, %v5342
        %5346 = vst.msk [vmem:[%s1580] sm:$0xff] %vm2659, %v4177
        %5347 = vst.msk [vmem:[%s1580 + $0x8] sm:$0xff] %vm2659, %v4178
        %5348 = vst.msk [vmem:[%s1580 + $0x10] sm:$0xff] %vm2659, %v4179
        %5349 = vst.msk [vmem:[%s1580 + $0x18] sm:$0xff] %vm2659, %v4180
        %5350 = vrot.lane.b32.xlu0 %v4189, 8
        %v5351 = vpop.permute.xlu0 %5350
        %5352 = vrot.lane.b32.xlu0 %v4190, 8
        %v5353 = vpop.permute.xlu0 %5352
        %5354 = vrot.lane.b32.xlu0 %v4191, 8
        %v5355 = vpop.permute.xlu0 %5354
        %5356 = vrot.lane.b32.xlu0 %v4192, 8
        %v5357 = vpop.permute.xlu0 %5356
        %vm5362 = vcmask 72768
        %5363 = vst.msk [vmem:[%s1580] sm:$0xff] %vm5362, %v5351
        %5364 = vst.msk [vmem:[%s1580 + $0x8] sm:$0xff] %vm5362, %v5353
        %5365 = vst.msk [vmem:[%s1580 + $0x10] sm:$0xff] %vm5362, %v5355
        %5366 = vst.msk [vmem:[%s1580 + $0x18] sm:$0xff] %vm5362, %v5357
        %5367 = vst.msk [vmem:[#allocation4] sm:$0xff] %vm2247, %v5344
        %5368 = vst.msk [vmem:[#allocation4 + $0x8] sm:$0xff] %vm2247, %v5345
        %5369 = vst.msk [vmem:[#allocation6] sm:$0xff] %vm2247, %v4883
        %5370 = vst.msk [vmem:[#allocation6 + $0x8] sm:$0xff] %vm2247, %v4884
        %5371 = vst.msk [vmem:[#allocation6 + $0x10] sm:$0xff] %vm2247, %v4885
        %5372 = vst.msk [vmem:[#allocation6 + $0x18] sm:$0xff] %vm2247, %v4886
        %5373 = vst.msk [vmem:[%s109] sm:$0xff] %vm2659, %v4177
        %5374 = vst.msk [vmem:[%s109 + $0x8] sm:$0xff] %vm2659, %v4178
        %5375 = vst.msk [vmem:[%s109 + $0x10] sm:$0xff] %vm2659, %v4179
        %5376 = vst.msk [vmem:[%s109 + $0x18] sm:$0xff] %vm2659, %v4180
        %p5377 = scmp.lt.s32.totalorder %s127, 1
        %s5378 = scalar_select %p5377, %s127, 1
        %s5379 = smul.addr %s5378, 4
        %s5380 = smul.addr %s5379, 8
        %s5381 = scalar_lea.vmem %s103, %s5380
        // Predicated region
        $region229: #{iterative_refiner_forward.1} parent=223 // pred_check
          %p5382 = pneg %p1216
        $region230: #{iterative_refiner_forward.1} parent=223 // pred_check_branch
          %5384 = sbr.rel (%p5382) target = $region232
        $region231: #{iterative_refiner_forward.1} parent=223 // pred_region
          _
        $region232: #{iterative_refiner_forward.1} parent=223 // pred_fallthru
          _
        // Predicated region
        $region233: #{iterative_refiner_forward.1} parent=223 // pred_check
          %p5385 = pneg %p1237
        $region234: #{iterative_refiner_forward.1} parent=223 // pred_check_branch
          %5387 = sbr.rel (%p5385) target = $region236
        $region235: #{iterative_refiner_forward.1} parent=223 // pred_region
          %5389 = vsyncadd [#allocation5], 0
          %s5390 = sshll.u32 [#allocation4], 4
          %s5391 = int_to_ptr.vmem [resolvable:$true] %s5390
          %s5392 = sshll.u32 %s105, 4
          %s5393 = int_to_ptr.hbm [resolvable:$true] %s5392
          %5398 = dma.vmem_to_hbm [thread:$0]  %s5391, 256, %s5393, [#allocation5], 128, 128, 8
        $region236: #{iterative_refiner_forward.1} parent=223 // pred_fallthru
          _
        // Predicated region
        $region237: #{iterative_refiner_forward.1} parent=223 // pred_check
          %p5399 = pneg %p1258
        $region238: #{iterative_refiner_forward.1} parent=223 // pred_check_branch
          %5401 = sbr.rel (%p5399) target = $region240
        $region239: #{iterative_refiner_forward.1} parent=223 // pred_region
          %5403 = vsyncadd [#allocation7], 0
          %s5404 = sshll.u32 [#allocation6], 4
          %s5405 = int_to_ptr.vmem [resolvable:$true] %s5404
          %s5406 = sshll.u32 %s107, 4
          %s5407 = int_to_ptr.hbm [resolvable:$true] %s5406
          %5412 = dma.vmem_to_hbm [thread:$0]  %s5405, 512, %s5407, [#allocation7], 128, 128, 8
        $region240: #{iterative_refiner_forward.1} parent=223 // pred_fallthru
          _
        // Predicated region
        $region241: #{iterative_refiner_forward.1} parent=223 // pred_check
          %p5413 = pneg %p1279
        $region242: #{iterative_refiner_forward.1} parent=223 // pred_check_branch
          %5415 = sbr.rel (%p5413) target = $region244
        $region243: #{iterative_refiner_forward.1} parent=223 // pred_region
          _
        $region244: #{iterative_refiner_forward.1} parent=223 // pred_fallthru
          _
        // Predicated region
        $region245: #{iterative_refiner_forward.1} parent=223 // pred_check
          %p5416 = pneg %p1237
        $region246: #{iterative_refiner_forward.1} parent=223 // pred_check_branch
          %5418 = sbr.rel (%p5416) target = $region248
        $region247: #{iterative_refiner_forward.1} parent=223 // pred_region
          %5420 = dma.done [#allocation5], 256
        $region248: #{iterative_refiner_forward.1} parent=223 // pred_fallthru
          _
        // Predicated region
        $region249: #{iterative_refiner_forward.1} parent=223 // pred_check
          %p5421 = pneg %p1258
        $region250: #{iterative_refiner_forward.1} parent=223 // pred_check_branch
          %5423 = sbr.rel (%p5421) target = $region252
        $region251: #{iterative_refiner_forward.1} parent=223 // pred_region
          %5425 = dma.done [#allocation7], 512
        $region252: #{iterative_refiner_forward.1} parent=223 // pred_fallthru
          _
        // Predicated region
        $region253: #{iterative_refiner_forward.1} parent=223 // pred_check
          %p5426 = pneg %p1279
        $region254: #{iterative_refiner_forward.1} parent=223 // pred_check_branch
          %5428 = sbr.rel (%p5426) target = $region256
        $region255: #{iterative_refiner_forward.1} parent=223 // pred_region
          _
        $region256: #{iterative_refiner_forward.1} parent=223 // pred_fallthru
          _
      $region224: #{iterative_refiner_forward.1} parent=5 // pred_fallthru
        _
      %p5429 = scmp.le.s32.totalorder 2, %s122
      // Predicated region
      $region257: #{iterative_refiner_forward.1} parent=5 // pred_check
        %p5430 = pneg %p5429
      $region258: #{iterative_refiner_forward.1} parent=5 // pred_check_branch
        %5432 = sbr.rel (%p5430) target = $region260
      $region259: #{iterative_refiner_forward.1} parent=5 // pred_region
        %s5433 = ssub.s32 %s122, 2
        // Predicated region
        $region261: #{iterative_refiner_forward.1} parent=259 // pred_check
          %p5434 = pneg %p1222
        $region262: #{iterative_refiner_forward.1} parent=259 // pred_check_branch
          %5436 = sbr.rel (%p5434) target = $region264
        $region263: #{iterative_refiner_forward.1} parent=259 // pred_region
          %p5437 = scmp.lt.s32.totalorder %s128, 1
          %s5438 = scalar_select %p5437, %s128, 1
          %s5439 = smul.addr %s5438, 4
          %s5440 = smul.addr %s5439, 8
          %s5441 = scalar_lea.vmem %s103, %s5440
        $region264: #{iterative_refiner_forward.1} parent=259 // pred_fallthru
          _
      $region260: #{iterative_refiner_forward.1} parent=5 // pred_fallthru
        _
    $region6: #{iterative_refiner_forward.1} parent=1 // loop_footer
      %s126 = sadd.s32 1, %s122
    $region7: #{iterative_refiner_forward.1} parent=1 // loop_footer_branch
      %121 = sbr.rel target = $region3
    $region8: #{iterative_refiner_forward.1} parent=1 // loop_exit
      _
    %5442 = vsyncpa [#allocation5], 1
    %s5443 = scalar_lea.sflag [#allocation5], 1
    %5444 = vsyncpa %s5443, 1
    %5445 = vsyncpa [#allocation7], 1

</llo_original>
